<compile_context>
chip_gen: v7x
topology: tpu7x:2x2x1
jax: 0.10.0
libtpu: 0.0.40
codegen_flags: <defaults>
</compile_context>

<pallas_src>
import jax
import jax.numpy as jnp
from jax.experimental import pallas as pl
from jax.experimental.pallas import tpu as pltpu

INPUT_SIZE = 784
HIDDEN1 = 1024
HIDDEN2 = 512
NUM_CLASSES = 10

OUT_PAD = 128         # 10 -> 128: lane-dense, unmasked output stores
MIN_BATCH_TILE = 128  # minimum rows per grid step (sublane/MXU alignment)
MAX_BATCH_TILE = 1024 # cap keeps footprint well under v7x's scoped VMEM


def _pick_batch_tile(batch):
    """Largest tile <= MAX_BATCH_TILE that still leaves >= 2 grid steps when
    the batch spans more than one minimum tile (so v7x megacore can split the
    grid across both TensorCores)."""
    aligned = pl.cdiv(batch, MIN_BATCH_TILE) * MIN_BATCH_TILE
    if aligned <= MIN_BATCH_TILE:
        return MIN_BATCH_TILE
    half = (aligned // 2) // MIN_BATCH_TILE * MIN_BATCH_TILE
    return max(MIN_BATCH_TILE, min(MAX_BATCH_TILE, half))


def mlp_kernel(x_ref, w1_ref, b1_ref, w2_ref, b2_ref, w3_ref, b3_ref, o_ref):
    # fc1 + ReLU  (bf16 operands on the MXU, f32 accumulation / elementwise)
    h1 = jnp.dot(x_ref[...], w1_ref[...], preferred_element_type=jnp.float32)
    h1 = jnp.maximum(h1 + b1_ref[...], 0.0)
    # fc2 + ReLU
    h2 = jnp.dot(h1.astype(jnp.bfloat16), w2_ref[...],
                 preferred_element_type=jnp.float32)
    h2 = jnp.maximum(h2 + b2_ref[...], 0.0)
    # fc3 (logits, no activation); output slab is 128 lanes wide (padded)
    y = jnp.dot(h2.astype(jnp.bfloat16), w3_ref[...],
                preferred_element_type=jnp.float32)
    o_ref[...] = (y + b3_ref[...]).astype(o_ref.dtype)


def prepare_params(w1, b1, w2, b2, w3, b3):
    """One-time host-side weight prep (hoisted out of the per-call path):
    pad fc3's output dim 10 -> 128 lanes and cast matmul operands to bf16.
    Weights are stored (in, out), i.e. PyTorch's (out, in) transposed."""
    w3p = jnp.pad(w3, ((0, 0), (0, OUT_PAD - NUM_CLASSES)))
    b3p = jnp.pad(b3, ((0, 0), (0, OUT_PAD - NUM_CLASSES)))
    return (w1.astype(jnp.bfloat16), b1,
            w2.astype(jnp.bfloat16), b2,
            w3p.astype(jnp.bfloat16), b3p)


def mpl_forward(x, prepared_params, *, batch_tile=None):
    """x: (B, 784) f32.  prepared_params: output of prepare_params().
    Returns (B, 10) f32 logits."""
    w1, b1, w2, b2, w3p, b3p = prepared_params
    B = x.shape[0]
    tb = batch_tile if batch_tile is not None else _pick_batch_tile(B)
    Bp = pl.cdiv(B, tb) * tb

    # Only per-call data prep: bf16 cast of the activations and (if needed)
    # zero-pad of the batch dim up to a tile multiple.  No K padding of x.
    xp = x.astype(jnp.bfloat16)
    if Bp != B:
        xp = jnp.pad(xp, ((0, Bp - B), (0, 0)))

    grid = (Bp // tb,)

    in_specs = [
        pl.BlockSpec((tb, INPUT_SIZE), lambda i: (i, 0)),       # x tile (pipelined)
        pl.BlockSpec((INPUT_SIZE, HIDDEN1), lambda i: (0, 0)),  # w1 (VMEM-resident)
        pl.BlockSpec((1, HIDDEN1), lambda i: (0, 0)),           # b1
        pl.BlockSpec((HIDDEN1, HIDDEN2), lambda i: (0, 0)),     # w2
        pl.BlockSpec((1, HIDDEN2), lambda i: (0, 0)),           # b2
        pl.BlockSpec((HIDDEN2, OUT_PAD), lambda i: (0, 0)),     # w3 (padded lanes)
        pl.BlockSpec((1, OUT_PAD), lambda i: (0, 0)),           # b3 (padded lanes)
    ]
    out_specs = pl.BlockSpec((tb, OUT_PAD), lambda i: (i, 0))

    out_padded = pl.pallas_call(
        mlp_kernel,
        out_shape=jax.ShapeDtypeStruct((Bp, OUT_PAD), jnp.float32),
        grid=grid,
        in_specs=in_specs,
        out_specs=out_specs,
        compiler_params=pltpu.CompilerParams(
            dimension_semantics=("parallel",)),
    )(xp, w1, b1, w2, b2, w3p, b3p)

    return out_padded[:B, :NUM_CLASSES]


def init_params(key):
    """Deterministic init matching PyTorch Linear fan-in init; weights stored
    transposed as (in, out)."""
    ks = jax.random.split(key, 6)

    def linear(kw, kb, fan_in, fan_out):
        bound = 1.0 / jnp.sqrt(fan_in)
        w = jax.random.uniform(kw, (fan_in, fan_out), jnp.float32, -bound, bound)
        b = jax.random.uniform(kb, (1, fan_out), jnp.float32, -bound, bound)
        return w, b

    w1, b1 = linear(ks[0], ks[1], INPUT_SIZE, HIDDEN1)
    w2, b2 = linear(ks[2], ks[3], HIDDEN1, HIDDEN2)
    w3, b3 = linear(ks[4], ks[5], HIDDEN2, NUM_CLASSES)
    return w1, b1, w2, b2, w3, b3


def reference_forward(x, w1, b1, w2, b2, w3, b3):
    h1 = jnp.maximum(x @ w1 + b1, 0.0)
    h2 = jnp.maximum(h1 @ w2 + b2, 0.0)
    return h2 @ w3 + b3


if __name__ == "__main__":
    key = jax.random.PRNGKey(0)
    k_x1, k_x2, k_p = jax.random.split(key, 3)

    params = init_params(k_p)
    prepared = prepare_params(*params)   # hoisted one-time weight prep

    # Small demo batch (pads to a single 128-row tile internally).
    x_small = jax.random.normal(k_x1, (8, INPUT_SIZE), dtype=jnp.float32)
    y_small = jax.block_until_ready(mpl_forward(x_small, prepared))
    assert y_small.shape == (8, NUM_CLASSES)
    y_ref_small = reference_forward(x_small, *params)
    assert jnp.allclose(y_small, y_ref_small, atol=3e-2, rtol=3e-2), \
        "small-batch mismatch vs reference"

    # Larger batch exercises the adaptive tile path (tb=1024, 2 grid steps).
    x_big = jax.random.normal(k_x2, (2048, INPUT_SIZE), dtype=jnp.float32)
    y_big = jax.block_until_ready(mpl_forward(x_big, prepared))
    assert y_big.shape == (2048, NUM_CLASSES)
    y_ref_big = reference_forward(x_big, *params)
    assert jnp.allclose(y_big, y_ref_big, atol=3e-2, rtol=3e-2), \
        "large-batch mismatch vs reference"

    print("KERNEL_OK")
</pallas_src>

<mosaic_0001>
module attributes {stable_mosaic.version = 11 : i64} {
  func.func @mlp_kernel(%arg0: i32, %arg1: memref<128x784xbf16, #tpu.memory_space<vmem>>, %arg2: memref<784x1024xbf16, #tpu.memory_space<vmem>>, %arg3: memref<1x1024xf32, #tpu.memory_space<vmem>>, %arg4: memref<1024x512xbf16, #tpu.memory_space<vmem>>, %arg5: memref<1x512xf32, #tpu.memory_space<vmem>>, %arg6: memref<512x128xbf16, #tpu.memory_space<vmem>>, %arg7: memref<1x128xf32, #tpu.memory_space<vmem>>, %arg8: memref<128x128xf32, #tpu.memory_space<vmem>>) attributes {dimension_semantics = [#tpu.dimension_semantics<parallel>], iteration_bounds = array<i64: 1>, scalar_prefetch = 0 : i64, scratch_operands = 0 : i64, tpu.core_type = #tpu.core_type<tc>, window_params = [{transform_indices = @transform_0, window_bounds = array<i64: 128, 784>}, {pipeline_mode = #tpu.pipeline_mode<synchronous>, transform_indices = @transform_1, window_bounds = array<i64: 784, 1024>}, {pipeline_mode = #tpu.pipeline_mode<synchronous>, transform_indices = @transform_2, window_bounds = array<i64: 1, 1024>}, {pipeline_mode = #tpu.pipeline_mode<synchronous>, transform_indices = @transform_3, window_bounds = array<i64: 1024, 512>}, {pipeline_mode = #tpu.pipeline_mode<synchronous>, transform_indices = @transform_4, window_bounds = array<i64: 1, 512>}, {pipeline_mode = #tpu.pipeline_mode<synchronous>, transform_indices = @transform_5, window_bounds = array<i64: 512, 128>}, {pipeline_mode = #tpu.pipeline_mode<synchronous>, transform_indices = @transform_6, window_bounds = array<i64: 1, 128>}, {transform_indices = @transform_7, window_bounds = array<i64: 128, 128>}]} {
    %c0 = arith.constant 0 : index
    %c0_0 = arith.constant 0 : index
    %0 = vector.load %arg1[%c0, %c0_0] : memref<128x784xbf16, #tpu.memory_space<vmem>>, vector<128x784xbf16>
    %c0_1 = arith.constant 0 : index
    %c0_2 = arith.constant 0 : index
    %1 = vector.load %arg2[%c0_1, %c0_2] : memref<784x1024xbf16, #tpu.memory_space<vmem>>, vector<784x1024xbf16>
    %cst = arith.constant dense<0.000000e+00> : vector<128x1024xf32>
    %2 = tpu.matmul %0, %1, %cst {dimension_numbers = #tpu.dot_dimension_numbers<[1], [0], [0], [1], [0, 0, 1, 1], [], []>} : vector<128x784xbf16>, vector<784x1024xbf16>, vector<128x1024xf32> -> vector<128x1024xf32>
    %c0_3 = arith.constant 0 : index
    %c0_4 = arith.constant 0 : index
    %3 = vector.load %arg3[%c0_3, %c0_4] : memref<1x1024xf32, #tpu.memory_space<vmem>>, vector<1x1024xf32>
    %4 = vector.broadcast %3 : vector<1x1024xf32> to vector<128x1024xf32>
    %5 = arith.addf %2, %4 : vector<128x1024xf32>
    %cst_5 = arith.constant 0.000000e+00 : f32
    %6 = vector.broadcast %cst_5 : f32 to vector<128x1024xf32>
    %7 = arith.maximumf %5, %6 : vector<128x1024xf32>
    %8 = arith.truncf %7 : vector<128x1024xf32> to vector<128x1024xbf16>
    %c0_6 = arith.constant 0 : index
    %c0_7 = arith.constant 0 : index
    %9 = vector.load %arg4[%c0_6, %c0_7] : memref<1024x512xbf16, #tpu.memory_space<vmem>>, vector<1024x512xbf16>
    %cst_8 = arith.constant dense<0.000000e+00> : vector<128x512xf32>
    %10 = tpu.matmul %8, %9, %cst_8 {dimension_numbers = #tpu.dot_dimension_numbers<[1], [0], [0], [1], [0, 0, 1, 1], [], []>} : vector<128x1024xbf16>, vector<1024x512xbf16>, vector<128x512xf32> -> vector<128x512xf32>
    %c0_9 = arith.constant 0 : index
    %c0_10 = arith.constant 0 : index
    %11 = vector.load %arg5[%c0_9, %c0_10] : memref<1x512xf32, #tpu.memory_space<vmem>>, vector<1x512xf32>
    %12 = vector.broadcast %11 : vector<1x512xf32> to vector<128x512xf32>
    %13 = arith.addf %10, %12 : vector<128x512xf32>
    %cst_11 = arith.constant 0.000000e+00 : f32
    %14 = vector.broadcast %cst_11 : f32 to vector<128x512xf32>
    %15 = arith.maximumf %13, %14 : vector<128x512xf32>
    %16 = arith.truncf %15 : vector<128x512xf32> to vector<128x512xbf16>
    %c0_12 = arith.constant 0 : index
    %c0_13 = arith.constant 0 : index
    %17 = vector.load %arg6[%c0_12, %c0_13] : memref<512x128xbf16, #tpu.memory_space<vmem>>, vector<512x128xbf16>
    %cst_14 = arith.constant dense<0.000000e+00> : vector<128x128xf32>
    %18 = tpu.matmul %16, %17, %cst_14 {dimension_numbers = #tpu.dot_dimension_numbers<[1], [0], [0], [1], [0, 0, 1, 1], [], []>} : vector<128x512xbf16>, vector<512x128xbf16>, vector<128x128xf32> -> vector<128x128xf32>
    %c0_15 = arith.constant 0 : index
    %c0_16 = arith.constant 0 : index
    %19 = vector.load %arg7[%c0_15, %c0_16] : memref<1x128xf32, #tpu.memory_space<vmem>>, vector<1x128xf32>
    %20 = vector.broadcast %19 : vector<1x128xf32> to vector<128x128xf32>
    %21 = arith.addf %18, %20 : vector<128x128xf32>
    %c0_17 = arith.constant 0 : index
    %c0_18 = arith.constant 0 : index
    %22 = vector.load %arg8[%c0_17, %c0_18] : memref<128x128xf32, #tpu.memory_space<vmem>>, vector<128x128xf32>
    tpu.vector_store %arg8[%c0_17, %c0_18], %21 {strides = array<i32>} : memref<128x128xf32, #tpu.memory_space<vmem>>, vector<128x128xf32>,
    return
  }
  func.func @transform_0(%arg0: i32) -> (i32, i32) {
    %c0_i32 = arith.constant 0 : i32
    %c0_i32_0 = arith.constant 0 : i32
    return %arg0, %c0_i32 : i32, i32
  }
  func.func @transform_1(%arg0: i32) -> (i32, i32) {
    %c0_i32 = arith.constant 0 : i32
    %c0_i32_0 = arith.constant 0 : i32
    %c0_i32_1 = arith.constant 0 : i32
    return %c0_i32, %c0_i32_0 : i32, i32
  }
  func.func @transform_2(%arg0: i32) -> (i32, i32) {
    %c0_i32 = arith.constant 0 : i32
    %c0_i32_0 = arith.constant 0 : i32
    %c0_i32_1 = arith.constant 0 : i32
    return %c0_i32, %c0_i32_0 : i32, i32
  }
  func.func @transform_3(%arg0: i32) -> (i32, i32) {
    %c0_i32 = arith.constant 0 : i32
    %c0_i32_0 = arith.constant 0 : i32
    %c0_i32_1 = arith.constant 0 : i32
    return %c0_i32, %c0_i32_0 : i32, i32
  }
  func.func @transform_4(%arg0: i32) -> (i32, i32) {
    %c0_i32 = arith.constant 0 : i32
    %c0_i32_0 = arith.constant 0 : i32
    %c0_i32_1 = arith.constant 0 : i32
    return %c0_i32, %c0_i32_0 : i32, i32
  }
  func.func @transform_5(%arg0: i32) -> (i32, i32) {
    %c0_i32 = arith.constant 0 : i32
    %c0_i32_0 = arith.constant 0 : i32
    %c0_i32_1 = arith.constant 0 : i32
    return %c0_i32, %c0_i32_0 : i32, i32
  }
  func.func @transform_6(%arg0: i32) -> (i32, i32) {
    %c0_i32 = arith.constant 0 : i32
    %c0_i32_0 = arith.constant 0 : i32
    %c0_i32_1 = arith.constant 0 : i32
    return %c0_i32, %c0_i32_0 : i32, i32
  }
  func.func @transform_7(%arg0: i32) -> (i32, i32) {
    %c0_i32 = arith.constant 0 : i32
    %c0_i32_0 = arith.constant 0 : i32
    return %arg0, %c0_i32 : i32, i32
  }
}

</mosaic_0001>

<llo_original>
// kernel: tpu_custom_call.1
$region0: #{tpu_custom_call.1}
  #allocation0 [shape = 'u32[]', space=smem, size = 0x4, offset = 0x4, fixed_abs, tag = 'smem constant byte address 0x4 - core index']
  #allocation1 [shape = 'u32[144,128]{1,0:T(1,128)}', space=vmem, size = 0x12000, scoped, tag = 'internal scratch']
  %s0 = inlined_call_operand.vmem [shape: bf16[128,784], index: 0, kind: input, shape index: {}]
  %s1 = inlined_call_operand.hbm [shape: bf16[784,1024], index: 1, kind: input, shape index: {}]
  %s2 = inlined_call_operand.hbm [shape: f32[1,1024], index: 2, kind: input, shape index: {}]
  %s3 = inlined_call_operand.hbm [shape: bf16[1024,512], index: 3, kind: input, shape index: {}]
  %s4 = inlined_call_operand.hbm [shape: f32[1,512], index: 4, kind: input, shape index: {}]
  %s5 = inlined_call_operand.hbm [shape: bf16[512,128], index: 5, kind: input, shape index: {}]
  %s6 = inlined_call_operand.hbm [shape: f32[1,128], index: 6, kind: input, shape index: {}]
  %s7 = inlined_call_operand.hbm [shape: f32[128,128], index: 7, kind: output, shape index: {}]
  %s8 = sld [smem:[#allocation0]]
  $region62: #{tpu_custom_call.1} parent=0
    _
  %s10 = ssub.s32 1, %s8
  %s11 = scalar_select 0, %s10, %s8
  $region1: #{tpu_custom_call.1} parent=0
    #allocation2 [shape = 'u8[1605632]{0}', space=vmem, size = 0x188000, scoped, tag = 'input window, operand 1, single buffered']
    #allocation3 [shape = 's32[1]{0}', space=sflag, size = 0x4, scoped, tag = 'scoped memory for tpu_custom_call.1']
    #allocation4 [shape = 's32[1]{0}', space=sflag, size = 0x4, scoped, tag = 'scoped memory for tpu_custom_call.1']
    #allocation5 [shape = 'u8[4096]{0}', space=vmem, size = 0x1000, scoped, tag = 'input window, operand 2, single buffered']
    #allocation6 [shape = 's32[1]{0}', space=sflag, size = 0x4, scoped, tag = 'scoped memory for tpu_custom_call.1']
    #allocation7 [shape = 'u8[1048576]{0}', space=vmem, size = 0x100000, scoped, tag = 'input window, operand 3, single buffered']
    #allocation8 [shape = 'u8[2048]{0}', space=vmem, size = 0x800, scoped, tag = 'input window, operand 4, single buffered']
    #allocation9 [shape = 's32[1]{0}', space=sflag, size = 0x4, scoped, tag = 'scoped memory for tpu_custom_call.1']
    #allocation10 [shape = 'u8[131072]{0}', space=vmem, size = 0x20000, scoped, tag = 'input window, operand 5, single buffered']
    #allocation11 [shape = 'u8[512]{0}', space=vmem, size = 0x400, scoped, tag = 'input window, operand 6, single buffered']
    #allocation12 [shape = 's32[1]{0}', space=sflag, size = 0x4, scoped, tag = 'scoped memory for tpu_custom_call.1']
    #allocation13 [shape = 'u8[65536]{0}', space=vmem, size = 0x10000, scoped, tag = 'output window, operand 0, single buffered']
    %12 = vsyncpa [#allocation3], 0
    %13 = vsyncpa [#allocation6], 0
    %14 = vsyncpa [#allocation9], 0
    %15 = vsyncpa [#allocation12], 0
    %16 = vsyncpa [#allocation4], 0
    // Predicated region
    $region2: #{tpu_custom_call.1} parent=1 // pred_check
      _
    $region3: #{tpu_custom_call.1} parent=1 // pred_check_branch
      %18 = sbr.rel (0) target = $region5
    $region4: #{tpu_custom_call.1} parent=1 // pred_region
      _
    $region5: #{tpu_custom_call.1} parent=1 // pred_fallthru
      _
    // Predicated region
    $region6: #{tpu_custom_call.1} parent=1 // pred_check
      _
    $region7: #{tpu_custom_call.1} parent=1 // pred_check_branch
      %20 = sbr.rel (0) target = $region9
    $region8: #{tpu_custom_call.1} parent=1 // pred_region
      %s22 = ssub.s32 50176, 50176
      %23 = vsyncadd [#allocation3], %s22
      %s24 = sshll.u32 [#allocation2], 4
      %s25 = int_to_ptr.vmem [resolvable:$true] %s24
      %30 = dma.hbm_to_vmem [thread:$0]  %s1, 50176, %s25, [#allocation3], 512, 512, 32
    $region9: #{tpu_custom_call.1} parent=1 // pred_fallthru
      _
    // Predicated region
    $region10: #{tpu_custom_call.1} parent=1 // pred_check
      _
    $region11: #{tpu_custom_call.1} parent=1 // pred_check_branch
      %32 = sbr.rel (0) target = $region13
    $region12: #{tpu_custom_call.1} parent=1 // pred_region
      %s34 = ssub.s32 128, 128
      %35 = vsyncadd [#allocation6], %s34
      %s37 = sshll.u32 [#allocation5], 4
      %s38 = int_to_ptr.vmem [resolvable:$true] %s37
      %40 = dma.hbm_to_vmem [thread:$0]  %s2, 128, %s38, [#allocation6]
    $region13: #{tpu_custom_call.1} parent=1 // pred_fallthru
      _
    // Predicated region
    $region14: #{tpu_custom_call.1} parent=1 // pred_check
      _
    $region15: #{tpu_custom_call.1} parent=1 // pred_check_branch
      %42 = sbr.rel (0) target = $region17
    $region16: #{tpu_custom_call.1} parent=1 // pred_region
      %s44 = ssub.s32 32768, 32768
      %45 = vsyncadd [#allocation6], %s44
      %s46 = sshll.u32 [#allocation7], 4
      %s47 = int_to_ptr.vmem [resolvable:$true] %s46
      %52 = dma.hbm_to_vmem [thread:$0]  %s3, 32768, %s47, [#allocation6], 256, 256, 16
    $region17: #{tpu_custom_call.1} parent=1 // pred_fallthru
      _
    // Predicated region
    $region18: #{tpu_custom_call.1} parent=1 // pred_check
      _
    $region19: #{tpu_custom_call.1} parent=1 // pred_check_branch
      %54 = sbr.rel (0) target = $region21
    $region20: #{tpu_custom_call.1} parent=1 // pred_region
      %s56 = ssub.s32 64, 64
      %57 = vsyncadd [#allocation9], %s56
      %s59 = sshll.u32 [#allocation8], 4
      %s60 = int_to_ptr.vmem [resolvable:$true] %s59
      %62 = dma.hbm_to_vmem [thread:$0]  %s4, 64, %s60, [#allocation9]
    $region21: #{tpu_custom_call.1} parent=1 // pred_fallthru
      _
    // Predicated region
    $region22: #{tpu_custom_call.1} parent=1 // pred_check
      _
    $region23: #{tpu_custom_call.1} parent=1 // pred_check_branch
      %64 = sbr.rel (0) target = $region25
    $region24: #{tpu_custom_call.1} parent=1 // pred_region
      %s66 = ssub.s32 4096, 4096
      %67 = vsyncadd [#allocation9], %s66
      %s68 = sshll.u32 [#allocation10], 4
      %s69 = int_to_ptr.vmem [resolvable:$true] %s68
      %74 = dma.hbm_to_vmem [thread:$0]  %s5, 4096, %s69, [#allocation9], 64, 64, 4
    $region25: #{tpu_custom_call.1} parent=1 // pred_fallthru
      _
    // Predicated region
    $region26: #{tpu_custom_call.1} parent=1 // pred_check
      _
    $region27: #{tpu_custom_call.1} parent=1 // pred_check_branch
      %76 = sbr.rel (0) target = $region29
    $region28: #{tpu_custom_call.1} parent=1 // pred_region
      %s78 = ssub.s32 16, 16
      %79 = vsyncadd [#allocation12], %s78
      %s81 = sshll.u32 [#allocation11], 4
      %s82 = int_to_ptr.vmem [resolvable:$true] %s81
      %84 = dma.hbm_to_vmem [thread:$0]  %s6, 16, %s82, [#allocation12]
    $region29: #{tpu_custom_call.1} parent=1 // pred_fallthru
      _
    // Predicated region
    $region30: #{tpu_custom_call.1} parent=1 // pred_check
      _
    $region31: #{tpu_custom_call.1} parent=1 // pred_check_branch
      %86 = sbr.rel (0) target = $region33
    $region32: #{tpu_custom_call.1} parent=1 // pred_region
      %87 = dma.done [#allocation3], 50176
    $region33: #{tpu_custom_call.1} parent=1 // pred_fallthru
      _
    // Predicated region
    $region34: #{tpu_custom_call.1} parent=1 // pred_check
      _
    $region35: #{tpu_custom_call.1} parent=1 // pred_check_branch
      %89 = sbr.rel (0) target = $region37
    $region36: #{tpu_custom_call.1} parent=1 // pred_region
      %90 = dma.done [#allocation6], 128
    $region37: #{tpu_custom_call.1} parent=1 // pred_fallthru
      _
    // Predicated region
    $region38: #{tpu_custom_call.1} parent=1 // pred_check
      _
    $region39: #{tpu_custom_call.1} parent=1 // pred_check_branch
      %92 = sbr.rel (0) target = $region41
    $region40: #{tpu_custom_call.1} parent=1 // pred_region
      %93 = dma.done [#allocation6], 32768
    $region41: #{tpu_custom_call.1} parent=1 // pred_fallthru
      _
    // Predicated region
    $region42: #{tpu_custom_call.1} parent=1 // pred_check
      _
    $region43: #{tpu_custom_call.1} parent=1 // pred_check_branch
      %95 = sbr.rel (0) target = $region45
    $region44: #{tpu_custom_call.1} parent=1 // pred_region
      %96 = dma.done [#allocation9], 64
    $region45: #{tpu_custom_call.1} parent=1 // pred_fallthru
      _
    // Predicated region
    $region46: #{tpu_custom_call.1} parent=1 // pred_check
      _
    $region47: #{tpu_custom_call.1} parent=1 // pred_check_branch
      %98 = sbr.rel (0) target = $region49
    $region48: #{tpu_custom_call.1} parent=1 // pred_region
      %99 = dma.done [#allocation9], 4096
    $region49: #{tpu_custom_call.1} parent=1 // pred_fallthru
      _
    // Predicated region
    $region50: #{tpu_custom_call.1} parent=1 // pred_check
      _
    $region51: #{tpu_custom_call.1} parent=1 // pred_check_branch
      %101 = sbr.rel (0) target = $region53
    $region52: #{tpu_custom_call.1} parent=1 // pred_region
      %102 = dma.done [#allocation12], 16
    $region53: #{tpu_custom_call.1} parent=1 // pred_fallthru
      _
    %v104 = vld [vmem:[%s0] sm:$0xff]
    %v105 = vld [vmem:[%s0 + $0x8] sm:$0xff]
    %v106 = vld [vmem:[%s0 + $0x10] sm:$0xff]
    %v107 = vld [vmem:[%s0 + $0x18] sm:$0xf]
    %v108 = vld [vmem:[%s0 + $0x1c] sm:$0xff]
    %v109 = vld [vmem:[%s0 + $0x24] sm:$0xff]
    %v110 = vld [vmem:[%s0 + $0x2c] sm:$0xff]
    %v111 = vld [vmem:[%s0 + $0x34] sm:$0xf]
    %v112 = vld [vmem:[%s0 + $0x38] sm:$0xff]
    %v113 = vld [vmem:[%s0 + $0x40] sm:$0xff]
    %v114 = vld [vmem:[%s0 + $0x48] sm:$0xff]
    %v115 = vld [vmem:[%s0 + $0x50] sm:$0xf]
    %v116 = vld [vmem:[%s0 + $0x54] sm:$0xff]
    %v117 = vld [vmem:[%s0 + $0x5c] sm:$0xff]
    %v118 = vld [vmem:[%s0 + $0x64] sm:$0xff]
    %v119 = vld [vmem:[%s0 + $0x6c] sm:$0xf]
    %v120 = vld [vmem:[%s0 + $0x70] sm:$0xff]
    %v121 = vld [vmem:[%s0 + $0x78] sm:$0xff]
    %v122 = vld [vmem:[%s0 + $0x80] sm:$0xff]
    %v123 = vld [vmem:[%s0 + $0x88] sm:$0xf]
    %v124 = vld [vmem:[%s0 + $0x8c] sm:$0xff]
    %v125 = vld [vmem:[%s0 + $0x94] sm:$0xff]
    %v126 = vld [vmem:[%s0 + $0x9c] sm:$0xff]
    %v127 = vld [vmem:[%s0 + $0xa4] sm:$0xf]
    %v128 = vld [vmem:[%s0 + $0xa8] sm:$0xff]
    %v129 = vld [vmem:[%s0 + $0xb0] sm:$0xff]
    %v130 = vld [vmem:[%s0 + $0xb8] sm:$0xff]
    %v131 = vld [vmem:[%s0 + $0xc0] sm:$0xf]
    %v132 = vld [vmem:[%s0 + $0xc4] sm:$0xff]
    %v133 = vld [vmem:[%s0 + $0xcc] sm:$0xff]
    %v134 = vld [vmem:[%s0 + $0xd4] sm:$0xff]
    %v135 = vld [vmem:[%s0 + $0xdc] sm:$0xf]
    %v136 = vld [vmem:[%s0 + $0xe0] sm:$0xff]
    %v137 = vld [vmem:[%s0 + $0xe8] sm:$0xff]
    %v138 = vld [vmem:[%s0 + $0xf0] sm:$0xff]
    %v139 = vld [vmem:[%s0 + $0xf8] sm:$0xf]
    %v140 = vld [vmem:[%s0 + $0xfc] sm:$0xff]
    %v141 = vld [vmem:[%s0 + $0x104] sm:$0xff]
    %v142 = vld [vmem:[%s0 + $0x10c] sm:$0xff]
    %v143 = vld [vmem:[%s0 + $0x114] sm:$0xf]
    %v144 = vld [vmem:[%s0 + $0x118] sm:$0xff]
    %v145 = vld [vmem:[%s0 + $0x120] sm:$0xff]
    %v146 = vld [vmem:[%s0 + $0x128] sm:$0xff]
    %v147 = vld [vmem:[%s0 + $0x130] sm:$0xf]
    %v148 = vld [vmem:[%s0 + $0x134] sm:$0xff]
    %v149 = vld [vmem:[%s0 + $0x13c] sm:$0xff]
    %v150 = vld [vmem:[%s0 + $0x144] sm:$0xff]
    %v151 = vld [vmem:[%s0 + $0x14c] sm:$0xf]
    %v152 = vld [vmem:[%s0 + $0x150] sm:$0xff]
    %v153 = vld [vmem:[%s0 + $0x158] sm:$0xff]
    %v154 = vld [vmem:[%s0 + $0x160] sm:$0xff]
    %v155 = vld [vmem:[%s0 + $0x168] sm:$0xf]
    %v156 = vld [vmem:[%s0 + $0x16c] sm:$0xff]
    %v157 = vld [vmem:[%s0 + $0x174] sm:$0xff]
    %v158 = vld [vmem:[%s0 + $0x17c] sm:$0xff]
    %v159 = vld [vmem:[%s0 + $0x184] sm:$0xf]
    %v160 = vld [vmem:[%s0 + $0x188] sm:$0xff]
    %v161 = vld [vmem:[%s0 + $0x190] sm:$0xff]
    %v162 = vld [vmem:[%s0 + $0x198] sm:$0xff]
    %v163 = vld [vmem:[%s0 + $0x1a0] sm:$0xf]
    %v164 = vld [vmem:[%s0 + $0x1a4] sm:$0xff]
    %v165 = vld [vmem:[%s0 + $0x1ac] sm:$0xff]
    %v166 = vld [vmem:[%s0 + $0x1b4] sm:$0xff]
    %v167 = vld [vmem:[%s0 + $0x1bc] sm:$0xf]
    %v168 = vld [vmem:[#allocation2] sm:$0xff]
    %v169 = vld [vmem:[#allocation2 + $0x8] sm:$0xff]
    %v170 = vld [vmem:[#allocation2 + $0x10] sm:$0xff]
    %v171 = vld [vmem:[#allocation2 + $0x18] sm:$0xff]
    %v172 = vld [vmem:[#allocation2 + $0x20] sm:$0xff]
    %v173 = vld [vmem:[#allocation2 + $0x28] sm:$0xff]
    %v174 = vld [vmem:[#allocation2 + $0x30] sm:$0xff]
    %v175 = vld [vmem:[#allocation2 + $0x38] sm:$0xff]
    %v176 = vld [vmem:[#allocation2 + $0x40] sm:$0xff]
    %v177 = vld [vmem:[#allocation2 + $0x48] sm:$0xff]
    %v178 = vld [vmem:[#allocation2 + $0x50] sm:$0xff]
    %v179 = vld [vmem:[#allocation2 + $0x58] sm:$0xff]
    %v180 = vld [vmem:[#allocation2 + $0x60] sm:$0xff]
    %v181 = vld [vmem:[#allocation2 + $0x68] sm:$0xff]
    %v182 = vld [vmem:[#allocation2 + $0x70] sm:$0xff]
    %v183 = vld [vmem:[#allocation2 + $0x78] sm:$0xff]
    %v184 = vld [vmem:[#allocation2 + $0x80] sm:$0xff]
    %v185 = vld [vmem:[#allocation2 + $0x88] sm:$0xff]
    %v186 = vld [vmem:[#allocation2 + $0x90] sm:$0xff]
    %v187 = vld [vmem:[#allocation2 + $0x98] sm:$0xff]
    %v188 = vld [vmem:[#allocation2 + $0xa0] sm:$0xff]
    %v189 = vld [vmem:[#allocation2 + $0xa8] sm:$0xff]
    %v190 = vld [vmem:[#allocation2 + $0xb0] sm:$0xff]
    %v191 = vld [vmem:[#allocation2 + $0xb8] sm:$0xff]
    %v192 = vld [vmem:[#allocation2 + $0xc0] sm:$0xff]
    %v193 = vld [vmem:[#allocation2 + $0xc8] sm:$0xff]
    %v194 = vld [vmem:[#allocation2 + $0xd0] sm:$0xff]
    %v195 = vld [vmem:[#allocation2 + $0xd8] sm:$0xff]
    %v196 = vld [vmem:[#allocation2 + $0xe0] sm:$0xff]
    %v197 = vld [vmem:[#allocation2 + $0xe8] sm:$0xff]
    %v198 = vld [vmem:[#allocation2 + $0xf0] sm:$0xff]
    %v199 = vld [vmem:[#allocation2 + $0xf8] sm:$0xff]
    %v200 = vld [vmem:[#allocation2 + $0x100] sm:$0xff]
    %v201 = vld [vmem:[#allocation2 + $0x108] sm:$0xff]
    %v202 = vld [vmem:[#allocation2 + $0x110] sm:$0xff]
    %v203 = vld [vmem:[#allocation2 + $0x118] sm:$0xff]
    %v204 = vld [vmem:[#allocation2 + $0x120] sm:$0xff]
    %v205 = vld [vmem:[#allocation2 + $0x128] sm:$0xff]
    %v206 = vld [vmem:[#allocation2 + $0x130] sm:$0xff]
    %v207 = vld [vmem:[#allocation2 + $0x138] sm:$0xff]
    %v208 = vld [vmem:[#allocation2 + $0x140] sm:$0xff]
    %v209 = vld [vmem:[#allocation2 + $0x148] sm:$0xff]
    %v210 = vld [vmem:[#allocation2 + $0x150] sm:$0xff]
    %v211 = vld [vmem:[#allocation2 + $0x158] sm:$0xff]
    %v212 = vld [vmem:[#allocation2 + $0x160] sm:$0xff]
    %v213 = vld [vmem:[#allocation2 + $0x168] sm:$0xff]
    %v214 = vld [vmem:[#allocation2 + $0x170] sm:$0xff]
    %v215 = vld [vmem:[#allocation2 + $0x178] sm:$0xff]
    %v216 = vld [vmem:[#allocation2 + $0x180] sm:$0xff]
    %v217 = vld [vmem:[#allocation2 + $0x188] sm:$0xff]
    %v218 = vld [vmem:[#allocation2 + $0x190] sm:$0xff]
    %v219 = vld [vmem:[#allocation2 + $0x198] sm:$0xff]
    %v220 = vld [vmem:[#allocation2 + $0x1a0] sm:$0xff]
    %v221 = vld [vmem:[#allocation2 + $0x1a8] sm:$0xff]
    %v222 = vld [vmem:[#allocation2 + $0x1b0] sm:$0xff]
    %v223 = vld [vmem:[#allocation2 + $0x1b8] sm:$0xff]
    %v224 = vld [vmem:[#allocation2 + $0x1c0] sm:$0xff]
    %v225 = vld [vmem:[#allocation2 + $0x1c8] sm:$0xff]
    %v226 = vld [vmem:[#allocation2 + $0x1d0] sm:$0xff]
    %v227 = vld [vmem:[#allocation2 + $0x1d8] sm:$0xff]
    %v228 = vld [vmem:[#allocation2 + $0x1e0] sm:$0xff]
    %v229 = vld [vmem:[#allocation2 + $0x1e8] sm:$0xff]
    %v230 = vld [vmem:[#allocation2 + $0x1f0] sm:$0xff]
    %v231 = vld [vmem:[#allocation2 + $0x1f8] sm:$0xff]
    %v232 = vld [vmem:[#allocation2 + $0x200] sm:$0xff]
    %v233 = vld [vmem:[#allocation2 + $0x208] sm:$0xff]
    %v234 = vld [vmem:[#allocation2 + $0x210] sm:$0xff]
    %v235 = vld [vmem:[#allocation2 + $0x218] sm:$0xff]
    %v236 = vld [vmem:[#allocation2 + $0x220] sm:$0xff]
    %v237 = vld [vmem:[#allocation2 + $0x228] sm:$0xff]
    %v238 = vld [vmem:[#allocation2 + $0x230] sm:$0xff]
    %v239 = vld [vmem:[#allocation2 + $0x238] sm:$0xff]
    %v240 = vld [vmem:[#allocation2 + $0x240] sm:$0xff]
    %v241 = vld [vmem:[#allocation2 + $0x248] sm:$0xff]
    %v242 = vld [vmem:[#allocation2 + $0x250] sm:$0xff]
    %v243 = vld [vmem:[#allocation2 + $0x258] sm:$0xff]
    %v244 = vld [vmem:[#allocation2 + $0x260] sm:$0xff]
    %v245 = vld [vmem:[#allocation2 + $0x268] sm:$0xff]
    %v246 = vld [vmem:[#allocation2 + $0x270] sm:$0xff]
    %v247 = vld [vmem:[#allocation2 + $0x278] sm:$0xff]
    %v248 = vld [vmem:[#allocation2 + $0x280] sm:$0xff]
    %v249 = vld [vmem:[#allocation2 + $0x288] sm:$0xff]
    %v250 = vld [vmem:[#allocation2 + $0x290] sm:$0xff]
    %v251 = vld [vmem:[#allocation2 + $0x298] sm:$0xff]
    %v252 = vld [vmem:[#allocation2 + $0x2a0] sm:$0xff]
    %v253 = vld [vmem:[#allocation2 + $0x2a8] sm:$0xff]
    %v254 = vld [vmem:[#allocation2 + $0x2b0] sm:$0xff]
    %v255 = vld [vmem:[#allocation2 + $0x2b8] sm:$0xff]
    %v256 = vld [vmem:[#allocation2 + $0x2c0] sm:$0xff]
    %v257 = vld [vmem:[#allocation2 + $0x2c8] sm:$0xff]
    %v258 = vld [vmem:[#allocation2 + $0x2d0] sm:$0xff]
    %v259 = vld [vmem:[#allocation2 + $0x2d8] sm:$0xff]
    %v260 = vld [vmem:[#allocation2 + $0x2e0] sm:$0xff]
    %v261 = vld [vmem:[#allocation2 + $0x2e8] sm:$0xff]
    %v262 = vld [vmem:[#allocation2 + $0x2f0] sm:$0xff]
    %v263 = vld [vmem:[#allocation2 + $0x2f8] sm:$0xff]
    %v264 = vld [vmem:[#allocation2 + $0x300] sm:$0xff]
    %v265 = vld [vmem:[#allocation2 + $0x308] sm:$0xff]
    %v266 = vld [vmem:[#allocation2 + $0x310] sm:$0xff]
    %v267 = vld [vmem:[#allocation2 + $0x318] sm:$0xff]
    %v268 = vld [vmem:[#allocation2 + $0x320] sm:$0xff]
    %v269 = vld [vmem:[#allocation2 + $0x328] sm:$0xff]
    %v270 = vld [vmem:[#allocation2 + $0x330] sm:$0xff]
    %v271 = vld [vmem:[#allocation2 + $0x338] sm:$0xff]
    %v272 = vld [vmem:[#allocation2 + $0x340] sm:$0xff]
    %v273 = vld [vmem:[#allocation2 + $0x348] sm:$0xff]
    %v274 = vld [vmem:[#allocation2 + $0x350] sm:$0xff]
    %v275 = vld [vmem:[#allocation2 + $0x358] sm:$0xff]
    %v276 = vld [vmem:[#allocation2 + $0x360] sm:$0xff]
    %v277 = vld [vmem:[#allocation2 + $0x368] sm:$0xff]
    %v278 = vld [vmem:[#allocation2 + $0x370] sm:$0xff]
    %v279 = vld [vmem:[#allocation2 + $0x378] sm:$0xff]
    %v280 = vld [vmem:[#allocation2 + $0x380] sm:$0xff]
    %v281 = vld [vmem:[#allocation2 + $0x388] sm:$0xff]
    %v282 = vld [vmem:[#allocation2 + $0x390] sm:$0xff]
    %v283 = vld [vmem:[#allocation2 + $0x398] sm:$0xff]
    %v284 = vld [vmem:[#allocation2 + $0x3a0] sm:$0xff]
    %v285 = vld [vmem:[#allocation2 + $0x3a8] sm:$0xff]
    %v286 = vld [vmem:[#allocation2 + $0x3b0] sm:$0xff]
    %v287 = vld [vmem:[#allocation2 + $0x3b8] sm:$0xff]
    %v288 = vld [vmem:[#allocation2 + $0x3c0] sm:$0xff]
    %v289 = vld [vmem:[#allocation2 + $0x3c8] sm:$0xff]
    %v290 = vld [vmem:[#allocation2 + $0x3d0] sm:$0xff]
    %v291 = vld [vmem:[#allocation2 + $0x3d8] sm:$0xff]
    %v292 = vld [vmem:[#allocation2 + $0x3e0] sm:$0xff]
    %v293 = vld [vmem:[#allocation2 + $0x3e8] sm:$0xff]
    %v294 = vld [vmem:[#allocation2 + $0x3f0] sm:$0xff]
    %v295 = vld [vmem:[#allocation2 + $0x3f8] sm:$0xff]
    %v296 = vld [vmem:[#allocation2 + $0x400] sm:$0xff]
    %v297 = vld [vmem:[#allocation2 + $0x408] sm:$0xff]
    %v298 = vld [vmem:[#allocation2 + $0x410] sm:$0xff]
    %v299 = vld [vmem:[#allocation2 + $0x418] sm:$0xff]
    %v300 = vld [vmem:[#allocation2 + $0x420] sm:$0xff]
    %v301 = vld [vmem:[#allocation2 + $0x428] sm:$0xff]
    %v302 = vld [vmem:[#allocation2 + $0x430] sm:$0xff]
    %v303 = vld [vmem:[#allocation2 + $0x438] sm:$0xff]
    %v304 = vld [vmem:[#allocation2 + $0x440] sm:$0xff]
    %v305 = vld [vmem:[#allocation2 + $0x448] sm:$0xff]
    %v306 = vld [vmem:[#allocation2 + $0x450] sm:$0xff]
    %v307 = vld [vmem:[#allocation2 + $0x458] sm:$0xff]
    %v308 = vld [vmem:[#allocation2 + $0x460] sm:$0xff]
    %v309 = vld [vmem:[#allocation2 + $0x468] sm:$0xff]
    %v310 = vld [vmem:[#allocation2 + $0x470] sm:$0xff]
    %v311 = vld [vmem:[#allocation2 + $0x478] sm:$0xff]
    %v312 = vld [vmem:[#allocation2 + $0x480] sm:$0xff]
    %v313 = vld [vmem:[#allocation2 + $0x488] sm:$0xff]
    %v314 = vld [vmem:[#allocation2 + $0x490] sm:$0xff]
    %v315 = vld [vmem:[#allocation2 + $0x498] sm:$0xff]
    %v316 = vld [vmem:[#allocation2 + $0x4a0] sm:$0xff]
    %v317 = vld [vmem:[#allocation2 + $0x4a8] sm:$0xff]
    %v318 = vld [vmem:[#allocation2 + $0x4b0] sm:$0xff]
    %v319 = vld [vmem:[#allocation2 + $0x4b8] sm:$0xff]
    %v320 = vld [vmem:[#allocation2 + $0x4c0] sm:$0xff]
    %v321 = vld [vmem:[#allocation2 + $0x4c8] sm:$0xff]
    %v322 = vld [vmem:[#allocation2 + $0x4d0] sm:$0xff]
    %v323 = vld [vmem:[#allocation2 + $0x4d8] sm:$0xff]
    %v324 = vld [vmem:[#allocation2 + $0x4e0] sm:$0xff]
    %v325 = vld [vmem:[#allocation2 + $0x4e8] sm:$0xff]
    %v326 = vld [vmem:[#allocation2 + $0x4f0] sm:$0xff]
    %v327 = vld [vmem:[#allocation2 + $0x4f8] sm:$0xff]
    %v328 = vld [vmem:[#allocation2 + $0x500] sm:$0xff]
    %v329 = vld [vmem:[#allocation2 + $0x508] sm:$0xff]
    %v330 = vld [vmem:[#allocation2 + $0x510] sm:$0xff]
    %v331 = vld [vmem:[#allocation2 + $0x518] sm:$0xff]
    %v332 = vld [vmem:[#allocation2 + $0x520] sm:$0xff]
    %v333 = vld [vmem:[#allocation2 + $0x528] sm:$0xff]
    %v334 = vld [vmem:[#allocation2 + $0x530] sm:$0xff]
    %v335 = vld [vmem:[#allocation2 + $0x538] sm:$0xff]
    %v336 = vld [vmem:[#allocation2 + $0x540] sm:$0xff]
    %v337 = vld [vmem:[#allocation2 + $0x548] sm:$0xff]
    %v338 = vld [vmem:[#allocation2 + $0x550] sm:$0xff]
    %v339 = vld [vmem:[#allocation2 + $0x558] sm:$0xff]
    %v340 = vld [vmem:[#allocation2 + $0x560] sm:$0xff]
    %v341 = vld [vmem:[#allocation2 + $0x568] sm:$0xff]
    %v342 = vld [vmem:[#allocation2 + $0x570] sm:$0xff]
    %v343 = vld [vmem:[#allocation2 + $0x578] sm:$0xff]
    %v344 = vld [vmem:[#allocation2 + $0x580] sm:$0xff]
    %v345 = vld [vmem:[#allocation2 + $0x588] sm:$0xff]
    %v346 = vld [vmem:[#allocation2 + $0x590] sm:$0xff]
    %v347 = vld [vmem:[#allocation2 + $0x598] sm:$0xff]
    %v348 = vld [vmem:[#allocation2 + $0x5a0] sm:$0xff]
    %v349 = vld [vmem:[#allocation2 + $0x5a8] sm:$0xff]
    %v350 = vld [vmem:[#allocation2 + $0x5b0] sm:$0xff]
    %v351 = vld [vmem:[#allocation2 + $0x5b8] sm:$0xff]
    %v352 = vld [vmem:[#allocation2 + $0x5c0] sm:$0xff]
    %v353 = vld [vmem:[#allocation2 + $0x5c8] sm:$0xff]
    %v354 = vld [vmem:[#allocation2 + $0x5d0] sm:$0xff]
    %v355 = vld [vmem:[#allocation2 + $0x5d8] sm:$0xff]
    %v356 = vld [vmem:[#allocation2 + $0x5e0] sm:$0xff]
    %v357 = vld [vmem:[#allocation2 + $0x5e8] sm:$0xff]
    %v358 = vld [vmem:[#allocation2 + $0x5f0] sm:$0xff]
    %v359 = vld [vmem:[#allocation2 + $0x5f8] sm:$0xff]
    %v360 = vld [vmem:[#allocation2 + $0x600] sm:$0xff]
    %v361 = vld [vmem:[#allocation2 + $0x608] sm:$0xff]
    %v362 = vld [vmem:[#allocation2 + $0x610] sm:$0xff]
    %v363 = vld [vmem:[#allocation2 + $0x618] sm:$0xff]
    %v364 = vld [vmem:[#allocation2 + $0x620] sm:$0xff]
    %v365 = vld [vmem:[#allocation2 + $0x628] sm:$0xff]
    %v366 = vld [vmem:[#allocation2 + $0x630] sm:$0xff]
    %v367 = vld [vmem:[#allocation2 + $0x638] sm:$0xff]
    %v368 = vld [vmem:[#allocation2 + $0x640] sm:$0xff]
    %v369 = vld [vmem:[#allocation2 + $0x648] sm:$0xff]
    %v370 = vld [vmem:[#allocation2 + $0x650] sm:$0xff]
    %v371 = vld [vmem:[#allocation2 + $0x658] sm:$0xff]
    %v372 = vld [vmem:[#allocation2 + $0x660] sm:$0xff]
    %v373 = vld [vmem:[#allocation2 + $0x668] sm:$0xff]
    %v374 = vld [vmem:[#allocation2 + $0x670] sm:$0xff]
    %v375 = vld [vmem:[#allocation2 + $0x678] sm:$0xff]
    %v376 = vld [vmem:[#allocation2 + $0x680] sm:$0xff]
    %v377 = vld [vmem:[#allocation2 + $0x688] sm:$0xff]
    %v378 = vld [vmem:[#allocation2 + $0x690] sm:$0xff]
    %v379 = vld [vmem:[#allocation2 + $0x698] sm:$0xff]
    %v380 = vld [vmem:[#allocation2 + $0x6a0] sm:$0xff]
    %v381 = vld [vmem:[#allocation2 + $0x6a8] sm:$0xff]
    %v382 = vld [vmem:[#allocation2 + $0x6b0] sm:$0xff]
    %v383 = vld [vmem:[#allocation2 + $0x6b8] sm:$0xff]
    %v384 = vld [vmem:[#allocation2 + $0x6c0] sm:$0xff]
    %v385 = vld [vmem:[#allocation2 + $0x6c8] sm:$0xff]
    %v386 = vld [vmem:[#allocation2 + $0x6d0] sm:$0xff]
    %v387 = vld [vmem:[#allocation2 + $0x6d8] sm:$0xff]
    %v388 = vld [vmem:[#allocation2 + $0x6e0] sm:$0xff]
    %v389 = vld [vmem:[#allocation2 + $0x6e8] sm:$0xff]
    %v390 = vld [vmem:[#allocation2 + $0x6f0] sm:$0xff]
    %v391 = vld [vmem:[#allocation2 + $0x6f8] sm:$0xff]
    %v392 = vld [vmem:[#allocation2 + $0x700] sm:$0xff]
    %v393 = vld [vmem:[#allocation2 + $0x708] sm:$0xff]
    %v394 = vld [vmem:[#allocation2 + $0x710] sm:$0xff]
    %v395 = vld [vmem:[#allocation2 + $0x718] sm:$0xff]
    %v396 = vld [vmem:[#allocation2 + $0x720] sm:$0xff]
    %v397 = vld [vmem:[#allocation2 + $0x728] sm:$0xff]
    %v398 = vld [vmem:[#allocation2 + $0x730] sm:$0xff]
    %v399 = vld [vmem:[#allocation2 + $0x738] sm:$0xff]
    %v400 = vld [vmem:[#allocation2 + $0x740] sm:$0xff]
    %v401 = vld [vmem:[#allocation2 + $0x748] sm:$0xff]
    %v402 = vld [vmem:[#allocation2 + $0x750] sm:$0xff]
    %v403 = vld [vmem:[#allocation2 + $0x758] sm:$0xff]
    %v404 = vld [vmem:[#allocation2 + $0x760] sm:$0xff]
    %v405 = vld [vmem:[#allocation2 + $0x768] sm:$0xff]
    %v406 = vld [vmem:[#allocation2 + $0x770] sm:$0xff]
    %v407 = vld [vmem:[#allocation2 + $0x778] sm:$0xff]
    %v408 = vld [vmem:[#allocation2 + $0x780] sm:$0xff]
    %v409 = vld [vmem:[#allocation2 + $0x788] sm:$0xff]
    %v410 = vld [vmem:[#allocation2 + $0x790] sm:$0xff]
    %v411 = vld [vmem:[#allocation2 + $0x798] sm:$0xff]
    %v412 = vld [vmem:[#allocation2 + $0x7a0] sm:$0xff]
    %v413 = vld [vmem:[#allocation2 + $0x7a8] sm:$0xff]
    %v414 = vld [vmem:[#allocation2 + $0x7b0] sm:$0xff]
    %v415 = vld [vmem:[#allocation2 + $0x7b8] sm:$0xff]
    %v416 = vld [vmem:[#allocation2 + $0x7c0] sm:$0xff]
    %v417 = vld [vmem:[#allocation2 + $0x7c8] sm:$0xff]
    %v418 = vld [vmem:[#allocation2 + $0x7d0] sm:$0xff]
    %v419 = vld [vmem:[#allocation2 + $0x7d8] sm:$0xff]
    %v420 = vld [vmem:[#allocation2 + $0x7e0] sm:$0xff]
    %v421 = vld [vmem:[#allocation2 + $0x7e8] sm:$0xff]
    %v422 = vld [vmem:[#allocation2 + $0x7f0] sm:$0xff]
    %v423 = vld [vmem:[#allocation2 + $0x7f8] sm:$0xff]
    %v424 = vld [vmem:[#allocation2 + $0x800] sm:$0xff]
    %v425 = vld [vmem:[#allocation2 + $0x808] sm:$0xff]
    %v426 = vld [vmem:[#allocation2 + $0x810] sm:$0xff]
    %v427 = vld [vmem:[#allocation2 + $0x818] sm:$0xff]
    %v428 = vld [vmem:[#allocation2 + $0x820] sm:$0xff]
    %v429 = vld [vmem:[#allocation2 + $0x828] sm:$0xff]
    %v430 = vld [vmem:[#allocation2 + $0x830] sm:$0xff]
    %v431 = vld [vmem:[#allocation2 + $0x838] sm:$0xff]
    %v432 = vld [vmem:[#allocation2 + $0x840] sm:$0xff]
    %v433 = vld [vmem:[#allocation2 + $0x848] sm:$0xff]
    %v434 = vld [vmem:[#allocation2 + $0x850] sm:$0xff]
    %v435 = vld [vmem:[#allocation2 + $0x858] sm:$0xff]
    %v436 = vld [vmem:[#allocation2 + $0x860] sm:$0xff]
    %v437 = vld [vmem:[#allocation2 + $0x868] sm:$0xff]
    %v438 = vld [vmem:[#allocation2 + $0x870] sm:$0xff]
    %v439 = vld [vmem:[#allocation2 + $0x878] sm:$0xff]
    %v440 = vld [vmem:[#allocation2 + $0x880] sm:$0xff]
    %v441 = vld [vmem:[#allocation2 + $0x888] sm:$0xff]
    %v442 = vld [vmem:[#allocation2 + $0x890] sm:$0xff]
    %v443 = vld [vmem:[#allocation2 + $0x898] sm:$0xff]
    %v444 = vld [vmem:[#allocation2 + $0x8a0] sm:$0xff]
    %v445 = vld [vmem:[#allocation2 + $0x8a8] sm:$0xff]
    %v446 = vld [vmem:[#allocation2 + $0x8b0] sm:$0xff]
    %v447 = vld [vmem:[#allocation2 + $0x8b8] sm:$0xff]
    %v448 = vld [vmem:[#allocation2 + $0x8c0] sm:$0xff]
    %v449 = vld [vmem:[#allocation2 + $0x8c8] sm:$0xff]
    %v450 = vld [vmem:[#allocation2 + $0x8d0] sm:$0xff]
    %v451 = vld [vmem:[#allocation2 + $0x8d8] sm:$0xff]
    %v452 = vld [vmem:[#allocation2 + $0x8e0] sm:$0xff]
    %v453 = vld [vmem:[#allocation2 + $0x8e8] sm:$0xff]
    %v454 = vld [vmem:[#allocation2 + $0x8f0] sm:$0xff]
    %v455 = vld [vmem:[#allocation2 + $0x8f8] sm:$0xff]
    %v456 = vld [vmem:[#allocation2 + $0x900] sm:$0xff]
    %v457 = vld [vmem:[#allocation2 + $0x908] sm:$0xff]
    %v458 = vld [vmem:[#allocation2 + $0x910] sm:$0xff]
    %v459 = vld [vmem:[#allocation2 + $0x918] sm:$0xff]
    %v460 = vld [vmem:[#allocation2 + $0x920] sm:$0xff]
    %v461 = vld [vmem:[#allocation2 + $0x928] sm:$0xff]
    %v462 = vld [vmem:[#allocation2 + $0x930] sm:$0xff]
    %v463 = vld [vmem:[#allocation2 + $0x938] sm:$0xff]
    %v464 = vld [vmem:[#allocation2 + $0x940] sm:$0xff]
    %v465 = vld [vmem:[#allocation2 + $0x948] sm:$0xff]
    %v466 = vld [vmem:[#allocation2 + $0x950] sm:$0xff]
    %v467 = vld [vmem:[#allocation2 + $0x958] sm:$0xff]
    %v468 = vld [vmem:[#allocation2 + $0x960] sm:$0xff]
    %v469 = vld [vmem:[#allocation2 + $0x968] sm:$0xff]
    %v470 = vld [vmem:[#allocation2 + $0x970] sm:$0xff]
    %v471 = vld [vmem:[#allocation2 + $0x978] sm:$0xff]
    %v472 = vld [vmem:[#allocation2 + $0x980] sm:$0xff]
    %v473 = vld [vmem:[#allocation2 + $0x988] sm:$0xff]
    %v474 = vld [vmem:[#allocation2 + $0x990] sm:$0xff]
    %v475 = vld [vmem:[#allocation2 + $0x998] sm:$0xff]
    %v476 = vld [vmem:[#allocation2 + $0x9a0] sm:$0xff]
    %v477 = vld [vmem:[#allocation2 + $0x9a8] sm:$0xff]
    %v478 = vld [vmem:[#allocation2 + $0x9b0] sm:$0xff]
    %v479 = vld [vmem:[#allocation2 + $0x9b8] sm:$0xff]
    %v480 = vld [vmem:[#allocation2 + $0x9c0] sm:$0xff]
    %v481 = vld [vmem:[#allocation2 + $0x9c8] sm:$0xff]
    %v482 = vld [vmem:[#allocation2 + $0x9d0] sm:$0xff]
    %v483 = vld [vmem:[#allocation2 + $0x9d8] sm:$0xff]
    %v484 = vld [vmem:[#allocation2 + $0x9e0] sm:$0xff]
    %v485 = vld [vmem:[#allocation2 + $0x9e8] sm:$0xff]
    %v486 = vld [vmem:[#allocation2 + $0x9f0] sm:$0xff]
    %v487 = vld [vmem:[#allocation2 + $0x9f8] sm:$0xff]
    %v488 = vld [vmem:[#allocation2 + $0xa00] sm:$0xff]
    %v489 = vld [vmem:[#allocation2 + $0xa08] sm:$0xff]
    %v490 = vld [vmem:[#allocation2 + $0xa10] sm:$0xff]
    %v491 = vld [vmem:[#allocation2 + $0xa18] sm:$0xff]
    %v492 = vld [vmem:[#allocation2 + $0xa20] sm:$0xff]
    %v493 = vld [vmem:[#allocation2 + $0xa28] sm:$0xff]
    %v494 = vld [vmem:[#allocation2 + $0xa30] sm:$0xff]
    %v495 = vld [vmem:[#allocation2 + $0xa38] sm:$0xff]
    %v496 = vld [vmem:[#allocation2 + $0xa40] sm:$0xff]
    %v497 = vld [vmem:[#allocation2 + $0xa48] sm:$0xff]
    %v498 = vld [vmem:[#allocation2 + $0xa50] sm:$0xff]
    %v499 = vld [vmem:[#allocation2 + $0xa58] sm:$0xff]
    %v500 = vld [vmem:[#allocation2 + $0xa60] sm:$0xff]
    %v501 = vld [vmem:[#allocation2 + $0xa68] sm:$0xff]
    %v502 = vld [vmem:[#allocation2 + $0xa70] sm:$0xff]
    %v503 = vld [vmem:[#allocation2 + $0xa78] sm:$0xff]
    %v504 = vld [vmem:[#allocation2 + $0xa80] sm:$0xff]
    %v505 = vld [vmem:[#allocation2 + $0xa88] sm:$0xff]
    %v506 = vld [vmem:[#allocation2 + $0xa90] sm:$0xff]
    %v507 = vld [vmem:[#allocation2 + $0xa98] sm:$0xff]
    %v508 = vld [vmem:[#allocation2 + $0xaa0] sm:$0xff]
    %v509 = vld [vmem:[#allocation2 + $0xaa8] sm:$0xff]
    %v510 = vld [vmem:[#allocation2 + $0xab0] sm:$0xff]
    %v511 = vld [vmem:[#allocation2 + $0xab8] sm:$0xff]
    %v512 = vld [vmem:[#allocation2 + $0xac0] sm:$0xff]
    %v513 = vld [vmem:[#allocation2 + $0xac8] sm:$0xff]
    %v514 = vld [vmem:[#allocation2 + $0xad0] sm:$0xff]
    %v515 = vld [vmem:[#allocation2 + $0xad8] sm:$0xff]
    %v516 = vld [vmem:[#allocation2 + $0xae0] sm:$0xff]
    %v517 = vld [vmem:[#allocation2 + $0xae8] sm:$0xff]
    %v518 = vld [vmem:[#allocation2 + $0xaf0] sm:$0xff]
    %v519 = vld [vmem:[#allocation2 + $0xaf8] sm:$0xff]
    %v520 = vld [vmem:[#allocation2 + $0xb00] sm:$0xff]
    %v521 = vld [vmem:[#allocation2 + $0xb08] sm:$0xff]
    %v522 = vld [vmem:[#allocation2 + $0xb10] sm:$0xff]
    %v523 = vld [vmem:[#allocation2 + $0xb18] sm:$0xff]
    %v524 = vld [vmem:[#allocation2 + $0xb20] sm:$0xff]
    %v525 = vld [vmem:[#allocation2 + $0xb28] sm:$0xff]
    %v526 = vld [vmem:[#allocation2 + $0xb30] sm:$0xff]
    %v527 = vld [vmem:[#allocation2 + $0xb38] sm:$0xff]
    %v528 = vld [vmem:[#allocation2 + $0xb40] sm:$0xff]
    %v529 = vld [vmem:[#allocation2 + $0xb48] sm:$0xff]
    %v530 = vld [vmem:[#allocation2 + $0xb50] sm:$0xff]
    %v531 = vld [vmem:[#allocation2 + $0xb58] sm:$0xff]
    %v532 = vld [vmem:[#allocation2 + $0xb60] sm:$0xff]
    %v533 = vld [vmem:[#allocation2 + $0xb68] sm:$0xff]
    %v534 = vld [vmem:[#allocation2 + $0xb70] sm:$0xff]
    %v535 = vld [vmem:[#allocation2 + $0xb78] sm:$0xff]
    %v536 = vld [vmem:[#allocation2 + $0xb80] sm:$0xff]
    %v537 = vld [vmem:[#allocation2 + $0xb88] sm:$0xff]
    %v538 = vld [vmem:[#allocation2 + $0xb90] sm:$0xff]
    %v539 = vld [vmem:[#allocation2 + $0xb98] sm:$0xff]
    %v540 = vld [vmem:[#allocation2 + $0xba0] sm:$0xff]
    %v541 = vld [vmem:[#allocation2 + $0xba8] sm:$0xff]
    %v542 = vld [vmem:[#allocation2 + $0xbb0] sm:$0xff]
    %v543 = vld [vmem:[#allocation2 + $0xbb8] sm:$0xff]
    %v544 = vld [vmem:[#allocation2 + $0xbc0] sm:$0xff]
    %v545 = vld [vmem:[#allocation2 + $0xbc8] sm:$0xff]
    %v546 = vld [vmem:[#allocation2 + $0xbd0] sm:$0xff]
    %v547 = vld [vmem:[#allocation2 + $0xbd8] sm:$0xff]
    %v548 = vld [vmem:[#allocation2 + $0xbe0] sm:$0xff]
    %v549 = vld [vmem:[#allocation2 + $0xbe8] sm:$0xff]
    %v550 = vld [vmem:[#allocation2 + $0xbf0] sm:$0xff]
    %v551 = vld [vmem:[#allocation2 + $0xbf8] sm:$0xff]
    %v552 = vld [vmem:[#allocation2 + $0xc00] sm:$0xff]
    %v553 = vld [vmem:[#allocation2 + $0xc08] sm:$0xff]
    %v554 = vld [vmem:[#allocation2 + $0xc10] sm:$0xff]
    %v555 = vld [vmem:[#allocation2 + $0xc18] sm:$0xff]
    %v556 = vld [vmem:[#allocation2 + $0xc20] sm:$0xff]
    %v557 = vld [vmem:[#allocation2 + $0xc28] sm:$0xff]
    %v558 = vld [vmem:[#allocation2 + $0xc30] sm:$0xff]
    %v559 = vld [vmem:[#allocation2 + $0xc38] sm:$0xff]
    %v560 = vld [vmem:[#allocation5] sm:$0xff]
    %v562 = vlaneseq
    %v563 = vshrl.u32 %v562, 7
    %v564 = vsub.s32 0, %v563
    %v565 = vrot.slane %v560, %v564
    %v566 = vlaneseq
    %v567 = vshrl.u32 %v566, 7
    %v568 = vsub.s32 1, %v567
    %v569 = vrot.slane %v560, %v568
    %v570 = vlaneseq
    %v571 = vshrl.u32 %v570, 7
    %v572 = vsub.s32 2, %v571
    %v573 = vrot.slane %v560, %v572
    %v574 = vlaneseq
    %v575 = vshrl.u32 %v574, 7
    %v576 = vsub.s32 3, %v575
    %v577 = vrot.slane %v560, %v576
    %v578 = vlaneseq
    %v579 = vshrl.u32 %v578, 7
    %v580 = vsub.s32 4, %v579
    %v581 = vrot.slane %v560, %v580
    %v582 = vlaneseq
    %v583 = vshrl.u32 %v582, 7
    %v584 = vsub.s32 5, %v583
    %v585 = vrot.slane %v560, %v584
    %v586 = vlaneseq
    %v587 = vshrl.u32 %v586, 7
    %v588 = vsub.s32 6, %v587
    %v589 = vrot.slane %v560, %v588
    %v590 = vlaneseq
    %v591 = vshrl.u32 %v590, 7
    %v592 = vsub.s32 7, %v591
    %v593 = vrot.slane %v560, %v592
    %v666 = vunpack.c.l.b16 %v104
    %v667 = vunpack.c.h.b16 %v104
    %v668 = vunpack.c.l.b16 %v105
    %v669 = vunpack.c.h.b16 %v105
    %v670 = vunpack.c.l.b16 %v106
    %v671 = vunpack.c.h.b16 %v106
    %v672 = vunpack.c.l.b16 %v107
    %v673 = vunpack.c.l.b16 %v108
    %v674 = vunpack.c.h.b16 %v108
    %v675 = vunpack.c.l.b16 %v109
    %v676 = vunpack.c.h.b16 %v109
    %v677 = vunpack.c.l.b16 %v110
    %v678 = vunpack.c.h.b16 %v110
    %v679 = vunpack.c.l.b16 %v111
    %v680 = vunpack.c.l.b16 %v112
    %v681 = vunpack.c.h.b16 %v112
    %v682 = vunpack.c.l.b16 %v113
    %v683 = vunpack.c.h.b16 %v113
    %v684 = vunpack.c.l.b16 %v114
    %v685 = vunpack.c.h.b16 %v114
    %v686 = vunpack.c.l.b16 %v115
    %v687 = vunpack.c.l.b16 %v116
    %v688 = vunpack.c.h.b16 %v116
    %v689 = vunpack.c.l.b16 %v117
    %v690 = vunpack.c.h.b16 %v117
    %v691 = vunpack.c.l.b16 %v118
    %v692 = vunpack.c.h.b16 %v118
    %v693 = vunpack.c.l.b16 %v119
    %v694 = vunpack.c.l.b16 %v120
    %v695 = vunpack.c.h.b16 %v120
    %v696 = vunpack.c.l.b16 %v121
    %v697 = vunpack.c.h.b16 %v121
    %v698 = vunpack.c.l.b16 %v122
    %v699 = vunpack.c.h.b16 %v122
    %v700 = vunpack.c.l.b16 %v123
    %v701 = vunpack.c.l.b16 %v124
    %v702 = vunpack.c.h.b16 %v124
    %v703 = vunpack.c.l.b16 %v125
    %v704 = vunpack.c.h.b16 %v125
    %v705 = vunpack.c.l.b16 %v126
    %v706 = vunpack.c.h.b16 %v126
    %v707 = vunpack.c.l.b16 %v127
    %v708 = vunpack.c.l.b16 %v128
    %v709 = vunpack.c.h.b16 %v128
    %v710 = vunpack.c.l.b16 %v129
    %v711 = vunpack.c.h.b16 %v129
    %v712 = vunpack.c.l.b16 %v130
    %v713 = vunpack.c.h.b16 %v130
    %v714 = vunpack.c.l.b16 %v131
    %v715 = vunpack.c.l.b16 %v132
    %v716 = vunpack.c.h.b16 %v132
    %v717 = vunpack.c.l.b16 %v133
    %v718 = vunpack.c.h.b16 %v133
    %v719 = vunpack.c.l.b16 %v134
    %v720 = vunpack.c.h.b16 %v134
    %v721 = vunpack.c.l.b16 %v135
    %v722 = vunpack.c.l.b16 %v136
    %v723 = vunpack.c.h.b16 %v136
    %v724 = vunpack.c.l.b16 %v137
    %v725 = vunpack.c.h.b16 %v137
    %v726 = vunpack.c.l.b16 %v138
    %v727 = vunpack.c.h.b16 %v138
    %v728 = vunpack.c.l.b16 %v139
    %v729 = vunpack.c.l.b16 %v140
    %v730 = vunpack.c.h.b16 %v140
    %v731 = vunpack.c.l.b16 %v141
    %v732 = vunpack.c.h.b16 %v141
    %v733 = vunpack.c.l.b16 %v142
    %v734 = vunpack.c.h.b16 %v142
    %v735 = vunpack.c.l.b16 %v143
    %v736 = vunpack.c.l.b16 %v144
    %v737 = vunpack.c.h.b16 %v144
    %v738 = vunpack.c.l.b16 %v145
    %v739 = vunpack.c.h.b16 %v145
    %v740 = vunpack.c.l.b16 %v146
    %v741 = vunpack.c.h.b16 %v146
    %v742 = vunpack.c.l.b16 %v147
    %v743 = vunpack.c.l.b16 %v148
    %v744 = vunpack.c.h.b16 %v148
    %v745 = vunpack.c.l.b16 %v149
    %v746 = vunpack.c.h.b16 %v149
    %v747 = vunpack.c.l.b16 %v150
    %v748 = vunpack.c.h.b16 %v150
    %v749 = vunpack.c.l.b16 %v151
    %v750 = vunpack.c.l.b16 %v152
    %v751 = vunpack.c.h.b16 %v152
    %v752 = vunpack.c.l.b16 %v153
    %v753 = vunpack.c.h.b16 %v153
    %v754 = vunpack.c.l.b16 %v154
    %v755 = vunpack.c.h.b16 %v154
    %v756 = vunpack.c.l.b16 %v155
    %v757 = vunpack.c.l.b16 %v156
    %v758 = vunpack.c.h.b16 %v156
    %v759 = vunpack.c.l.b16 %v157
    %v760 = vunpack.c.h.b16 %v157
    %v761 = vunpack.c.l.b16 %v158
    %v762 = vunpack.c.h.b16 %v158
    %v763 = vunpack.c.l.b16 %v159
    %v764 = vunpack.c.l.b16 %v160
    %v765 = vunpack.c.h.b16 %v160
    %v766 = vunpack.c.l.b16 %v161
    %v767 = vunpack.c.h.b16 %v161
    %v768 = vunpack.c.l.b16 %v162
    %v769 = vunpack.c.h.b16 %v162
    %v770 = vunpack.c.l.b16 %v163
    %v771 = vunpack.c.l.b16 %v164
    %v772 = vunpack.c.h.b16 %v164
    %v773 = vunpack.c.l.b16 %v165
    %v774 = vunpack.c.h.b16 %v165
    %v775 = vunpack.c.l.b16 %v166
    %v776 = vunpack.c.h.b16 %v166
    %v777 = vunpack.c.l.b16 %v167
    %v778 = vpack.c.b16 %v673, %v666
    %v779 = vpack.c.b16 %v674, %v667
    %v780 = vpack.c.b16 %v675, %v668
    %v781 = vpack.c.b16 %v676, %v669
    %v782 = vpack.c.b16 %v677, %v670
    %v783 = vpack.c.b16 %v678, %v671
    %v784 = vpack.c.b16 %v679, %v672
    %v785 = vpack.c.b16 %v687, %v680
    %v786 = vpack.c.b16 %v688, %v681
    %v787 = vpack.c.b16 %v689, %v682
    %v788 = vpack.c.b16 %v690, %v683
    %v789 = vpack.c.b16 %v691, %v684
    %v790 = vpack.c.b16 %v692, %v685
    %v791 = vpack.c.b16 %v693, %v686
    %v792 = vpack.c.b16 %v701, %v694
    %v793 = vpack.c.b16 %v702, %v695
    %v794 = vpack.c.b16 %v703, %v696
    %v795 = vpack.c.b16 %v704, %v697
    %v796 = vpack.c.b16 %v705, %v698
    %v797 = vpack.c.b16 %v706, %v699
    %v798 = vpack.c.b16 %v707, %v700
    %v799 = vpack.c.b16 %v715, %v708
    %v800 = vpack.c.b16 %v716, %v709
    %v801 = vpack.c.b16 %v717, %v710
    %v802 = vpack.c.b16 %v718, %v711
    %v803 = vpack.c.b16 %v719, %v712
    %v804 = vpack.c.b16 %v720, %v713
    %v805 = vpack.c.b16 %v721, %v714
    %v806 = vpack.c.b16 %v729, %v722
    %v807 = vpack.c.b16 %v730, %v723
    %v808 = vpack.c.b16 %v731, %v724
    %v809 = vpack.c.b16 %v732, %v725
    %v810 = vpack.c.b16 %v733, %v726
    %v811 = vpack.c.b16 %v734, %v727
    %v812 = vpack.c.b16 %v735, %v728
    %v813 = vpack.c.b16 %v743, %v736
    %v814 = vpack.c.b16 %v744, %v737
    %v815 = vpack.c.b16 %v745, %v738
    %v816 = vpack.c.b16 %v746, %v739
    %v817 = vpack.c.b16 %v747, %v740
    %v818 = vpack.c.b16 %v748, %v741
    %v819 = vpack.c.b16 %v749, %v742
    %v820 = vpack.c.b16 %v757, %v750
    %v821 = vpack.c.b16 %v758, %v751
    %v822 = vpack.c.b16 %v759, %v752
    %v823 = vpack.c.b16 %v760, %v753
    %v824 = vpack.c.b16 %v761, %v754
    %v825 = vpack.c.b16 %v762, %v755
    %v826 = vpack.c.b16 %v763, %v756
    %v827 = vpack.c.b16 %v771, %v764
    %v828 = vpack.c.b16 %v772, %v765
    %v829 = vpack.c.b16 %v773, %v766
    %v830 = vpack.c.b16 %v774, %v767
    %v831 = vpack.c.b16 %v775, %v768
    %v832 = vpack.c.b16 %v776, %v769
    %v833 = vpack.c.b16 %v777, %v770
    %v1274 = vunpack.c.l.b16 %v168
    %v1275 = vunpack.c.h.b16 %v168
    %v1276 = vunpack.c.l.b16 %v169
    %v1277 = vunpack.c.h.b16 %v169
    %v1278 = vunpack.c.l.b16 %v170
    %v1279 = vunpack.c.h.b16 %v170
    %v1280 = vunpack.c.l.b16 %v171
    %v1281 = vunpack.c.h.b16 %v171
    %v1282 = vunpack.c.l.b16 %v172
    %v1283 = vunpack.c.h.b16 %v172
    %v1284 = vunpack.c.l.b16 %v173
    %v1285 = vunpack.c.h.b16 %v173
    %v1286 = vunpack.c.l.b16 %v174
    %v1287 = vunpack.c.h.b16 %v174
    %v1288 = vunpack.c.l.b16 %v175
    %v1289 = vunpack.c.h.b16 %v175
    %v1290 = vunpack.c.l.b16 %v176
    %v1291 = vunpack.c.h.b16 %v176
    %v1292 = vunpack.c.l.b16 %v177
    %v1293 = vunpack.c.h.b16 %v177
    %v1294 = vunpack.c.l.b16 %v178
    %v1295 = vunpack.c.h.b16 %v178
    %v1296 = vunpack.c.l.b16 %v179
    %v1297 = vunpack.c.h.b16 %v179
    %v1298 = vunpack.c.l.b16 %v180
    %v1299 = vunpack.c.h.b16 %v180
    %v1300 = vunpack.c.l.b16 %v181
    %v1301 = vunpack.c.h.b16 %v181
    %v1302 = vunpack.c.l.b16 %v182
    %v1303 = vunpack.c.h.b16 %v182
    %v1304 = vunpack.c.l.b16 %v183
    %v1305 = vunpack.c.h.b16 %v183
    %v1306 = vunpack.c.l.b16 %v184
    %v1307 = vunpack.c.h.b16 %v184
    %v1308 = vunpack.c.l.b16 %v185
    %v1309 = vunpack.c.h.b16 %v185
    %v1310 = vunpack.c.l.b16 %v186
    %v1311 = vunpack.c.h.b16 %v186
    %v1312 = vunpack.c.l.b16 %v187
    %v1313 = vunpack.c.h.b16 %v187
    %v1314 = vunpack.c.l.b16 %v188
    %v1315 = vunpack.c.h.b16 %v188
    %v1316 = vunpack.c.l.b16 %v189
    %v1317 = vunpack.c.h.b16 %v189
    %v1318 = vunpack.c.l.b16 %v190
    %v1319 = vunpack.c.h.b16 %v190
    %v1320 = vunpack.c.l.b16 %v191
    %v1321 = vunpack.c.h.b16 %v191
    %v1322 = vunpack.c.l.b16 %v192
    %v1323 = vunpack.c.h.b16 %v192
    %v1324 = vunpack.c.l.b16 %v193
    %v1325 = vunpack.c.h.b16 %v193
    %v1326 = vunpack.c.l.b16 %v194
    %v1327 = vunpack.c.h.b16 %v194
    %v1328 = vunpack.c.l.b16 %v195
    %v1329 = vunpack.c.h.b16 %v195
    %v1330 = vunpack.c.l.b16 %v196
    %v1331 = vunpack.c.h.b16 %v196
    %v1332 = vunpack.c.l.b16 %v197
    %v1333 = vunpack.c.h.b16 %v197
    %v1334 = vunpack.c.l.b16 %v198
    %v1335 = vunpack.c.h.b16 %v198
    %v1336 = vunpack.c.l.b16 %v199
    %v1337 = vunpack.c.h.b16 %v199
    %v1338 = vunpack.c.l.b16 %v200
    %v1339 = vunpack.c.h.b16 %v200
    %v1340 = vunpack.c.l.b16 %v201
    %v1341 = vunpack.c.h.b16 %v201
    %v1342 = vunpack.c.l.b16 %v202
    %v1343 = vunpack.c.h.b16 %v202
    %v1344 = vunpack.c.l.b16 %v203
    %v1345 = vunpack.c.h.b16 %v203
    %v1346 = vunpack.c.l.b16 %v204
    %v1347 = vunpack.c.h.b16 %v204
    %v1348 = vunpack.c.l.b16 %v205
    %v1349 = vunpack.c.h.b16 %v205
    %v1350 = vunpack.c.l.b16 %v206
    %v1351 = vunpack.c.h.b16 %v206
    %v1352 = vunpack.c.l.b16 %v207
    %v1353 = vunpack.c.h.b16 %v207
    %v1354 = vunpack.c.l.b16 %v208
    %v1355 = vunpack.c.h.b16 %v208
    %v1356 = vunpack.c.l.b16 %v209
    %v1357 = vunpack.c.h.b16 %v209
    %v1358 = vunpack.c.l.b16 %v210
    %v1359 = vunpack.c.h.b16 %v210
    %v1360 = vunpack.c.l.b16 %v211
    %v1361 = vunpack.c.h.b16 %v211
    %v1362 = vunpack.c.l.b16 %v212
    %v1363 = vunpack.c.h.b16 %v212
    %v1364 = vunpack.c.l.b16 %v213
    %v1365 = vunpack.c.h.b16 %v213
    %v1366 = vunpack.c.l.b16 %v214
    %v1367 = vunpack.c.h.b16 %v214
    %v1368 = vunpack.c.l.b16 %v215
    %v1369 = vunpack.c.h.b16 %v215
    %v1370 = vunpack.c.l.b16 %v216
    %v1371 = vunpack.c.h.b16 %v216
    %v1372 = vunpack.c.l.b16 %v217
    %v1373 = vunpack.c.h.b16 %v217
    %v1374 = vunpack.c.l.b16 %v218
    %v1375 = vunpack.c.h.b16 %v218
    %v1376 = vunpack.c.l.b16 %v219
    %v1377 = vunpack.c.h.b16 %v219
    %v1378 = vunpack.c.l.b16 %v220
    %v1379 = vunpack.c.h.b16 %v220
    %v1380 = vunpack.c.l.b16 %v221
    %v1381 = vunpack.c.h.b16 %v221
    %v1382 = vunpack.c.l.b16 %v222
    %v1383 = vunpack.c.h.b16 %v222
    %v1384 = vunpack.c.l.b16 %v223
    %v1385 = vunpack.c.h.b16 %v223
    %v1386 = vunpack.c.l.b16 %v224
    %v1387 = vunpack.c.h.b16 %v224
    %v1388 = vunpack.c.l.b16 %v225
    %v1389 = vunpack.c.h.b16 %v225
    %v1390 = vunpack.c.l.b16 %v226
    %v1391 = vunpack.c.h.b16 %v226
    %v1392 = vunpack.c.l.b16 %v227
    %v1393 = vunpack.c.h.b16 %v227
    %v1394 = vunpack.c.l.b16 %v228
    %v1395 = vunpack.c.h.b16 %v228
    %v1396 = vunpack.c.l.b16 %v229
    %v1397 = vunpack.c.h.b16 %v229
    %v1398 = vunpack.c.l.b16 %v230
    %v1399 = vunpack.c.h.b16 %v230
    %v1400 = vunpack.c.l.b16 %v231
    %v1401 = vunpack.c.h.b16 %v231
    %v1402 = vunpack.c.l.b16 %v232
    %v1403 = vunpack.c.h.b16 %v232
    %v1404 = vunpack.c.l.b16 %v233
    %v1405 = vunpack.c.h.b16 %v233
    %v1406 = vunpack.c.l.b16 %v234
    %v1407 = vunpack.c.h.b16 %v234
    %v1408 = vunpack.c.l.b16 %v235
    %v1409 = vunpack.c.h.b16 %v235
    %v1410 = vunpack.c.l.b16 %v236
    %v1411 = vunpack.c.h.b16 %v236
    %v1412 = vunpack.c.l.b16 %v237
    %v1413 = vunpack.c.h.b16 %v237
    %v1414 = vunpack.c.l.b16 %v238
    %v1415 = vunpack.c.h.b16 %v238
    %v1416 = vunpack.c.l.b16 %v239
    %v1417 = vunpack.c.h.b16 %v239
    %v1418 = vunpack.c.l.b16 %v240
    %v1419 = vunpack.c.h.b16 %v240
    %v1420 = vunpack.c.l.b16 %v241
    %v1421 = vunpack.c.h.b16 %v241
    %v1422 = vunpack.c.l.b16 %v242
    %v1423 = vunpack.c.h.b16 %v242
    %v1424 = vunpack.c.l.b16 %v243
    %v1425 = vunpack.c.h.b16 %v243
    %v1426 = vunpack.c.l.b16 %v244
    %v1427 = vunpack.c.h.b16 %v244
    %v1428 = vunpack.c.l.b16 %v245
    %v1429 = vunpack.c.h.b16 %v245
    %v1430 = vunpack.c.l.b16 %v246
    %v1431 = vunpack.c.h.b16 %v246
    %v1432 = vunpack.c.l.b16 %v247
    %v1433 = vunpack.c.h.b16 %v247
    %v1434 = vunpack.c.l.b16 %v248
    %v1435 = vunpack.c.h.b16 %v248
    %v1436 = vunpack.c.l.b16 %v249
    %v1437 = vunpack.c.h.b16 %v249
    %v1438 = vunpack.c.l.b16 %v250
    %v1439 = vunpack.c.h.b16 %v250
    %v1440 = vunpack.c.l.b16 %v251
    %v1441 = vunpack.c.h.b16 %v251
    %v1442 = vunpack.c.l.b16 %v252
    %v1443 = vunpack.c.h.b16 %v252
    %v1444 = vunpack.c.l.b16 %v253
    %v1445 = vunpack.c.h.b16 %v253
    %v1446 = vunpack.c.l.b16 %v254
    %v1447 = vunpack.c.h.b16 %v254
    %v1448 = vunpack.c.l.b16 %v255
    %v1449 = vunpack.c.h.b16 %v255
    %v1450 = vunpack.c.l.b16 %v256
    %v1451 = vunpack.c.h.b16 %v256
    %v1452 = vunpack.c.l.b16 %v257
    %v1453 = vunpack.c.h.b16 %v257
    %v1454 = vunpack.c.l.b16 %v258
    %v1455 = vunpack.c.h.b16 %v258
    %v1456 = vunpack.c.l.b16 %v259
    %v1457 = vunpack.c.h.b16 %v259
    %v1458 = vunpack.c.l.b16 %v260
    %v1459 = vunpack.c.h.b16 %v260
    %v1460 = vunpack.c.l.b16 %v261
    %v1461 = vunpack.c.h.b16 %v261
    %v1462 = vunpack.c.l.b16 %v262
    %v1463 = vunpack.c.h.b16 %v262
    %v1464 = vunpack.c.l.b16 %v263
    %v1465 = vunpack.c.h.b16 %v263
    %v1466 = vunpack.c.l.b16 %v264
    %v1467 = vunpack.c.h.b16 %v264
    %v1468 = vunpack.c.l.b16 %v265
    %v1469 = vunpack.c.h.b16 %v265
    %v1470 = vunpack.c.l.b16 %v266
    %v1471 = vunpack.c.h.b16 %v266
    %v1472 = vunpack.c.l.b16 %v267
    %v1473 = vunpack.c.h.b16 %v267
    %v1474 = vunpack.c.l.b16 %v268
    %v1475 = vunpack.c.h.b16 %v268
    %v1476 = vunpack.c.l.b16 %v269
    %v1477 = vunpack.c.h.b16 %v269
    %v1478 = vunpack.c.l.b16 %v270
    %v1479 = vunpack.c.h.b16 %v270
    %v1480 = vunpack.c.l.b16 %v271
    %v1481 = vunpack.c.h.b16 %v271
    %v1482 = vunpack.c.l.b16 %v272
    %v1483 = vunpack.c.h.b16 %v272
    %v1484 = vunpack.c.l.b16 %v273
    %v1485 = vunpack.c.h.b16 %v273
    %v1486 = vunpack.c.l.b16 %v274
    %v1487 = vunpack.c.h.b16 %v274
    %v1488 = vunpack.c.l.b16 %v275
    %v1489 = vunpack.c.h.b16 %v275
    %v1490 = vunpack.c.l.b16 %v276
    %v1491 = vunpack.c.h.b16 %v276
    %v1492 = vunpack.c.l.b16 %v277
    %v1493 = vunpack.c.h.b16 %v277
    %v1494 = vunpack.c.l.b16 %v278
    %v1495 = vunpack.c.h.b16 %v278
    %v1496 = vunpack.c.l.b16 %v279
    %v1497 = vunpack.c.h.b16 %v279
    %v1498 = vunpack.c.l.b16 %v280
    %v1499 = vunpack.c.h.b16 %v280
    %v1500 = vunpack.c.l.b16 %v281
    %v1501 = vunpack.c.h.b16 %v281
    %v1502 = vunpack.c.l.b16 %v282
    %v1503 = vunpack.c.h.b16 %v282
    %v1504 = vunpack.c.l.b16 %v283
    %v1505 = vunpack.c.h.b16 %v283
    %v1506 = vunpack.c.l.b16 %v284
    %v1507 = vunpack.c.h.b16 %v284
    %v1508 = vunpack.c.l.b16 %v285
    %v1509 = vunpack.c.h.b16 %v285
    %v1510 = vunpack.c.l.b16 %v286
    %v1511 = vunpack.c.h.b16 %v286
    %v1512 = vunpack.c.l.b16 %v287
    %v1513 = vunpack.c.h.b16 %v287
    %v1514 = vunpack.c.l.b16 %v288
    %v1515 = vunpack.c.h.b16 %v288
    %v1516 = vunpack.c.l.b16 %v289
    %v1517 = vunpack.c.h.b16 %v289
    %v1518 = vunpack.c.l.b16 %v290
    %v1519 = vunpack.c.h.b16 %v290
    %v1520 = vunpack.c.l.b16 %v291
    %v1521 = vunpack.c.h.b16 %v291
    %v1522 = vunpack.c.l.b16 %v292
    %v1523 = vunpack.c.h.b16 %v292
    %v1524 = vunpack.c.l.b16 %v293
    %v1525 = vunpack.c.h.b16 %v293
    %v1526 = vunpack.c.l.b16 %v294
    %v1527 = vunpack.c.h.b16 %v294
    %v1528 = vunpack.c.l.b16 %v295
    %v1529 = vunpack.c.h.b16 %v295
    %v1530 = vunpack.c.l.b16 %v296
    %v1531 = vunpack.c.h.b16 %v296
    %v1532 = vunpack.c.l.b16 %v297
    %v1533 = vunpack.c.h.b16 %v297
    %v1534 = vunpack.c.l.b16 %v298
    %v1535 = vunpack.c.h.b16 %v298
    %v1536 = vunpack.c.l.b16 %v299
    %v1537 = vunpack.c.h.b16 %v299
    %v1538 = vunpack.c.l.b16 %v300
    %v1539 = vunpack.c.h.b16 %v300
    %v1540 = vunpack.c.l.b16 %v301
    %v1541 = vunpack.c.h.b16 %v301
    %v1542 = vunpack.c.l.b16 %v302
    %v1543 = vunpack.c.h.b16 %v302
    %v1544 = vunpack.c.l.b16 %v303
    %v1545 = vunpack.c.h.b16 %v303
    %v1546 = vunpack.c.l.b16 %v304
    %v1547 = vunpack.c.h.b16 %v304
    %v1548 = vunpack.c.l.b16 %v305
    %v1549 = vunpack.c.h.b16 %v305
    %v1550 = vunpack.c.l.b16 %v306
    %v1551 = vunpack.c.h.b16 %v306
    %v1552 = vunpack.c.l.b16 %v307
    %v1553 = vunpack.c.h.b16 %v307
    %v1554 = vunpack.c.l.b16 %v308
    %v1555 = vunpack.c.h.b16 %v308
    %v1556 = vunpack.c.l.b16 %v309
    %v1557 = vunpack.c.h.b16 %v309
    %v1558 = vunpack.c.l.b16 %v310
    %v1559 = vunpack.c.h.b16 %v310
    %v1560 = vunpack.c.l.b16 %v311
    %v1561 = vunpack.c.h.b16 %v311
    %v1562 = vunpack.c.l.b16 %v312
    %v1563 = vunpack.c.h.b16 %v312
    %v1564 = vunpack.c.l.b16 %v313
    %v1565 = vunpack.c.h.b16 %v313
    %v1566 = vunpack.c.l.b16 %v314
    %v1567 = vunpack.c.h.b16 %v314
    %v1568 = vunpack.c.l.b16 %v315
    %v1569 = vunpack.c.h.b16 %v315
    %v1570 = vunpack.c.l.b16 %v316
    %v1571 = vunpack.c.h.b16 %v316
    %v1572 = vunpack.c.l.b16 %v317
    %v1573 = vunpack.c.h.b16 %v317
    %v1574 = vunpack.c.l.b16 %v318
    %v1575 = vunpack.c.h.b16 %v318
    %v1576 = vunpack.c.l.b16 %v319
    %v1577 = vunpack.c.h.b16 %v319
    %v1578 = vunpack.c.l.b16 %v320
    %v1579 = vunpack.c.h.b16 %v320
    %v1580 = vunpack.c.l.b16 %v321
    %v1581 = vunpack.c.h.b16 %v321
    %v1582 = vunpack.c.l.b16 %v322
    %v1583 = vunpack.c.h.b16 %v322
    %v1584 = vunpack.c.l.b16 %v323
    %v1585 = vunpack.c.h.b16 %v323
    %v1586 = vunpack.c.l.b16 %v324
    %v1587 = vunpack.c.h.b16 %v324
    %v1588 = vunpack.c.l.b16 %v325
    %v1589 = vunpack.c.h.b16 %v325
    %v1590 = vunpack.c.l.b16 %v326
    %v1591 = vunpack.c.h.b16 %v326
    %v1592 = vunpack.c.l.b16 %v327
    %v1593 = vunpack.c.h.b16 %v327
    %v1594 = vunpack.c.l.b16 %v328
    %v1595 = vunpack.c.h.b16 %v328
    %v1596 = vunpack.c.l.b16 %v329
    %v1597 = vunpack.c.h.b16 %v329
    %v1598 = vunpack.c.l.b16 %v330
    %v1599 = vunpack.c.h.b16 %v330
    %v1600 = vunpack.c.l.b16 %v331
    %v1601 = vunpack.c.h.b16 %v331
    %v1602 = vunpack.c.l.b16 %v332
    %v1603 = vunpack.c.h.b16 %v332
    %v1604 = vunpack.c.l.b16 %v333
    %v1605 = vunpack.c.h.b16 %v333
    %v1606 = vunpack.c.l.b16 %v334
    %v1607 = vunpack.c.h.b16 %v334
    %v1608 = vunpack.c.l.b16 %v335
    %v1609 = vunpack.c.h.b16 %v335
    %v1610 = vunpack.c.l.b16 %v336
    %v1611 = vunpack.c.h.b16 %v336
    %v1612 = vunpack.c.l.b16 %v337
    %v1613 = vunpack.c.h.b16 %v337
    %v1614 = vunpack.c.l.b16 %v338
    %v1615 = vunpack.c.h.b16 %v338
    %v1616 = vunpack.c.l.b16 %v339
    %v1617 = vunpack.c.h.b16 %v339
    %v1618 = vunpack.c.l.b16 %v340
    %v1619 = vunpack.c.h.b16 %v340
    %v1620 = vunpack.c.l.b16 %v341
    %v1621 = vunpack.c.h.b16 %v341
    %v1622 = vunpack.c.l.b16 %v342
    %v1623 = vunpack.c.h.b16 %v342
    %v1624 = vunpack.c.l.b16 %v343
    %v1625 = vunpack.c.h.b16 %v343
    %v1626 = vunpack.c.l.b16 %v344
    %v1627 = vunpack.c.h.b16 %v344
    %v1628 = vunpack.c.l.b16 %v345
    %v1629 = vunpack.c.h.b16 %v345
    %v1630 = vunpack.c.l.b16 %v346
    %v1631 = vunpack.c.h.b16 %v346
    %v1632 = vunpack.c.l.b16 %v347
    %v1633 = vunpack.c.h.b16 %v347
    %v1634 = vunpack.c.l.b16 %v348
    %v1635 = vunpack.c.h.b16 %v348
    %v1636 = vunpack.c.l.b16 %v349
    %v1637 = vunpack.c.h.b16 %v349
    %v1638 = vunpack.c.l.b16 %v350
    %v1639 = vunpack.c.h.b16 %v350
    %v1640 = vunpack.c.l.b16 %v351
    %v1641 = vunpack.c.h.b16 %v351
    %v1642 = vunpack.c.l.b16 %v352
    %v1643 = vunpack.c.h.b16 %v352
    %v1644 = vunpack.c.l.b16 %v353
    %v1645 = vunpack.c.h.b16 %v353
    %v1646 = vunpack.c.l.b16 %v354
    %v1647 = vunpack.c.h.b16 %v354
    %v1648 = vunpack.c.l.b16 %v355
    %v1649 = vunpack.c.h.b16 %v355
    %v1650 = vunpack.c.l.b16 %v356
    %v1651 = vunpack.c.h.b16 %v356
    %v1652 = vunpack.c.l.b16 %v357
    %v1653 = vunpack.c.h.b16 %v357
    %v1654 = vunpack.c.l.b16 %v358
    %v1655 = vunpack.c.h.b16 %v358
    %v1656 = vunpack.c.l.b16 %v359
    %v1657 = vunpack.c.h.b16 %v359
    %v1658 = vunpack.c.l.b16 %v360
    %v1659 = vunpack.c.h.b16 %v360
    %v1660 = vunpack.c.l.b16 %v361
    %v1661 = vunpack.c.h.b16 %v361
    %v1662 = vunpack.c.l.b16 %v362
    %v1663 = vunpack.c.h.b16 %v362
    %v1664 = vunpack.c.l.b16 %v363
    %v1665 = vunpack.c.h.b16 %v363
    %v1666 = vunpack.c.l.b16 %v364
    %v1667 = vunpack.c.h.b16 %v364
    %v1668 = vunpack.c.l.b16 %v365
    %v1669 = vunpack.c.h.b16 %v365
    %v1670 = vunpack.c.l.b16 %v366
    %v1671 = vunpack.c.h.b16 %v366
    %v1672 = vunpack.c.l.b16 %v367
    %v1673 = vunpack.c.h.b16 %v367
    %v1674 = vunpack.c.l.b16 %v368
    %v1675 = vunpack.c.h.b16 %v368
    %v1676 = vunpack.c.l.b16 %v369
    %v1677 = vunpack.c.h.b16 %v369
    %v1678 = vunpack.c.l.b16 %v370
    %v1679 = vunpack.c.h.b16 %v370
    %v1680 = vunpack.c.l.b16 %v371
    %v1681 = vunpack.c.h.b16 %v371
    %v1682 = vunpack.c.l.b16 %v372
    %v1683 = vunpack.c.h.b16 %v372
    %v1684 = vunpack.c.l.b16 %v373
    %v1685 = vunpack.c.h.b16 %v373
    %v1686 = vunpack.c.l.b16 %v374
    %v1687 = vunpack.c.h.b16 %v374
    %v1688 = vunpack.c.l.b16 %v375
    %v1689 = vunpack.c.h.b16 %v375
    %v1690 = vunpack.c.l.b16 %v376
    %v1691 = vunpack.c.h.b16 %v376
    %v1692 = vunpack.c.l.b16 %v377
    %v1693 = vunpack.c.h.b16 %v377
    %v1694 = vunpack.c.l.b16 %v378
    %v1695 = vunpack.c.h.b16 %v378
    %v1696 = vunpack.c.l.b16 %v379
    %v1697 = vunpack.c.h.b16 %v379
    %v1698 = vunpack.c.l.b16 %v380
    %v1699 = vunpack.c.h.b16 %v380
    %v1700 = vunpack.c.l.b16 %v381
    %v1701 = vunpack.c.h.b16 %v381
    %v1702 = vunpack.c.l.b16 %v382
    %v1703 = vunpack.c.h.b16 %v382
    %v1704 = vunpack.c.l.b16 %v383
    %v1705 = vunpack.c.h.b16 %v383
    %v1706 = vunpack.c.l.b16 %v384
    %v1707 = vunpack.c.h.b16 %v384
    %v1708 = vunpack.c.l.b16 %v385
    %v1709 = vunpack.c.h.b16 %v385
    %v1710 = vunpack.c.l.b16 %v386
    %v1711 = vunpack.c.h.b16 %v386
    %v1712 = vunpack.c.l.b16 %v387
    %v1713 = vunpack.c.h.b16 %v387
    %v1714 = vunpack.c.l.b16 %v388
    %v1715 = vunpack.c.h.b16 %v388
    %v1716 = vunpack.c.l.b16 %v389
    %v1717 = vunpack.c.h.b16 %v389
    %v1718 = vunpack.c.l.b16 %v390
    %v1719 = vunpack.c.h.b16 %v390
    %v1720 = vunpack.c.l.b16 %v391
    %v1721 = vunpack.c.h.b16 %v391
    %v1722 = vunpack.c.l.b16 %v392
    %v1723 = vunpack.c.h.b16 %v392
    %v1724 = vunpack.c.l.b16 %v393
    %v1725 = vunpack.c.h.b16 %v393
    %v1726 = vunpack.c.l.b16 %v394
    %v1727 = vunpack.c.h.b16 %v394
    %v1728 = vunpack.c.l.b16 %v395
    %v1729 = vunpack.c.h.b16 %v395
    %v1730 = vunpack.c.l.b16 %v396
    %v1731 = vunpack.c.h.b16 %v396
    %v1732 = vunpack.c.l.b16 %v397
    %v1733 = vunpack.c.h.b16 %v397
    %v1734 = vunpack.c.l.b16 %v398
    %v1735 = vunpack.c.h.b16 %v398
    %v1736 = vunpack.c.l.b16 %v399
    %v1737 = vunpack.c.h.b16 %v399
    %v1738 = vunpack.c.l.b16 %v400
    %v1739 = vunpack.c.h.b16 %v400
    %v1740 = vunpack.c.l.b16 %v401
    %v1741 = vunpack.c.h.b16 %v401
    %v1742 = vunpack.c.l.b16 %v402
    %v1743 = vunpack.c.h.b16 %v402
    %v1744 = vunpack.c.l.b16 %v403
    %v1745 = vunpack.c.h.b16 %v403
    %v1746 = vunpack.c.l.b16 %v404
    %v1747 = vunpack.c.h.b16 %v404
    %v1748 = vunpack.c.l.b16 %v405
    %v1749 = vunpack.c.h.b16 %v405
    %v1750 = vunpack.c.l.b16 %v406
    %v1751 = vunpack.c.h.b16 %v406
    %v1752 = vunpack.c.l.b16 %v407
    %v1753 = vunpack.c.h.b16 %v407
    %v1754 = vunpack.c.l.b16 %v408
    %v1755 = vunpack.c.h.b16 %v408
    %v1756 = vunpack.c.l.b16 %v409
    %v1757 = vunpack.c.h.b16 %v409
    %v1758 = vunpack.c.l.b16 %v410
    %v1759 = vunpack.c.h.b16 %v410
    %v1760 = vunpack.c.l.b16 %v411
    %v1761 = vunpack.c.h.b16 %v411
    %v1762 = vunpack.c.l.b16 %v412
    %v1763 = vunpack.c.h.b16 %v412
    %v1764 = vunpack.c.l.b16 %v413
    %v1765 = vunpack.c.h.b16 %v413
    %v1766 = vunpack.c.l.b16 %v414
    %v1767 = vunpack.c.h.b16 %v414
    %v1768 = vunpack.c.l.b16 %v415
    %v1769 = vunpack.c.h.b16 %v415
    %v1770 = vunpack.c.l.b16 %v416
    %v1771 = vunpack.c.h.b16 %v416
    %v1772 = vunpack.c.l.b16 %v417
    %v1773 = vunpack.c.h.b16 %v417
    %v1774 = vunpack.c.l.b16 %v418
    %v1775 = vunpack.c.h.b16 %v418
    %v1776 = vunpack.c.l.b16 %v419
    %v1777 = vunpack.c.h.b16 %v419
    %v1778 = vunpack.c.l.b16 %v420
    %v1779 = vunpack.c.h.b16 %v420
    %v1780 = vunpack.c.l.b16 %v421
    %v1781 = vunpack.c.h.b16 %v421
    %v1782 = vunpack.c.l.b16 %v422
    %v1783 = vunpack.c.h.b16 %v422
    %v1784 = vunpack.c.l.b16 %v423
    %v1785 = vunpack.c.h.b16 %v423
    %v1786 = vunpack.c.l.b16 %v424
    %v1787 = vunpack.c.h.b16 %v424
    %v1788 = vunpack.c.l.b16 %v425
    %v1789 = vunpack.c.h.b16 %v425
    %v1790 = vunpack.c.l.b16 %v426
    %v1791 = vunpack.c.h.b16 %v426
    %v1792 = vunpack.c.l.b16 %v427
    %v1793 = vunpack.c.h.b16 %v427
    %v1794 = vunpack.c.l.b16 %v428
    %v1795 = vunpack.c.h.b16 %v428
    %v1796 = vunpack.c.l.b16 %v429
    %v1797 = vunpack.c.h.b16 %v429
    %v1798 = vunpack.c.l.b16 %v430
    %v1799 = vunpack.c.h.b16 %v430
    %v1800 = vunpack.c.l.b16 %v431
    %v1801 = vunpack.c.h.b16 %v431
    %v1802 = vunpack.c.l.b16 %v432
    %v1803 = vunpack.c.h.b16 %v432
    %v1804 = vunpack.c.l.b16 %v433
    %v1805 = vunpack.c.h.b16 %v433
    %v1806 = vunpack.c.l.b16 %v434
    %v1807 = vunpack.c.h.b16 %v434
    %v1808 = vunpack.c.l.b16 %v435
    %v1809 = vunpack.c.h.b16 %v435
    %v1810 = vunpack.c.l.b16 %v436
    %v1811 = vunpack.c.h.b16 %v436
    %v1812 = vunpack.c.l.b16 %v437
    %v1813 = vunpack.c.h.b16 %v437
    %v1814 = vunpack.c.l.b16 %v438
    %v1815 = vunpack.c.h.b16 %v438
    %v1816 = vunpack.c.l.b16 %v439
    %v1817 = vunpack.c.h.b16 %v439
    %v1818 = vunpack.c.l.b16 %v440
    %v1819 = vunpack.c.h.b16 %v440
    %v1820 = vunpack.c.l.b16 %v441
    %v1821 = vunpack.c.h.b16 %v441
    %v1822 = vunpack.c.l.b16 %v442
    %v1823 = vunpack.c.h.b16 %v442
    %v1824 = vunpack.c.l.b16 %v443
    %v1825 = vunpack.c.h.b16 %v443
    %v1826 = vunpack.c.l.b16 %v444
    %v1827 = vunpack.c.h.b16 %v444
    %v1828 = vunpack.c.l.b16 %v445
    %v1829 = vunpack.c.h.b16 %v445
    %v1830 = vunpack.c.l.b16 %v446
    %v1831 = vunpack.c.h.b16 %v446
    %v1832 = vunpack.c.l.b16 %v447
    %v1833 = vunpack.c.h.b16 %v447
    %v1834 = vunpack.c.l.b16 %v448
    %v1835 = vunpack.c.h.b16 %v448
    %v1836 = vunpack.c.l.b16 %v449
    %v1837 = vunpack.c.h.b16 %v449
    %v1838 = vunpack.c.l.b16 %v450
    %v1839 = vunpack.c.h.b16 %v450
    %v1840 = vunpack.c.l.b16 %v451
    %v1841 = vunpack.c.h.b16 %v451
    %v1842 = vunpack.c.l.b16 %v452
    %v1843 = vunpack.c.h.b16 %v452
    %v1844 = vunpack.c.l.b16 %v453
    %v1845 = vunpack.c.h.b16 %v453
    %v1846 = vunpack.c.l.b16 %v454
    %v1847 = vunpack.c.h.b16 %v454
    %v1848 = vunpack.c.l.b16 %v455
    %v1849 = vunpack.c.h.b16 %v455
    %v1850 = vunpack.c.l.b16 %v456
    %v1851 = vunpack.c.h.b16 %v456
    %v1852 = vunpack.c.l.b16 %v457
    %v1853 = vunpack.c.h.b16 %v457
    %v1854 = vunpack.c.l.b16 %v458
    %v1855 = vunpack.c.h.b16 %v458
    %v1856 = vunpack.c.l.b16 %v459
    %v1857 = vunpack.c.h.b16 %v459
    %v1858 = vunpack.c.l.b16 %v460
    %v1859 = vunpack.c.h.b16 %v460
    %v1860 = vunpack.c.l.b16 %v461
    %v1861 = vunpack.c.h.b16 %v461
    %v1862 = vunpack.c.l.b16 %v462
    %v1863 = vunpack.c.h.b16 %v462
    %v1864 = vunpack.c.l.b16 %v463
    %v1865 = vunpack.c.h.b16 %v463
    %v1866 = vunpack.c.l.b16 %v464
    %v1867 = vunpack.c.h.b16 %v464
    %v1868 = vunpack.c.l.b16 %v465
    %v1869 = vunpack.c.h.b16 %v465
    %v1870 = vunpack.c.l.b16 %v466
    %v1871 = vunpack.c.h.b16 %v466
    %v1872 = vunpack.c.l.b16 %v467
    %v1873 = vunpack.c.h.b16 %v467
    %v1874 = vunpack.c.l.b16 %v468
    %v1875 = vunpack.c.h.b16 %v468
    %v1876 = vunpack.c.l.b16 %v469
    %v1877 = vunpack.c.h.b16 %v469
    %v1878 = vunpack.c.l.b16 %v470
    %v1879 = vunpack.c.h.b16 %v470
    %v1880 = vunpack.c.l.b16 %v471
    %v1881 = vunpack.c.h.b16 %v471
    %v1882 = vunpack.c.l.b16 %v472
    %v1883 = vunpack.c.h.b16 %v472
    %v1884 = vunpack.c.l.b16 %v473
    %v1885 = vunpack.c.h.b16 %v473
    %v1886 = vunpack.c.l.b16 %v474
    %v1887 = vunpack.c.h.b16 %v474
    %v1888 = vunpack.c.l.b16 %v475
    %v1889 = vunpack.c.h.b16 %v475
    %v1890 = vunpack.c.l.b16 %v476
    %v1891 = vunpack.c.h.b16 %v476
    %v1892 = vunpack.c.l.b16 %v477
    %v1893 = vunpack.c.h.b16 %v477
    %v1894 = vunpack.c.l.b16 %v478
    %v1895 = vunpack.c.h.b16 %v478
    %v1896 = vunpack.c.l.b16 %v479
    %v1897 = vunpack.c.h.b16 %v479
    %v1898 = vunpack.c.l.b16 %v480
    %v1899 = vunpack.c.h.b16 %v480
    %v1900 = vunpack.c.l.b16 %v481
    %v1901 = vunpack.c.h.b16 %v481
    %v1902 = vunpack.c.l.b16 %v482
    %v1903 = vunpack.c.h.b16 %v482
    %v1904 = vunpack.c.l.b16 %v483
    %v1905 = vunpack.c.h.b16 %v483
    %v1906 = vunpack.c.l.b16 %v484
    %v1907 = vunpack.c.h.b16 %v484
    %v1908 = vunpack.c.l.b16 %v485
    %v1909 = vunpack.c.h.b16 %v485
    %v1910 = vunpack.c.l.b16 %v486
    %v1911 = vunpack.c.h.b16 %v486
    %v1912 = vunpack.c.l.b16 %v487
    %v1913 = vunpack.c.h.b16 %v487
    %v1914 = vunpack.c.l.b16 %v488
    %v1915 = vunpack.c.h.b16 %v488
    %v1916 = vunpack.c.l.b16 %v489
    %v1917 = vunpack.c.h.b16 %v489
    %v1918 = vunpack.c.l.b16 %v490
    %v1919 = vunpack.c.h.b16 %v490
    %v1920 = vunpack.c.l.b16 %v491
    %v1921 = vunpack.c.h.b16 %v491
    %v1922 = vunpack.c.l.b16 %v492
    %v1923 = vunpack.c.h.b16 %v492
    %v1924 = vunpack.c.l.b16 %v493
    %v1925 = vunpack.c.h.b16 %v493
    %v1926 = vunpack.c.l.b16 %v494
    %v1927 = vunpack.c.h.b16 %v494
    %v1928 = vunpack.c.l.b16 %v495
    %v1929 = vunpack.c.h.b16 %v495
    %v1930 = vunpack.c.l.b16 %v496
    %v1931 = vunpack.c.h.b16 %v496
    %v1932 = vunpack.c.l.b16 %v497
    %v1933 = vunpack.c.h.b16 %v497
    %v1934 = vunpack.c.l.b16 %v498
    %v1935 = vunpack.c.h.b16 %v498
    %v1936 = vunpack.c.l.b16 %v499
    %v1937 = vunpack.c.h.b16 %v499
    %v1938 = vunpack.c.l.b16 %v500
    %v1939 = vunpack.c.h.b16 %v500
    %v1940 = vunpack.c.l.b16 %v501
    %v1941 = vunpack.c.h.b16 %v501
    %v1942 = vunpack.c.l.b16 %v502
    %v1943 = vunpack.c.h.b16 %v502
    %v1944 = vunpack.c.l.b16 %v503
    %v1945 = vunpack.c.h.b16 %v503
    %v1946 = vunpack.c.l.b16 %v504
    %v1947 = vunpack.c.h.b16 %v504
    %v1948 = vunpack.c.l.b16 %v505
    %v1949 = vunpack.c.h.b16 %v505
    %v1950 = vunpack.c.l.b16 %v506
    %v1951 = vunpack.c.h.b16 %v506
    %v1952 = vunpack.c.l.b16 %v507
    %v1953 = vunpack.c.h.b16 %v507
    %v1954 = vunpack.c.l.b16 %v508
    %v1955 = vunpack.c.h.b16 %v508
    %v1956 = vunpack.c.l.b16 %v509
    %v1957 = vunpack.c.h.b16 %v509
    %v1958 = vunpack.c.l.b16 %v510
    %v1959 = vunpack.c.h.b16 %v510
    %v1960 = vunpack.c.l.b16 %v511
    %v1961 = vunpack.c.h.b16 %v511
    %v1962 = vunpack.c.l.b16 %v512
    %v1963 = vunpack.c.h.b16 %v512
    %v1964 = vunpack.c.l.b16 %v513
    %v1965 = vunpack.c.h.b16 %v513
    %v1966 = vunpack.c.l.b16 %v514
    %v1967 = vunpack.c.h.b16 %v514
    %v1968 = vunpack.c.l.b16 %v515
    %v1969 = vunpack.c.h.b16 %v515
    %v1970 = vunpack.c.l.b16 %v516
    %v1971 = vunpack.c.h.b16 %v516
    %v1972 = vunpack.c.l.b16 %v517
    %v1973 = vunpack.c.h.b16 %v517
    %v1974 = vunpack.c.l.b16 %v518
    %v1975 = vunpack.c.h.b16 %v518
    %v1976 = vunpack.c.l.b16 %v519
    %v1977 = vunpack.c.h.b16 %v519
    %v1978 = vunpack.c.l.b16 %v520
    %v1979 = vunpack.c.h.b16 %v520
    %v1980 = vunpack.c.l.b16 %v521
    %v1981 = vunpack.c.h.b16 %v521
    %v1982 = vunpack.c.l.b16 %v522
    %v1983 = vunpack.c.h.b16 %v522
    %v1984 = vunpack.c.l.b16 %v523
    %v1985 = vunpack.c.h.b16 %v523
    %v1986 = vunpack.c.l.b16 %v524
    %v1987 = vunpack.c.h.b16 %v524
    %v1988 = vunpack.c.l.b16 %v525
    %v1989 = vunpack.c.h.b16 %v525
    %v1990 = vunpack.c.l.b16 %v526
    %v1991 = vunpack.c.h.b16 %v526
    %v1992 = vunpack.c.l.b16 %v527
    %v1993 = vunpack.c.h.b16 %v527
    %v1994 = vunpack.c.l.b16 %v528
    %v1995 = vunpack.c.h.b16 %v528
    %v1996 = vunpack.c.l.b16 %v529
    %v1997 = vunpack.c.h.b16 %v529
    %v1998 = vunpack.c.l.b16 %v530
    %v1999 = vunpack.c.h.b16 %v530
    %v2000 = vunpack.c.l.b16 %v531
    %v2001 = vunpack.c.h.b16 %v531
    %v2002 = vunpack.c.l.b16 %v532
    %v2003 = vunpack.c.h.b16 %v532
    %v2004 = vunpack.c.l.b16 %v533
    %v2005 = vunpack.c.h.b16 %v533
    %v2006 = vunpack.c.l.b16 %v534
    %v2007 = vunpack.c.h.b16 %v534
    %v2008 = vunpack.c.l.b16 %v535
    %v2009 = vunpack.c.h.b16 %v535
    %v2010 = vunpack.c.l.b16 %v536
    %v2011 = vunpack.c.h.b16 %v536
    %v2012 = vunpack.c.l.b16 %v537
    %v2013 = vunpack.c.h.b16 %v537
    %v2014 = vunpack.c.l.b16 %v538
    %v2015 = vunpack.c.h.b16 %v538
    %v2016 = vunpack.c.l.b16 %v539
    %v2017 = vunpack.c.h.b16 %v539
    %v2018 = vunpack.c.l.b16 %v540
    %v2019 = vunpack.c.h.b16 %v540
    %v2020 = vunpack.c.l.b16 %v541
    %v2021 = vunpack.c.h.b16 %v541
    %v2022 = vunpack.c.l.b16 %v542
    %v2023 = vunpack.c.h.b16 %v542
    %v2024 = vunpack.c.l.b16 %v543
    %v2025 = vunpack.c.h.b16 %v543
    %v2026 = vunpack.c.l.b16 %v544
    %v2027 = vunpack.c.h.b16 %v544
    %v2028 = vunpack.c.l.b16 %v545
    %v2029 = vunpack.c.h.b16 %v545
    %v2030 = vunpack.c.l.b16 %v546
    %v2031 = vunpack.c.h.b16 %v546
    %v2032 = vunpack.c.l.b16 %v547
    %v2033 = vunpack.c.h.b16 %v547
    %v2034 = vunpack.c.l.b16 %v548
    %v2035 = vunpack.c.h.b16 %v548
    %v2036 = vunpack.c.l.b16 %v549
    %v2037 = vunpack.c.h.b16 %v549
    %v2038 = vunpack.c.l.b16 %v550
    %v2039 = vunpack.c.h.b16 %v550
    %v2040 = vunpack.c.l.b16 %v551
    %v2041 = vunpack.c.h.b16 %v551
    %v2042 = vunpack.c.l.b16 %v552
    %v2043 = vunpack.c.h.b16 %v552
    %v2044 = vunpack.c.l.b16 %v553
    %v2045 = vunpack.c.h.b16 %v553
    %v2046 = vunpack.c.l.b16 %v554
    %v2047 = vunpack.c.h.b16 %v554
    %v2048 = vunpack.c.l.b16 %v555
    %v2049 = vunpack.c.h.b16 %v555
    %v2050 = vunpack.c.l.b16 %v556
    %v2051 = vunpack.c.h.b16 %v556
    %v2052 = vunpack.c.l.b16 %v557
    %v2053 = vunpack.c.h.b16 %v557
    %v2054 = vunpack.c.l.b16 %v558
    %v2055 = vunpack.c.h.b16 %v558
    %v2056 = vunpack.c.l.b16 %v559
    %v2057 = vunpack.c.h.b16 %v559
    %v2058 = vpack.c.b16 %v1282, %v1274
    %v2059 = vpack.c.b16 %v1283, %v1275
    %v2060 = vpack.c.b16 %v1284, %v1276
    %v2061 = vpack.c.b16 %v1285, %v1277
    %v2062 = vpack.c.b16 %v1286, %v1278
    %v2063 = vpack.c.b16 %v1287, %v1279
    %v2064 = vpack.c.b16 %v1288, %v1280
    %v2065 = vpack.c.b16 %v1289, %v1281
    %v2066 = vpack.c.b16 %v1298, %v1290
    %v2067 = vpack.c.b16 %v1299, %v1291
    %v2068 = vpack.c.b16 %v1300, %v1292
    %v2069 = vpack.c.b16 %v1301, %v1293
    %v2070 = vpack.c.b16 %v1302, %v1294
    %v2071 = vpack.c.b16 %v1303, %v1295
    %v2072 = vpack.c.b16 %v1304, %v1296
    %v2073 = vpack.c.b16 %v1305, %v1297
    %v2074 = vpack.c.b16 %v1314, %v1306
    %v2075 = vpack.c.b16 %v1315, %v1307
    %v2076 = vpack.c.b16 %v1316, %v1308
    %v2077 = vpack.c.b16 %v1317, %v1309
    %v2078 = vpack.c.b16 %v1318, %v1310
    %v2079 = vpack.c.b16 %v1319, %v1311
    %v2080 = vpack.c.b16 %v1320, %v1312
    %v2081 = vpack.c.b16 %v1321, %v1313
    %v2082 = vpack.c.b16 %v1330, %v1322
    %v2083 = vpack.c.b16 %v1331, %v1323
    %v2084 = vpack.c.b16 %v1332, %v1324
    %v2085 = vpack.c.b16 %v1333, %v1325
    %v2086 = vpack.c.b16 %v1334, %v1326
    %v2087 = vpack.c.b16 %v1335, %v1327
    %v2088 = vpack.c.b16 %v1336, %v1328
    %v2089 = vpack.c.b16 %v1337, %v1329
    %v2090 = vpack.c.b16 %v1346, %v1338
    %v2091 = vpack.c.b16 %v1347, %v1339
    %v2092 = vpack.c.b16 %v1348, %v1340
    %v2093 = vpack.c.b16 %v1349, %v1341
    %v2094 = vpack.c.b16 %v1350, %v1342
    %v2095 = vpack.c.b16 %v1351, %v1343
    %v2096 = vpack.c.b16 %v1352, %v1344
    %v2097 = vpack.c.b16 %v1353, %v1345
    %v2098 = vpack.c.b16 %v1362, %v1354
    %v2099 = vpack.c.b16 %v1363, %v1355
    %v2100 = vpack.c.b16 %v1364, %v1356
    %v2101 = vpack.c.b16 %v1365, %v1357
    %v2102 = vpack.c.b16 %v1366, %v1358
    %v2103 = vpack.c.b16 %v1367, %v1359
    %v2104 = vpack.c.b16 %v1368, %v1360
    %v2105 = vpack.c.b16 %v1369, %v1361
    %v2106 = vpack.c.b16 %v1378, %v1370
    %v2107 = vpack.c.b16 %v1379, %v1371
    %v2108 = vpack.c.b16 %v1380, %v1372
    %v2109 = vpack.c.b16 %v1381, %v1373
    %v2110 = vpack.c.b16 %v1382, %v1374
    %v2111 = vpack.c.b16 %v1383, %v1375
    %v2112 = vpack.c.b16 %v1384, %v1376
    %v2113 = vpack.c.b16 %v1385, %v1377
    %v2114 = vpack.c.b16 %v1394, %v1386
    %v2115 = vpack.c.b16 %v1395, %v1387
    %v2116 = vpack.c.b16 %v1396, %v1388
    %v2117 = vpack.c.b16 %v1397, %v1389
    %v2118 = vpack.c.b16 %v1398, %v1390
    %v2119 = vpack.c.b16 %v1399, %v1391
    %v2120 = vpack.c.b16 %v1400, %v1392
    %v2121 = vpack.c.b16 %v1401, %v1393
    %v2122 = vpack.c.b16 %v1410, %v1402
    %v2123 = vpack.c.b16 %v1411, %v1403
    %v2124 = vpack.c.b16 %v1412, %v1404
    %v2125 = vpack.c.b16 %v1413, %v1405
    %v2126 = vpack.c.b16 %v1414, %v1406
    %v2127 = vpack.c.b16 %v1415, %v1407
    %v2128 = vpack.c.b16 %v1416, %v1408
    %v2129 = vpack.c.b16 %v1417, %v1409
    %v2130 = vpack.c.b16 %v1426, %v1418
    %v2131 = vpack.c.b16 %v1427, %v1419
    %v2132 = vpack.c.b16 %v1428, %v1420
    %v2133 = vpack.c.b16 %v1429, %v1421
    %v2134 = vpack.c.b16 %v1430, %v1422
    %v2135 = vpack.c.b16 %v1431, %v1423
    %v2136 = vpack.c.b16 %v1432, %v1424
    %v2137 = vpack.c.b16 %v1433, %v1425
    %v2138 = vpack.c.b16 %v1442, %v1434
    %v2139 = vpack.c.b16 %v1443, %v1435
    %v2140 = vpack.c.b16 %v1444, %v1436
    %v2141 = vpack.c.b16 %v1445, %v1437
    %v2142 = vpack.c.b16 %v1446, %v1438
    %v2143 = vpack.c.b16 %v1447, %v1439
    %v2144 = vpack.c.b16 %v1448, %v1440
    %v2145 = vpack.c.b16 %v1449, %v1441
    %v2146 = vpack.c.b16 %v1458, %v1450
    %v2147 = vpack.c.b16 %v1459, %v1451
    %v2148 = vpack.c.b16 %v1460, %v1452
    %v2149 = vpack.c.b16 %v1461, %v1453
    %v2150 = vpack.c.b16 %v1462, %v1454
    %v2151 = vpack.c.b16 %v1463, %v1455
    %v2152 = vpack.c.b16 %v1464, %v1456
    %v2153 = vpack.c.b16 %v1465, %v1457
    %v2154 = vpack.c.b16 %v1474, %v1466
    %v2155 = vpack.c.b16 %v1475, %v1467
    %v2156 = vpack.c.b16 %v1476, %v1468
    %v2157 = vpack.c.b16 %v1477, %v1469
    %v2158 = vpack.c.b16 %v1478, %v1470
    %v2159 = vpack.c.b16 %v1479, %v1471
    %v2160 = vpack.c.b16 %v1480, %v1472
    %v2161 = vpack.c.b16 %v1481, %v1473
    %v2162 = vpack.c.b16 %v1490, %v1482
    %v2163 = vpack.c.b16 %v1491, %v1483
    %v2164 = vpack.c.b16 %v1492, %v1484
    %v2165 = vpack.c.b16 %v1493, %v1485
    %v2166 = vpack.c.b16 %v1494, %v1486
    %v2167 = vpack.c.b16 %v1495, %v1487
    %v2168 = vpack.c.b16 %v1496, %v1488
    %v2169 = vpack.c.b16 %v1497, %v1489
    %v2170 = vpack.c.b16 %v1506, %v1498
    %v2171 = vpack.c.b16 %v1507, %v1499
    %v2172 = vpack.c.b16 %v1508, %v1500
    %v2173 = vpack.c.b16 %v1509, %v1501
    %v2174 = vpack.c.b16 %v1510, %v1502
    %v2175 = vpack.c.b16 %v1511, %v1503
    %v2176 = vpack.c.b16 %v1512, %v1504
    %v2177 = vpack.c.b16 %v1513, %v1505
    %v2178 = vpack.c.b16 %v1522, %v1514
    %v2179 = vpack.c.b16 %v1523, %v1515
    %v2180 = vpack.c.b16 %v1524, %v1516
    %v2181 = vpack.c.b16 %v1525, %v1517
    %v2182 = vpack.c.b16 %v1526, %v1518
    %v2183 = vpack.c.b16 %v1527, %v1519
    %v2184 = vpack.c.b16 %v1528, %v1520
    %v2185 = vpack.c.b16 %v1529, %v1521
    %v2186 = vpack.c.b16 %v1538, %v1530
    %v2187 = vpack.c.b16 %v1539, %v1531
    %v2188 = vpack.c.b16 %v1540, %v1532
    %v2189 = vpack.c.b16 %v1541, %v1533
    %v2190 = vpack.c.b16 %v1542, %v1534
    %v2191 = vpack.c.b16 %v1543, %v1535
    %v2192 = vpack.c.b16 %v1544, %v1536
    %v2193 = vpack.c.b16 %v1545, %v1537
    %v2194 = vpack.c.b16 %v1554, %v1546
    %v2195 = vpack.c.b16 %v1555, %v1547
    %v2196 = vpack.c.b16 %v1556, %v1548
    %v2197 = vpack.c.b16 %v1557, %v1549
    %v2198 = vpack.c.b16 %v1558, %v1550
    %v2199 = vpack.c.b16 %v1559, %v1551
    %v2200 = vpack.c.b16 %v1560, %v1552
    %v2201 = vpack.c.b16 %v1561, %v1553
    %v2202 = vpack.c.b16 %v1570, %v1562
    %v2203 = vpack.c.b16 %v1571, %v1563
    %v2204 = vpack.c.b16 %v1572, %v1564
    %v2205 = vpack.c.b16 %v1573, %v1565
    %v2206 = vpack.c.b16 %v1574, %v1566
    %v2207 = vpack.c.b16 %v1575, %v1567
    %v2208 = vpack.c.b16 %v1576, %v1568
    %v2209 = vpack.c.b16 %v1577, %v1569
    %v2210 = vpack.c.b16 %v1586, %v1578
    %v2211 = vpack.c.b16 %v1587, %v1579
    %v2212 = vpack.c.b16 %v1588, %v1580
    %v2213 = vpack.c.b16 %v1589, %v1581
    %v2214 = vpack.c.b16 %v1590, %v1582
    %v2215 = vpack.c.b16 %v1591, %v1583
    %v2216 = vpack.c.b16 %v1592, %v1584
    %v2217 = vpack.c.b16 %v1593, %v1585
    %v2218 = vpack.c.b16 %v1602, %v1594
    %v2219 = vpack.c.b16 %v1603, %v1595
    %v2220 = vpack.c.b16 %v1604, %v1596
    %v2221 = vpack.c.b16 %v1605, %v1597
    %v2222 = vpack.c.b16 %v1606, %v1598
    %v2223 = vpack.c.b16 %v1607, %v1599
    %v2224 = vpack.c.b16 %v1608, %v1600
    %v2225 = vpack.c.b16 %v1609, %v1601
    %v2226 = vpack.c.b16 %v1618, %v1610
    %v2227 = vpack.c.b16 %v1619, %v1611
    %v2228 = vpack.c.b16 %v1620, %v1612
    %v2229 = vpack.c.b16 %v1621, %v1613
    %v2230 = vpack.c.b16 %v1622, %v1614
    %v2231 = vpack.c.b16 %v1623, %v1615
    %v2232 = vpack.c.b16 %v1624, %v1616
    %v2233 = vpack.c.b16 %v1625, %v1617
    %v2234 = vpack.c.b16 %v1634, %v1626
    %v2235 = vpack.c.b16 %v1635, %v1627
    %v2236 = vpack.c.b16 %v1636, %v1628
    %v2237 = vpack.c.b16 %v1637, %v1629
    %v2238 = vpack.c.b16 %v1638, %v1630
    %v2239 = vpack.c.b16 %v1639, %v1631
    %v2240 = vpack.c.b16 %v1640, %v1632
    %v2241 = vpack.c.b16 %v1641, %v1633
    %v2242 = vpack.c.b16 %v1650, %v1642
    %v2243 = vpack.c.b16 %v1651, %v1643
    %v2244 = vpack.c.b16 %v1652, %v1644
    %v2245 = vpack.c.b16 %v1653, %v1645
    %v2246 = vpack.c.b16 %v1654, %v1646
    %v2247 = vpack.c.b16 %v1655, %v1647
    %v2248 = vpack.c.b16 %v1656, %v1648
    %v2249 = vpack.c.b16 %v1657, %v1649
    %v2250 = vpack.c.b16 %v1666, %v1658
    %v2251 = vpack.c.b16 %v1667, %v1659
    %v2252 = vpack.c.b16 %v1668, %v1660
    %v2253 = vpack.c.b16 %v1669, %v1661
    %v2254 = vpack.c.b16 %v1670, %v1662
    %v2255 = vpack.c.b16 %v1671, %v1663
    %v2256 = vpack.c.b16 %v1672, %v1664
    %v2257 = vpack.c.b16 %v1673, %v1665
    %v2258 = vpack.c.b16 %v1682, %v1674
    %v2259 = vpack.c.b16 %v1683, %v1675
    %v2260 = vpack.c.b16 %v1684, %v1676
    %v2261 = vpack.c.b16 %v1685, %v1677
    %v2262 = vpack.c.b16 %v1686, %v1678
    %v2263 = vpack.c.b16 %v1687, %v1679
    %v2264 = vpack.c.b16 %v1688, %v1680
    %v2265 = vpack.c.b16 %v1689, %v1681
    %v2266 = vpack.c.b16 %v1698, %v1690
    %v2267 = vpack.c.b16 %v1699, %v1691
    %v2268 = vpack.c.b16 %v1700, %v1692
    %v2269 = vpack.c.b16 %v1701, %v1693
    %v2270 = vpack.c.b16 %v1702, %v1694
    %v2271 = vpack.c.b16 %v1703, %v1695
    %v2272 = vpack.c.b16 %v1704, %v1696
    %v2273 = vpack.c.b16 %v1705, %v1697
    %v2274 = vpack.c.b16 %v1714, %v1706
    %v2275 = vpack.c.b16 %v1715, %v1707
    %v2276 = vpack.c.b16 %v1716, %v1708
    %v2277 = vpack.c.b16 %v1717, %v1709
    %v2278 = vpack.c.b16 %v1718, %v1710
    %v2279 = vpack.c.b16 %v1719, %v1711
    %v2280 = vpack.c.b16 %v1720, %v1712
    %v2281 = vpack.c.b16 %v1721, %v1713
    %v2282 = vpack.c.b16 %v1730, %v1722
    %v2283 = vpack.c.b16 %v1731, %v1723
    %v2284 = vpack.c.b16 %v1732, %v1724
    %v2285 = vpack.c.b16 %v1733, %v1725
    %v2286 = vpack.c.b16 %v1734, %v1726
    %v2287 = vpack.c.b16 %v1735, %v1727
    %v2288 = vpack.c.b16 %v1736, %v1728
    %v2289 = vpack.c.b16 %v1737, %v1729
    %v2290 = vpack.c.b16 %v1746, %v1738
    %v2291 = vpack.c.b16 %v1747, %v1739
    %v2292 = vpack.c.b16 %v1748, %v1740
    %v2293 = vpack.c.b16 %v1749, %v1741
    %v2294 = vpack.c.b16 %v1750, %v1742
    %v2295 = vpack.c.b16 %v1751, %v1743
    %v2296 = vpack.c.b16 %v1752, %v1744
    %v2297 = vpack.c.b16 %v1753, %v1745
    %v2298 = vpack.c.b16 %v1762, %v1754
    %v2299 = vpack.c.b16 %v1763, %v1755
    %v2300 = vpack.c.b16 %v1764, %v1756
    %v2301 = vpack.c.b16 %v1765, %v1757
    %v2302 = vpack.c.b16 %v1766, %v1758
    %v2303 = vpack.c.b16 %v1767, %v1759
    %v2304 = vpack.c.b16 %v1768, %v1760
    %v2305 = vpack.c.b16 %v1769, %v1761
    %v2306 = vpack.c.b16 %v1778, %v1770
    %v2307 = vpack.c.b16 %v1779, %v1771
    %v2308 = vpack.c.b16 %v1780, %v1772
    %v2309 = vpack.c.b16 %v1781, %v1773
    %v2310 = vpack.c.b16 %v1782, %v1774
    %v2311 = vpack.c.b16 %v1783, %v1775
    %v2312 = vpack.c.b16 %v1784, %v1776
    %v2313 = vpack.c.b16 %v1785, %v1777
    %v2314 = vpack.c.b16 %v1794, %v1786
    %v2315 = vpack.c.b16 %v1795, %v1787
    %v2316 = vpack.c.b16 %v1796, %v1788
    %v2317 = vpack.c.b16 %v1797, %v1789
    %v2318 = vpack.c.b16 %v1798, %v1790
    %v2319 = vpack.c.b16 %v1799, %v1791
    %v2320 = vpack.c.b16 %v1800, %v1792
    %v2321 = vpack.c.b16 %v1801, %v1793
    %v2322 = vpack.c.b16 %v1810, %v1802
    %v2323 = vpack.c.b16 %v1811, %v1803
    %v2324 = vpack.c.b16 %v1812, %v1804
    %v2325 = vpack.c.b16 %v1813, %v1805
    %v2326 = vpack.c.b16 %v1814, %v1806
    %v2327 = vpack.c.b16 %v1815, %v1807
    %v2328 = vpack.c.b16 %v1816, %v1808
    %v2329 = vpack.c.b16 %v1817, %v1809
    %v2330 = vpack.c.b16 %v1826, %v1818
    %v2331 = vpack.c.b16 %v1827, %v1819
    %v2332 = vpack.c.b16 %v1828, %v1820
    %v2333 = vpack.c.b16 %v1829, %v1821
    %v2334 = vpack.c.b16 %v1830, %v1822
    %v2335 = vpack.c.b16 %v1831, %v1823
    %v2336 = vpack.c.b16 %v1832, %v1824
    %v2337 = vpack.c.b16 %v1833, %v1825
    %v2338 = vpack.c.b16 %v1842, %v1834
    %v2339 = vpack.c.b16 %v1843, %v1835
    %v2340 = vpack.c.b16 %v1844, %v1836
    %v2341 = vpack.c.b16 %v1845, %v1837
    %v2342 = vpack.c.b16 %v1846, %v1838
    %v2343 = vpack.c.b16 %v1847, %v1839
    %v2344 = vpack.c.b16 %v1848, %v1840
    %v2345 = vpack.c.b16 %v1849, %v1841
    %v2346 = vpack.c.b16 %v1858, %v1850
    %v2347 = vpack.c.b16 %v1859, %v1851
    %v2348 = vpack.c.b16 %v1860, %v1852
    %v2349 = vpack.c.b16 %v1861, %v1853
    %v2350 = vpack.c.b16 %v1862, %v1854
    %v2351 = vpack.c.b16 %v1863, %v1855
    %v2352 = vpack.c.b16 %v1864, %v1856
    %v2353 = vpack.c.b16 %v1865, %v1857
    %v2354 = vpack.c.b16 %v1874, %v1866
    %v2355 = vpack.c.b16 %v1875, %v1867
    %v2356 = vpack.c.b16 %v1876, %v1868
    %v2357 = vpack.c.b16 %v1877, %v1869
    %v2358 = vpack.c.b16 %v1878, %v1870
    %v2359 = vpack.c.b16 %v1879, %v1871
    %v2360 = vpack.c.b16 %v1880, %v1872
    %v2361 = vpack.c.b16 %v1881, %v1873
    %v2362 = vpack.c.b16 %v1890, %v1882
    %v2363 = vpack.c.b16 %v1891, %v1883
    %v2364 = vpack.c.b16 %v1892, %v1884
    %v2365 = vpack.c.b16 %v1893, %v1885
    %v2366 = vpack.c.b16 %v1894, %v1886
    %v2367 = vpack.c.b16 %v1895, %v1887
    %v2368 = vpack.c.b16 %v1896, %v1888
    %v2369 = vpack.c.b16 %v1897, %v1889
    %v2370 = vpack.c.b16 %v1906, %v1898
    %v2371 = vpack.c.b16 %v1907, %v1899
    %v2372 = vpack.c.b16 %v1908, %v1900
    %v2373 = vpack.c.b16 %v1909, %v1901
    %v2374 = vpack.c.b16 %v1910, %v1902
    %v2375 = vpack.c.b16 %v1911, %v1903
    %v2376 = vpack.c.b16 %v1912, %v1904
    %v2377 = vpack.c.b16 %v1913, %v1905
    %v2378 = vpack.c.b16 %v1922, %v1914
    %v2379 = vpack.c.b16 %v1923, %v1915
    %v2380 = vpack.c.b16 %v1924, %v1916
    %v2381 = vpack.c.b16 %v1925, %v1917
    %v2382 = vpack.c.b16 %v1926, %v1918
    %v2383 = vpack.c.b16 %v1927, %v1919
    %v2384 = vpack.c.b16 %v1928, %v1920
    %v2385 = vpack.c.b16 %v1929, %v1921
    %v2386 = vpack.c.b16 %v1938, %v1930
    %v2387 = vpack.c.b16 %v1939, %v1931
    %v2388 = vpack.c.b16 %v1940, %v1932
    %v2389 = vpack.c.b16 %v1941, %v1933
    %v2390 = vpack.c.b16 %v1942, %v1934
    %v2391 = vpack.c.b16 %v1943, %v1935
    %v2392 = vpack.c.b16 %v1944, %v1936
    %v2393 = vpack.c.b16 %v1945, %v1937
    %v2394 = vpack.c.b16 %v1954, %v1946
    %v2395 = vpack.c.b16 %v1955, %v1947
    %v2396 = vpack.c.b16 %v1956, %v1948
    %v2397 = vpack.c.b16 %v1957, %v1949
    %v2398 = vpack.c.b16 %v1958, %v1950
    %v2399 = vpack.c.b16 %v1959, %v1951
    %v2400 = vpack.c.b16 %v1960, %v1952
    %v2401 = vpack.c.b16 %v1961, %v1953
    %v2402 = vpack.c.b16 %v1970, %v1962
    %v2403 = vpack.c.b16 %v1971, %v1963
    %v2404 = vpack.c.b16 %v1972, %v1964
    %v2405 = vpack.c.b16 %v1973, %v1965
    %v2406 = vpack.c.b16 %v1974, %v1966
    %v2407 = vpack.c.b16 %v1975, %v1967
    %v2408 = vpack.c.b16 %v1976, %v1968
    %v2409 = vpack.c.b16 %v1977, %v1969
    %v2410 = vpack.c.b16 %v1986, %v1978
    %v2411 = vpack.c.b16 %v1987, %v1979
    %v2412 = vpack.c.b16 %v1988, %v1980
    %v2413 = vpack.c.b16 %v1989, %v1981
    %v2414 = vpack.c.b16 %v1990, %v1982
    %v2415 = vpack.c.b16 %v1991, %v1983
    %v2416 = vpack.c.b16 %v1992, %v1984
    %v2417 = vpack.c.b16 %v1993, %v1985
    %v2418 = vpack.c.b16 %v2002, %v1994
    %v2419 = vpack.c.b16 %v2003, %v1995
    %v2420 = vpack.c.b16 %v2004, %v1996
    %v2421 = vpack.c.b16 %v2005, %v1997
    %v2422 = vpack.c.b16 %v2006, %v1998
    %v2423 = vpack.c.b16 %v2007, %v1999
    %v2424 = vpack.c.b16 %v2008, %v2000
    %v2425 = vpack.c.b16 %v2009, %v2001
    %v2426 = vpack.c.b16 %v2018, %v2010
    %v2427 = vpack.c.b16 %v2019, %v2011
    %v2428 = vpack.c.b16 %v2020, %v2012
    %v2429 = vpack.c.b16 %v2021, %v2013
    %v2430 = vpack.c.b16 %v2022, %v2014
    %v2431 = vpack.c.b16 %v2023, %v2015
    %v2432 = vpack.c.b16 %v2024, %v2016
    %v2433 = vpack.c.b16 %v2025, %v2017
    %v2434 = vpack.c.b16 %v2034, %v2026
    %v2435 = vpack.c.b16 %v2035, %v2027
    %v2436 = vpack.c.b16 %v2036, %v2028
    %v2437 = vpack.c.b16 %v2037, %v2029
    %v2438 = vpack.c.b16 %v2038, %v2030
    %v2439 = vpack.c.b16 %v2039, %v2031
    %v2440 = vpack.c.b16 %v2040, %v2032
    %v2441 = vpack.c.b16 %v2041, %v2033
    %v2442 = vpack.c.b16 %v2050, %v2042
    %v2443 = vpack.c.b16 %v2051, %v2043
    %v2444 = vpack.c.b16 %v2052, %v2044
    %v2445 = vpack.c.b16 %v2053, %v2045
    %v2446 = vpack.c.b16 %v2054, %v2046
    %v2447 = vpack.c.b16 %v2055, %v2047
    %v2448 = vpack.c.b16 %v2056, %v2048
    %v2449 = vpack.c.b16 %v2057, %v2049
    %vm2842 = vcmask 130048
    %v2844 = vsel %vm2842, %v784, 0
    %v2847 = vsel %vm2842, %v791, 0
    %v2850 = vsel %vm2842, %v798, 0
    %v2853 = vsel %vm2842, %v805, 0
    %v2856 = vsel %vm2842, %v812, 0
    %v2859 = vsel %vm2842, %v819, 0
    %v2862 = vsel %vm2842, %v826, 0
    %v2865 = vsel %vm2842, %v833, 0
    %2867 = vmatprep.subr.bf16.mxu0 %v2059
    %2868 = vmatpush1.bf16.msra.mxu0 %v2058
    %2869 = vmatprep.subr.bf16.mxu0 %v2067
    %2870 = vmatpush1.bf16.msra.mxu0 %v2066
    %2871 = vmatprep.subr.bf16.mxu0 %v2075
    %2872 = vmatpush1.bf16.msra.mxu0 %v2074
    %2873 = vmatprep.subr.bf16.mxu0 %v2083
    %2874 = vmatpush1.bf16.msra.mxu0 %v2082
    %2875 = vmatprep.subr.bf16.mxu0 %v2091
    %2876 = vmatpush1.bf16.msra.mxu0 %v2090
    %2877 = vmatprep.subr.bf16.mxu0 %v2099
    %2878 = vmatpush1.bf16.msra.mxu0 %v2098
    %2879 = vmatprep.subr.bf16.mxu0 %v2107
    %2880 = vmatpush1.bf16.msra.mxu0 %v2106
    %2881 = vmatprep.subr.bf16.mxu0 %v2115
    %2882 = vmatpush1.bf16.msra.mxu0 %v2114
    %2883 = vmatprep.subr.bf16.mxu0 %v2123
    %2884 = vmatpush1.bf16.msra.mxu0 %v2122
    %2885 = vmatprep.subr.bf16.mxu0 %v2131
    %2886 = vmatpush1.bf16.msra.mxu0 %v2130
    %2887 = vmatprep.subr.bf16.mxu0 %v2139
    %2888 = vmatpush1.bf16.msra.mxu0 %v2138
    %2889 = vmatprep.subr.bf16.mxu0 %v2147
    %2890 = vmatpush1.bf16.msra.mxu0 %v2146
    %2891 = vmatprep.subr.bf16.mxu0 %v2155
    %2892 = vmatpush1.bf16.msra.mxu0 %v2154
    %2893 = vmatprep.subr.bf16.mxu0 %v2163
    %2894 = vmatpush1.bf16.msra.mxu0 %v2162
    %2895 = vmatprep.subr.bf16.mxu0 %v2171
    %2896 = vmatpush1.bf16.msra.mxu0 %v2170
    %2897 = vmatprep.subr.bf16.mxu0 %v2179
    %2898 = vmatpush1.bf16.msra.mxu0 %v2178
    %2899 = vmatprep.mubr.bf16.mxu0 %v779
    %2900 = vmatmul.mubr.bf16.gmra.mrb[0].mxu0 %v778
    %v2901 = vpop.f32.mrb[0].mxu0
    %v2902 = vadd.f32 %v565, %v2901
    %v2903 = vpop.f32.mrb[0].mxu0
    %v2904 = vadd.f32 %v569, %v2903
    %v2905 = vpop.f32.mrb[0].mxu0
    %v2906 = vadd.f32 %v565, %v2905
    %v2907 = vpop.f32.mrb[0].mxu0
    %v2908 = vadd.f32 %v569, %v2907
    %2909 = vmatprep.mubr.bf16.mxu0 %v786
    %2910 = vmatmul.mubr.bf16.gmra.mrb[0].mxu0 %v785
    %v2911 = vpop.f32.mrb[0].mxu0
    %v2912 = vadd.f32 %v565, %v2911
    %v2913 = vpop.f32.mrb[0].mxu0
    %v2914 = vadd.f32 %v569, %v2913
    %v2915 = vpop.f32.mrb[0].mxu0
    %v2916 = vadd.f32 %v565, %v2915
    %v2917 = vpop.f32.mrb[0].mxu0
    %v2918 = vadd.f32 %v569, %v2917
    %2919 = vmatprep.mubr.bf16.mxu0 %v793
    %2920 = vmatmul.mubr.bf16.gmra.mrb[0].mxu0 %v792
    %v2921 = vpop.f32.mrb[0].mxu0
    %v2922 = vadd.f32 %v565, %v2921
    %v2923 = vpop.f32.mrb[0].mxu0
    %v2924 = vadd.f32 %v569, %v2923
    %v2925 = vpop.f32.mrb[0].mxu0
    %v2926 = vadd.f32 %v565, %v2925
    %v2927 = vpop.f32.mrb[0].mxu0
    %v2928 = vadd.f32 %v569, %v2927
    %2929 = vmatprep.mubr.bf16.mxu0 %v800
    %2930 = vmatmul.mubr.bf16.gmra.mrb[0].mxu0 %v799
    %v2931 = vpop.f32.mrb[0].mxu0
    %v2932 = vadd.f32 %v565, %v2931
    %v2933 = vpop.f32.mrb[0].mxu0
    %v2934 = vadd.f32 %v569, %v2933
    %v2935 = vpop.f32.mrb[0].mxu0
    %v2936 = vadd.f32 %v565, %v2935
    %v2937 = vpop.f32.mrb[0].mxu0
    %v2938 = vadd.f32 %v569, %v2937
    %2939 = vmatprep.mubr.bf16.mxu0 %v807
    %2940 = vmatmul.mubr.bf16.gmra.mrb[0].mxu0 %v806
    %v2941 = vpop.f32.mrb[0].mxu0
    %v2942 = vadd.f32 %v565, %v2941
    %v2943 = vpop.f32.mrb[0].mxu0
    %v2944 = vadd.f32 %v569, %v2943
    %v2945 = vpop.f32.mrb[0].mxu0
    %v2946 = vadd.f32 %v565, %v2945
    %v2947 = vpop.f32.mrb[0].mxu0
    %v2948 = vadd.f32 %v569, %v2947
    %2949 = vmatprep.mubr.bf16.mxu0 %v814
    %2950 = vmatmul.mubr.bf16.gmra.mrb[0].mxu0 %v813
    %v2951 = vpop.f32.mrb[0].mxu0
    %v2952 = vadd.f32 %v565, %v2951
    %v2953 = vpop.f32.mrb[0].mxu0
    %v2954 = vadd.f32 %v569, %v2953
    %v2955 = vpop.f32.mrb[0].mxu0
    %v2956 = vadd.f32 %v565, %v2955
    %v2957 = vpop.f32.mrb[0].mxu0
    %v2958 = vadd.f32 %v569, %v2957
    %2959 = vmatprep.mubr.bf16.mxu0 %v821
    %2960 = vmatmul.mubr.bf16.gmra.mrb[0].mxu0 %v820
    %v2961 = vpop.f32.mrb[0].mxu0
    %v2962 = vadd.f32 %v565, %v2961
    %v2963 = vpop.f32.mrb[0].mxu0
    %v2964 = vadd.f32 %v569, %v2963
    %v2965 = vpop.f32.mrb[0].mxu0
    %v2966 = vadd.f32 %v565, %v2965
    %v2967 = vpop.f32.mrb[0].mxu0
    %v2968 = vadd.f32 %v569, %v2967
    %2969 = vmatprep.mubr.bf16.mxu0 %v828
    %2970 = vmatmul.mubr.bf16.gmra.mrb[0].mxu0 %v827
    %v2971 = vpop.f32.mrb[0].mxu0
    %v2972 = vadd.f32 %v565, %v2971
    %v2973 = vpop.f32.mrb[0].mxu0
    %v2974 = vadd.f32 %v569, %v2973
    %v2975 = vpop.f32.mrb[0].mxu0
    %v2976 = vadd.f32 %v565, %v2975
    %v2977 = vpop.f32.mrb[0].mxu0
    %v2978 = vadd.f32 %v569, %v2977
    %2979 = vdwg.mxu0
    %2980 = vmatprep.subr.bf16.mxu0 %v2187
    %2981 = vmatpush1.bf16.msra.mxu0 %v2186
    %2982 = vmatprep.subr.bf16.mxu0 %v2195
    %2983 = vmatpush1.bf16.msra.mxu0 %v2194
    %2984 = vmatprep.subr.bf16.mxu0 %v2203
    %2985 = vmatpush1.bf16.msra.mxu0 %v2202
    %2986 = vmatprep.subr.bf16.mxu0 %v2211
    %2987 = vmatpush1.bf16.msra.mxu0 %v2210
    %2988 = vmatprep.subr.bf16.mxu0 %v2219
    %2989 = vmatpush1.bf16.msra.mxu0 %v2218
    %2990 = vmatprep.subr.bf16.mxu0 %v2227
    %2991 = vmatpush1.bf16.msra.mxu0 %v2226
    %2992 = vmatprep.subr.bf16.mxu0 %v2235
    %2993 = vmatpush1.bf16.msra.mxu0 %v2234
    %2994 = vmatprep.subr.bf16.mxu0 %v2243
    %2995 = vmatpush1.bf16.msra.mxu0 %v2242
    %2996 = vmatprep.subr.bf16.mxu0 %v2251
    %2997 = vmatpush1.bf16.msra.mxu0 %v2250
    %2998 = vmatprep.subr.bf16.mxu0 %v2259
    %2999 = vmatpush1.bf16.msra.mxu0 %v2258
    %3000 = vmatprep.subr.bf16.mxu0 %v2267
    %3001 = vmatpush1.bf16.msra.mxu0 %v2266
    %3002 = vmatprep.subr.bf16.mxu0 %v2275
    %3003 = vmatpush1.bf16.msra.mxu0 %v2274
    %3004 = vmatprep.subr.bf16.mxu0 %v2283
    %3005 = vmatpush1.bf16.msra.mxu0 %v2282
    %3006 = vmatprep.subr.bf16.mxu0 %v2291
    %3007 = vmatpush1.bf16.msra.mxu0 %v2290
    %3008 = vmatprep.subr.bf16.mxu0 %v2299
    %3009 = vmatpush1.bf16.msra.mxu0 %v2298
    %3010 = vmatprep.subr.bf16.mxu0 %v2307
    %3011 = vmatpush1.bf16.msra.mxu0 %v2306
    %3012 = vmatprep.mubr.bf16.mxu0 %v781
    %3013 = vmatmul.mubr.bf16.gmra.mrb[0].mxu0 %v780
    %v3014 = vpop.f32.mrb[0].mxu0
    %v3015 = vadd.f32 %v2902, %v3014
    %v3016 = vpop.f32.mrb[0].mxu0
    %v3017 = vadd.f32 %v2904, %v3016
    %v3018 = vpop.f32.mrb[0].mxu0
    %v3019 = vadd.f32 %v2906, %v3018
    %v3020 = vpop.f32.mrb[0].mxu0
    %v3021 = vadd.f32 %v2908, %v3020
    %3022 = vmatprep.mubr.bf16.mxu0 %v788
    %3023 = vmatmul.mubr.bf16.gmra.mrb[0].mxu0 %v787
    %v3024 = vpop.f32.mrb[0].mxu0
    %v3025 = vadd.f32 %v2912, %v3024
    %v3026 = vpop.f32.mrb[0].mxu0
    %v3027 = vadd.f32 %v2914, %v3026
    %v3028 = vpop.f32.mrb[0].mxu0
    %v3029 = vadd.f32 %v2916, %v3028
    %v3030 = vpop.f32.mrb[0].mxu0
    %v3031 = vadd.f32 %v2918, %v3030
    %3032 = vmatprep.mubr.bf16.mxu0 %v795
    %3033 = vmatmul.mubr.bf16.gmra.mrb[0].mxu0 %v794
    %v3034 = vpop.f32.mrb[0].mxu0
    %v3035 = vadd.f32 %v2922, %v3034
    %v3036 = vpop.f32.mrb[0].mxu0
    %v3037 = vadd.f32 %v2924, %v3036
    %v3038 = vpop.f32.mrb[0].mxu0
    %v3039 = vadd.f32 %v2926, %v3038
    %v3040 = vpop.f32.mrb[0].mxu0
    %v3041 = vadd.f32 %v2928, %v3040
    %3042 = vmatprep.mubr.bf16.mxu0 %v802
    %3043 = vmatmul.mubr.bf16.gmra.mrb[0].mxu0 %v801
    %v3044 = vpop.f32.mrb[0].mxu0
    %v3045 = vadd.f32 %v2932, %v3044
    %v3046 = vpop.f32.mrb[0].mxu0
    %v3047 = vadd.f32 %v2934, %v3046
    %v3048 = vpop.f32.mrb[0].mxu0
    %v3049 = vadd.f32 %v2936, %v3048
    %v3050 = vpop.f32.mrb[0].mxu0
    %v3051 = vadd.f32 %v2938, %v3050
    %3052 = vmatprep.mubr.bf16.mxu0 %v809
    %3053 = vmatmul.mubr.bf16.gmra.mrb[0].mxu0 %v808
    %v3054 = vpop.f32.mrb[0].mxu0
    %v3055 = vadd.f32 %v2942, %v3054
    %v3056 = vpop.f32.mrb[0].mxu0
    %v3057 = vadd.f32 %v2944, %v3056
    %v3058 = vpop.f32.mrb[0].mxu0
    %v3059 = vadd.f32 %v2946, %v3058
    %v3060 = vpop.f32.mrb[0].mxu0
    %v3061 = vadd.f32 %v2948, %v3060
    %3062 = vmatprep.mubr.bf16.mxu0 %v816
    %3063 = vmatmul.mubr.bf16.gmra.mrb[0].mxu0 %v815
    %v3064 = vpop.f32.mrb[0].mxu0
    %v3065 = vadd.f32 %v2952, %v3064
    %v3066 = vpop.f32.mrb[0].mxu0
    %v3067 = vadd.f32 %v2954, %v3066
    %v3068 = vpop.f32.mrb[0].mxu0
    %v3069 = vadd.f32 %v2956, %v3068
    %v3070 = vpop.f32.mrb[0].mxu0
    %v3071 = vadd.f32 %v2958, %v3070
    %3072 = vmatprep.mubr.bf16.mxu0 %v823
    %3073 = vmatmul.mubr.bf16.gmra.mrb[0].mxu0 %v822
    %v3074 = vpop.f32.mrb[0].mxu0
    %v3075 = vadd.f32 %v2962, %v3074
    %v3076 = vpop.f32.mrb[0].mxu0
    %v3077 = vadd.f32 %v2964, %v3076
    %v3078 = vpop.f32.mrb[0].mxu0
    %v3079 = vadd.f32 %v2966, %v3078
    %v3080 = vpop.f32.mrb[0].mxu0
    %v3081 = vadd.f32 %v2968, %v3080
    %3082 = vmatprep.mubr.bf16.mxu0 %v830
    %3083 = vmatmul.mubr.bf16.gmra.mrb[0].mxu0 %v829
    %v3084 = vpop.f32.mrb[0].mxu0
    %v3085 = vadd.f32 %v2972, %v3084
    %v3086 = vpop.f32.mrb[0].mxu0
    %v3087 = vadd.f32 %v2974, %v3086
    %v3088 = vpop.f32.mrb[0].mxu0
    %v3089 = vadd.f32 %v2976, %v3088
    %v3090 = vpop.f32.mrb[0].mxu0
    %v3091 = vadd.f32 %v2978, %v3090
    %3092 = vdwg.mxu0
    %3093 = vmatprep.subr.bf16.mxu0 %v2315
    %3094 = vmatpush1.bf16.msra.mxu0 %v2314
    %3095 = vmatprep.subr.bf16.mxu0 %v2323
    %3096 = vmatpush1.bf16.msra.mxu0 %v2322
    %3097 = vmatprep.subr.bf16.mxu0 %v2331
    %3098 = vmatpush1.bf16.msra.mxu0 %v2330
    %3099 = vmatprep.subr.bf16.mxu0 %v2339
    %3100 = vmatpush1.bf16.msra.mxu0 %v2338
    %3101 = vmatprep.subr.bf16.mxu0 %v2347
    %3102 = vmatpush1.bf16.msra.mxu0 %v2346
    %3103 = vmatprep.subr.bf16.mxu0 %v2355
    %3104 = vmatpush1.bf16.msra.mxu0 %v2354
    %3105 = vmatprep.subr.bf16.mxu0 %v2363
    %3106 = vmatpush1.bf16.msra.mxu0 %v2362
    %3107 = vmatprep.subr.bf16.mxu0 %v2371
    %3108 = vmatpush1.bf16.msra.mxu0 %v2370
    %3109 = vmatprep.subr.bf16.mxu0 %v2379
    %3110 = vmatpush1.bf16.msra.mxu0 %v2378
    %3111 = vmatprep.subr.bf16.mxu0 %v2387
    %3112 = vmatpush1.bf16.msra.mxu0 %v2386
    %3113 = vmatprep.subr.bf16.mxu0 %v2395
    %3114 = vmatpush1.bf16.msra.mxu0 %v2394
    %3115 = vmatprep.subr.bf16.mxu0 %v2403
    %3116 = vmatpush1.bf16.msra.mxu0 %v2402
    %3117 = vmatprep.subr.bf16.mxu0 %v2411
    %3118 = vmatpush1.bf16.msra.mxu0 %v2410
    %3119 = vmatprep.subr.bf16.mxu0 %v2419
    %3120 = vmatpush1.bf16.msra.mxu0 %v2418
    %3121 = vmatprep.subr.bf16.mxu0 %v2427
    %3122 = vmatpush1.bf16.msra.mxu0 %v2426
    %3123 = vmatprep.subr.bf16.mxu0 %v2435
    %3124 = vmatpush1.bf16.msra.mxu0 %v2434
    %3125 = vmatprep.mubr.bf16.mxu0 %v783
    %3126 = vmatmul.mubr.bf16.gmra.mrb[0].mxu0 %v782
    %v3127 = vpop.f32.mrb[0].mxu0
    %v3128 = vadd.f32 %v3015, %v3127
    %v3129 = vpop.f32.mrb[0].mxu0
    %v3130 = vadd.f32 %v3017, %v3129
    %v3131 = vpop.f32.mrb[0].mxu0
    %v3132 = vadd.f32 %v3019, %v3131
    %v3133 = vpop.f32.mrb[0].mxu0
    %v3134 = vadd.f32 %v3021, %v3133
    %3135 = vmatprep.mubr.bf16.mxu0 %v790
    %3136 = vmatmul.mubr.bf16.gmra.mrb[0].mxu0 %v789
    %v3137 = vpop.f32.mrb[0].mxu0
    %v3138 = vadd.f32 %v3025, %v3137
    %v3139 = vpop.f32.mrb[0].mxu0
    %v3140 = vadd.f32 %v3027, %v3139
    %v3141 = vpop.f32.mrb[0].mxu0
    %v3142 = vadd.f32 %v3029, %v3141
    %v3143 = vpop.f32.mrb[0].mxu0
    %v3144 = vadd.f32 %v3031, %v3143
    %3145 = vmatprep.mubr.bf16.mxu0 %v797
    %3146 = vmatmul.mubr.bf16.gmra.mrb[0].mxu0 %v796
    %v3147 = vpop.f32.mrb[0].mxu0
    %v3148 = vadd.f32 %v3035, %v3147
    %v3149 = vpop.f32.mrb[0].mxu0
    %v3150 = vadd.f32 %v3037, %v3149
    %v3151 = vpop.f32.mrb[0].mxu0
    %v3152 = vadd.f32 %v3039, %v3151
    %v3153 = vpop.f32.mrb[0].mxu0
    %v3154 = vadd.f32 %v3041, %v3153
    %3155 = vmatprep.mubr.bf16.mxu0 %v804
    %3156 = vmatmul.mubr.bf16.gmra.mrb[0].mxu0 %v803
    %v3157 = vpop.f32.mrb[0].mxu0
    %v3158 = vadd.f32 %v3045, %v3157
    %v3159 = vpop.f32.mrb[0].mxu0
    %v3160 = vadd.f32 %v3047, %v3159
    %v3161 = vpop.f32.mrb[0].mxu0
    %v3162 = vadd.f32 %v3049, %v3161
    %v3163 = vpop.f32.mrb[0].mxu0
    %v3164 = vadd.f32 %v3051, %v3163
    %3165 = vmatprep.mubr.bf16.mxu0 %v811
    %3166 = vmatmul.mubr.bf16.gmra.mrb[0].mxu0 %v810
    %v3167 = vpop.f32.mrb[0].mxu0
    %v3168 = vadd.f32 %v3055, %v3167
    %v3169 = vpop.f32.mrb[0].mxu0
    %v3170 = vadd.f32 %v3057, %v3169
    %v3171 = vpop.f32.mrb[0].mxu0
    %v3172 = vadd.f32 %v3059, %v3171
    %v3173 = vpop.f32.mrb[0].mxu0
    %v3174 = vadd.f32 %v3061, %v3173
    %3175 = vmatprep.mubr.bf16.mxu0 %v818
    %3176 = vmatmul.mubr.bf16.gmra.mrb[0].mxu0 %v817
    %v3177 = vpop.f32.mrb[0].mxu0
    %v3178 = vadd.f32 %v3065, %v3177
    %v3179 = vpop.f32.mrb[0].mxu0
    %v3180 = vadd.f32 %v3067, %v3179
    %v3181 = vpop.f32.mrb[0].mxu0
    %v3182 = vadd.f32 %v3069, %v3181
    %v3183 = vpop.f32.mrb[0].mxu0
    %v3184 = vadd.f32 %v3071, %v3183
    %3185 = vmatprep.mubr.bf16.mxu0 %v825
    %3186 = vmatmul.mubr.bf16.gmra.mrb[0].mxu0 %v824
    %v3187 = vpop.f32.mrb[0].mxu0
    %v3188 = vadd.f32 %v3075, %v3187
    %v3189 = vpop.f32.mrb[0].mxu0
    %v3190 = vadd.f32 %v3077, %v3189
    %v3191 = vpop.f32.mrb[0].mxu0
    %v3192 = vadd.f32 %v3079, %v3191
    %v3193 = vpop.f32.mrb[0].mxu0
    %v3194 = vadd.f32 %v3081, %v3193
    %3195 = vmatprep.mubr.bf16.mxu0 %v832
    %3196 = vmatmul.mubr.bf16.gmra.mrb[0].mxu0 %v831
    %v3197 = vpop.f32.mrb[0].mxu0
    %v3198 = vadd.f32 %v3085, %v3197
    %v3199 = vpop.f32.mrb[0].mxu0
    %v3200 = vadd.f32 %v3087, %v3199
    %v3201 = vpop.f32.mrb[0].mxu0
    %v3202 = vadd.f32 %v3089, %v3201
    %v3203 = vpop.f32.mrb[0].mxu0
    %v3204 = vadd.f32 %v3091, %v3203
    %3205 = vdwg.mxu0
    %3206 = vmatprep.subr.bf16.mxu0 %v2443
    %3207 = vmatpush1.bf16.msra.mxu0 %v2442
    %3208 = vmatprep.subr.bf16.mxu0 0
    %3209 = vmatpush1.bf16.msra.mxu0 0
    %3210 = vmatprep.subr.bf16.mxu0 0
    %3211 = vmatpush1.bf16.msra.mxu0 0
    %3212 = vmatprep.subr.bf16.mxu0 0
    %3213 = vmatpush1.bf16.msra.mxu0 0
    %3214 = vmatprep.subr.bf16.mxu0 0
    %3215 = vmatpush1.bf16.msra.mxu0 0
    %3216 = vmatprep.subr.bf16.mxu0 0
    %3217 = vmatpush1.bf16.msra.mxu0 0
    %3218 = vmatprep.subr.bf16.mxu0 0
    %3219 = vmatpush1.bf16.msra.mxu0 0
    %3220 = vmatprep.subr.bf16.mxu0 0
    %3221 = vmatpush1.bf16.msra.mxu0 0
    %3222 = vmatprep.subr.bf16.mxu0 0
    %3223 = vmatpush1.bf16.msra.mxu0 0
    %3224 = vmatprep.subr.bf16.mxu0 0
    %3225 = vmatpush1.bf16.msra.mxu0 0
    %3226 = vmatprep.subr.bf16.mxu0 0
    %3227 = vmatpush1.bf16.msra.mxu0 0
    %3228 = vmatprep.subr.bf16.mxu0 0
    %3229 = vmatpush1.bf16.msra.mxu0 0
    %3230 = vmatprep.subr.bf16.mxu0 0
    %3231 = vmatpush1.bf16.msra.mxu0 0
    %3232 = vmatprep.subr.bf16.mxu0 0
    %3233 = vmatpush1.bf16.msra.mxu0 0
    %3234 = vmatprep.subr.bf16.mxu0 0
    %3235 = vmatpush1.bf16.msra.mxu0 0
    %3236 = vmatprep.subr.bf16.mxu0 0
    %3237 = vmatpush1.bf16.msra.mxu0 0
    %3238 = vmatprep.mubr.bf16.mxu0 0
    %3239 = vmatmul.mubr.bf16.gmra.mrb[0].mxu0 %v2844
    %v3240 = vpop.f32.mrb[0].mxu0
    %v3241 = vadd.f32 %v3128, %v3240
    %v3242 = vpop.f32.mrb[0].mxu0
    %v3243 = vadd.f32 %v3130, %v3242
    %v3244 = vpop.f32.mrb[0].mxu0
    %v3245 = vadd.f32 %v3132, %v3244
    %v3246 = vpop.f32.mrb[0].mxu0
    %v3247 = vadd.f32 %v3134, %v3246
    %3248 = vmatprep.mubr.bf16.mxu0 0
    %3249 = vmatmul.mubr.bf16.gmra.mrb[0].mxu0 %v2847
    %v3250 = vpop.f32.mrb[0].mxu0
    %v3251 = vadd.f32 %v3138, %v3250
    %v3252 = vpop.f32.mrb[0].mxu0
    %v3253 = vadd.f32 %v3140, %v3252
    %v3254 = vpop.f32.mrb[0].mxu0
    %v3255 = vadd.f32 %v3142, %v3254
    %v3256 = vpop.f32.mrb[0].mxu0
    %v3257 = vadd.f32 %v3144, %v3256
    %3258 = vmatprep.mubr.bf16.mxu0 0
    %3259 = vmatmul.mubr.bf16.gmra.mrb[0].mxu0 %v2850
    %v3260 = vpop.f32.mrb[0].mxu0
    %v3261 = vadd.f32 %v3148, %v3260
    %v3262 = vpop.f32.mrb[0].mxu0
    %v3263 = vadd.f32 %v3150, %v3262
    %v3264 = vpop.f32.mrb[0].mxu0
    %v3265 = vadd.f32 %v3152, %v3264
    %v3266 = vpop.f32.mrb[0].mxu0
    %v3267 = vadd.f32 %v3154, %v3266
    %3268 = vmatprep.mubr.bf16.mxu0 0
    %3269 = vmatmul.mubr.bf16.gmra.mrb[0].mxu0 %v2853
    %v3270 = vpop.f32.mrb[0].mxu0
    %v3271 = vadd.f32 %v3158, %v3270
    %v3272 = vpop.f32.mrb[0].mxu0
    %v3273 = vadd.f32 %v3160, %v3272
    %v3274 = vpop.f32.mrb[0].mxu0
    %v3275 = vadd.f32 %v3162, %v3274
    %v3276 = vpop.f32.mrb[0].mxu0
    %v3277 = vadd.f32 %v3164, %v3276
    %3278 = vmatprep.mubr.bf16.mxu0 0
    %3279 = vmatmul.mubr.bf16.gmra.mrb[0].mxu0 %v2856
    %v3280 = vpop.f32.mrb[0].mxu0
    %v3281 = vadd.f32 %v3168, %v3280
    %v3282 = vpop.f32.mrb[0].mxu0
    %v3283 = vadd.f32 %v3170, %v3282
    %v3284 = vpop.f32.mrb[0].mxu0
    %v3285 = vadd.f32 %v3172, %v3284
    %v3286 = vpop.f32.mrb[0].mxu0
    %v3287 = vadd.f32 %v3174, %v3286
    %3288 = vmatprep.mubr.bf16.mxu0 0
    %3289 = vmatmul.mubr.bf16.gmra.mrb[0].mxu0 %v2859
    %v3290 = vpop.f32.mrb[0].mxu0
    %v3291 = vadd.f32 %v3178, %v3290
    %v3292 = vpop.f32.mrb[0].mxu0
    %v3293 = vadd.f32 %v3180, %v3292
    %v3294 = vpop.f32.mrb[0].mxu0
    %v3295 = vadd.f32 %v3182, %v3294
    %v3296 = vpop.f32.mrb[0].mxu0
    %v3297 = vadd.f32 %v3184, %v3296
    %3298 = vmatprep.mubr.bf16.mxu0 0
    %3299 = vmatmul.mubr.bf16.gmra.mrb[0].mxu0 %v2862
    %v3300 = vpop.f32.mrb[0].mxu0
    %v3301 = vadd.f32 %v3188, %v3300
    %v3302 = vpop.f32.mrb[0].mxu0
    %v3303 = vadd.f32 %v3190, %v3302
    %v3304 = vpop.f32.mrb[0].mxu0
    %v3305 = vadd.f32 %v3192, %v3304
    %v3306 = vpop.f32.mrb[0].mxu0
    %v3307 = vadd.f32 %v3194, %v3306
    %3308 = vmatprep.mubr.bf16.mxu0 0
    %3309 = vmatmul.mubr.bf16.gmra.mrb[0].mxu0 %v2865
    %v3310 = vpop.f32.mrb[0].mxu0
    %v3311 = vadd.f32 %v3198, %v3310
    %v3312 = vpop.f32.mrb[0].mxu0
    %v3313 = vadd.f32 %v3200, %v3312
    %v3314 = vpop.f32.mrb[0].mxu0
    %v3315 = vadd.f32 %v3202, %v3314
    %v3316 = vpop.f32.mrb[0].mxu0
    %v3317 = vadd.f32 %v3204, %v3316
    %3318 = vdwg.mxu0
    %3319 = vmatprep.subr.bf16.mxu0 %v2061
    %3320 = vmatpush1.bf16.msra.mxu0 %v2060
    %3321 = vmatprep.subr.bf16.mxu0 %v2069
    %3322 = vmatpush1.bf16.msra.mxu0 %v2068
    %3323 = vmatprep.subr.bf16.mxu0 %v2077
    %3324 = vmatpush1.bf16.msra.mxu0 %v2076
    %3325 = vmatprep.subr.bf16.mxu0 %v2085
    %3326 = vmatpush1.bf16.msra.mxu0 %v2084
    %3327 = vmatprep.subr.bf16.mxu0 %v2093
    %3328 = vmatpush1.bf16.msra.mxu0 %v2092
    %3329 = vmatprep.subr.bf16.mxu0 %v2101
    %3330 = vmatpush1.bf16.msra.mxu0 %v2100
    %3331 = vmatprep.subr.bf16.mxu0 %v2109
    %3332 = vmatpush1.bf16.msra.mxu0 %v2108
    %3333 = vmatprep.subr.bf16.mxu0 %v2117
    %3334 = vmatpush1.bf16.msra.mxu0 %v2116
    %3335 = vmatprep.subr.bf16.mxu0 %v2125
    %3336 = vmatpush1.bf16.msra.mxu0 %v2124
    %3337 = vmatprep.subr.bf16.mxu0 %v2133
    %3338 = vmatpush1.bf16.msra.mxu0 %v2132
    %3339 = vmatprep.subr.bf16.mxu0 %v2141
    %3340 = vmatpush1.bf16.msra.mxu0 %v2140
    %3341 = vmatprep.subr.bf16.mxu0 %v2149
    %3342 = vmatpush1.bf16.msra.mxu0 %v2148
    %3343 = vmatprep.subr.bf16.mxu0 %v2157
    %3344 = vmatpush1.bf16.msra.mxu0 %v2156
    %3345 = vmatprep.subr.bf16.mxu0 %v2165
    %3346 = vmatpush1.bf16.msra.mxu0 %v2164
    %3347 = vmatprep.subr.bf16.mxu0 %v2173
    %3348 = vmatpush1.bf16.msra.mxu0 %v2172
    %3349 = vmatprep.subr.bf16.mxu0 %v2181
    %3350 = vmatpush1.bf16.msra.mxu0 %v2180
    %3351 = vmatprep.mubr.bf16.mxu0 %v779
    %3352 = vmatmul.mubr.bf16.gmra.mrb[0].mxu0 %v778
    %v3353 = vpop.f32.mrb[0].mxu0
    %v3354 = vadd.f32 %v573, %v3353
    %v3355 = vpop.f32.mrb[0].mxu0
    %v3356 = vadd.f32 %v577, %v3355
    %v3357 = vpop.f32.mrb[0].mxu0
    %v3358 = vadd.f32 %v573, %v3357
    %v3359 = vpop.f32.mrb[0].mxu0
    %v3360 = vadd.f32 %v577, %v3359
    %3361 = vmatprep.mubr.bf16.mxu0 %v786
    %3362 = vmatmul.mubr.bf16.gmra.mrb[0].mxu0 %v785
    %v3363 = vpop.f32.mrb[0].mxu0
    %v3364 = vadd.f32 %v573, %v3363
    %v3365 = vpop.f32.mrb[0].mxu0
    %v3366 = vadd.f32 %v577, %v3365
    %v3367 = vpop.f32.mrb[0].mxu0
    %v3368 = vadd.f32 %v573, %v3367
    %v3369 = vpop.f32.mrb[0].mxu0
    %v3370 = vadd.f32 %v577, %v3369
    %3371 = vmatprep.mubr.bf16.mxu0 %v793
    %3372 = vmatmul.mubr.bf16.gmra.mrb[0].mxu0 %v792
    %v3373 = vpop.f32.mrb[0].mxu0
    %v3374 = vadd.f32 %v573, %v3373
    %v3375 = vpop.f32.mrb[0].mxu0
    %v3376 = vadd.f32 %v577, %v3375
    %v3377 = vpop.f32.mrb[0].mxu0
    %v3378 = vadd.f32 %v573, %v3377
    %v3379 = vpop.f32.mrb[0].mxu0
    %v3380 = vadd.f32 %v577, %v3379
    %3381 = vmatprep.mubr.bf16.mxu0 %v800
    %3382 = vmatmul.mubr.bf16.gmra.mrb[0].mxu0 %v799
    %v3383 = vpop.f32.mrb[0].mxu0
    %v3384 = vadd.f32 %v573, %v3383
    %v3385 = vpop.f32.mrb[0].mxu0
    %v3386 = vadd.f32 %v577, %v3385
    %v3387 = vpop.f32.mrb[0].mxu0
    %v3388 = vadd.f32 %v573, %v3387
    %v3389 = vpop.f32.mrb[0].mxu0
    %v3390 = vadd.f32 %v577, %v3389
    %3391 = vmatprep.mubr.bf16.mxu0 %v807
    %3392 = vmatmul.mubr.bf16.gmra.mrb[0].mxu0 %v806
    %v3393 = vpop.f32.mrb[0].mxu0
    %v3394 = vadd.f32 %v573, %v3393
    %v3395 = vpop.f32.mrb[0].mxu0
    %v3396 = vadd.f32 %v577, %v3395
    %v3397 = vpop.f32.mrb[0].mxu0
    %v3398 = vadd.f32 %v573, %v3397
    %v3399 = vpop.f32.mrb[0].mxu0
    %v3400 = vadd.f32 %v577, %v3399
    %3401 = vmatprep.mubr.bf16.mxu0 %v814
    %3402 = vmatmul.mubr.bf16.gmra.mrb[0].mxu0 %v813
    %v3403 = vpop.f32.mrb[0].mxu0
    %v3404 = vadd.f32 %v573, %v3403
    %v3405 = vpop.f32.mrb[0].mxu0
    %v3406 = vadd.f32 %v577, %v3405
    %v3407 = vpop.f32.mrb[0].mxu0
    %v3408 = vadd.f32 %v573, %v3407
    %v3409 = vpop.f32.mrb[0].mxu0
    %v3410 = vadd.f32 %v577, %v3409
    %3411 = vmatprep.mubr.bf16.mxu0 %v821
    %3412 = vmatmul.mubr.bf16.gmra.mrb[0].mxu0 %v820
    %v3413 = vpop.f32.mrb[0].mxu0
    %v3414 = vadd.f32 %v573, %v3413
    %v3415 = vpop.f32.mrb[0].mxu0
    %v3416 = vadd.f32 %v577, %v3415
    %v3417 = vpop.f32.mrb[0].mxu0
    %v3418 = vadd.f32 %v573, %v3417
    %v3419 = vpop.f32.mrb[0].mxu0
    %v3420 = vadd.f32 %v577, %v3419
    %3421 = vmatprep.mubr.bf16.mxu0 %v828
    %3422 = vmatmul.mubr.bf16.gmra.mrb[0].mxu0 %v827
    %v3423 = vpop.f32.mrb[0].mxu0
    %v3424 = vadd.f32 %v573, %v3423
    %v3425 = vpop.f32.mrb[0].mxu0
    %v3426 = vadd.f32 %v577, %v3425
    %v3427 = vpop.f32.mrb[0].mxu0
    %v3428 = vadd.f32 %v573, %v3427
    %v3429 = vpop.f32.mrb[0].mxu0
    %v3430 = vadd.f32 %v577, %v3429
    %3431 = vdwg.mxu0
    %3432 = vmatprep.subr.bf16.mxu0 %v2189
    %3433 = vmatpush1.bf16.msra.mxu0 %v2188
    %3434 = vmatprep.subr.bf16.mxu0 %v2197
    %3435 = vmatpush1.bf16.msra.mxu0 %v2196
    %3436 = vmatprep.subr.bf16.mxu0 %v2205
    %3437 = vmatpush1.bf16.msra.mxu0 %v2204
    %3438 = vmatprep.subr.bf16.mxu0 %v2213
    %3439 = vmatpush1.bf16.msra.mxu0 %v2212
    %3440 = vmatprep.subr.bf16.mxu0 %v2221
    %3441 = vmatpush1.bf16.msra.mxu0 %v2220
    %3442 = vmatprep.subr.bf16.mxu0 %v2229
    %3443 = vmatpush1.bf16.msra.mxu0 %v2228
    %3444 = vmatprep.subr.bf16.mxu0 %v2237
    %3445 = vmatpush1.bf16.msra.mxu0 %v2236
    %3446 = vmatprep.subr.bf16.mxu0 %v2245
    %3447 = vmatpush1.bf16.msra.mxu0 %v2244
    %3448 = vmatprep.subr.bf16.mxu0 %v2253
    %3449 = vmatpush1.bf16.msra.mxu0 %v2252
    %3450 = vmatprep.subr.bf16.mxu0 %v2261
    %3451 = vmatpush1.bf16.msra.mxu0 %v2260
    %3452 = vmatprep.subr.bf16.mxu0 %v2269
    %3453 = vmatpush1.bf16.msra.mxu0 %v2268
    %3454 = vmatprep.subr.bf16.mxu0 %v2277
    %3455 = vmatpush1.bf16.msra.mxu0 %v2276
    %3456 = vmatprep.subr.bf16.mxu0 %v2285
    %3457 = vmatpush1.bf16.msra.mxu0 %v2284
    %3458 = vmatprep.subr.bf16.mxu0 %v2293
    %3459 = vmatpush1.bf16.msra.mxu0 %v2292
    %3460 = vmatprep.subr.bf16.mxu0 %v2301
    %3461 = vmatpush1.bf16.msra.mxu0 %v2300
    %3462 = vmatprep.subr.bf16.mxu0 %v2309
    %3463 = vmatpush1.bf16.msra.mxu0 %v2308
    %3464 = vmatprep.mubr.bf16.mxu0 %v781
    %3465 = vmatmul.mubr.bf16.gmra.mrb[0].mxu0 %v780
    %v3466 = vpop.f32.mrb[0].mxu0
    %v3467 = vadd.f32 %v3354, %v3466
    %v3468 = vpop.f32.mrb[0].mxu0
    %v3469 = vadd.f32 %v3356, %v3468
    %v3470 = vpop.f32.mrb[0].mxu0
    %v3471 = vadd.f32 %v3358, %v3470
    %v3472 = vpop.f32.mrb[0].mxu0
    %v3473 = vadd.f32 %v3360, %v3472
    %3474 = vmatprep.mubr.bf16.mxu0 %v788
    %3475 = vmatmul.mubr.bf16.gmra.mrb[0].mxu0 %v787
    %v3476 = vpop.f32.mrb[0].mxu0
    %v3477 = vadd.f32 %v3364, %v3476
    %v3478 = vpop.f32.mrb[0].mxu0
    %v3479 = vadd.f32 %v3366, %v3478
    %v3480 = vpop.f32.mrb[0].mxu0
    %v3481 = vadd.f32 %v3368, %v3480
    %v3482 = vpop.f32.mrb[0].mxu0
    %v3483 = vadd.f32 %v3370, %v3482
    %3484 = vmatprep.mubr.bf16.mxu0 %v795
    %3485 = vmatmul.mubr.bf16.gmra.mrb[0].mxu0 %v794
    %v3486 = vpop.f32.mrb[0].mxu0
    %v3487 = vadd.f32 %v3374, %v3486
    %v3488 = vpop.f32.mrb[0].mxu0
    %v3489 = vadd.f32 %v3376, %v3488
    %v3490 = vpop.f32.mrb[0].mxu0
    %v3491 = vadd.f32 %v3378, %v3490
    %v3492 = vpop.f32.mrb[0].mxu0
    %v3493 = vadd.f32 %v3380, %v3492
    %3494 = vmatprep.mubr.bf16.mxu0 %v802
    %3495 = vmatmul.mubr.bf16.gmra.mrb[0].mxu0 %v801
    %v3496 = vpop.f32.mrb[0].mxu0
    %v3497 = vadd.f32 %v3384, %v3496
    %v3498 = vpop.f32.mrb[0].mxu0
    %v3499 = vadd.f32 %v3386, %v3498
    %v3500 = vpop.f32.mrb[0].mxu0
    %v3501 = vadd.f32 %v3388, %v3500
    %v3502 = vpop.f32.mrb[0].mxu0
    %v3503 = vadd.f32 %v3390, %v3502
    %3504 = vmatprep.mubr.bf16.mxu0 %v809
    %3505 = vmatmul.mubr.bf16.gmra.mrb[0].mxu0 %v808
    %v3506 = vpop.f32.mrb[0].mxu0
    %v3507 = vadd.f32 %v3394, %v3506
    %v3508 = vpop.f32.mrb[0].mxu0
    %v3509 = vadd.f32 %v3396, %v3508
    %v3510 = vpop.f32.mrb[0].mxu0
    %v3511 = vadd.f32 %v3398, %v3510
    %v3512 = vpop.f32.mrb[0].mxu0
    %v3513 = vadd.f32 %v3400, %v3512
    %3514 = vmatprep.mubr.bf16.mxu0 %v816
    %3515 = vmatmul.mubr.bf16.gmra.mrb[0].mxu0 %v815
    %v3516 = vpop.f32.mrb[0].mxu0
    %v3517 = vadd.f32 %v3404, %v3516
    %v3518 = vpop.f32.mrb[0].mxu0
    %v3519 = vadd.f32 %v3406, %v3518
    %v3520 = vpop.f32.mrb[0].mxu0
    %v3521 = vadd.f32 %v3408, %v3520
    %v3522 = vpop.f32.mrb[0].mxu0
    %v3523 = vadd.f32 %v3410, %v3522
    %3524 = vmatprep.mubr.bf16.mxu0 %v823
    %3525 = vmatmul.mubr.bf16.gmra.mrb[0].mxu0 %v822
    %v3526 = vpop.f32.mrb[0].mxu0
    %v3527 = vadd.f32 %v3414, %v3526
    %v3528 = vpop.f32.mrb[0].mxu0
    %v3529 = vadd.f32 %v3416, %v3528
    %v3530 = vpop.f32.mrb[0].mxu0
    %v3531 = vadd.f32 %v3418, %v3530
    %v3532 = vpop.f32.mrb[0].mxu0
    %v3533 = vadd.f32 %v3420, %v3532
    %3534 = vmatprep.mubr.bf16.mxu0 %v830
    %3535 = vmatmul.mubr.bf16.gmra.mrb[0].mxu0 %v829
    %v3536 = vpop.f32.mrb[0].mxu0
    %v3537 = vadd.f32 %v3424, %v3536
    %v3538 = vpop.f32.mrb[0].mxu0
    %v3539 = vadd.f32 %v3426, %v3538
    %v3540 = vpop.f32.mrb[0].mxu0
    %v3541 = vadd.f32 %v3428, %v3540
    %v3542 = vpop.f32.mrb[0].mxu0
    %v3543 = vadd.f32 %v3430, %v3542
    %3544 = vdwg.mxu0
    %3545 = vmatprep.subr.bf16.mxu0 %v2317
    %3546 = vmatpush1.bf16.msra.mxu0 %v2316
    %3547 = vmatprep.subr.bf16.mxu0 %v2325
    %3548 = vmatpush1.bf16.msra.mxu0 %v2324
    %3549 = vmatprep.subr.bf16.mxu0 %v2333
    %3550 = vmatpush1.bf16.msra.mxu0 %v2332
    %3551 = vmatprep.subr.bf16.mxu0 %v2341
    %3552 = vmatpush1.bf16.msra.mxu0 %v2340
    %3553 = vmatprep.subr.bf16.mxu0 %v2349
    %3554 = vmatpush1.bf16.msra.mxu0 %v2348
    %3555 = vmatprep.subr.bf16.mxu0 %v2357
    %3556 = vmatpush1.bf16.msra.mxu0 %v2356
    %3557 = vmatprep.subr.bf16.mxu0 %v2365
    %3558 = vmatpush1.bf16.msra.mxu0 %v2364
    %3559 = vmatprep.subr.bf16.mxu0 %v2373
    %3560 = vmatpush1.bf16.msra.mxu0 %v2372
    %3561 = vmatprep.subr.bf16.mxu0 %v2381
    %3562 = vmatpush1.bf16.msra.mxu0 %v2380
    %3563 = vmatprep.subr.bf16.mxu0 %v2389
    %3564 = vmatpush1.bf16.msra.mxu0 %v2388
    %3565 = vmatprep.subr.bf16.mxu0 %v2397
    %3566 = vmatpush1.bf16.msra.mxu0 %v2396
    %3567 = vmatprep.subr.bf16.mxu0 %v2405
    %3568 = vmatpush1.bf16.msra.mxu0 %v2404
    %3569 = vmatprep.subr.bf16.mxu0 %v2413
    %3570 = vmatpush1.bf16.msra.mxu0 %v2412
    %3571 = vmatprep.subr.bf16.mxu0 %v2421
    %3572 = vmatpush1.bf16.msra.mxu0 %v2420
    %3573 = vmatprep.subr.bf16.mxu0 %v2429
    %3574 = vmatpush1.bf16.msra.mxu0 %v2428
    %3575 = vmatprep.subr.bf16.mxu0 %v2437
    %3576 = vmatpush1.bf16.msra.mxu0 %v2436
    %3577 = vmatprep.mubr.bf16.mxu0 %v783
    %3578 = vmatmul.mubr.bf16.gmra.mrb[0].mxu0 %v782
    %v3579 = vpop.f32.mrb[0].mxu0
    %v3580 = vadd.f32 %v3467, %v3579
    %v3581 = vpop.f32.mrb[0].mxu0
    %v3582 = vadd.f32 %v3469, %v3581
    %v3583 = vpop.f32.mrb[0].mxu0
    %v3584 = vadd.f32 %v3471, %v3583
    %v3585 = vpop.f32.mrb[0].mxu0
    %v3586 = vadd.f32 %v3473, %v3585
    %3587 = vmatprep.mubr.bf16.mxu0 %v790
    %3588 = vmatmul.mubr.bf16.gmra.mrb[0].mxu0 %v789
    %v3589 = vpop.f32.mrb[0].mxu0
    %v3590 = vadd.f32 %v3477, %v3589
    %v3591 = vpop.f32.mrb[0].mxu0
    %v3592 = vadd.f32 %v3479, %v3591
    %v3593 = vpop.f32.mrb[0].mxu0
    %v3594 = vadd.f32 %v3481, %v3593
    %v3595 = vpop.f32.mrb[0].mxu0
    %v3596 = vadd.f32 %v3483, %v3595
    %3597 = vmatprep.mubr.bf16.mxu0 %v797
    %3598 = vmatmul.mubr.bf16.gmra.mrb[0].mxu0 %v796
    %v3599 = vpop.f32.mrb[0].mxu0
    %v3600 = vadd.f32 %v3487, %v3599
    %v3601 = vpop.f32.mrb[0].mxu0
    %v3602 = vadd.f32 %v3489, %v3601
    %v3603 = vpop.f32.mrb[0].mxu0
    %v3604 = vadd.f32 %v3491, %v3603
    %v3605 = vpop.f32.mrb[0].mxu0
    %v3606 = vadd.f32 %v3493, %v3605
    %3607 = vmatprep.mubr.bf16.mxu0 %v804
    %3608 = vmatmul.mubr.bf16.gmra.mrb[0].mxu0 %v803
    %v3609 = vpop.f32.mrb[0].mxu0
    %v3610 = vadd.f32 %v3497, %v3609
    %v3611 = vpop.f32.mrb[0].mxu0
    %v3612 = vadd.f32 %v3499, %v3611
    %v3613 = vpop.f32.mrb[0].mxu0
    %v3614 = vadd.f32 %v3501, %v3613
    %v3615 = vpop.f32.mrb[0].mxu0
    %v3616 = vadd.f32 %v3503, %v3615
    %3617 = vmatprep.mubr.bf16.mxu0 %v811
    %3618 = vmatmul.mubr.bf16.gmra.mrb[0].mxu0 %v810
    %v3619 = vpop.f32.mrb[0].mxu0
    %v3620 = vadd.f32 %v3507, %v3619
    %v3621 = vpop.f32.mrb[0].mxu0
    %v3622 = vadd.f32 %v3509, %v3621
    %v3623 = vpop.f32.mrb[0].mxu0
    %v3624 = vadd.f32 %v3511, %v3623
    %v3625 = vpop.f32.mrb[0].mxu0
    %v3626 = vadd.f32 %v3513, %v3625
    %3627 = vmatprep.mubr.bf16.mxu0 %v818
    %3628 = vmatmul.mubr.bf16.gmra.mrb[0].mxu0 %v817
    %v3629 = vpop.f32.mrb[0].mxu0
    %v3630 = vadd.f32 %v3517, %v3629
    %v3631 = vpop.f32.mrb[0].mxu0
    %v3632 = vadd.f32 %v3519, %v3631
    %v3633 = vpop.f32.mrb[0].mxu0
    %v3634 = vadd.f32 %v3521, %v3633
    %v3635 = vpop.f32.mrb[0].mxu0
    %v3636 = vadd.f32 %v3523, %v3635
    %3637 = vmatprep.mubr.bf16.mxu0 %v825
    %3638 = vmatmul.mubr.bf16.gmra.mrb[0].mxu0 %v824
    %v3639 = vpop.f32.mrb[0].mxu0
    %v3640 = vadd.f32 %v3527, %v3639
    %v3641 = vpop.f32.mrb[0].mxu0
    %v3642 = vadd.f32 %v3529, %v3641
    %v3643 = vpop.f32.mrb[0].mxu0
    %v3644 = vadd.f32 %v3531, %v3643
    %v3645 = vpop.f32.mrb[0].mxu0
    %v3646 = vadd.f32 %v3533, %v3645
    %3647 = vmatprep.mubr.bf16.mxu0 %v832
    %3648 = vmatmul.mubr.bf16.gmra.mrb[0].mxu0 %v831
    %v3649 = vpop.f32.mrb[0].mxu0
    %v3650 = vadd.f32 %v3537, %v3649
    %v3651 = vpop.f32.mrb[0].mxu0
    %v3652 = vadd.f32 %v3539, %v3651
    %v3653 = vpop.f32.mrb[0].mxu0
    %v3654 = vadd.f32 %v3541, %v3653
    %v3655 = vpop.f32.mrb[0].mxu0
    %v3656 = vadd.f32 %v3543, %v3655
    %3657 = vdwg.mxu0
    %3658 = vmatprep.subr.bf16.mxu0 %v2445
    %3659 = vmatpush1.bf16.msra.mxu0 %v2444
    %3660 = vmatprep.subr.bf16.mxu0 0
    %3661 = vmatpush1.bf16.msra.mxu0 0
    %3662 = vmatprep.subr.bf16.mxu0 0
    %3663 = vmatpush1.bf16.msra.mxu0 0
    %3664 = vmatprep.subr.bf16.mxu0 0
    %3665 = vmatpush1.bf16.msra.mxu0 0
    %3666 = vmatprep.subr.bf16.mxu0 0
    %3667 = vmatpush1.bf16.msra.mxu0 0
    %3668 = vmatprep.subr.bf16.mxu0 0
    %3669 = vmatpush1.bf16.msra.mxu0 0
    %3670 = vmatprep.subr.bf16.mxu0 0
    %3671 = vmatpush1.bf16.msra.mxu0 0
    %3672 = vmatprep.subr.bf16.mxu0 0
    %3673 = vmatpush1.bf16.msra.mxu0 0
    %3674 = vmatprep.subr.bf16.mxu0 0
    %3675 = vmatpush1.bf16.msra.mxu0 0
    %3676 = vmatprep.subr.bf16.mxu0 0
    %3677 = vmatpush1.bf16.msra.mxu0 0
    %3678 = vmatprep.subr.bf16.mxu0 0
    %3679 = vmatpush1.bf16.msra.mxu0 0
    %3680 = vmatprep.subr.bf16.mxu0 0
    %3681 = vmatpush1.bf16.msra.mxu0 0
    %3682 = vmatprep.subr.bf16.mxu0 0
    %3683 = vmatpush1.bf16.msra.mxu0 0
    %3684 = vmatprep.subr.bf16.mxu0 0
    %3685 = vmatpush1.bf16.msra.mxu0 0
    %3686 = vmatprep.subr.bf16.mxu0 0
    %3687 = vmatpush1.bf16.msra.mxu0 0
    %3688 = vmatprep.subr.bf16.mxu0 0
    %3689 = vmatpush1.bf16.msra.mxu0 0
    %3690 = vmatprep.mubr.bf16.mxu0 0
    %3691 = vmatmul.mubr.bf16.gmra.mrb[0].mxu0 %v2844
    %v3692 = vpop.f32.mrb[0].mxu0
    %v3693 = vadd.f32 %v3580, %v3692
    %v3694 = vpop.f32.mrb[0].mxu0
    %v3695 = vadd.f32 %v3582, %v3694
    %v3696 = vpop.f32.mrb[0].mxu0
    %v3697 = vadd.f32 %v3584, %v3696
    %v3698 = vpop.f32.mrb[0].mxu0
    %v3699 = vadd.f32 %v3586, %v3698
    %3700 = vmatprep.mubr.bf16.mxu0 0
    %3701 = vmatmul.mubr.bf16.gmra.mrb[0].mxu0 %v2847
    %v3702 = vpop.f32.mrb[0].mxu0
    %v3703 = vadd.f32 %v3590, %v3702
    %v3704 = vpop.f32.mrb[0].mxu0
    %v3705 = vadd.f32 %v3592, %v3704
    %v3706 = vpop.f32.mrb[0].mxu0
    %v3707 = vadd.f32 %v3594, %v3706
    %v3708 = vpop.f32.mrb[0].mxu0
    %v3709 = vadd.f32 %v3596, %v3708
    %3710 = vmatprep.mubr.bf16.mxu0 0
    %3711 = vmatmul.mubr.bf16.gmra.mrb[0].mxu0 %v2850
    %v3712 = vpop.f32.mrb[0].mxu0
    %v3713 = vadd.f32 %v3600, %v3712
    %v3714 = vpop.f32.mrb[0].mxu0
    %v3715 = vadd.f32 %v3602, %v3714
    %v3716 = vpop.f32.mrb[0].mxu0
    %v3717 = vadd.f32 %v3604, %v3716
    %v3718 = vpop.f32.mrb[0].mxu0
    %v3719 = vadd.f32 %v3606, %v3718
    %3720 = vmatprep.mubr.bf16.mxu0 0
    %3721 = vmatmul.mubr.bf16.gmra.mrb[0].mxu0 %v2853
    %v3722 = vpop.f32.mrb[0].mxu0
    %v3723 = vadd.f32 %v3610, %v3722
    %v3724 = vpop.f32.mrb[0].mxu0
    %v3725 = vadd.f32 %v3612, %v3724
    %v3726 = vpop.f32.mrb[0].mxu0
    %v3727 = vadd.f32 %v3614, %v3726
    %v3728 = vpop.f32.mrb[0].mxu0
    %v3729 = vadd.f32 %v3616, %v3728
    %3730 = vmatprep.mubr.bf16.mxu0 0
    %3731 = vmatmul.mubr.bf16.gmra.mrb[0].mxu0 %v2856
    %v3732 = vpop.f32.mrb[0].mxu0
    %v3733 = vadd.f32 %v3620, %v3732
    %v3734 = vpop.f32.mrb[0].mxu0
    %v3735 = vadd.f32 %v3622, %v3734
    %v3736 = vpop.f32.mrb[0].mxu0
    %v3737 = vadd.f32 %v3624, %v3736
    %v3738 = vpop.f32.mrb[0].mxu0
    %v3739 = vadd.f32 %v3626, %v3738
    %3740 = vmatprep.mubr.bf16.mxu0 0
    %3741 = vmatmul.mubr.bf16.gmra.mrb[0].mxu0 %v2859
    %v3742 = vpop.f32.mrb[0].mxu0
    %v3743 = vadd.f32 %v3630, %v3742
    %v3744 = vpop.f32.mrb[0].mxu0
    %v3745 = vadd.f32 %v3632, %v3744
    %v3746 = vpop.f32.mrb[0].mxu0
    %v3747 = vadd.f32 %v3634, %v3746
    %v3748 = vpop.f32.mrb[0].mxu0
    %v3749 = vadd.f32 %v3636, %v3748
    %3750 = vmatprep.mubr.bf16.mxu0 0
    %3751 = vmatmul.mubr.bf16.gmra.mrb[0].mxu0 %v2862
    %v3752 = vpop.f32.mrb[0].mxu0
    %v3753 = vadd.f32 %v3640, %v3752
    %v3754 = vpop.f32.mrb[0].mxu0
    %v3755 = vadd.f32 %v3642, %v3754
    %v3756 = vpop.f32.mrb[0].mxu0
    %v3757 = vadd.f32 %v3644, %v3756
    %v3758 = vpop.f32.mrb[0].mxu0
    %v3759 = vadd.f32 %v3646, %v3758
    %3760 = vmatprep.mubr.bf16.mxu0 0
    %3761 = vmatmul.mubr.bf16.gmra.mrb[0].mxu0 %v2865
    %v3762 = vpop.f32.mrb[0].mxu0
    %v3763 = vadd.f32 %v3650, %v3762
    %v3764 = vpop.f32.mrb[0].mxu0
    %v3765 = vadd.f32 %v3652, %v3764
    %v3766 = vpop.f32.mrb[0].mxu0
    %v3767 = vadd.f32 %v3654, %v3766
    %v3768 = vpop.f32.mrb[0].mxu0
    %v3769 = vadd.f32 %v3656, %v3768
    %3770 = vdwg.mxu0
    %3771 = vmatprep.subr.bf16.mxu0 %v2063
    %3772 = vmatpush1.bf16.msra.mxu0 %v2062
    %3773 = vmatprep.subr.bf16.mxu0 %v2071
    %3774 = vmatpush1.bf16.msra.mxu0 %v2070
    %3775 = vmatprep.subr.bf16.mxu0 %v2079
    %3776 = vmatpush1.bf16.msra.mxu0 %v2078
    %3777 = vmatprep.subr.bf16.mxu0 %v2087
    %3778 = vmatpush1.bf16.msra.mxu0 %v2086
    %3779 = vmatprep.subr.bf16.mxu0 %v2095
    %3780 = vmatpush1.bf16.msra.mxu0 %v2094
    %3781 = vmatprep.subr.bf16.mxu0 %v2103
    %3782 = vmatpush1.bf16.msra.mxu0 %v2102
    %3783 = vmatprep.subr.bf16.mxu0 %v2111
    %3784 = vmatpush1.bf16.msra.mxu0 %v2110
    %3785 = vmatprep.subr.bf16.mxu0 %v2119
    %3786 = vmatpush1.bf16.msra.mxu0 %v2118
    %3787 = vmatprep.subr.bf16.mxu0 %v2127
    %3788 = vmatpush1.bf16.msra.mxu0 %v2126
    %3789 = vmatprep.subr.bf16.mxu0 %v2135
    %3790 = vmatpush1.bf16.msra.mxu0 %v2134
    %3791 = vmatprep.subr.bf16.mxu0 %v2143
    %3792 = vmatpush1.bf16.msra.mxu0 %v2142
    %3793 = vmatprep.subr.bf16.mxu0 %v2151
    %3794 = vmatpush1.bf16.msra.mxu0 %v2150
    %3795 = vmatprep.subr.bf16.mxu0 %v2159
    %3796 = vmatpush1.bf16.msra.mxu0 %v2158
    %3797 = vmatprep.subr.bf16.mxu0 %v2167
    %3798 = vmatpush1.bf16.msra.mxu0 %v2166
    %3799 = vmatprep.subr.bf16.mxu0 %v2175
    %3800 = vmatpush1.bf16.msra.mxu0 %v2174
    %3801 = vmatprep.subr.bf16.mxu0 %v2183
    %3802 = vmatpush1.bf16.msra.mxu0 %v2182
    %3803 = vmatprep.mubr.bf16.mxu0 %v779
    %3804 = vmatmul.mubr.bf16.gmra.mrb[0].mxu0 %v778
    %v3805 = vpop.f32.mrb[0].mxu0
    %v3806 = vadd.f32 %v581, %v3805
    %v3807 = vpop.f32.mrb[0].mxu0
    %v3808 = vadd.f32 %v585, %v3807
    %v3809 = vpop.f32.mrb[0].mxu0
    %v3810 = vadd.f32 %v581, %v3809
    %v3811 = vpop.f32.mrb[0].mxu0
    %v3812 = vadd.f32 %v585, %v3811
    %3813 = vmatprep.mubr.bf16.mxu0 %v786
    %3814 = vmatmul.mubr.bf16.gmra.mrb[0].mxu0 %v785
    %v3815 = vpop.f32.mrb[0].mxu0
    %v3816 = vadd.f32 %v581, %v3815
    %v3817 = vpop.f32.mrb[0].mxu0
    %v3818 = vadd.f32 %v585, %v3817
    %v3819 = vpop.f32.mrb[0].mxu0
    %v3820 = vadd.f32 %v581, %v3819
    %v3821 = vpop.f32.mrb[0].mxu0
    %v3822 = vadd.f32 %v585, %v3821
    %3823 = vmatprep.mubr.bf16.mxu0 %v793
    %3824 = vmatmul.mubr.bf16.gmra.mrb[0].mxu0 %v792
    %v3825 = vpop.f32.mrb[0].mxu0
    %v3826 = vadd.f32 %v581, %v3825
    %v3827 = vpop.f32.mrb[0].mxu0
    %v3828 = vadd.f32 %v585, %v3827
    %v3829 = vpop.f32.mrb[0].mxu0
    %v3830 = vadd.f32 %v581, %v3829
    %v3831 = vpop.f32.mrb[0].mxu0
    %v3832 = vadd.f32 %v585, %v3831
    %3833 = vmatprep.mubr.bf16.mxu0 %v800
    %3834 = vmatmul.mubr.bf16.gmra.mrb[0].mxu0 %v799
    %v3835 = vpop.f32.mrb[0].mxu0
    %v3836 = vadd.f32 %v581, %v3835
    %v3837 = vpop.f32.mrb[0].mxu0
    %v3838 = vadd.f32 %v585, %v3837
    %v3839 = vpop.f32.mrb[0].mxu0
    %v3840 = vadd.f32 %v581, %v3839
    %v3841 = vpop.f32.mrb[0].mxu0
    %v3842 = vadd.f32 %v585, %v3841
    %3843 = vmatprep.mubr.bf16.mxu0 %v807
    %3844 = vmatmul.mubr.bf16.gmra.mrb[0].mxu0 %v806
    %v3845 = vpop.f32.mrb[0].mxu0
    %v3846 = vadd.f32 %v581, %v3845
    %v3847 = vpop.f32.mrb[0].mxu0
    %v3848 = vadd.f32 %v585, %v3847
    %v3849 = vpop.f32.mrb[0].mxu0
    %v3850 = vadd.f32 %v581, %v3849
    %v3851 = vpop.f32.mrb[0].mxu0
    %v3852 = vadd.f32 %v585, %v3851
    %3853 = vmatprep.mubr.bf16.mxu0 %v814
    %3854 = vmatmul.mubr.bf16.gmra.mrb[0].mxu0 %v813
    %v3855 = vpop.f32.mrb[0].mxu0
    %v3856 = vadd.f32 %v581, %v3855
    %v3857 = vpop.f32.mrb[0].mxu0
    %v3858 = vadd.f32 %v585, %v3857
    %v3859 = vpop.f32.mrb[0].mxu0
    %v3860 = vadd.f32 %v581, %v3859
    %v3861 = vpop.f32.mrb[0].mxu0
    %v3862 = vadd.f32 %v585, %v3861
    %3863 = vmatprep.mubr.bf16.mxu0 %v821
    %3864 = vmatmul.mubr.bf16.gmra.mrb[0].mxu0 %v820
    %v3865 = vpop.f32.mrb[0].mxu0
    %v3866 = vadd.f32 %v581, %v3865
    %v3867 = vpop.f32.mrb[0].mxu0
    %v3868 = vadd.f32 %v585, %v3867
    %v3869 = vpop.f32.mrb[0].mxu0
    %v3870 = vadd.f32 %v581, %v3869
    %v3871 = vpop.f32.mrb[0].mxu0
    %v3872 = vadd.f32 %v585, %v3871
    %3873 = vmatprep.mubr.bf16.mxu0 %v828
    %3874 = vmatmul.mubr.bf16.gmra.mrb[0].mxu0 %v827
    %v3875 = vpop.f32.mrb[0].mxu0
    %v3876 = vadd.f32 %v581, %v3875
    %v3877 = vpop.f32.mrb[0].mxu0
    %v3878 = vadd.f32 %v585, %v3877
    %v3879 = vpop.f32.mrb[0].mxu0
    %v3880 = vadd.f32 %v581, %v3879
    %v3881 = vpop.f32.mrb[0].mxu0
    %v3882 = vadd.f32 %v585, %v3881
    %3883 = vdwg.mxu0
    %3884 = vmatprep.subr.bf16.mxu0 %v2191
    %3885 = vmatpush1.bf16.msra.mxu0 %v2190
    %3886 = vmatprep.subr.bf16.mxu0 %v2199
    %3887 = vmatpush1.bf16.msra.mxu0 %v2198
    %3888 = vmatprep.subr.bf16.mxu0 %v2207
    %3889 = vmatpush1.bf16.msra.mxu0 %v2206
    %3890 = vmatprep.subr.bf16.mxu0 %v2215
    %3891 = vmatpush1.bf16.msra.mxu0 %v2214
    %3892 = vmatprep.subr.bf16.mxu0 %v2223
    %3893 = vmatpush1.bf16.msra.mxu0 %v2222
    %3894 = vmatprep.subr.bf16.mxu0 %v2231
    %3895 = vmatpush1.bf16.msra.mxu0 %v2230
    %3896 = vmatprep.subr.bf16.mxu0 %v2239
    %3897 = vmatpush1.bf16.msra.mxu0 %v2238
    %3898 = vmatprep.subr.bf16.mxu0 %v2247
    %3899 = vmatpush1.bf16.msra.mxu0 %v2246
    %3900 = vmatprep.subr.bf16.mxu0 %v2255
    %3901 = vmatpush1.bf16.msra.mxu0 %v2254
    %3902 = vmatprep.subr.bf16.mxu0 %v2263
    %3903 = vmatpush1.bf16.msra.mxu0 %v2262
    %3904 = vmatprep.subr.bf16.mxu0 %v2271
    %3905 = vmatpush1.bf16.msra.mxu0 %v2270
    %3906 = vmatprep.subr.bf16.mxu0 %v2279
    %3907 = vmatpush1.bf16.msra.mxu0 %v2278
    %3908 = vmatprep.subr.bf16.mxu0 %v2287
    %3909 = vmatpush1.bf16.msra.mxu0 %v2286
    %3910 = vmatprep.subr.bf16.mxu0 %v2295
    %3911 = vmatpush1.bf16.msra.mxu0 %v2294
    %3912 = vmatprep.subr.bf16.mxu0 %v2303
    %3913 = vmatpush1.bf16.msra.mxu0 %v2302
    %3914 = vmatprep.subr.bf16.mxu0 %v2311
    %3915 = vmatpush1.bf16.msra.mxu0 %v2310
    %3916 = vmatprep.mubr.bf16.mxu0 %v781
    %3917 = vmatmul.mubr.bf16.gmra.mrb[0].mxu0 %v780
    %v3918 = vpop.f32.mrb[0].mxu0
    %v3919 = vadd.f32 %v3806, %v3918
    %v3920 = vpop.f32.mrb[0].mxu0
    %v3921 = vadd.f32 %v3808, %v3920
    %v3922 = vpop.f32.mrb[0].mxu0
    %v3923 = vadd.f32 %v3810, %v3922
    %v3924 = vpop.f32.mrb[0].mxu0
    %v3925 = vadd.f32 %v3812, %v3924
    %3926 = vmatprep.mubr.bf16.mxu0 %v788
    %3927 = vmatmul.mubr.bf16.gmra.mrb[0].mxu0 %v787
    %v3928 = vpop.f32.mrb[0].mxu0
    %v3929 = vadd.f32 %v3816, %v3928
    %v3930 = vpop.f32.mrb[0].mxu0
    %v3931 = vadd.f32 %v3818, %v3930
    %v3932 = vpop.f32.mrb[0].mxu0
    %v3933 = vadd.f32 %v3820, %v3932
    %v3934 = vpop.f32.mrb[0].mxu0
    %v3935 = vadd.f32 %v3822, %v3934
    %3936 = vmatprep.mubr.bf16.mxu0 %v795
    %3937 = vmatmul.mubr.bf16.gmra.mrb[0].mxu0 %v794
    %v3938 = vpop.f32.mrb[0].mxu0
    %v3939 = vadd.f32 %v3826, %v3938
    %v3940 = vpop.f32.mrb[0].mxu0
    %v3941 = vadd.f32 %v3828, %v3940
    %v3942 = vpop.f32.mrb[0].mxu0
    %v3943 = vadd.f32 %v3830, %v3942
    %v3944 = vpop.f32.mrb[0].mxu0
    %v3945 = vadd.f32 %v3832, %v3944
    %3946 = vmatprep.mubr.bf16.mxu0 %v802
    %3947 = vmatmul.mubr.bf16.gmra.mrb[0].mxu0 %v801
    %v3948 = vpop.f32.mrb[0].mxu0
    %v3949 = vadd.f32 %v3836, %v3948
    %v3950 = vpop.f32.mrb[0].mxu0
    %v3951 = vadd.f32 %v3838, %v3950
    %v3952 = vpop.f32.mrb[0].mxu0
    %v3953 = vadd.f32 %v3840, %v3952
    %v3954 = vpop.f32.mrb[0].mxu0
    %v3955 = vadd.f32 %v3842, %v3954
    %3956 = vmatprep.mubr.bf16.mxu0 %v809
    %3957 = vmatmul.mubr.bf16.gmra.mrb[0].mxu0 %v808
    %v3958 = vpop.f32.mrb[0].mxu0
    %v3959 = vadd.f32 %v3846, %v3958
    %v3960 = vpop.f32.mrb[0].mxu0
    %v3961 = vadd.f32 %v3848, %v3960
    %v3962 = vpop.f32.mrb[0].mxu0
    %v3963 = vadd.f32 %v3850, %v3962
    %v3964 = vpop.f32.mrb[0].mxu0
    %v3965 = vadd.f32 %v3852, %v3964
    %3966 = vmatprep.mubr.bf16.mxu0 %v816
    %3967 = vmatmul.mubr.bf16.gmra.mrb[0].mxu0 %v815
    %v3968 = vpop.f32.mrb[0].mxu0
    %v3969 = vadd.f32 %v3856, %v3968
    %v3970 = vpop.f32.mrb[0].mxu0
    %v3971 = vadd.f32 %v3858, %v3970
    %v3972 = vpop.f32.mrb[0].mxu0
    %v3973 = vadd.f32 %v3860, %v3972
    %v3974 = vpop.f32.mrb[0].mxu0
    %v3975 = vadd.f32 %v3862, %v3974
    %3976 = vmatprep.mubr.bf16.mxu0 %v823
    %3977 = vmatmul.mubr.bf16.gmra.mrb[0].mxu0 %v822
    %v3978 = vpop.f32.mrb[0].mxu0
    %v3979 = vadd.f32 %v3866, %v3978
    %v3980 = vpop.f32.mrb[0].mxu0
    %v3981 = vadd.f32 %v3868, %v3980
    %v3982 = vpop.f32.mrb[0].mxu0
    %v3983 = vadd.f32 %v3870, %v3982
    %v3984 = vpop.f32.mrb[0].mxu0
    %v3985 = vadd.f32 %v3872, %v3984
    %3986 = vmatprep.mubr.bf16.mxu0 %v830
    %3987 = vmatmul.mubr.bf16.gmra.mrb[0].mxu0 %v829
    %v3988 = vpop.f32.mrb[0].mxu0
    %v3989 = vadd.f32 %v3876, %v3988
    %v3990 = vpop.f32.mrb[0].mxu0
    %v3991 = vadd.f32 %v3878, %v3990
    %v3992 = vpop.f32.mrb[0].mxu0
    %v3993 = vadd.f32 %v3880, %v3992
    %v3994 = vpop.f32.mrb[0].mxu0
    %v3995 = vadd.f32 %v3882, %v3994
    %3996 = vdwg.mxu0
    %3997 = vmatprep.subr.bf16.mxu0 %v2319
    %3998 = vmatpush1.bf16.msra.mxu0 %v2318
    %3999 = vmatprep.subr.bf16.mxu0 %v2327
    %4000 = vmatpush1.bf16.msra.mxu0 %v2326
    %4001 = vmatprep.subr.bf16.mxu0 %v2335
    %4002 = vmatpush1.bf16.msra.mxu0 %v2334
    %4003 = vmatprep.subr.bf16.mxu0 %v2343
    %4004 = vmatpush1.bf16.msra.mxu0 %v2342
    %4005 = vmatprep.subr.bf16.mxu0 %v2351
    %4006 = vmatpush1.bf16.msra.mxu0 %v2350
    %4007 = vmatprep.subr.bf16.mxu0 %v2359
    %4008 = vmatpush1.bf16.msra.mxu0 %v2358
    %4009 = vmatprep.subr.bf16.mxu0 %v2367
    %4010 = vmatpush1.bf16.msra.mxu0 %v2366
    %4011 = vmatprep.subr.bf16.mxu0 %v2375
    %4012 = vmatpush1.bf16.msra.mxu0 %v2374
    %4013 = vmatprep.subr.bf16.mxu0 %v2383
    %4014 = vmatpush1.bf16.msra.mxu0 %v2382
    %4015 = vmatprep.subr.bf16.mxu0 %v2391
    %4016 = vmatpush1.bf16.msra.mxu0 %v2390
    %4017 = vmatprep.subr.bf16.mxu0 %v2399
    %4018 = vmatpush1.bf16.msra.mxu0 %v2398
    %4019 = vmatprep.subr.bf16.mxu0 %v2407
    %4020 = vmatpush1.bf16.msra.mxu0 %v2406
    %4021 = vmatprep.subr.bf16.mxu0 %v2415
    %4022 = vmatpush1.bf16.msra.mxu0 %v2414
    %4023 = vmatprep.subr.bf16.mxu0 %v2423
    %4024 = vmatpush1.bf16.msra.mxu0 %v2422
    %4025 = vmatprep.subr.bf16.mxu0 %v2431
    %4026 = vmatpush1.bf16.msra.mxu0 %v2430
    %4027 = vmatprep.subr.bf16.mxu0 %v2439
    %4028 = vmatpush1.bf16.msra.mxu0 %v2438
    %4029 = vmatprep.mubr.bf16.mxu0 %v783
    %4030 = vmatmul.mubr.bf16.gmra.mrb[0].mxu0 %v782
    %v4031 = vpop.f32.mrb[0].mxu0
    %v4032 = vadd.f32 %v3919, %v4031
    %v4033 = vpop.f32.mrb[0].mxu0
    %v4034 = vadd.f32 %v3921, %v4033
    %v4035 = vpop.f32.mrb[0].mxu0
    %v4036 = vadd.f32 %v3923, %v4035
    %v4037 = vpop.f32.mrb[0].mxu0
    %v4038 = vadd.f32 %v3925, %v4037
    %4039 = vmatprep.mubr.bf16.mxu0 %v790
    %4040 = vmatmul.mubr.bf16.gmra.mrb[0].mxu0 %v789
    %v4041 = vpop.f32.mrb[0].mxu0
    %v4042 = vadd.f32 %v3929, %v4041
    %v4043 = vpop.f32.mrb[0].mxu0
    %v4044 = vadd.f32 %v3931, %v4043
    %v4045 = vpop.f32.mrb[0].mxu0
    %v4046 = vadd.f32 %v3933, %v4045
    %v4047 = vpop.f32.mrb[0].mxu0
    %v4048 = vadd.f32 %v3935, %v4047
    %4049 = vmatprep.mubr.bf16.mxu0 %v797
    %4050 = vmatmul.mubr.bf16.gmra.mrb[0].mxu0 %v796
    %v4051 = vpop.f32.mrb[0].mxu0
    %v4052 = vadd.f32 %v3939, %v4051
    %v4053 = vpop.f32.mrb[0].mxu0
    %v4054 = vadd.f32 %v3941, %v4053
    %v4055 = vpop.f32.mrb[0].mxu0
    %v4056 = vadd.f32 %v3943, %v4055
    %v4057 = vpop.f32.mrb[0].mxu0
    %v4058 = vadd.f32 %v3945, %v4057
    %4059 = vmatprep.mubr.bf16.mxu0 %v804
    %4060 = vmatmul.mubr.bf16.gmra.mrb[0].mxu0 %v803
    %v4061 = vpop.f32.mrb[0].mxu0
    %v4062 = vadd.f32 %v3949, %v4061
    %v4063 = vpop.f32.mrb[0].mxu0
    %v4064 = vadd.f32 %v3951, %v4063
    %v4065 = vpop.f32.mrb[0].mxu0
    %v4066 = vadd.f32 %v3953, %v4065
    %v4067 = vpop.f32.mrb[0].mxu0
    %v4068 = vadd.f32 %v3955, %v4067
    %4069 = vmatprep.mubr.bf16.mxu0 %v811
    %4070 = vmatmul.mubr.bf16.gmra.mrb[0].mxu0 %v810
    %v4071 = vpop.f32.mrb[0].mxu0
    %v4072 = vadd.f32 %v3959, %v4071
    %v4073 = vpop.f32.mrb[0].mxu0
    %v4074 = vadd.f32 %v3961, %v4073
    %v4075 = vpop.f32.mrb[0].mxu0
    %v4076 = vadd.f32 %v3963, %v4075
    %v4077 = vpop.f32.mrb[0].mxu0
    %v4078 = vadd.f32 %v3965, %v4077
    %4079 = vmatprep.mubr.bf16.mxu0 %v818
    %4080 = vmatmul.mubr.bf16.gmra.mrb[0].mxu0 %v817
    %v4081 = vpop.f32.mrb[0].mxu0
    %v4082 = vadd.f32 %v3969, %v4081
    %v4083 = vpop.f32.mrb[0].mxu0
    %v4084 = vadd.f32 %v3971, %v4083
    %v4085 = vpop.f32.mrb[0].mxu0
    %v4086 = vadd.f32 %v3973, %v4085
    %v4087 = vpop.f32.mrb[0].mxu0
    %v4088 = vadd.f32 %v3975, %v4087
    %4089 = vmatprep.mubr.bf16.mxu0 %v825
    %4090 = vmatmul.mubr.bf16.gmra.mrb[0].mxu0 %v824
    %v4091 = vpop.f32.mrb[0].mxu0
    %v4092 = vadd.f32 %v3979, %v4091
    %v4093 = vpop.f32.mrb[0].mxu0
    %v4094 = vadd.f32 %v3981, %v4093
    %v4095 = vpop.f32.mrb[0].mxu0
    %v4096 = vadd.f32 %v3983, %v4095
    %v4097 = vpop.f32.mrb[0].mxu0
    %v4098 = vadd.f32 %v3985, %v4097
    %4099 = vmatprep.mubr.bf16.mxu0 %v832
    %4100 = vmatmul.mubr.bf16.gmra.mrb[0].mxu0 %v831
    %v4101 = vpop.f32.mrb[0].mxu0
    %v4102 = vadd.f32 %v3989, %v4101
    %v4103 = vpop.f32.mrb[0].mxu0
    %v4104 = vadd.f32 %v3991, %v4103
    %v4105 = vpop.f32.mrb[0].mxu0
    %v4106 = vadd.f32 %v3993, %v4105
    %v4107 = vpop.f32.mrb[0].mxu0
    %v4108 = vadd.f32 %v3995, %v4107
    %4109 = vdwg.mxu0
    %4110 = vmatprep.subr.bf16.mxu0 %v2447
    %4111 = vmatpush1.bf16.msra.mxu0 %v2446
    %4112 = vmatprep.subr.bf16.mxu0 0
    %4113 = vmatpush1.bf16.msra.mxu0 0
    %4114 = vmatprep.subr.bf16.mxu0 0
    %4115 = vmatpush1.bf16.msra.mxu0 0
    %4116 = vmatprep.subr.bf16.mxu0 0
    %4117 = vmatpush1.bf16.msra.mxu0 0
    %4118 = vmatprep.subr.bf16.mxu0 0
    %4119 = vmatpush1.bf16.msra.mxu0 0
    %4120 = vmatprep.subr.bf16.mxu0 0
    %4121 = vmatpush1.bf16.msra.mxu0 0
    %4122 = vmatprep.subr.bf16.mxu0 0
    %4123 = vmatpush1.bf16.msra.mxu0 0
    %4124 = vmatprep.subr.bf16.mxu0 0
    %4125 = vmatpush1.bf16.msra.mxu0 0
    %4126 = vmatprep.subr.bf16.mxu0 0
    %4127 = vmatpush1.bf16.msra.mxu0 0
    %4128 = vmatprep.subr.bf16.mxu0 0
    %4129 = vmatpush1.bf16.msra.mxu0 0
    %4130 = vmatprep.subr.bf16.mxu0 0
    %4131 = vmatpush1.bf16.msra.mxu0 0
    %4132 = vmatprep.subr.bf16.mxu0 0
    %4133 = vmatpush1.bf16.msra.mxu0 0
    %4134 = vmatprep.subr.bf16.mxu0 0
    %4135 = vmatpush1.bf16.msra.mxu0 0
    %4136 = vmatprep.subr.bf16.mxu0 0
    %4137 = vmatpush1.bf16.msra.mxu0 0
    %4138 = vmatprep.subr.bf16.mxu0 0
    %4139 = vmatpush1.bf16.msra.mxu0 0
    %4140 = vmatprep.subr.bf16.mxu0 0
    %4141 = vmatpush1.bf16.msra.mxu0 0
    %4142 = vmatprep.mubr.bf16.mxu0 0
    %4143 = vmatmul.mubr.bf16.gmra.mrb[0].mxu0 %v2844
    %v4144 = vpop.f32.mrb[0].mxu0
    %v4145 = vadd.f32 %v4032, %v4144
    %v4146 = vpop.f32.mrb[0].mxu0
    %v4147 = vadd.f32 %v4034, %v4146
    %v4148 = vpop.f32.mrb[0].mxu0
    %v4149 = vadd.f32 %v4036, %v4148
    %v4150 = vpop.f32.mrb[0].mxu0
    %v4151 = vadd.f32 %v4038, %v4150
    %4152 = vmatprep.mubr.bf16.mxu0 0
    %4153 = vmatmul.mubr.bf16.gmra.mrb[0].mxu0 %v2847
    %v4154 = vpop.f32.mrb[0].mxu0
    %v4155 = vadd.f32 %v4042, %v4154
    %v4156 = vpop.f32.mrb[0].mxu0
    %v4157 = vadd.f32 %v4044, %v4156
    %v4158 = vpop.f32.mrb[0].mxu0
    %v4159 = vadd.f32 %v4046, %v4158
    %v4160 = vpop.f32.mrb[0].mxu0
    %v4161 = vadd.f32 %v4048, %v4160
    %4162 = vmatprep.mubr.bf16.mxu0 0
    %4163 = vmatmul.mubr.bf16.gmra.mrb[0].mxu0 %v2850
    %v4164 = vpop.f32.mrb[0].mxu0
    %v4165 = vadd.f32 %v4052, %v4164
    %v4166 = vpop.f32.mrb[0].mxu0
    %v4167 = vadd.f32 %v4054, %v4166
    %v4168 = vpop.f32.mrb[0].mxu0
    %v4169 = vadd.f32 %v4056, %v4168
    %v4170 = vpop.f32.mrb[0].mxu0
    %v4171 = vadd.f32 %v4058, %v4170
    %4172 = vmatprep.mubr.bf16.mxu0 0
    %4173 = vmatmul.mubr.bf16.gmra.mrb[0].mxu0 %v2853
    %v4174 = vpop.f32.mrb[0].mxu0
    %v4175 = vadd.f32 %v4062, %v4174
    %v4176 = vpop.f32.mrb[0].mxu0
    %v4177 = vadd.f32 %v4064, %v4176
    %v4178 = vpop.f32.mrb[0].mxu0
    %v4179 = vadd.f32 %v4066, %v4178
    %v4180 = vpop.f32.mrb[0].mxu0
    %v4181 = vadd.f32 %v4068, %v4180
    %4182 = vmatprep.mubr.bf16.mxu0 0
    %4183 = vmatmul.mubr.bf16.gmra.mrb[0].mxu0 %v2856
    %v4184 = vpop.f32.mrb[0].mxu0
    %v4185 = vadd.f32 %v4072, %v4184
    %v4186 = vpop.f32.mrb[0].mxu0
    %v4187 = vadd.f32 %v4074, %v4186
    %v4188 = vpop.f32.mrb[0].mxu0
    %v4189 = vadd.f32 %v4076, %v4188
    %v4190 = vpop.f32.mrb[0].mxu0
    %v4191 = vadd.f32 %v4078, %v4190
    %4192 = vmatprep.mubr.bf16.mxu0 0
    %4193 = vmatmul.mubr.bf16.gmra.mrb[0].mxu0 %v2859
    %v4194 = vpop.f32.mrb[0].mxu0
    %v4195 = vadd.f32 %v4082, %v4194
    %v4196 = vpop.f32.mrb[0].mxu0
    %v4197 = vadd.f32 %v4084, %v4196
    %v4198 = vpop.f32.mrb[0].mxu0
    %v4199 = vadd.f32 %v4086, %v4198
    %v4200 = vpop.f32.mrb[0].mxu0
    %v4201 = vadd.f32 %v4088, %v4200
    %4202 = vmatprep.mubr.bf16.mxu0 0
    %4203 = vmatmul.mubr.bf16.gmra.mrb[0].mxu0 %v2862
    %v4204 = vpop.f32.mrb[0].mxu0
    %v4205 = vadd.f32 %v4092, %v4204
    %v4206 = vpop.f32.mrb[0].mxu0
    %v4207 = vadd.f32 %v4094, %v4206
    %v4208 = vpop.f32.mrb[0].mxu0
    %v4209 = vadd.f32 %v4096, %v4208
    %v4210 = vpop.f32.mrb[0].mxu0
    %v4211 = vadd.f32 %v4098, %v4210
    %4212 = vmatprep.mubr.bf16.mxu0 0
    %4213 = vmatmul.mubr.bf16.gmra.mrb[0].mxu0 %v2865
    %v4214 = vpop.f32.mrb[0].mxu0
    %v4215 = vadd.f32 %v4102, %v4214
    %v4216 = vpop.f32.mrb[0].mxu0
    %v4217 = vadd.f32 %v4104, %v4216
    %v4218 = vpop.f32.mrb[0].mxu0
    %v4219 = vadd.f32 %v4106, %v4218
    %v4220 = vpop.f32.mrb[0].mxu0
    %v4221 = vadd.f32 %v4108, %v4220
    %4222 = vdwg.mxu0
    %4223 = vmatprep.subr.bf16.mxu0 %v2065
    %4224 = vmatpush1.bf16.msra.mxu0 %v2064
    %4225 = vmatprep.subr.bf16.mxu0 %v2073
    %4226 = vmatpush1.bf16.msra.mxu0 %v2072
    %4227 = vmatprep.subr.bf16.mxu0 %v2081
    %4228 = vmatpush1.bf16.msra.mxu0 %v2080
    %4229 = vmatprep.subr.bf16.mxu0 %v2089
    %4230 = vmatpush1.bf16.msra.mxu0 %v2088
    %4231 = vmatprep.subr.bf16.mxu0 %v2097
    %4232 = vmatpush1.bf16.msra.mxu0 %v2096
    %4233 = vmatprep.subr.bf16.mxu0 %v2105
    %4234 = vmatpush1.bf16.msra.mxu0 %v2104
    %4235 = vmatprep.subr.bf16.mxu0 %v2113
    %4236 = vmatpush1.bf16.msra.mxu0 %v2112
    %4237 = vmatprep.subr.bf16.mxu0 %v2121
    %4238 = vmatpush1.bf16.msra.mxu0 %v2120
    %4239 = vmatprep.subr.bf16.mxu0 %v2129
    %4240 = vmatpush1.bf16.msra.mxu0 %v2128
    %4241 = vmatprep.subr.bf16.mxu0 %v2137
    %4242 = vmatpush1.bf16.msra.mxu0 %v2136
    %4243 = vmatprep.subr.bf16.mxu0 %v2145
    %4244 = vmatpush1.bf16.msra.mxu0 %v2144
    %4245 = vmatprep.subr.bf16.mxu0 %v2153
    %4246 = vmatpush1.bf16.msra.mxu0 %v2152
    %4247 = vmatprep.subr.bf16.mxu0 %v2161
    %4248 = vmatpush1.bf16.msra.mxu0 %v2160
    %4249 = vmatprep.subr.bf16.mxu0 %v2169
    %4250 = vmatpush1.bf16.msra.mxu0 %v2168
    %4251 = vmatprep.subr.bf16.mxu0 %v2177
    %4252 = vmatpush1.bf16.msra.mxu0 %v2176
    %4253 = vmatprep.subr.bf16.mxu0 %v2185
    %4254 = vmatpush1.bf16.msra.mxu0 %v2184
    %4255 = vmatprep.mubr.bf16.mxu0 %v779
    %4256 = vmatmul.mubr.bf16.gmra.mrb[0].mxu0 %v778
    %v4257 = vpop.f32.mrb[0].mxu0
    %v4258 = vadd.f32 %v589, %v4257
    %v4259 = vpop.f32.mrb[0].mxu0
    %v4260 = vadd.f32 %v593, %v4259
    %v4261 = vpop.f32.mrb[0].mxu0
    %v4262 = vadd.f32 %v589, %v4261
    %v4263 = vpop.f32.mrb[0].mxu0
    %v4264 = vadd.f32 %v593, %v4263
    %4265 = vmatprep.mubr.bf16.mxu0 %v786
    %4266 = vmatmul.mubr.bf16.gmra.mrb[0].mxu0 %v785
    %v4267 = vpop.f32.mrb[0].mxu0
    %v4268 = vadd.f32 %v589, %v4267
    %v4269 = vpop.f32.mrb[0].mxu0
    %v4270 = vadd.f32 %v593, %v4269
    %v4271 = vpop.f32.mrb[0].mxu0
    %v4272 = vadd.f32 %v589, %v4271
    %v4273 = vpop.f32.mrb[0].mxu0
    %v4274 = vadd.f32 %v593, %v4273
    %4275 = vmatprep.mubr.bf16.mxu0 %v793
    %4276 = vmatmul.mubr.bf16.gmra.mrb[0].mxu0 %v792
    %v4277 = vpop.f32.mrb[0].mxu0
    %v4278 = vadd.f32 %v589, %v4277
    %v4279 = vpop.f32.mrb[0].mxu0
    %v4280 = vadd.f32 %v593, %v4279
    %v4281 = vpop.f32.mrb[0].mxu0
    %v4282 = vadd.f32 %v589, %v4281
    %v4283 = vpop.f32.mrb[0].mxu0
    %v4284 = vadd.f32 %v593, %v4283
    %4285 = vmatprep.mubr.bf16.mxu0 %v800
    %4286 = vmatmul.mubr.bf16.gmra.mrb[0].mxu0 %v799
    %v4287 = vpop.f32.mrb[0].mxu0
    %v4288 = vadd.f32 %v589, %v4287
    %v4289 = vpop.f32.mrb[0].mxu0
    %v4290 = vadd.f32 %v593, %v4289
    %v4291 = vpop.f32.mrb[0].mxu0
    %v4292 = vadd.f32 %v589, %v4291
    %v4293 = vpop.f32.mrb[0].mxu0
    %v4294 = vadd.f32 %v593, %v4293
    %4295 = vmatprep.mubr.bf16.mxu0 %v807
    %4296 = vmatmul.mubr.bf16.gmra.mrb[0].mxu0 %v806
    %v4297 = vpop.f32.mrb[0].mxu0
    %v4298 = vadd.f32 %v589, %v4297
    %v4299 = vpop.f32.mrb[0].mxu0
    %v4300 = vadd.f32 %v593, %v4299
    %v4301 = vpop.f32.mrb[0].mxu0
    %v4302 = vadd.f32 %v589, %v4301
    %v4303 = vpop.f32.mrb[0].mxu0
    %v4304 = vadd.f32 %v593, %v4303
    %4305 = vmatprep.mubr.bf16.mxu0 %v814
    %4306 = vmatmul.mubr.bf16.gmra.mrb[0].mxu0 %v813
    %v4307 = vpop.f32.mrb[0].mxu0
    %v4308 = vadd.f32 %v589, %v4307
    %v4309 = vpop.f32.mrb[0].mxu0
    %v4310 = vadd.f32 %v593, %v4309
    %v4311 = vpop.f32.mrb[0].mxu0
    %v4312 = vadd.f32 %v589, %v4311
    %v4313 = vpop.f32.mrb[0].mxu0
    %v4314 = vadd.f32 %v593, %v4313
    %4315 = vmatprep.mubr.bf16.mxu0 %v821
    %4316 = vmatmul.mubr.bf16.gmra.mrb[0].mxu0 %v820
    %v4317 = vpop.f32.mrb[0].mxu0
    %v4318 = vadd.f32 %v589, %v4317
    %v4319 = vpop.f32.mrb[0].mxu0
    %v4320 = vadd.f32 %v593, %v4319
    %v4321 = vpop.f32.mrb[0].mxu0
    %v4322 = vadd.f32 %v589, %v4321
    %v4323 = vpop.f32.mrb[0].mxu0
    %v4324 = vadd.f32 %v593, %v4323
    %4325 = vmatprep.mubr.bf16.mxu0 %v828
    %4326 = vmatmul.mubr.bf16.gmra.mrb[0].mxu0 %v827
    %v4327 = vpop.f32.mrb[0].mxu0
    %v4328 = vadd.f32 %v589, %v4327
    %v4329 = vpop.f32.mrb[0].mxu0
    %v4330 = vadd.f32 %v593, %v4329
    %v4331 = vpop.f32.mrb[0].mxu0
    %v4332 = vadd.f32 %v589, %v4331
    %v4333 = vpop.f32.mrb[0].mxu0
    %v4334 = vadd.f32 %v593, %v4333
    %4335 = vdwg.mxu0
    %4336 = vmatprep.subr.bf16.mxu0 %v2193
    %4337 = vmatpush1.bf16.msra.mxu0 %v2192
    %4338 = vmatprep.subr.bf16.mxu0 %v2201
    %4339 = vmatpush1.bf16.msra.mxu0 %v2200
    %4340 = vmatprep.subr.bf16.mxu0 %v2209
    %4341 = vmatpush1.bf16.msra.mxu0 %v2208
    %4342 = vmatprep.subr.bf16.mxu0 %v2217
    %4343 = vmatpush1.bf16.msra.mxu0 %v2216
    %4344 = vmatprep.subr.bf16.mxu0 %v2225
    %4345 = vmatpush1.bf16.msra.mxu0 %v2224
    %4346 = vmatprep.subr.bf16.mxu0 %v2233
    %4347 = vmatpush1.bf16.msra.mxu0 %v2232
    %4348 = vmatprep.subr.bf16.mxu0 %v2241
    %4349 = vmatpush1.bf16.msra.mxu0 %v2240
    %4350 = vmatprep.subr.bf16.mxu0 %v2249
    %4351 = vmatpush1.bf16.msra.mxu0 %v2248
    %4352 = vmatprep.subr.bf16.mxu0 %v2257
    %4353 = vmatpush1.bf16.msra.mxu0 %v2256
    %4354 = vmatprep.subr.bf16.mxu0 %v2265
    %4355 = vmatpush1.bf16.msra.mxu0 %v2264
    %4356 = vmatprep.subr.bf16.mxu0 %v2273
    %4357 = vmatpush1.bf16.msra.mxu0 %v2272
    %4358 = vmatprep.subr.bf16.mxu0 %v2281
    %4359 = vmatpush1.bf16.msra.mxu0 %v2280
    %4360 = vmatprep.subr.bf16.mxu0 %v2289
    %4361 = vmatpush1.bf16.msra.mxu0 %v2288
    %4362 = vmatprep.subr.bf16.mxu0 %v2297
    %4363 = vmatpush1.bf16.msra.mxu0 %v2296
    %4364 = vmatprep.subr.bf16.mxu0 %v2305
    %4365 = vmatpush1.bf16.msra.mxu0 %v2304
    %4366 = vmatprep.subr.bf16.mxu0 %v2313
    %4367 = vmatpush1.bf16.msra.mxu0 %v2312
    %4368 = vmatprep.mubr.bf16.mxu0 %v781
    %4369 = vmatmul.mubr.bf16.gmra.mrb[0].mxu0 %v780
    %v4370 = vpop.f32.mrb[0].mxu0
    %v4371 = vadd.f32 %v4258, %v4370
    %v4372 = vpop.f32.mrb[0].mxu0
    %v4373 = vadd.f32 %v4260, %v4372
    %v4374 = vpop.f32.mrb[0].mxu0
    %v4375 = vadd.f32 %v4262, %v4374
    %v4376 = vpop.f32.mrb[0].mxu0
    %v4377 = vadd.f32 %v4264, %v4376
    %4378 = vmatprep.mubr.bf16.mxu0 %v788
    %4379 = vmatmul.mubr.bf16.gmra.mrb[0].mxu0 %v787
    %v4380 = vpop.f32.mrb[0].mxu0
    %v4381 = vadd.f32 %v4268, %v4380
    %v4382 = vpop.f32.mrb[0].mxu0
    %v4383 = vadd.f32 %v4270, %v4382
    %v4384 = vpop.f32.mrb[0].mxu0
    %v4385 = vadd.f32 %v4272, %v4384
    %v4386 = vpop.f32.mrb[0].mxu0
    %v4387 = vadd.f32 %v4274, %v4386
    %4388 = vmatprep.mubr.bf16.mxu0 %v795
    %4389 = vmatmul.mubr.bf16.gmra.mrb[0].mxu0 %v794
    %v4390 = vpop.f32.mrb[0].mxu0
    %v4391 = vadd.f32 %v4278, %v4390
    %v4392 = vpop.f32.mrb[0].mxu0
    %v4393 = vadd.f32 %v4280, %v4392
    %v4394 = vpop.f32.mrb[0].mxu0
    %v4395 = vadd.f32 %v4282, %v4394
    %v4396 = vpop.f32.mrb[0].mxu0
    %v4397 = vadd.f32 %v4284, %v4396
    %4398 = vmatprep.mubr.bf16.mxu0 %v802
    %4399 = vmatmul.mubr.bf16.gmra.mrb[0].mxu0 %v801
    %v4400 = vpop.f32.mrb[0].mxu0
    %v4401 = vadd.f32 %v4288, %v4400
    %v4402 = vpop.f32.mrb[0].mxu0
    %v4403 = vadd.f32 %v4290, %v4402
    %v4404 = vpop.f32.mrb[0].mxu0
    %v4405 = vadd.f32 %v4292, %v4404
    %v4406 = vpop.f32.mrb[0].mxu0
    %v4407 = vadd.f32 %v4294, %v4406
    %4408 = vmatprep.mubr.bf16.mxu0 %v809
    %4409 = vmatmul.mubr.bf16.gmra.mrb[0].mxu0 %v808
    %v4410 = vpop.f32.mrb[0].mxu0
    %v4411 = vadd.f32 %v4298, %v4410
    %v4412 = vpop.f32.mrb[0].mxu0
    %v4413 = vadd.f32 %v4300, %v4412
    %v4414 = vpop.f32.mrb[0].mxu0
    %v4415 = vadd.f32 %v4302, %v4414
    %v4416 = vpop.f32.mrb[0].mxu0
    %v4417 = vadd.f32 %v4304, %v4416
    %4418 = vmatprep.mubr.bf16.mxu0 %v816
    %4419 = vmatmul.mubr.bf16.gmra.mrb[0].mxu0 %v815
    %v4420 = vpop.f32.mrb[0].mxu0
    %v4421 = vadd.f32 %v4308, %v4420
    %v4422 = vpop.f32.mrb[0].mxu0
    %v4423 = vadd.f32 %v4310, %v4422
    %v4424 = vpop.f32.mrb[0].mxu0
    %v4425 = vadd.f32 %v4312, %v4424
    %v4426 = vpop.f32.mrb[0].mxu0
    %v4427 = vadd.f32 %v4314, %v4426
    %4428 = vmatprep.mubr.bf16.mxu0 %v823
    %4429 = vmatmul.mubr.bf16.gmra.mrb[0].mxu0 %v822
    %v4430 = vpop.f32.mrb[0].mxu0
    %v4431 = vadd.f32 %v4318, %v4430
    %v4432 = vpop.f32.mrb[0].mxu0
    %v4433 = vadd.f32 %v4320, %v4432
    %v4434 = vpop.f32.mrb[0].mxu0
    %v4435 = vadd.f32 %v4322, %v4434
    %v4436 = vpop.f32.mrb[0].mxu0
    %v4437 = vadd.f32 %v4324, %v4436
    %4438 = vmatprep.mubr.bf16.mxu0 %v830
    %4439 = vmatmul.mubr.bf16.gmra.mrb[0].mxu0 %v829
    %v4440 = vpop.f32.mrb[0].mxu0
    %v4441 = vadd.f32 %v4328, %v4440
    %v4442 = vpop.f32.mrb[0].mxu0
    %v4443 = vadd.f32 %v4330, %v4442
    %v4444 = vpop.f32.mrb[0].mxu0
    %v4445 = vadd.f32 %v4332, %v4444
    %v4446 = vpop.f32.mrb[0].mxu0
    %v4447 = vadd.f32 %v4334, %v4446
    %4448 = vdwg.mxu0
    %4449 = vmatprep.subr.bf16.mxu0 %v2321
    %4450 = vmatpush1.bf16.msra.mxu0 %v2320
    %4451 = vmatprep.subr.bf16.mxu0 %v2329
    %4452 = vmatpush1.bf16.msra.mxu0 %v2328
    %4453 = vmatprep.subr.bf16.mxu0 %v2337
    %4454 = vmatpush1.bf16.msra.mxu0 %v2336
    %4455 = vmatprep.subr.bf16.mxu0 %v2345
    %4456 = vmatpush1.bf16.msra.mxu0 %v2344
    %4457 = vmatprep.subr.bf16.mxu0 %v2353
    %4458 = vmatpush1.bf16.msra.mxu0 %v2352
    %4459 = vmatprep.subr.bf16.mxu0 %v2361
    %4460 = vmatpush1.bf16.msra.mxu0 %v2360
    %4461 = vmatprep.subr.bf16.mxu0 %v2369
    %4462 = vmatpush1.bf16.msra.mxu0 %v2368
    %4463 = vmatprep.subr.bf16.mxu0 %v2377
    %4464 = vmatpush1.bf16.msra.mxu0 %v2376
    %4465 = vmatprep.subr.bf16.mxu0 %v2385
    %4466 = vmatpush1.bf16.msra.mxu0 %v2384
    %4467 = vmatprep.subr.bf16.mxu0 %v2393
    %4468 = vmatpush1.bf16.msra.mxu0 %v2392
    %4469 = vmatprep.subr.bf16.mxu0 %v2401
    %4470 = vmatpush1.bf16.msra.mxu0 %v2400
    %4471 = vmatprep.subr.bf16.mxu0 %v2409
    %4472 = vmatpush1.bf16.msra.mxu0 %v2408
    %4473 = vmatprep.subr.bf16.mxu0 %v2417
    %4474 = vmatpush1.bf16.msra.mxu0 %v2416
    %4475 = vmatprep.subr.bf16.mxu0 %v2425
    %4476 = vmatpush1.bf16.msra.mxu0 %v2424
    %4477 = vmatprep.subr.bf16.mxu0 %v2433
    %4478 = vmatpush1.bf16.msra.mxu0 %v2432
    %4479 = vmatprep.subr.bf16.mxu0 %v2441
    %4480 = vmatpush1.bf16.msra.mxu0 %v2440
    %4481 = vmatprep.mubr.bf16.mxu0 %v783
    %4482 = vmatmul.mubr.bf16.gmra.mrb[0].mxu0 %v782
    %v4483 = vpop.f32.mrb[0].mxu0
    %v4484 = vadd.f32 %v4371, %v4483
    %v4485 = vpop.f32.mrb[0].mxu0
    %v4486 = vadd.f32 %v4373, %v4485
    %v4487 = vpop.f32.mrb[0].mxu0
    %v4488 = vadd.f32 %v4375, %v4487
    %v4489 = vpop.f32.mrb[0].mxu0
    %v4490 = vadd.f32 %v4377, %v4489
    %4491 = vmatprep.mubr.bf16.mxu0 %v790
    %4492 = vmatmul.mubr.bf16.gmra.mrb[0].mxu0 %v789
    %v4493 = vpop.f32.mrb[0].mxu0
    %v4494 = vadd.f32 %v4381, %v4493
    %v4495 = vpop.f32.mrb[0].mxu0
    %v4496 = vadd.f32 %v4383, %v4495
    %v4497 = vpop.f32.mrb[0].mxu0
    %v4498 = vadd.f32 %v4385, %v4497
    %v4499 = vpop.f32.mrb[0].mxu0
    %v4500 = vadd.f32 %v4387, %v4499
    %4501 = vmatprep.mubr.bf16.mxu0 %v797
    %4502 = vmatmul.mubr.bf16.gmra.mrb[0].mxu0 %v796
    %v4503 = vpop.f32.mrb[0].mxu0
    %v4504 = vadd.f32 %v4391, %v4503
    %v4505 = vpop.f32.mrb[0].mxu0
    %v4506 = vadd.f32 %v4393, %v4505
    %v4507 = vpop.f32.mrb[0].mxu0
    %v4508 = vadd.f32 %v4395, %v4507
    %v4509 = vpop.f32.mrb[0].mxu0
    %v4510 = vadd.f32 %v4397, %v4509
    %4511 = vmatprep.mubr.bf16.mxu0 %v804
    %4512 = vmatmul.mubr.bf16.gmra.mrb[0].mxu0 %v803
    %v4513 = vpop.f32.mrb[0].mxu0
    %v4514 = vadd.f32 %v4401, %v4513
    %v4515 = vpop.f32.mrb[0].mxu0
    %v4516 = vadd.f32 %v4403, %v4515
    %v4517 = vpop.f32.mrb[0].mxu0
    %v4518 = vadd.f32 %v4405, %v4517
    %v4519 = vpop.f32.mrb[0].mxu0
    %v4520 = vadd.f32 %v4407, %v4519
    %4521 = vmatprep.mubr.bf16.mxu0 %v811
    %4522 = vmatmul.mubr.bf16.gmra.mrb[0].mxu0 %v810
    %v4523 = vpop.f32.mrb[0].mxu0
    %v4524 = vadd.f32 %v4411, %v4523
    %v4525 = vpop.f32.mrb[0].mxu0
    %v4526 = vadd.f32 %v4413, %v4525
    %v4527 = vpop.f32.mrb[0].mxu0
    %v4528 = vadd.f32 %v4415, %v4527
    %v4529 = vpop.f32.mrb[0].mxu0
    %v4530 = vadd.f32 %v4417, %v4529
    %4531 = vmatprep.mubr.bf16.mxu0 %v818
    %4532 = vmatmul.mubr.bf16.gmra.mrb[0].mxu0 %v817
    %v4533 = vpop.f32.mrb[0].mxu0
    %v4534 = vadd.f32 %v4421, %v4533
    %v4535 = vpop.f32.mrb[0].mxu0
    %v4536 = vadd.f32 %v4423, %v4535
    %v4537 = vpop.f32.mrb[0].mxu0
    %v4538 = vadd.f32 %v4425, %v4537
    %v4539 = vpop.f32.mrb[0].mxu0
    %v4540 = vadd.f32 %v4427, %v4539
    %4541 = vmatprep.mubr.bf16.mxu0 %v825
    %4542 = vmatmul.mubr.bf16.gmra.mrb[0].mxu0 %v824
    %v4543 = vpop.f32.mrb[0].mxu0
    %v4544 = vadd.f32 %v4431, %v4543
    %v4545 = vpop.f32.mrb[0].mxu0
    %v4546 = vadd.f32 %v4433, %v4545
    %v4547 = vpop.f32.mrb[0].mxu0
    %v4548 = vadd.f32 %v4435, %v4547
    %v4549 = vpop.f32.mrb[0].mxu0
    %v4550 = vadd.f32 %v4437, %v4549
    %4551 = vmatprep.mubr.bf16.mxu0 %v832
    %4552 = vmatmul.mubr.bf16.gmra.mrb[0].mxu0 %v831
    %v4553 = vpop.f32.mrb[0].mxu0
    %v4554 = vadd.f32 %v4441, %v4553
    %v4555 = vpop.f32.mrb[0].mxu0
    %v4556 = vadd.f32 %v4443, %v4555
    %v4557 = vpop.f32.mrb[0].mxu0
    %v4558 = vadd.f32 %v4445, %v4557
    %v4559 = vpop.f32.mrb[0].mxu0
    %v4560 = vadd.f32 %v4447, %v4559
    %4561 = vdwg.mxu0
    %4562 = vmatprep.subr.bf16.mxu0 %v2449
    %4563 = vmatpush1.bf16.msra.mxu0 %v2448
    %4564 = vmatprep.subr.bf16.mxu0 0
    %4565 = vmatpush1.bf16.msra.mxu0 0
    %4566 = vmatprep.subr.bf16.mxu0 0
    %4567 = vmatpush1.bf16.msra.mxu0 0
    %4568 = vmatprep.subr.bf16.mxu0 0
    %4569 = vmatpush1.bf16.msra.mxu0 0
    %4570 = vmatprep.subr.bf16.mxu0 0
    %4571 = vmatpush1.bf16.msra.mxu0 0
    %4572 = vmatprep.subr.bf16.mxu0 0
    %4573 = vmatpush1.bf16.msra.mxu0 0
    %4574 = vmatprep.subr.bf16.mxu0 0
    %4575 = vmatpush1.bf16.msra.mxu0 0
    %4576 = vmatprep.subr.bf16.mxu0 0
    %4577 = vmatpush1.bf16.msra.mxu0 0
    %4578 = vmatprep.subr.bf16.mxu0 0
    %4579 = vmatpush1.bf16.msra.mxu0 0
    %4580 = vmatprep.subr.bf16.mxu0 0
    %4581 = vmatpush1.bf16.msra.mxu0 0
    %4582 = vmatprep.subr.bf16.mxu0 0
    %4583 = vmatpush1.bf16.msra.mxu0 0
    %4584 = vmatprep.subr.bf16.mxu0 0
    %4585 = vmatpush1.bf16.msra.mxu0 0
    %4586 = vmatprep.subr.bf16.mxu0 0
    %4587 = vmatpush1.bf16.msra.mxu0 0
    %4588 = vmatprep.subr.bf16.mxu0 0
    %4589 = vmatpush1.bf16.msra.mxu0 0
    %4590 = vmatprep.subr.bf16.mxu0 0
    %4591 = vmatpush1.bf16.msra.mxu0 0
    %4592 = vmatprep.subr.bf16.mxu0 0
    %4593 = vmatpush1.bf16.msra.mxu0 0
    %4594 = vmatprep.mubr.bf16.mxu0 0
    %4595 = vmatmul.mubr.bf16.gmra.mrb[0].mxu0 %v2844
    %v4596 = vpop.f32.mrb[0].mxu0
    %v4597 = vadd.f32 %v4484, %v4596
    %v4598 = vpop.f32.mrb[0].mxu0
    %v4599 = vadd.f32 %v4486, %v4598
    %v4600 = vpop.f32.mrb[0].mxu0
    %v4601 = vadd.f32 %v4488, %v4600
    %v4602 = vpop.f32.mrb[0].mxu0
    %v4603 = vadd.f32 %v4490, %v4602
    %4604 = vmatprep.mubr.bf16.mxu0 0
    %4605 = vmatmul.mubr.bf16.gmra.mrb[0].mxu0 %v2847
    %v4606 = vpop.f32.mrb[0].mxu0
    %v4607 = vadd.f32 %v4494, %v4606
    %v4608 = vpop.f32.mrb[0].mxu0
    %v4609 = vadd.f32 %v4496, %v4608
    %v4610 = vpop.f32.mrb[0].mxu0
    %v4611 = vadd.f32 %v4498, %v4610
    %v4612 = vpop.f32.mrb[0].mxu0
    %v4613 = vadd.f32 %v4500, %v4612
    %4614 = vmatprep.mubr.bf16.mxu0 0
    %4615 = vmatmul.mubr.bf16.gmra.mrb[0].mxu0 %v2850
    %v4616 = vpop.f32.mrb[0].mxu0
    %v4617 = vadd.f32 %v4504, %v4616
    %v4618 = vpop.f32.mrb[0].mxu0
    %v4619 = vadd.f32 %v4506, %v4618
    %v4620 = vpop.f32.mrb[0].mxu0
    %v4621 = vadd.f32 %v4508, %v4620
    %v4622 = vpop.f32.mrb[0].mxu0
    %v4623 = vadd.f32 %v4510, %v4622
    %4624 = vmatprep.mubr.bf16.mxu0 0
    %4625 = vmatmul.mubr.bf16.gmra.mrb[0].mxu0 %v2853
    %v4626 = vpop.f32.mrb[0].mxu0
    %v4627 = vadd.f32 %v4514, %v4626
    %v4628 = vpop.f32.mrb[0].mxu0
    %v4629 = vadd.f32 %v4516, %v4628
    %v4630 = vpop.f32.mrb[0].mxu0
    %v4631 = vadd.f32 %v4518, %v4630
    %v4632 = vpop.f32.mrb[0].mxu0
    %v4633 = vadd.f32 %v4520, %v4632
    %4634 = vmatprep.mubr.bf16.mxu0 0
    %4635 = vmatmul.mubr.bf16.gmra.mrb[0].mxu0 %v2856
    %v4636 = vpop.f32.mrb[0].mxu0
    %v4637 = vadd.f32 %v4524, %v4636
    %v4638 = vpop.f32.mrb[0].mxu0
    %v4639 = vadd.f32 %v4526, %v4638
    %v4640 = vpop.f32.mrb[0].mxu0
    %v4641 = vadd.f32 %v4528, %v4640
    %v4642 = vpop.f32.mrb[0].mxu0
    %v4643 = vadd.f32 %v4530, %v4642
    %4644 = vmatprep.mubr.bf16.mxu0 0
    %4645 = vmatmul.mubr.bf16.gmra.mrb[0].mxu0 %v2859
    %v4646 = vpop.f32.mrb[0].mxu0
    %v4647 = vadd.f32 %v4534, %v4646
    %v4648 = vpop.f32.mrb[0].mxu0
    %v4649 = vadd.f32 %v4536, %v4648
    %v4650 = vpop.f32.mrb[0].mxu0
    %v4651 = vadd.f32 %v4538, %v4650
    %v4652 = vpop.f32.mrb[0].mxu0
    %v4653 = vadd.f32 %v4540, %v4652
    %4654 = vmatprep.mubr.bf16.mxu0 0
    %4655 = vmatmul.mubr.bf16.gmra.mrb[0].mxu0 %v2862
    %v4656 = vpop.f32.mrb[0].mxu0
    %v4657 = vadd.f32 %v4544, %v4656
    %v4658 = vpop.f32.mrb[0].mxu0
    %v4659 = vadd.f32 %v4546, %v4658
    %v4660 = vpop.f32.mrb[0].mxu0
    %v4661 = vadd.f32 %v4548, %v4660
    %v4662 = vpop.f32.mrb[0].mxu0
    %v4663 = vadd.f32 %v4550, %v4662
    %4664 = vmatprep.mubr.bf16.mxu0 0
    %4665 = vmatmul.mubr.bf16.gmra.mrb[0].mxu0 %v2865
    %v4666 = vpop.f32.mrb[0].mxu0
    %v4667 = vadd.f32 %v4554, %v4666
    %v4668 = vpop.f32.mrb[0].mxu0
    %v4669 = vadd.f32 %v4556, %v4668
    %v4670 = vpop.f32.mrb[0].mxu0
    %v4671 = vadd.f32 %v4558, %v4670
    %v4672 = vpop.f32.mrb[0].mxu0
    %v4673 = vadd.f32 %v4560, %v4672
    %4674 = vdwg.mxu0
    %v4675 = vmax.f32 %v3241, 0.0
    %v4676 = vmax.f32 %v3243, 0.0
    %v4677 = vmax.f32 %v3693, 0.0
    %v4678 = vmax.f32 %v3695, 0.0
    %v4679 = vmax.f32 %v4145, 0.0
    %v4680 = vmax.f32 %v4147, 0.0
    %v4681 = vmax.f32 %v4597, 0.0
    %v4682 = vmax.f32 %v4599, 0.0
    %v4683 = vmax.f32 %v3245, 0.0
    %v4684 = vmax.f32 %v3247, 0.0
    %v4685 = vmax.f32 %v3697, 0.0
    %v4686 = vmax.f32 %v3699, 0.0
    %v4687 = vmax.f32 %v4149, 0.0
    %v4688 = vmax.f32 %v4151, 0.0
    %v4689 = vmax.f32 %v4601, 0.0
    %v4690 = vmax.f32 %v4603, 0.0
    %v4691 = vmax.f32 %v3251, 0.0
    %v4692 = vmax.f32 %v3253, 0.0
    %v4693 = vmax.f32 %v3703, 0.0
    %v4694 = vmax.f32 %v3705, 0.0
    %v4695 = vmax.f32 %v4155, 0.0
    %v4696 = vmax.f32 %v4157, 0.0
    %v4697 = vmax.f32 %v4607, 0.0
    %v4698 = vmax.f32 %v4609, 0.0
    %v4699 = vmax.f32 %v3255, 0.0
    %v4700 = vmax.f32 %v3257, 0.0
    %v4701 = vmax.f32 %v3707, 0.0
    %v4702 = vmax.f32 %v3709, 0.0
    %v4703 = vmax.f32 %v4159, 0.0
    %v4704 = vmax.f32 %v4161, 0.0
    %v4705 = vmax.f32 %v4611, 0.0
    %v4706 = vmax.f32 %v4613, 0.0
    %v4707 = vmax.f32 %v3261, 0.0
    %v4708 = vmax.f32 %v3263, 0.0
    %v4709 = vmax.f32 %v3713, 0.0
    %v4710 = vmax.f32 %v3715, 0.0
    %v4711 = vmax.f32 %v4165, 0.0
    %v4712 = vmax.f32 %v4167, 0.0
    %v4713 = vmax.f32 %v4617, 0.0
    %v4714 = vmax.f32 %v4619, 0.0
    %v4715 = vmax.f32 %v3265, 0.0
    %v4716 = vmax.f32 %v3267, 0.0
    %v4717 = vmax.f32 %v3717, 0.0
    %v4718 = vmax.f32 %v3719, 0.0
    %v4719 = vmax.f32 %v4169, 0.0
    %v4720 = vmax.f32 %v4171, 0.0
    %v4721 = vmax.f32 %v4621, 0.0
    %v4722 = vmax.f32 %v4623, 0.0
    %v4723 = vmax.f32 %v3271, 0.0
    %v4724 = vmax.f32 %v3273, 0.0
    %v4725 = vmax.f32 %v3723, 0.0
    %v4726 = vmax.f32 %v3725, 0.0
    %v4727 = vmax.f32 %v4175, 0.0
    %v4728 = vmax.f32 %v4177, 0.0
    %v4729 = vmax.f32 %v4627, 0.0
    %v4730 = vmax.f32 %v4629, 0.0
    %v4731 = vmax.f32 %v3275, 0.0
    %v4732 = vmax.f32 %v3277, 0.0
    %v4733 = vmax.f32 %v3727, 0.0
    %v4734 = vmax.f32 %v3729, 0.0
    %v4735 = vmax.f32 %v4179, 0.0
    %v4736 = vmax.f32 %v4181, 0.0
    %v4737 = vmax.f32 %v4631, 0.0
    %v4738 = vmax.f32 %v4633, 0.0
    %v4739 = vmax.f32 %v3281, 0.0
    %v4740 = vmax.f32 %v3283, 0.0
    %v4741 = vmax.f32 %v3733, 0.0
    %v4742 = vmax.f32 %v3735, 0.0
    %v4743 = vmax.f32 %v4185, 0.0
    %v4744 = vmax.f32 %v4187, 0.0
    %v4745 = vmax.f32 %v4637, 0.0
    %v4746 = vmax.f32 %v4639, 0.0
    %v4747 = vmax.f32 %v3285, 0.0
    %v4748 = vmax.f32 %v3287, 0.0
    %v4749 = vmax.f32 %v3737, 0.0
    %v4750 = vmax.f32 %v3739, 0.0
    %v4751 = vmax.f32 %v4189, 0.0
    %v4752 = vmax.f32 %v4191, 0.0
    %v4753 = vmax.f32 %v4641, 0.0
    %v4754 = vmax.f32 %v4643, 0.0
    %v4755 = vmax.f32 %v3291, 0.0
    %v4756 = vmax.f32 %v3293, 0.0
    %v4757 = vmax.f32 %v3743, 0.0
    %v4758 = vmax.f32 %v3745, 0.0
    %v4759 = vmax.f32 %v4195, 0.0
    %v4760 = vmax.f32 %v4197, 0.0
    %v4761 = vmax.f32 %v4647, 0.0
    %v4762 = vmax.f32 %v4649, 0.0
    %v4763 = vmax.f32 %v3295, 0.0
    %v4764 = vmax.f32 %v3297, 0.0
    %v4765 = vmax.f32 %v3747, 0.0
    %v4766 = vmax.f32 %v3749, 0.0
    %v4767 = vmax.f32 %v4199, 0.0
    %v4768 = vmax.f32 %v4201, 0.0
    %v4769 = vmax.f32 %v4651, 0.0
    %v4770 = vmax.f32 %v4653, 0.0
    %v4771 = vmax.f32 %v3301, 0.0
    %v4772 = vmax.f32 %v3303, 0.0
    %v4773 = vmax.f32 %v3753, 0.0
    %v4774 = vmax.f32 %v3755, 0.0
    %v4775 = vmax.f32 %v4205, 0.0
    %v4776 = vmax.f32 %v4207, 0.0
    %v4777 = vmax.f32 %v4657, 0.0
    %v4778 = vmax.f32 %v4659, 0.0
    %v4779 = vmax.f32 %v3305, 0.0
    %v4780 = vmax.f32 %v3307, 0.0
    %v4781 = vmax.f32 %v3757, 0.0
    %v4782 = vmax.f32 %v3759, 0.0
    %v4783 = vmax.f32 %v4209, 0.0
    %v4784 = vmax.f32 %v4211, 0.0
    %v4785 = vmax.f32 %v4661, 0.0
    %v4786 = vmax.f32 %v4663, 0.0
    %v4787 = vmax.f32 %v3311, 0.0
    %v4788 = vmax.f32 %v3313, 0.0
    %v4789 = vmax.f32 %v3763, 0.0
    %v4790 = vmax.f32 %v3765, 0.0
    %v4791 = vmax.f32 %v4215, 0.0
    %v4792 = vmax.f32 %v4217, 0.0
    %v4793 = vmax.f32 %v4667, 0.0
    %v4794 = vmax.f32 %v4669, 0.0
    %v4795 = vmax.f32 %v3315, 0.0
    %v4796 = vmax.f32 %v3317, 0.0
    %v4797 = vmax.f32 %v3767, 0.0
    %v4798 = vmax.f32 %v3769, 0.0
    %v4799 = vmax.f32 %v4219, 0.0
    %v4800 = vmax.f32 %v4221, 0.0
    %v4801 = vmax.f32 %v4671, 0.0
    %v4802 = vmax.f32 %v4673, 0.0
    %v4803 = vpack.c.bf16 %v4683, %v4675
    %v4804 = vpack.c.bf16 %v4684, %v4676
    %v4805 = vpack.c.bf16 %v4685, %v4677
    %v4806 = vpack.c.bf16 %v4686, %v4678
    %v4807 = vpack.c.bf16 %v4687, %v4679
    %v4808 = vpack.c.bf16 %v4688, %v4680
    %v4809 = vpack.c.bf16 %v4689, %v4681
    %v4810 = vpack.c.bf16 %v4690, %v4682
    %v4811 = vpack.c.bf16 %v4699, %v4691
    %v4812 = vpack.c.bf16 %v4700, %v4692
    %v4813 = vpack.c.bf16 %v4701, %v4693
    %v4814 = vpack.c.bf16 %v4702, %v4694
    %v4815 = vpack.c.bf16 %v4703, %v4695
    %v4816 = vpack.c.bf16 %v4704, %v4696
    %v4817 = vpack.c.bf16 %v4705, %v4697
    %v4818 = vpack.c.bf16 %v4706, %v4698
    %v4819 = vpack.c.bf16 %v4715, %v4707
    %v4820 = vpack.c.bf16 %v4716, %v4708
    %v4821 = vpack.c.bf16 %v4717, %v4709
    %v4822 = vpack.c.bf16 %v4718, %v4710
    %v4823 = vpack.c.bf16 %v4719, %v4711
    %v4824 = vpack.c.bf16 %v4720, %v4712
    %v4825 = vpack.c.bf16 %v4721, %v4713
    %v4826 = vpack.c.bf16 %v4722, %v4714
    %v4827 = vpack.c.bf16 %v4731, %v4723
    %v4828 = vpack.c.bf16 %v4732, %v4724
    %v4829 = vpack.c.bf16 %v4733, %v4725
    %v4830 = vpack.c.bf16 %v4734, %v4726
    %v4831 = vpack.c.bf16 %v4735, %v4727
    %v4832 = vpack.c.bf16 %v4736, %v4728
    %v4833 = vpack.c.bf16 %v4737, %v4729
    %v4834 = vpack.c.bf16 %v4738, %v4730
    %v4835 = vpack.c.bf16 %v4747, %v4739
    %v4836 = vpack.c.bf16 %v4748, %v4740
    %v4837 = vpack.c.bf16 %v4749, %v4741
    %v4838 = vpack.c.bf16 %v4750, %v4742
    %v4839 = vpack.c.bf16 %v4751, %v4743
    %v4840 = vpack.c.bf16 %v4752, %v4744
    %v4841 = vpack.c.bf16 %v4753, %v4745
    %v4842 = vpack.c.bf16 %v4754, %v4746
    %v4843 = vpack.c.bf16 %v4763, %v4755
    %v4844 = vpack.c.bf16 %v4764, %v4756
    %v4845 = vpack.c.bf16 %v4765, %v4757
    %v4846 = vpack.c.bf16 %v4766, %v4758
    %v4847 = vpack.c.bf16 %v4767, %v4759
    %v4848 = vpack.c.bf16 %v4768, %v4760
    %v4849 = vpack.c.bf16 %v4769, %v4761
    %v4850 = vpack.c.bf16 %v4770, %v4762
    %v4851 = vpack.c.bf16 %v4779, %v4771
    %v4852 = vpack.c.bf16 %v4780, %v4772
    %v4853 = vpack.c.bf16 %v4781, %v4773
    %v4854 = vpack.c.bf16 %v4782, %v4774
    %v4855 = vpack.c.bf16 %v4783, %v4775
    %v4856 = vpack.c.bf16 %v4784, %v4776
    %v4857 = vpack.c.bf16 %v4785, %v4777
    %v4858 = vpack.c.bf16 %v4786, %v4778
    %v4859 = vpack.c.bf16 %v4795, %v4787
    %v4860 = vpack.c.bf16 %v4796, %v4788
    %v4861 = vpack.c.bf16 %v4797, %v4789
    %v4862 = vpack.c.bf16 %v4798, %v4790
    %v4863 = vpack.c.bf16 %v4799, %v4791
    %v4864 = vpack.c.bf16 %v4800, %v4792
    %v4865 = vpack.c.bf16 %v4801, %v4793
    %v4866 = vpack.c.bf16 %v4802, %v4794
    %v4867 = vld [vmem:[#allocation7] sm:$0xff]
    %v4868 = vld [vmem:[#allocation7 + $0x8] sm:$0xff]
    %v4869 = vld [vmem:[#allocation7 + $0x10] sm:$0xff]
    %v4870 = vld [vmem:[#allocation7 + $0x18] sm:$0xff]
    %v4871 = vld [vmem:[#allocation7 + $0x20] sm:$0xff]
    %v4872 = vld [vmem:[#allocation7 + $0x28] sm:$0xff]
    %v4873 = vld [vmem:[#allocation7 + $0x30] sm:$0xff]
    %v4874 = vld [vmem:[#allocation7 + $0x38] sm:$0xff]
    %v4875 = vld [vmem:[#allocation7 + $0x40] sm:$0xff]
    %v4876 = vld [vmem:[#allocation7 + $0x48] sm:$0xff]
    %v4877 = vld [vmem:[#allocation7 + $0x50] sm:$0xff]
    %v4878 = vld [vmem:[#allocation7 + $0x58] sm:$0xff]
    %v4879 = vld [vmem:[#allocation7 + $0x60] sm:$0xff]
    %v4880 = vld [vmem:[#allocation7 + $0x68] sm:$0xff]
    %v4881 = vld [vmem:[#allocation7 + $0x70] sm:$0xff]
    %v4882 = vld [vmem:[#allocation7 + $0x78] sm:$0xff]
    %v4883 = vld [vmem:[#allocation7 + $0x80] sm:$0xff]
    %v4884 = vld [vmem:[#allocation7 + $0x88] sm:$0xff]
    %v4885 = vld [vmem:[#allocation7 + $0x90] sm:$0xff]
    %v4886 = vld [vmem:[#allocation7 + $0x98] sm:$0xff]
    %v4887 = vld [vmem:[#allocation7 + $0xa0] sm:$0xff]
    %v4888 = vld [vmem:[#allocation7 + $0xa8] sm:$0xff]
    %v4889 = vld [vmem:[#allocation7 + $0xb0] sm:$0xff]
    %v4890 = vld [vmem:[#allocation7 + $0xb8] sm:$0xff]
    %v4891 = vld [vmem:[#allocation7 + $0xc0] sm:$0xff]
    %v4892 = vld [vmem:[#allocation7 + $0xc8] sm:$0xff]
    %v4893 = vld [vmem:[#allocation7 + $0xd0] sm:$0xff]
    %v4894 = vld [vmem:[#allocation7 + $0xd8] sm:$0xff]
    %v4895 = vld [vmem:[#allocation7 + $0xe0] sm:$0xff]
    %v4896 = vld [vmem:[#allocation7 + $0xe8] sm:$0xff]
    %v4897 = vld [vmem:[#allocation7 + $0xf0] sm:$0xff]
    %v4898 = vld [vmem:[#allocation7 + $0xf8] sm:$0xff]
    %v4899 = vld [vmem:[#allocation7 + $0x100] sm:$0xff]
    %v4900 = vld [vmem:[#allocation7 + $0x108] sm:$0xff]
    %v4901 = vld [vmem:[#allocation7 + $0x110] sm:$0xff]
    %v4902 = vld [vmem:[#allocation7 + $0x118] sm:$0xff]
    %v4903 = vld [vmem:[#allocation7 + $0x120] sm:$0xff]
    %v4904 = vld [vmem:[#allocation7 + $0x128] sm:$0xff]
    %v4905 = vld [vmem:[#allocation7 + $0x130] sm:$0xff]
    %v4906 = vld [vmem:[#allocation7 + $0x138] sm:$0xff]
    %v4907 = vld [vmem:[#allocation7 + $0x140] sm:$0xff]
    %v4908 = vld [vmem:[#allocation7 + $0x148] sm:$0xff]
    %v4909 = vld [vmem:[#allocation7 + $0x150] sm:$0xff]
    %v4910 = vld [vmem:[#allocation7 + $0x158] sm:$0xff]
    %v4911 = vld [vmem:[#allocation7 + $0x160] sm:$0xff]
    %v4912 = vld [vmem:[#allocation7 + $0x168] sm:$0xff]
    %v4913 = vld [vmem:[#allocation7 + $0x170] sm:$0xff]
    %v4914 = vld [vmem:[#allocation7 + $0x178] sm:$0xff]
    %v4915 = vld [vmem:[#allocation7 + $0x180] sm:$0xff]
    %v4916 = vld [vmem:[#allocation7 + $0x188] sm:$0xff]
    %v4917 = vld [vmem:[#allocation7 + $0x190] sm:$0xff]
    %v4918 = vld [vmem:[#allocation7 + $0x198] sm:$0xff]
    %v4919 = vld [vmem:[#allocation7 + $0x1a0] sm:$0xff]
    %v4920 = vld [vmem:[#allocation7 + $0x1a8] sm:$0xff]
    %v4921 = vld [vmem:[#allocation7 + $0x1b0] sm:$0xff]
    %v4922 = vld [vmem:[#allocation7 + $0x1b8] sm:$0xff]
    %v4923 = vld [vmem:[#allocation7 + $0x1c0] sm:$0xff]
    %v4924 = vld [vmem:[#allocation7 + $0x1c8] sm:$0xff]
    %v4925 = vld [vmem:[#allocation7 + $0x1d0] sm:$0xff]
    %v4926 = vld [vmem:[#allocation7 + $0x1d8] sm:$0xff]
    %v4927 = vld [vmem:[#allocation7 + $0x1e0] sm:$0xff]
    %v4928 = vld [vmem:[#allocation7 + $0x1e8] sm:$0xff]
    %v4929 = vld [vmem:[#allocation7 + $0x1f0] sm:$0xff]
    %v4930 = vld [vmem:[#allocation7 + $0x1f8] sm:$0xff]
    %v4931 = vld [vmem:[#allocation7 + $0x200] sm:$0xff]
    %v4932 = vld [vmem:[#allocation7 + $0x208] sm:$0xff]
    %v4933 = vld [vmem:[#allocation7 + $0x210] sm:$0xff]
    %v4934 = vld [vmem:[#allocation7 + $0x218] sm:$0xff]
    %v4935 = vld [vmem:[#allocation7 + $0x220] sm:$0xff]
    %v4936 = vld [vmem:[#allocation7 + $0x228] sm:$0xff]
    %v4937 = vld [vmem:[#allocation7 + $0x230] sm:$0xff]
    %v4938 = vld [vmem:[#allocation7 + $0x238] sm:$0xff]
    %v4939 = vld [vmem:[#allocation7 + $0x240] sm:$0xff]
    %v4940 = vld [vmem:[#allocation7 + $0x248] sm:$0xff]
    %v4941 = vld [vmem:[#allocation7 + $0x250] sm:$0xff]
    %v4942 = vld [vmem:[#allocation7 + $0x258] sm:$0xff]
    %v4943 = vld [vmem:[#allocation7 + $0x260] sm:$0xff]
    %v4944 = vld [vmem:[#allocation7 + $0x268] sm:$0xff]
    %v4945 = vld [vmem:[#allocation7 + $0x270] sm:$0xff]
    %v4946 = vld [vmem:[#allocation7 + $0x278] sm:$0xff]
    %v4947 = vld [vmem:[#allocation7 + $0x280] sm:$0xff]
    %v4948 = vld [vmem:[#allocation7 + $0x288] sm:$0xff]
    %v4949 = vld [vmem:[#allocation7 + $0x290] sm:$0xff]
    %v4950 = vld [vmem:[#allocation7 + $0x298] sm:$0xff]
    %v4951 = vld [vmem:[#allocation7 + $0x2a0] sm:$0xff]
    %v4952 = vld [vmem:[#allocation7 + $0x2a8] sm:$0xff]
    %v4953 = vld [vmem:[#allocation7 + $0x2b0] sm:$0xff]
    %v4954 = vld [vmem:[#allocation7 + $0x2b8] sm:$0xff]
    %v4955 = vld [vmem:[#allocation7 + $0x2c0] sm:$0xff]
    %v4956 = vld [vmem:[#allocation7 + $0x2c8] sm:$0xff]
    %v4957 = vld [vmem:[#allocation7 + $0x2d0] sm:$0xff]
    %v4958 = vld [vmem:[#allocation7 + $0x2d8] sm:$0xff]
    %v4959 = vld [vmem:[#allocation7 + $0x2e0] sm:$0xff]
    %v4960 = vld [vmem:[#allocation7 + $0x2e8] sm:$0xff]
    %v4961 = vld [vmem:[#allocation7 + $0x2f0] sm:$0xff]
    %v4962 = vld [vmem:[#allocation7 + $0x2f8] sm:$0xff]
    %v4963 = vld [vmem:[#allocation7 + $0x300] sm:$0xff]
    %v4964 = vld [vmem:[#allocation7 + $0x308] sm:$0xff]
    %v4965 = vld [vmem:[#allocation7 + $0x310] sm:$0xff]
    %v4966 = vld [vmem:[#allocation7 + $0x318] sm:$0xff]
    %v4967 = vld [vmem:[#allocation7 + $0x320] sm:$0xff]
    %v4968 = vld [vmem:[#allocation7 + $0x328] sm:$0xff]
    %v4969 = vld [vmem:[#allocation7 + $0x330] sm:$0xff]
    %v4970 = vld [vmem:[#allocation7 + $0x338] sm:$0xff]
    %v4971 = vld [vmem:[#allocation7 + $0x340] sm:$0xff]
    %v4972 = vld [vmem:[#allocation7 + $0x348] sm:$0xff]
    %v4973 = vld [vmem:[#allocation7 + $0x350] sm:$0xff]
    %v4974 = vld [vmem:[#allocation7 + $0x358] sm:$0xff]
    %v4975 = vld [vmem:[#allocation7 + $0x360] sm:$0xff]
    %v4976 = vld [vmem:[#allocation7 + $0x368] sm:$0xff]
    %v4977 = vld [vmem:[#allocation7 + $0x370] sm:$0xff]
    %v4978 = vld [vmem:[#allocation7 + $0x378] sm:$0xff]
    %v4979 = vld [vmem:[#allocation7 + $0x380] sm:$0xff]
    %v4980 = vld [vmem:[#allocation7 + $0x388] sm:$0xff]
    %v4981 = vld [vmem:[#allocation7 + $0x390] sm:$0xff]
    %v4982 = vld [vmem:[#allocation7 + $0x398] sm:$0xff]
    %v4983 = vld [vmem:[#allocation7 + $0x3a0] sm:$0xff]
    %v4984 = vld [vmem:[#allocation7 + $0x3a8] sm:$0xff]
    %v4985 = vld [vmem:[#allocation7 + $0x3b0] sm:$0xff]
    %v4986 = vld [vmem:[#allocation7 + $0x3b8] sm:$0xff]
    %v4987 = vld [vmem:[#allocation7 + $0x3c0] sm:$0xff]
    %v4988 = vld [vmem:[#allocation7 + $0x3c8] sm:$0xff]
    %v4989 = vld [vmem:[#allocation7 + $0x3d0] sm:$0xff]
    %v4990 = vld [vmem:[#allocation7 + $0x3d8] sm:$0xff]
    %v4991 = vld [vmem:[#allocation7 + $0x3e0] sm:$0xff]
    %v4992 = vld [vmem:[#allocation7 + $0x3e8] sm:$0xff]
    %v4993 = vld [vmem:[#allocation7 + $0x3f0] sm:$0xff]
    %v4994 = vld [vmem:[#allocation7 + $0x3f8] sm:$0xff]
    %v4995 = vld [vmem:[#allocation7 + $0x400] sm:$0xff]
    %v4996 = vld [vmem:[#allocation7 + $0x408] sm:$0xff]
    %v4997 = vld [vmem:[#allocation7 + $0x410] sm:$0xff]
    %v4998 = vld [vmem:[#allocation7 + $0x418] sm:$0xff]
    %v4999 = vld [vmem:[#allocation7 + $0x420] sm:$0xff]
    %v5000 = vld [vmem:[#allocation7 + $0x428] sm:$0xff]
    %v5001 = vld [vmem:[#allocation7 + $0x430] sm:$0xff]
    %v5002 = vld [vmem:[#allocation7 + $0x438] sm:$0xff]
    %v5003 = vld [vmem:[#allocation7 + $0x440] sm:$0xff]
    %v5004 = vld [vmem:[#allocation7 + $0x448] sm:$0xff]
    %v5005 = vld [vmem:[#allocation7 + $0x450] sm:$0xff]
    %v5006 = vld [vmem:[#allocation7 + $0x458] sm:$0xff]
    %v5007 = vld [vmem:[#allocation7 + $0x460] sm:$0xff]
    %v5008 = vld [vmem:[#allocation7 + $0x468] sm:$0xff]
    %v5009 = vld [vmem:[#allocation7 + $0x470] sm:$0xff]
    %v5010 = vld [vmem:[#allocation7 + $0x478] sm:$0xff]
    %v5011 = vld [vmem:[#allocation7 + $0x480] sm:$0xff]
    %v5012 = vld [vmem:[#allocation7 + $0x488] sm:$0xff]
    %v5013 = vld [vmem:[#allocation7 + $0x490] sm:$0xff]
    %v5014 = vld [vmem:[#allocation7 + $0x498] sm:$0xff]
    %v5015 = vld [vmem:[#allocation7 + $0x4a0] sm:$0xff]
    %v5016 = vld [vmem:[#allocation7 + $0x4a8] sm:$0xff]
    %v5017 = vld [vmem:[#allocation7 + $0x4b0] sm:$0xff]
    %v5018 = vld [vmem:[#allocation7 + $0x4b8] sm:$0xff]
    %v5019 = vld [vmem:[#allocation7 + $0x4c0] sm:$0xff]
    %v5020 = vld [vmem:[#allocation7 + $0x4c8] sm:$0xff]
    %v5021 = vld [vmem:[#allocation7 + $0x4d0] sm:$0xff]
    %v5022 = vld [vmem:[#allocation7 + $0x4d8] sm:$0xff]
    %v5023 = vld [vmem:[#allocation7 + $0x4e0] sm:$0xff]
    %v5024 = vld [vmem:[#allocation7 + $0x4e8] sm:$0xff]
    %v5025 = vld [vmem:[#allocation7 + $0x4f0] sm:$0xff]
    %v5026 = vld [vmem:[#allocation7 + $0x4f8] sm:$0xff]
    %v5027 = vld [vmem:[#allocation7 + $0x500] sm:$0xff]
    %v5028 = vld [vmem:[#allocation7 + $0x508] sm:$0xff]
    %v5029 = vld [vmem:[#allocation7 + $0x510] sm:$0xff]
    %v5030 = vld [vmem:[#allocation7 + $0x518] sm:$0xff]
    %v5031 = vld [vmem:[#allocation7 + $0x520] sm:$0xff]
    %v5032 = vld [vmem:[#allocation7 + $0x528] sm:$0xff]
    %v5033 = vld [vmem:[#allocation7 + $0x530] sm:$0xff]
    %v5034 = vld [vmem:[#allocation7 + $0x538] sm:$0xff]
    %v5035 = vld [vmem:[#allocation7 + $0x540] sm:$0xff]
    %v5036 = vld [vmem:[#allocation7 + $0x548] sm:$0xff]
    %v5037 = vld [vmem:[#allocation7 + $0x550] sm:$0xff]
    %v5038 = vld [vmem:[#allocation7 + $0x558] sm:$0xff]
    %v5039 = vld [vmem:[#allocation7 + $0x560] sm:$0xff]
    %v5040 = vld [vmem:[#allocation7 + $0x568] sm:$0xff]
    %v5041 = vld [vmem:[#allocation7 + $0x570] sm:$0xff]
    %v5042 = vld [vmem:[#allocation7 + $0x578] sm:$0xff]
    %v5043 = vld [vmem:[#allocation7 + $0x580] sm:$0xff]
    %v5044 = vld [vmem:[#allocation7 + $0x588] sm:$0xff]
    %v5045 = vld [vmem:[#allocation7 + $0x590] sm:$0xff]
    %v5046 = vld [vmem:[#allocation7 + $0x598] sm:$0xff]
    %v5047 = vld [vmem:[#allocation7 + $0x5a0] sm:$0xff]
    %v5048 = vld [vmem:[#allocation7 + $0x5a8] sm:$0xff]
    %v5049 = vld [vmem:[#allocation7 + $0x5b0] sm:$0xff]
    %v5050 = vld [vmem:[#allocation7 + $0x5b8] sm:$0xff]
    %v5051 = vld [vmem:[#allocation7 + $0x5c0] sm:$0xff]
    %v5052 = vld [vmem:[#allocation7 + $0x5c8] sm:$0xff]
    %v5053 = vld [vmem:[#allocation7 + $0x5d0] sm:$0xff]
    %v5054 = vld [vmem:[#allocation7 + $0x5d8] sm:$0xff]
    %v5055 = vld [vmem:[#allocation7 + $0x5e0] sm:$0xff]
    %v5056 = vld [vmem:[#allocation7 + $0x5e8] sm:$0xff]
    %v5057 = vld [vmem:[#allocation7 + $0x5f0] sm:$0xff]
    %v5058 = vld [vmem:[#allocation7 + $0x5f8] sm:$0xff]
    %v5059 = vld [vmem:[#allocation7 + $0x600] sm:$0xff]
    %v5060 = vld [vmem:[#allocation7 + $0x608] sm:$0xff]
    %v5061 = vld [vmem:[#allocation7 + $0x610] sm:$0xff]
    %v5062 = vld [vmem:[#allocation7 + $0x618] sm:$0xff]
    %v5063 = vld [vmem:[#allocation7 + $0x620] sm:$0xff]
    %v5064 = vld [vmem:[#allocation7 + $0x628] sm:$0xff]
    %v5065 = vld [vmem:[#allocation7 + $0x630] sm:$0xff]
    %v5066 = vld [vmem:[#allocation7 + $0x638] sm:$0xff]
    %v5067 = vld [vmem:[#allocation7 + $0x640] sm:$0xff]
    %v5068 = vld [vmem:[#allocation7 + $0x648] sm:$0xff]
    %v5069 = vld [vmem:[#allocation7 + $0x650] sm:$0xff]
    %v5070 = vld [vmem:[#allocation7 + $0x658] sm:$0xff]
    %v5071 = vld [vmem:[#allocation7 + $0x660] sm:$0xff]
    %v5072 = vld [vmem:[#allocation7 + $0x668] sm:$0xff]
    %v5073 = vld [vmem:[#allocation7 + $0x670] sm:$0xff]
    %v5074 = vld [vmem:[#allocation7 + $0x678] sm:$0xff]
    %v5075 = vld [vmem:[#allocation7 + $0x680] sm:$0xff]
    %v5076 = vld [vmem:[#allocation7 + $0x688] sm:$0xff]
    %v5077 = vld [vmem:[#allocation7 + $0x690] sm:$0xff]
    %v5078 = vld [vmem:[#allocation7 + $0x698] sm:$0xff]
    %v5079 = vld [vmem:[#allocation7 + $0x6a0] sm:$0xff]
    %v5080 = vld [vmem:[#allocation7 + $0x6a8] sm:$0xff]
    %v5081 = vld [vmem:[#allocation7 + $0x6b0] sm:$0xff]
    %v5082 = vld [vmem:[#allocation7 + $0x6b8] sm:$0xff]
    %v5083 = vld [vmem:[#allocation7 + $0x6c0] sm:$0xff]
    %v5084 = vld [vmem:[#allocation7 + $0x6c8] sm:$0xff]
    %v5085 = vld [vmem:[#allocation7 + $0x6d0] sm:$0xff]
    %v5086 = vld [vmem:[#allocation7 + $0x6d8] sm:$0xff]
    %v5087 = vld [vmem:[#allocation7 + $0x6e0] sm:$0xff]
    %v5088 = vld [vmem:[#allocation7 + $0x6e8] sm:$0xff]
    %v5089 = vld [vmem:[#allocation7 + $0x6f0] sm:$0xff]
    %v5090 = vld [vmem:[#allocation7 + $0x6f8] sm:$0xff]
    %v5091 = vld [vmem:[#allocation7 + $0x700] sm:$0xff]
    %v5092 = vld [vmem:[#allocation7 + $0x708] sm:$0xff]
    %v5093 = vld [vmem:[#allocation7 + $0x710] sm:$0xff]
    %v5094 = vld [vmem:[#allocation7 + $0x718] sm:$0xff]
    %v5095 = vld [vmem:[#allocation7 + $0x720] sm:$0xff]
    %v5096 = vld [vmem:[#allocation7 + $0x728] sm:$0xff]
    %v5097 = vld [vmem:[#allocation7 + $0x730] sm:$0xff]
    %v5098 = vld [vmem:[#allocation7 + $0x738] sm:$0xff]
    %v5099 = vld [vmem:[#allocation7 + $0x740] sm:$0xff]
    %v5100 = vld [vmem:[#allocation7 + $0x748] sm:$0xff]
    %v5101 = vld [vmem:[#allocation7 + $0x750] sm:$0xff]
    %v5102 = vld [vmem:[#allocation7 + $0x758] sm:$0xff]
    %v5103 = vld [vmem:[#allocation7 + $0x760] sm:$0xff]
    %v5104 = vld [vmem:[#allocation7 + $0x768] sm:$0xff]
    %v5105 = vld [vmem:[#allocation7 + $0x770] sm:$0xff]
    %v5106 = vld [vmem:[#allocation7 + $0x778] sm:$0xff]
    %v5107 = vld [vmem:[#allocation7 + $0x780] sm:$0xff]
    %v5108 = vld [vmem:[#allocation7 + $0x788] sm:$0xff]
    %v5109 = vld [vmem:[#allocation7 + $0x790] sm:$0xff]
    %v5110 = vld [vmem:[#allocation7 + $0x798] sm:$0xff]
    %v5111 = vld [vmem:[#allocation7 + $0x7a0] sm:$0xff]
    %v5112 = vld [vmem:[#allocation7 + $0x7a8] sm:$0xff]
    %v5113 = vld [vmem:[#allocation7 + $0x7b0] sm:$0xff]
    %v5114 = vld [vmem:[#allocation7 + $0x7b8] sm:$0xff]
    %v5115 = vld [vmem:[#allocation7 + $0x7c0] sm:$0xff]
    %v5116 = vld [vmem:[#allocation7 + $0x7c8] sm:$0xff]
    %v5117 = vld [vmem:[#allocation7 + $0x7d0] sm:$0xff]
    %v5118 = vld [vmem:[#allocation7 + $0x7d8] sm:$0xff]
    %v5119 = vld [vmem:[#allocation7 + $0x7e0] sm:$0xff]
    %v5120 = vld [vmem:[#allocation7 + $0x7e8] sm:$0xff]
    %v5121 = vld [vmem:[#allocation7 + $0x7f0] sm:$0xff]
    %v5122 = vld [vmem:[#allocation7 + $0x7f8] sm:$0xff]
    %v5123 = vld [vmem:[#allocation8] sm:$0xf]
    %v5125 = vlaneseq
    %v5126 = vshrl.u32 %v5125, 7
    %v5127 = vsub.s32 0, %v5126
    %v5128 = vrot.slane %v5123, %v5127
    %v5129 = vlaneseq
    %v5130 = vshrl.u32 %v5129, 7
    %v5131 = vsub.s32 1, %v5130
    %v5132 = vrot.slane %v5123, %v5131
    %v5133 = vlaneseq
    %v5134 = vshrl.u32 %v5133, 7
    %v5135 = vsub.s32 2, %v5134
    %v5136 = vrot.slane %v5123, %v5135
    %v5137 = vlaneseq
    %v5138 = vshrl.u32 %v5137, 7
    %v5139 = vsub.s32 3, %v5138
    %v5140 = vrot.slane %v5123, %v5139
    %v5401 = vunpack.c.l.b16 %v4867
    %v5402 = vunpack.c.h.b16 %v4867
    %v5403 = vunpack.c.l.b16 %v4868
    %v5404 = vunpack.c.h.b16 %v4868
    %v5405 = vunpack.c.l.b16 %v4869
    %v5406 = vunpack.c.h.b16 %v4869
    %v5407 = vunpack.c.l.b16 %v4870
    %v5408 = vunpack.c.h.b16 %v4870
    %v5409 = vunpack.c.l.b16 %v4871
    %v5410 = vunpack.c.h.b16 %v4871
    %v5411 = vunpack.c.l.b16 %v4872
    %v5412 = vunpack.c.h.b16 %v4872
    %v5413 = vunpack.c.l.b16 %v4873
    %v5414 = vunpack.c.h.b16 %v4873
    %v5415 = vunpack.c.l.b16 %v4874
    %v5416 = vunpack.c.h.b16 %v4874
    %v5417 = vunpack.c.l.b16 %v4875
    %v5418 = vunpack.c.h.b16 %v4875
    %v5419 = vunpack.c.l.b16 %v4876
    %v5420 = vunpack.c.h.b16 %v4876
    %v5421 = vunpack.c.l.b16 %v4877
    %v5422 = vunpack.c.h.b16 %v4877
    %v5423 = vunpack.c.l.b16 %v4878
    %v5424 = vunpack.c.h.b16 %v4878
    %v5425 = vunpack.c.l.b16 %v4879
    %v5426 = vunpack.c.h.b16 %v4879
    %v5427 = vunpack.c.l.b16 %v4880
    %v5428 = vunpack.c.h.b16 %v4880
    %v5429 = vunpack.c.l.b16 %v4881
    %v5430 = vunpack.c.h.b16 %v4881
    %v5431 = vunpack.c.l.b16 %v4882
    %v5432 = vunpack.c.h.b16 %v4882
    %v5433 = vunpack.c.l.b16 %v4883
    %v5434 = vunpack.c.h.b16 %v4883
    %v5435 = vunpack.c.l.b16 %v4884
    %v5436 = vunpack.c.h.b16 %v4884
    %v5437 = vunpack.c.l.b16 %v4885
    %v5438 = vunpack.c.h.b16 %v4885
    %v5439 = vunpack.c.l.b16 %v4886
    %v5440 = vunpack.c.h.b16 %v4886
    %v5441 = vunpack.c.l.b16 %v4887
    %v5442 = vunpack.c.h.b16 %v4887
    %v5443 = vunpack.c.l.b16 %v4888
    %v5444 = vunpack.c.h.b16 %v4888
    %v5445 = vunpack.c.l.b16 %v4889
    %v5446 = vunpack.c.h.b16 %v4889
    %v5447 = vunpack.c.l.b16 %v4890
    %v5448 = vunpack.c.h.b16 %v4890
    %v5449 = vunpack.c.l.b16 %v4891
    %v5450 = vunpack.c.h.b16 %v4891
    %v5451 = vunpack.c.l.b16 %v4892
    %v5452 = vunpack.c.h.b16 %v4892
    %v5453 = vunpack.c.l.b16 %v4893
    %v5454 = vunpack.c.h.b16 %v4893
    %v5455 = vunpack.c.l.b16 %v4894
    %v5456 = vunpack.c.h.b16 %v4894
    %v5457 = vunpack.c.l.b16 %v4895
    %v5458 = vunpack.c.h.b16 %v4895
    %v5459 = vunpack.c.l.b16 %v4896
    %v5460 = vunpack.c.h.b16 %v4896
    %v5461 = vunpack.c.l.b16 %v4897
    %v5462 = vunpack.c.h.b16 %v4897
    %v5463 = vunpack.c.l.b16 %v4898
    %v5464 = vunpack.c.h.b16 %v4898
    %v5465 = vunpack.c.l.b16 %v4899
    %v5466 = vunpack.c.h.b16 %v4899
    %v5467 = vunpack.c.l.b16 %v4900
    %v5468 = vunpack.c.h.b16 %v4900
    %v5469 = vunpack.c.l.b16 %v4901
    %v5470 = vunpack.c.h.b16 %v4901
    %v5471 = vunpack.c.l.b16 %v4902
    %v5472 = vunpack.c.h.b16 %v4902
    %v5473 = vunpack.c.l.b16 %v4903
    %v5474 = vunpack.c.h.b16 %v4903
    %v5475 = vunpack.c.l.b16 %v4904
    %v5476 = vunpack.c.h.b16 %v4904
    %v5477 = vunpack.c.l.b16 %v4905
    %v5478 = vunpack.c.h.b16 %v4905
    %v5479 = vunpack.c.l.b16 %v4906
    %v5480 = vunpack.c.h.b16 %v4906
    %v5481 = vunpack.c.l.b16 %v4907
    %v5482 = vunpack.c.h.b16 %v4907
    %v5483 = vunpack.c.l.b16 %v4908
    %v5484 = vunpack.c.h.b16 %v4908
    %v5485 = vunpack.c.l.b16 %v4909
    %v5486 = vunpack.c.h.b16 %v4909
    %v5487 = vunpack.c.l.b16 %v4910
    %v5488 = vunpack.c.h.b16 %v4910
    %v5489 = vunpack.c.l.b16 %v4911
    %v5490 = vunpack.c.h.b16 %v4911
    %v5491 = vunpack.c.l.b16 %v4912
    %v5492 = vunpack.c.h.b16 %v4912
    %v5493 = vunpack.c.l.b16 %v4913
    %v5494 = vunpack.c.h.b16 %v4913
    %v5495 = vunpack.c.l.b16 %v4914
    %v5496 = vunpack.c.h.b16 %v4914
    %v5497 = vunpack.c.l.b16 %v4915
    %v5498 = vunpack.c.h.b16 %v4915
    %v5499 = vunpack.c.l.b16 %v4916
    %v5500 = vunpack.c.h.b16 %v4916
    %v5501 = vunpack.c.l.b16 %v4917
    %v5502 = vunpack.c.h.b16 %v4917
    %v5503 = vunpack.c.l.b16 %v4918
    %v5504 = vunpack.c.h.b16 %v4918
    %v5505 = vunpack.c.l.b16 %v4919
    %v5506 = vunpack.c.h.b16 %v4919
    %v5507 = vunpack.c.l.b16 %v4920
    %v5508 = vunpack.c.h.b16 %v4920
    %v5509 = vunpack.c.l.b16 %v4921
    %v5510 = vunpack.c.h.b16 %v4921
    %v5511 = vunpack.c.l.b16 %v4922
    %v5512 = vunpack.c.h.b16 %v4922
    %v5513 = vunpack.c.l.b16 %v4923
    %v5514 = vunpack.c.h.b16 %v4923
    %v5515 = vunpack.c.l.b16 %v4924
    %v5516 = vunpack.c.h.b16 %v4924
    %v5517 = vunpack.c.l.b16 %v4925
    %v5518 = vunpack.c.h.b16 %v4925
    %v5519 = vunpack.c.l.b16 %v4926
    %v5520 = vunpack.c.h.b16 %v4926
    %v5521 = vunpack.c.l.b16 %v4927
    %v5522 = vunpack.c.h.b16 %v4927
    %v5523 = vunpack.c.l.b16 %v4928
    %v5524 = vunpack.c.h.b16 %v4928
    %v5525 = vunpack.c.l.b16 %v4929
    %v5526 = vunpack.c.h.b16 %v4929
    %v5527 = vunpack.c.l.b16 %v4930
    %v5528 = vunpack.c.h.b16 %v4930
    %v5529 = vunpack.c.l.b16 %v4931
    %v5530 = vunpack.c.h.b16 %v4931
    %v5531 = vunpack.c.l.b16 %v4932
    %v5532 = vunpack.c.h.b16 %v4932
    %v5533 = vunpack.c.l.b16 %v4933
    %v5534 = vunpack.c.h.b16 %v4933
    %v5535 = vunpack.c.l.b16 %v4934
    %v5536 = vunpack.c.h.b16 %v4934
    %v5537 = vunpack.c.l.b16 %v4935
    %v5538 = vunpack.c.h.b16 %v4935
    %v5539 = vunpack.c.l.b16 %v4936
    %v5540 = vunpack.c.h.b16 %v4936
    %v5541 = vunpack.c.l.b16 %v4937
    %v5542 = vunpack.c.h.b16 %v4937
    %v5543 = vunpack.c.l.b16 %v4938
    %v5544 = vunpack.c.h.b16 %v4938
    %v5545 = vunpack.c.l.b16 %v4939
    %v5546 = vunpack.c.h.b16 %v4939
    %v5547 = vunpack.c.l.b16 %v4940
    %v5548 = vunpack.c.h.b16 %v4940
    %v5549 = vunpack.c.l.b16 %v4941
    %v5550 = vunpack.c.h.b16 %v4941
    %v5551 = vunpack.c.l.b16 %v4942
    %v5552 = vunpack.c.h.b16 %v4942
    %v5553 = vunpack.c.l.b16 %v4943
    %v5554 = vunpack.c.h.b16 %v4943
    %v5555 = vunpack.c.l.b16 %v4944
    %v5556 = vunpack.c.h.b16 %v4944
    %v5557 = vunpack.c.l.b16 %v4945
    %v5558 = vunpack.c.h.b16 %v4945
    %v5559 = vunpack.c.l.b16 %v4946
    %v5560 = vunpack.c.h.b16 %v4946
    %v5561 = vunpack.c.l.b16 %v4947
    %v5562 = vunpack.c.h.b16 %v4947
    %v5563 = vunpack.c.l.b16 %v4948
    %v5564 = vunpack.c.h.b16 %v4948
    %v5565 = vunpack.c.l.b16 %v4949
    %v5566 = vunpack.c.h.b16 %v4949
    %v5567 = vunpack.c.l.b16 %v4950
    %v5568 = vunpack.c.h.b16 %v4950
    %v5569 = vunpack.c.l.b16 %v4951
    %v5570 = vunpack.c.h.b16 %v4951
    %v5571 = vunpack.c.l.b16 %v4952
    %v5572 = vunpack.c.h.b16 %v4952
    %v5573 = vunpack.c.l.b16 %v4953
    %v5574 = vunpack.c.h.b16 %v4953
    %v5575 = vunpack.c.l.b16 %v4954
    %v5576 = vunpack.c.h.b16 %v4954
    %v5577 = vunpack.c.l.b16 %v4955
    %v5578 = vunpack.c.h.b16 %v4955
    %v5579 = vunpack.c.l.b16 %v4956
    %v5580 = vunpack.c.h.b16 %v4956
    %v5581 = vunpack.c.l.b16 %v4957
    %v5582 = vunpack.c.h.b16 %v4957
    %v5583 = vunpack.c.l.b16 %v4958
    %v5584 = vunpack.c.h.b16 %v4958
    %v5585 = vunpack.c.l.b16 %v4959
    %v5586 = vunpack.c.h.b16 %v4959
    %v5587 = vunpack.c.l.b16 %v4960
    %v5588 = vunpack.c.h.b16 %v4960
    %v5589 = vunpack.c.l.b16 %v4961
    %v5590 = vunpack.c.h.b16 %v4961
    %v5591 = vunpack.c.l.b16 %v4962
    %v5592 = vunpack.c.h.b16 %v4962
    %v5593 = vunpack.c.l.b16 %v4963
    %v5594 = vunpack.c.h.b16 %v4963
    %v5595 = vunpack.c.l.b16 %v4964
    %v5596 = vunpack.c.h.b16 %v4964
    %v5597 = vunpack.c.l.b16 %v4965
    %v5598 = vunpack.c.h.b16 %v4965
    %v5599 = vunpack.c.l.b16 %v4966
    %v5600 = vunpack.c.h.b16 %v4966
    %v5601 = vunpack.c.l.b16 %v4967
    %v5602 = vunpack.c.h.b16 %v4967
    %v5603 = vunpack.c.l.b16 %v4968
    %v5604 = vunpack.c.h.b16 %v4968
    %v5605 = vunpack.c.l.b16 %v4969
    %v5606 = vunpack.c.h.b16 %v4969
    %v5607 = vunpack.c.l.b16 %v4970
    %v5608 = vunpack.c.h.b16 %v4970
    %v5609 = vunpack.c.l.b16 %v4971
    %v5610 = vunpack.c.h.b16 %v4971
    %v5611 = vunpack.c.l.b16 %v4972
    %v5612 = vunpack.c.h.b16 %v4972
    %v5613 = vunpack.c.l.b16 %v4973
    %v5614 = vunpack.c.h.b16 %v4973
    %v5615 = vunpack.c.l.b16 %v4974
    %v5616 = vunpack.c.h.b16 %v4974
    %v5617 = vunpack.c.l.b16 %v4975
    %v5618 = vunpack.c.h.b16 %v4975
    %v5619 = vunpack.c.l.b16 %v4976
    %v5620 = vunpack.c.h.b16 %v4976
    %v5621 = vunpack.c.l.b16 %v4977
    %v5622 = vunpack.c.h.b16 %v4977
    %v5623 = vunpack.c.l.b16 %v4978
    %v5624 = vunpack.c.h.b16 %v4978
    %v5625 = vunpack.c.l.b16 %v4979
    %v5626 = vunpack.c.h.b16 %v4979
    %v5627 = vunpack.c.l.b16 %v4980
    %v5628 = vunpack.c.h.b16 %v4980
    %v5629 = vunpack.c.l.b16 %v4981
    %v5630 = vunpack.c.h.b16 %v4981
    %v5631 = vunpack.c.l.b16 %v4982
    %v5632 = vunpack.c.h.b16 %v4982
    %v5633 = vunpack.c.l.b16 %v4983
    %v5634 = vunpack.c.h.b16 %v4983
    %v5635 = vunpack.c.l.b16 %v4984
    %v5636 = vunpack.c.h.b16 %v4984
    %v5637 = vunpack.c.l.b16 %v4985
    %v5638 = vunpack.c.h.b16 %v4985
    %v5639 = vunpack.c.l.b16 %v4986
    %v5640 = vunpack.c.h.b16 %v4986
    %v5641 = vunpack.c.l.b16 %v4987
    %v5642 = vunpack.c.h.b16 %v4987
    %v5643 = vunpack.c.l.b16 %v4988
    %v5644 = vunpack.c.h.b16 %v4988
    %v5645 = vunpack.c.l.b16 %v4989
    %v5646 = vunpack.c.h.b16 %v4989
    %v5647 = vunpack.c.l.b16 %v4990
    %v5648 = vunpack.c.h.b16 %v4990
    %v5649 = vunpack.c.l.b16 %v4991
    %v5650 = vunpack.c.h.b16 %v4991
    %v5651 = vunpack.c.l.b16 %v4992
    %v5652 = vunpack.c.h.b16 %v4992
    %v5653 = vunpack.c.l.b16 %v4993
    %v5654 = vunpack.c.h.b16 %v4993
    %v5655 = vunpack.c.l.b16 %v4994
    %v5656 = vunpack.c.h.b16 %v4994
    %v5657 = vunpack.c.l.b16 %v4995
    %v5658 = vunpack.c.h.b16 %v4995
    %v5659 = vunpack.c.l.b16 %v4996
    %v5660 = vunpack.c.h.b16 %v4996
    %v5661 = vunpack.c.l.b16 %v4997
    %v5662 = vunpack.c.h.b16 %v4997
    %v5663 = vunpack.c.l.b16 %v4998
    %v5664 = vunpack.c.h.b16 %v4998
    %v5665 = vunpack.c.l.b16 %v4999
    %v5666 = vunpack.c.h.b16 %v4999
    %v5667 = vunpack.c.l.b16 %v5000
    %v5668 = vunpack.c.h.b16 %v5000
    %v5669 = vunpack.c.l.b16 %v5001
    %v5670 = vunpack.c.h.b16 %v5001
    %v5671 = vunpack.c.l.b16 %v5002
    %v5672 = vunpack.c.h.b16 %v5002
    %v5673 = vunpack.c.l.b16 %v5003
    %v5674 = vunpack.c.h.b16 %v5003
    %v5675 = vunpack.c.l.b16 %v5004
    %v5676 = vunpack.c.h.b16 %v5004
    %v5677 = vunpack.c.l.b16 %v5005
    %v5678 = vunpack.c.h.b16 %v5005
    %v5679 = vunpack.c.l.b16 %v5006
    %v5680 = vunpack.c.h.b16 %v5006
    %v5681 = vunpack.c.l.b16 %v5007
    %v5682 = vunpack.c.h.b16 %v5007
    %v5683 = vunpack.c.l.b16 %v5008
    %v5684 = vunpack.c.h.b16 %v5008
    %v5685 = vunpack.c.l.b16 %v5009
    %v5686 = vunpack.c.h.b16 %v5009
    %v5687 = vunpack.c.l.b16 %v5010
    %v5688 = vunpack.c.h.b16 %v5010
    %v5689 = vunpack.c.l.b16 %v5011
    %v5690 = vunpack.c.h.b16 %v5011
    %v5691 = vunpack.c.l.b16 %v5012
    %v5692 = vunpack.c.h.b16 %v5012
    %v5693 = vunpack.c.l.b16 %v5013
    %v5694 = vunpack.c.h.b16 %v5013
    %v5695 = vunpack.c.l.b16 %v5014
    %v5696 = vunpack.c.h.b16 %v5014
    %v5697 = vunpack.c.l.b16 %v5015
    %v5698 = vunpack.c.h.b16 %v5015
    %v5699 = vunpack.c.l.b16 %v5016
    %v5700 = vunpack.c.h.b16 %v5016
    %v5701 = vunpack.c.l.b16 %v5017
    %v5702 = vunpack.c.h.b16 %v5017
    %v5703 = vunpack.c.l.b16 %v5018
    %v5704 = vunpack.c.h.b16 %v5018
    %v5705 = vunpack.c.l.b16 %v5019
    %v5706 = vunpack.c.h.b16 %v5019
    %v5707 = vunpack.c.l.b16 %v5020
    %v5708 = vunpack.c.h.b16 %v5020
    %v5709 = vunpack.c.l.b16 %v5021
    %v5710 = vunpack.c.h.b16 %v5021
    %v5711 = vunpack.c.l.b16 %v5022
    %v5712 = vunpack.c.h.b16 %v5022
    %v5713 = vunpack.c.l.b16 %v5023
    %v5714 = vunpack.c.h.b16 %v5023
    %v5715 = vunpack.c.l.b16 %v5024
    %v5716 = vunpack.c.h.b16 %v5024
    %v5717 = vunpack.c.l.b16 %v5025
    %v5718 = vunpack.c.h.b16 %v5025
    %v5719 = vunpack.c.l.b16 %v5026
    %v5720 = vunpack.c.h.b16 %v5026
    %v5721 = vunpack.c.l.b16 %v5027
    %v5722 = vunpack.c.h.b16 %v5027
    %v5723 = vunpack.c.l.b16 %v5028
    %v5724 = vunpack.c.h.b16 %v5028
    %v5725 = vunpack.c.l.b16 %v5029
    %v5726 = vunpack.c.h.b16 %v5029
    %v5727 = vunpack.c.l.b16 %v5030
    %v5728 = vunpack.c.h.b16 %v5030
    %v5729 = vunpack.c.l.b16 %v5031
    %v5730 = vunpack.c.h.b16 %v5031
    %v5731 = vunpack.c.l.b16 %v5032
    %v5732 = vunpack.c.h.b16 %v5032
    %v5733 = vunpack.c.l.b16 %v5033
    %v5734 = vunpack.c.h.b16 %v5033
    %v5735 = vunpack.c.l.b16 %v5034
    %v5736 = vunpack.c.h.b16 %v5034
    %v5737 = vunpack.c.l.b16 %v5035
    %v5738 = vunpack.c.h.b16 %v5035
    %v5739 = vunpack.c.l.b16 %v5036
    %v5740 = vunpack.c.h.b16 %v5036
    %v5741 = vunpack.c.l.b16 %v5037
    %v5742 = vunpack.c.h.b16 %v5037
    %v5743 = vunpack.c.l.b16 %v5038
    %v5744 = vunpack.c.h.b16 %v5038
    %v5745 = vunpack.c.l.b16 %v5039
    %v5746 = vunpack.c.h.b16 %v5039
    %v5747 = vunpack.c.l.b16 %v5040
    %v5748 = vunpack.c.h.b16 %v5040
    %v5749 = vunpack.c.l.b16 %v5041
    %v5750 = vunpack.c.h.b16 %v5041
    %v5751 = vunpack.c.l.b16 %v5042
    %v5752 = vunpack.c.h.b16 %v5042
    %v5753 = vunpack.c.l.b16 %v5043
    %v5754 = vunpack.c.h.b16 %v5043
    %v5755 = vunpack.c.l.b16 %v5044
    %v5756 = vunpack.c.h.b16 %v5044
    %v5757 = vunpack.c.l.b16 %v5045
    %v5758 = vunpack.c.h.b16 %v5045
    %v5759 = vunpack.c.l.b16 %v5046
    %v5760 = vunpack.c.h.b16 %v5046
    %v5761 = vunpack.c.l.b16 %v5047
    %v5762 = vunpack.c.h.b16 %v5047
    %v5763 = vunpack.c.l.b16 %v5048
    %v5764 = vunpack.c.h.b16 %v5048
    %v5765 = vunpack.c.l.b16 %v5049
    %v5766 = vunpack.c.h.b16 %v5049
    %v5767 = vunpack.c.l.b16 %v5050
    %v5768 = vunpack.c.h.b16 %v5050
    %v5769 = vunpack.c.l.b16 %v5051
    %v5770 = vunpack.c.h.b16 %v5051
    %v5771 = vunpack.c.l.b16 %v5052
    %v5772 = vunpack.c.h.b16 %v5052
    %v5773 = vunpack.c.l.b16 %v5053
    %v5774 = vunpack.c.h.b16 %v5053
    %v5775 = vunpack.c.l.b16 %v5054
    %v5776 = vunpack.c.h.b16 %v5054
    %v5777 = vunpack.c.l.b16 %v5055
    %v5778 = vunpack.c.h.b16 %v5055
    %v5779 = vunpack.c.l.b16 %v5056
    %v5780 = vunpack.c.h.b16 %v5056
    %v5781 = vunpack.c.l.b16 %v5057
    %v5782 = vunpack.c.h.b16 %v5057
    %v5783 = vunpack.c.l.b16 %v5058
    %v5784 = vunpack.c.h.b16 %v5058
    %v5785 = vunpack.c.l.b16 %v5059
    %v5786 = vunpack.c.h.b16 %v5059
    %v5787 = vunpack.c.l.b16 %v5060
    %v5788 = vunpack.c.h.b16 %v5060
    %v5789 = vunpack.c.l.b16 %v5061
    %v5790 = vunpack.c.h.b16 %v5061
    %v5791 = vunpack.c.l.b16 %v5062
    %v5792 = vunpack.c.h.b16 %v5062
    %v5793 = vunpack.c.l.b16 %v5063
    %v5794 = vunpack.c.h.b16 %v5063
    %v5795 = vunpack.c.l.b16 %v5064
    %v5796 = vunpack.c.h.b16 %v5064
    %v5797 = vunpack.c.l.b16 %v5065
    %v5798 = vunpack.c.h.b16 %v5065
    %v5799 = vunpack.c.l.b16 %v5066
    %v5800 = vunpack.c.h.b16 %v5066
    %v5801 = vunpack.c.l.b16 %v5067
    %v5802 = vunpack.c.h.b16 %v5067
    %v5803 = vunpack.c.l.b16 %v5068
    %v5804 = vunpack.c.h.b16 %v5068
    %v5805 = vunpack.c.l.b16 %v5069
    %v5806 = vunpack.c.h.b16 %v5069
    %v5807 = vunpack.c.l.b16 %v5070
    %v5808 = vunpack.c.h.b16 %v5070
    %v5809 = vunpack.c.l.b16 %v5071
    %v5810 = vunpack.c.h.b16 %v5071
    %v5811 = vunpack.c.l.b16 %v5072
    %v5812 = vunpack.c.h.b16 %v5072
    %v5813 = vunpack.c.l.b16 %v5073
    %v5814 = vunpack.c.h.b16 %v5073
    %v5815 = vunpack.c.l.b16 %v5074
    %v5816 = vunpack.c.h.b16 %v5074
    %v5817 = vunpack.c.l.b16 %v5075
    %v5818 = vunpack.c.h.b16 %v5075
    %v5819 = vunpack.c.l.b16 %v5076
    %v5820 = vunpack.c.h.b16 %v5076
    %v5821 = vunpack.c.l.b16 %v5077
    %v5822 = vunpack.c.h.b16 %v5077
    %v5823 = vunpack.c.l.b16 %v5078
    %v5824 = vunpack.c.h.b16 %v5078
    %v5825 = vunpack.c.l.b16 %v5079
    %v5826 = vunpack.c.h.b16 %v5079
    %v5827 = vunpack.c.l.b16 %v5080
    %v5828 = vunpack.c.h.b16 %v5080
    %v5829 = vunpack.c.l.b16 %v5081
    %v5830 = vunpack.c.h.b16 %v5081
    %v5831 = vunpack.c.l.b16 %v5082
    %v5832 = vunpack.c.h.b16 %v5082
    %v5833 = vunpack.c.l.b16 %v5083
    %v5834 = vunpack.c.h.b16 %v5083
    %v5835 = vunpack.c.l.b16 %v5084
    %v5836 = vunpack.c.h.b16 %v5084
    %v5837 = vunpack.c.l.b16 %v5085
    %v5838 = vunpack.c.h.b16 %v5085
    %v5839 = vunpack.c.l.b16 %v5086
    %v5840 = vunpack.c.h.b16 %v5086
    %v5841 = vunpack.c.l.b16 %v5087
    %v5842 = vunpack.c.h.b16 %v5087
    %v5843 = vunpack.c.l.b16 %v5088
    %v5844 = vunpack.c.h.b16 %v5088
    %v5845 = vunpack.c.l.b16 %v5089
    %v5846 = vunpack.c.h.b16 %v5089
    %v5847 = vunpack.c.l.b16 %v5090
    %v5848 = vunpack.c.h.b16 %v5090
    %v5849 = vunpack.c.l.b16 %v5091
    %v5850 = vunpack.c.h.b16 %v5091
    %v5851 = vunpack.c.l.b16 %v5092
    %v5852 = vunpack.c.h.b16 %v5092
    %v5853 = vunpack.c.l.b16 %v5093
    %v5854 = vunpack.c.h.b16 %v5093
    %v5855 = vunpack.c.l.b16 %v5094
    %v5856 = vunpack.c.h.b16 %v5094
    %v5857 = vunpack.c.l.b16 %v5095
    %v5858 = vunpack.c.h.b16 %v5095
    %v5859 = vunpack.c.l.b16 %v5096
    %v5860 = vunpack.c.h.b16 %v5096
    %v5861 = vunpack.c.l.b16 %v5097
    %v5862 = vunpack.c.h.b16 %v5097
    %v5863 = vunpack.c.l.b16 %v5098
    %v5864 = vunpack.c.h.b16 %v5098
    %v5865 = vunpack.c.l.b16 %v5099
    %v5866 = vunpack.c.h.b16 %v5099
    %v5867 = vunpack.c.l.b16 %v5100
    %v5868 = vunpack.c.h.b16 %v5100
    %v5869 = vunpack.c.l.b16 %v5101
    %v5870 = vunpack.c.h.b16 %v5101
    %v5871 = vunpack.c.l.b16 %v5102
    %v5872 = vunpack.c.h.b16 %v5102
    %v5873 = vunpack.c.l.b16 %v5103
    %v5874 = vunpack.c.h.b16 %v5103
    %v5875 = vunpack.c.l.b16 %v5104
    %v5876 = vunpack.c.h.b16 %v5104
    %v5877 = vunpack.c.l.b16 %v5105
    %v5878 = vunpack.c.h.b16 %v5105
    %v5879 = vunpack.c.l.b16 %v5106
    %v5880 = vunpack.c.h.b16 %v5106
    %v5881 = vunpack.c.l.b16 %v5107
    %v5882 = vunpack.c.h.b16 %v5107
    %v5883 = vunpack.c.l.b16 %v5108
    %v5884 = vunpack.c.h.b16 %v5108
    %v5885 = vunpack.c.l.b16 %v5109
    %v5886 = vunpack.c.h.b16 %v5109
    %v5887 = vunpack.c.l.b16 %v5110
    %v5888 = vunpack.c.h.b16 %v5110
    %v5889 = vunpack.c.l.b16 %v5111
    %v5890 = vunpack.c.h.b16 %v5111
    %v5891 = vunpack.c.l.b16 %v5112
    %v5892 = vunpack.c.h.b16 %v5112
    %v5893 = vunpack.c.l.b16 %v5113
    %v5894 = vunpack.c.h.b16 %v5113
    %v5895 = vunpack.c.l.b16 %v5114
    %v5896 = vunpack.c.h.b16 %v5114
    %v5897 = vunpack.c.l.b16 %v5115
    %v5898 = vunpack.c.h.b16 %v5115
    %v5899 = vunpack.c.l.b16 %v5116
    %v5900 = vunpack.c.h.b16 %v5116
    %v5901 = vunpack.c.l.b16 %v5117
    %v5902 = vunpack.c.h.b16 %v5117
    %v5903 = vunpack.c.l.b16 %v5118
    %v5904 = vunpack.c.h.b16 %v5118
    %v5905 = vunpack.c.l.b16 %v5119
    %v5906 = vunpack.c.h.b16 %v5119
    %v5907 = vunpack.c.l.b16 %v5120
    %v5908 = vunpack.c.h.b16 %v5120
    %v5909 = vunpack.c.l.b16 %v5121
    %v5910 = vunpack.c.h.b16 %v5121
    %v5911 = vunpack.c.l.b16 %v5122
    %v5912 = vunpack.c.h.b16 %v5122
    %v5913 = vpack.c.b16 %v5405, %v5401
    %v5914 = vpack.c.b16 %v5406, %v5402
    %v5915 = vpack.c.b16 %v5407, %v5403
    %v5916 = vpack.c.b16 %v5408, %v5404
    %v5917 = vpack.c.b16 %v5413, %v5409
    %v5918 = vpack.c.b16 %v5414, %v5410
    %v5919 = vpack.c.b16 %v5415, %v5411
    %v5920 = vpack.c.b16 %v5416, %v5412
    %v5921 = vpack.c.b16 %v5421, %v5417
    %v5922 = vpack.c.b16 %v5422, %v5418
    %v5923 = vpack.c.b16 %v5423, %v5419
    %v5924 = vpack.c.b16 %v5424, %v5420
    %v5925 = vpack.c.b16 %v5429, %v5425
    %v5926 = vpack.c.b16 %v5430, %v5426
    %v5927 = vpack.c.b16 %v5431, %v5427
    %v5928 = vpack.c.b16 %v5432, %v5428
    %v5929 = vpack.c.b16 %v5437, %v5433
    %v5930 = vpack.c.b16 %v5438, %v5434
    %v5931 = vpack.c.b16 %v5439, %v5435
    %v5932 = vpack.c.b16 %v5440, %v5436
    %v5933 = vpack.c.b16 %v5445, %v5441
    %v5934 = vpack.c.b16 %v5446, %v5442
    %v5935 = vpack.c.b16 %v5447, %v5443
    %v5936 = vpack.c.b16 %v5448, %v5444
    %v5937 = vpack.c.b16 %v5453, %v5449
    %v5938 = vpack.c.b16 %v5454, %v5450
    %v5939 = vpack.c.b16 %v5455, %v5451
    %v5940 = vpack.c.b16 %v5456, %v5452
    %v5941 = vpack.c.b16 %v5461, %v5457
    %v5942 = vpack.c.b16 %v5462, %v5458
    %v5943 = vpack.c.b16 %v5463, %v5459
    %v5944 = vpack.c.b16 %v5464, %v5460
    %v5945 = vpack.c.b16 %v5469, %v5465
    %v5946 = vpack.c.b16 %v5470, %v5466
    %v5947 = vpack.c.b16 %v5471, %v5467
    %v5948 = vpack.c.b16 %v5472, %v5468
    %v5949 = vpack.c.b16 %v5477, %v5473
    %v5950 = vpack.c.b16 %v5478, %v5474
    %v5951 = vpack.c.b16 %v5479, %v5475
    %v5952 = vpack.c.b16 %v5480, %v5476
    %v5953 = vpack.c.b16 %v5485, %v5481
    %v5954 = vpack.c.b16 %v5486, %v5482
    %v5955 = vpack.c.b16 %v5487, %v5483
    %v5956 = vpack.c.b16 %v5488, %v5484
    %v5957 = vpack.c.b16 %v5493, %v5489
    %v5958 = vpack.c.b16 %v5494, %v5490
    %v5959 = vpack.c.b16 %v5495, %v5491
    %v5960 = vpack.c.b16 %v5496, %v5492
    %v5961 = vpack.c.b16 %v5501, %v5497
    %v5962 = vpack.c.b16 %v5502, %v5498
    %v5963 = vpack.c.b16 %v5503, %v5499
    %v5964 = vpack.c.b16 %v5504, %v5500
    %v5965 = vpack.c.b16 %v5509, %v5505
    %v5966 = vpack.c.b16 %v5510, %v5506
    %v5967 = vpack.c.b16 %v5511, %v5507
    %v5968 = vpack.c.b16 %v5512, %v5508
    %v5969 = vpack.c.b16 %v5517, %v5513
    %v5970 = vpack.c.b16 %v5518, %v5514
    %v5971 = vpack.c.b16 %v5519, %v5515
    %v5972 = vpack.c.b16 %v5520, %v5516
    %v5973 = vpack.c.b16 %v5525, %v5521
    %v5974 = vpack.c.b16 %v5526, %v5522
    %v5975 = vpack.c.b16 %v5527, %v5523
    %v5976 = vpack.c.b16 %v5528, %v5524
    %v5977 = vpack.c.b16 %v5533, %v5529
    %v5978 = vpack.c.b16 %v5534, %v5530
    %v5979 = vpack.c.b16 %v5535, %v5531
    %v5980 = vpack.c.b16 %v5536, %v5532
    %v5981 = vpack.c.b16 %v5541, %v5537
    %v5982 = vpack.c.b16 %v5542, %v5538
    %v5983 = vpack.c.b16 %v5543, %v5539
    %v5984 = vpack.c.b16 %v5544, %v5540
    %v5985 = vpack.c.b16 %v5549, %v5545
    %v5986 = vpack.c.b16 %v5550, %v5546
    %v5987 = vpack.c.b16 %v5551, %v5547
    %v5988 = vpack.c.b16 %v5552, %v5548
    %v5989 = vpack.c.b16 %v5557, %v5553
    %v5990 = vpack.c.b16 %v5558, %v5554
    %v5991 = vpack.c.b16 %v5559, %v5555
    %v5992 = vpack.c.b16 %v5560, %v5556
    %v5993 = vpack.c.b16 %v5565, %v5561
    %v5994 = vpack.c.b16 %v5566, %v5562
    %v5995 = vpack.c.b16 %v5567, %v5563
    %v5996 = vpack.c.b16 %v5568, %v5564
    %v5997 = vpack.c.b16 %v5573, %v5569
    %v5998 = vpack.c.b16 %v5574, %v5570
    %v5999 = vpack.c.b16 %v5575, %v5571
    %v6000 = vpack.c.b16 %v5576, %v5572
    %v6001 = vpack.c.b16 %v5581, %v5577
    %v6002 = vpack.c.b16 %v5582, %v5578
    %v6003 = vpack.c.b16 %v5583, %v5579
    %v6004 = vpack.c.b16 %v5584, %v5580
    %v6005 = vpack.c.b16 %v5589, %v5585
    %v6006 = vpack.c.b16 %v5590, %v5586
    %v6007 = vpack.c.b16 %v5591, %v5587
    %v6008 = vpack.c.b16 %v5592, %v5588
    %v6009 = vpack.c.b16 %v5597, %v5593
    %v6010 = vpack.c.b16 %v5598, %v5594
    %v6011 = vpack.c.b16 %v5599, %v5595
    %v6012 = vpack.c.b16 %v5600, %v5596
    %v6013 = vpack.c.b16 %v5605, %v5601
    %v6014 = vpack.c.b16 %v5606, %v5602
    %v6015 = vpack.c.b16 %v5607, %v5603
    %v6016 = vpack.c.b16 %v5608, %v5604
    %v6017 = vpack.c.b16 %v5613, %v5609
    %v6018 = vpack.c.b16 %v5614, %v5610
    %v6019 = vpack.c.b16 %v5615, %v5611
    %v6020 = vpack.c.b16 %v5616, %v5612
    %v6021 = vpack.c.b16 %v5621, %v5617
    %v6022 = vpack.c.b16 %v5622, %v5618
    %v6023 = vpack.c.b16 %v5623, %v5619
    %v6024 = vpack.c.b16 %v5624, %v5620
    %v6025 = vpack.c.b16 %v5629, %v5625
    %v6026 = vpack.c.b16 %v5630, %v5626
    %v6027 = vpack.c.b16 %v5631, %v5627
    %v6028 = vpack.c.b16 %v5632, %v5628
    %v6029 = vpack.c.b16 %v5637, %v5633
    %v6030 = vpack.c.b16 %v5638, %v5634
    %v6031 = vpack.c.b16 %v5639, %v5635
    %v6032 = vpack.c.b16 %v5640, %v5636
    %v6033 = vpack.c.b16 %v5645, %v5641
    %v6034 = vpack.c.b16 %v5646, %v5642
    %v6035 = vpack.c.b16 %v5647, %v5643
    %v6036 = vpack.c.b16 %v5648, %v5644
    %v6037 = vpack.c.b16 %v5653, %v5649
    %v6038 = vpack.c.b16 %v5654, %v5650
    %v6039 = vpack.c.b16 %v5655, %v5651
    %v6040 = vpack.c.b16 %v5656, %v5652
    %v6041 = vpack.c.b16 %v5661, %v5657
    %v6042 = vpack.c.b16 %v5662, %v5658
    %v6043 = vpack.c.b16 %v5663, %v5659
    %v6044 = vpack.c.b16 %v5664, %v5660
    %v6045 = vpack.c.b16 %v5669, %v5665
    %v6046 = vpack.c.b16 %v5670, %v5666
    %v6047 = vpack.c.b16 %v5671, %v5667
    %v6048 = vpack.c.b16 %v5672, %v5668
    %v6049 = vpack.c.b16 %v5677, %v5673
    %v6050 = vpack.c.b16 %v5678, %v5674
    %v6051 = vpack.c.b16 %v5679, %v5675
    %v6052 = vpack.c.b16 %v5680, %v5676
    %v6053 = vpack.c.b16 %v5685, %v5681
    %v6054 = vpack.c.b16 %v5686, %v5682
    %v6055 = vpack.c.b16 %v5687, %v5683
    %v6056 = vpack.c.b16 %v5688, %v5684
    %v6057 = vpack.c.b16 %v5693, %v5689
    %v6058 = vpack.c.b16 %v5694, %v5690
    %v6059 = vpack.c.b16 %v5695, %v5691
    %v6060 = vpack.c.b16 %v5696, %v5692
    %v6061 = vpack.c.b16 %v5701, %v5697
    %v6062 = vpack.c.b16 %v5702, %v5698
    %v6063 = vpack.c.b16 %v5703, %v5699
    %v6064 = vpack.c.b16 %v5704, %v5700
    %v6065 = vpack.c.b16 %v5709, %v5705
    %v6066 = vpack.c.b16 %v5710, %v5706
    %v6067 = vpack.c.b16 %v5711, %v5707
    %v6068 = vpack.c.b16 %v5712, %v5708
    %v6069 = vpack.c.b16 %v5717, %v5713
    %v6070 = vpack.c.b16 %v5718, %v5714
    %v6071 = vpack.c.b16 %v5719, %v5715
    %v6072 = vpack.c.b16 %v5720, %v5716
    %v6073 = vpack.c.b16 %v5725, %v5721
    %v6074 = vpack.c.b16 %v5726, %v5722
    %v6075 = vpack.c.b16 %v5727, %v5723
    %v6076 = vpack.c.b16 %v5728, %v5724
    %v6077 = vpack.c.b16 %v5733, %v5729
    %v6078 = vpack.c.b16 %v5734, %v5730
    %v6079 = vpack.c.b16 %v5735, %v5731
    %v6080 = vpack.c.b16 %v5736, %v5732
    %v6081 = vpack.c.b16 %v5741, %v5737
    %v6082 = vpack.c.b16 %v5742, %v5738
    %v6083 = vpack.c.b16 %v5743, %v5739
    %v6084 = vpack.c.b16 %v5744, %v5740
    %v6085 = vpack.c.b16 %v5749, %v5745
    %v6086 = vpack.c.b16 %v5750, %v5746
    %v6087 = vpack.c.b16 %v5751, %v5747
    %v6088 = vpack.c.b16 %v5752, %v5748
    %v6089 = vpack.c.b16 %v5757, %v5753
    %v6090 = vpack.c.b16 %v5758, %v5754
    %v6091 = vpack.c.b16 %v5759, %v5755
    %v6092 = vpack.c.b16 %v5760, %v5756
    %v6093 = vpack.c.b16 %v5765, %v5761
    %v6094 = vpack.c.b16 %v5766, %v5762
    %v6095 = vpack.c.b16 %v5767, %v5763
    %v6096 = vpack.c.b16 %v5768, %v5764
    %v6097 = vpack.c.b16 %v5773, %v5769
    %v6098 = vpack.c.b16 %v5774, %v5770
    %v6099 = vpack.c.b16 %v5775, %v5771
    %v6100 = vpack.c.b16 %v5776, %v5772
    %v6101 = vpack.c.b16 %v5781, %v5777
    %v6102 = vpack.c.b16 %v5782, %v5778
    %v6103 = vpack.c.b16 %v5783, %v5779
    %v6104 = vpack.c.b16 %v5784, %v5780
    %v6105 = vpack.c.b16 %v5789, %v5785
    %v6106 = vpack.c.b16 %v5790, %v5786
    %v6107 = vpack.c.b16 %v5791, %v5787
    %v6108 = vpack.c.b16 %v5792, %v5788
    %v6109 = vpack.c.b16 %v5797, %v5793
    %v6110 = vpack.c.b16 %v5798, %v5794
    %v6111 = vpack.c.b16 %v5799, %v5795
    %v6112 = vpack.c.b16 %v5800, %v5796
    %v6113 = vpack.c.b16 %v5805, %v5801
    %v6114 = vpack.c.b16 %v5806, %v5802
    %v6115 = vpack.c.b16 %v5807, %v5803
    %v6116 = vpack.c.b16 %v5808, %v5804
    %v6117 = vpack.c.b16 %v5813, %v5809
    %v6118 = vpack.c.b16 %v5814, %v5810
    %v6119 = vpack.c.b16 %v5815, %v5811
    %v6120 = vpack.c.b16 %v5816, %v5812
    %v6121 = vpack.c.b16 %v5821, %v5817
    %v6122 = vpack.c.b16 %v5822, %v5818
    %v6123 = vpack.c.b16 %v5823, %v5819
    %v6124 = vpack.c.b16 %v5824, %v5820
    %v6125 = vpack.c.b16 %v5829, %v5825
    %v6126 = vpack.c.b16 %v5830, %v5826
    %v6127 = vpack.c.b16 %v5831, %v5827
    %v6128 = vpack.c.b16 %v5832, %v5828
    %v6129 = vpack.c.b16 %v5837, %v5833
    %v6130 = vpack.c.b16 %v5838, %v5834
    %v6131 = vpack.c.b16 %v5839, %v5835
    %v6132 = vpack.c.b16 %v5840, %v5836
    %v6133 = vpack.c.b16 %v5845, %v5841
    %v6134 = vpack.c.b16 %v5846, %v5842
    %v6135 = vpack.c.b16 %v5847, %v5843
    %v6136 = vpack.c.b16 %v5848, %v5844
    %v6137 = vpack.c.b16 %v5853, %v5849
    %v6138 = vpack.c.b16 %v5854, %v5850
    %v6139 = vpack.c.b16 %v5855, %v5851
    %v6140 = vpack.c.b16 %v5856, %v5852
    %v6141 = vpack.c.b16 %v5861, %v5857
    %v6142 = vpack.c.b16 %v5862, %v5858
    %v6143 = vpack.c.b16 %v5863, %v5859
    %v6144 = vpack.c.b16 %v5864, %v5860
    %v6145 = vpack.c.b16 %v5869, %v5865
    %v6146 = vpack.c.b16 %v5870, %v5866
    %v6147 = vpack.c.b16 %v5871, %v5867
    %v6148 = vpack.c.b16 %v5872, %v5868
    %v6149 = vpack.c.b16 %v5877, %v5873
    %v6150 = vpack.c.b16 %v5878, %v5874
    %v6151 = vpack.c.b16 %v5879, %v5875
    %v6152 = vpack.c.b16 %v5880, %v5876
    %v6153 = vpack.c.b16 %v5885, %v5881
    %v6154 = vpack.c.b16 %v5886, %v5882
    %v6155 = vpack.c.b16 %v5887, %v5883
    %v6156 = vpack.c.b16 %v5888, %v5884
    %v6157 = vpack.c.b16 %v5893, %v5889
    %v6158 = vpack.c.b16 %v5894, %v5890
    %v6159 = vpack.c.b16 %v5895, %v5891
    %v6160 = vpack.c.b16 %v5896, %v5892
    %v6161 = vpack.c.b16 %v5901, %v5897
    %v6162 = vpack.c.b16 %v5902, %v5898
    %v6163 = vpack.c.b16 %v5903, %v5899
    %v6164 = vpack.c.b16 %v5904, %v5900
    %v6165 = vpack.c.b16 %v5909, %v5905
    %v6166 = vpack.c.b16 %v5910, %v5906
    %v6167 = vpack.c.b16 %v5911, %v5907
    %v6168 = vpack.c.b16 %v5912, %v5908
    %6425 = vmatprep.subr.bf16.mxu0 %v5914
    %6426 = vmatpush1.bf16.msra.mxu0 %v5913
    %6427 = vmatprep.subr.bf16.mxu0 %v5918
    %6428 = vmatpush1.bf16.msra.mxu0 %v5917
    %6429 = vmatprep.subr.bf16.mxu0 %v5922
    %6430 = vmatpush1.bf16.msra.mxu0 %v5921
    %6431 = vmatprep.subr.bf16.mxu0 %v5926
    %6432 = vmatpush1.bf16.msra.mxu0 %v5925
    %6433 = vmatprep.subr.bf16.mxu0 %v5930
    %6434 = vmatpush1.bf16.msra.mxu0 %v5929
    %6435 = vmatprep.subr.bf16.mxu0 %v5934
    %6436 = vmatpush1.bf16.msra.mxu0 %v5933
    %6437 = vmatprep.subr.bf16.mxu0 %v5938
    %6438 = vmatpush1.bf16.msra.mxu0 %v5937
    %6439 = vmatprep.subr.bf16.mxu0 %v5942
    %6440 = vmatpush1.bf16.msra.mxu0 %v5941
    %6441 = vmatprep.subr.bf16.mxu0 %v5946
    %6442 = vmatpush1.bf16.msra.mxu0 %v5945
    %6443 = vmatprep.subr.bf16.mxu0 %v5950
    %6444 = vmatpush1.bf16.msra.mxu0 %v5949
    %6445 = vmatprep.subr.bf16.mxu0 %v5954
    %6446 = vmatpush1.bf16.msra.mxu0 %v5953
    %6447 = vmatprep.subr.bf16.mxu0 %v5958
    %6448 = vmatpush1.bf16.msra.mxu0 %v5957
    %6449 = vmatprep.subr.bf16.mxu0 %v5962
    %6450 = vmatpush1.bf16.msra.mxu0 %v5961
    %6451 = vmatprep.subr.bf16.mxu0 %v5966
    %6452 = vmatpush1.bf16.msra.mxu0 %v5965
    %6453 = vmatprep.subr.bf16.mxu0 %v5970
    %6454 = vmatpush1.bf16.msra.mxu0 %v5969
    %6455 = vmatprep.subr.bf16.mxu0 %v5974
    %6456 = vmatpush1.bf16.msra.mxu0 %v5973
    %6457 = vmatprep.mubr.bf16.mxu0 %v4804
    %6458 = vmatmul.mubr.bf16.gmra.mrb[0].mxu0 %v4803
    %v6459 = vpop.f32.mrb[0].mxu0
    %v6460 = vadd.f32 %v5128, %v6459
    %v6461 = vpop.f32.mrb[0].mxu0
    %v6462 = vadd.f32 %v5132, %v6461
    %v6463 = vpop.f32.mrb[0].mxu0
    %v6464 = vadd.f32 %v5128, %v6463
    %v6465 = vpop.f32.mrb[0].mxu0
    %v6466 = vadd.f32 %v5132, %v6465
    %6467 = vmatprep.mubr.bf16.mxu0 %v4812
    %6468 = vmatmul.mubr.bf16.gmra.mrb[0].mxu0 %v4811
    %v6469 = vpop.f32.mrb[0].mxu0
    %v6470 = vadd.f32 %v5128, %v6469
    %v6471 = vpop.f32.mrb[0].mxu0
    %v6472 = vadd.f32 %v5132, %v6471
    %v6473 = vpop.f32.mrb[0].mxu0
    %v6474 = vadd.f32 %v5128, %v6473
    %v6475 = vpop.f32.mrb[0].mxu0
    %v6476 = vadd.f32 %v5132, %v6475
    %6477 = vmatprep.mubr.bf16.mxu0 %v4820
    %6478 = vmatmul.mubr.bf16.gmra.mrb[0].mxu0 %v4819
    %v6479 = vpop.f32.mrb[0].mxu0
    %v6480 = vadd.f32 %v5128, %v6479
    %v6481 = vpop.f32.mrb[0].mxu0
    %v6482 = vadd.f32 %v5132, %v6481
    %v6483 = vpop.f32.mrb[0].mxu0
    %v6484 = vadd.f32 %v5128, %v6483
    %v6485 = vpop.f32.mrb[0].mxu0
    %v6486 = vadd.f32 %v5132, %v6485
    %6487 = vmatprep.mubr.bf16.mxu0 %v4828
    %6488 = vmatmul.mubr.bf16.gmra.mrb[0].mxu0 %v4827
    %v6489 = vpop.f32.mrb[0].mxu0
    %v6490 = vadd.f32 %v5128, %v6489
    %v6491 = vpop.f32.mrb[0].mxu0
    %v6492 = vadd.f32 %v5132, %v6491
    %v6493 = vpop.f32.mrb[0].mxu0
    %v6494 = vadd.f32 %v5128, %v6493
    %v6495 = vpop.f32.mrb[0].mxu0
    %v6496 = vadd.f32 %v5132, %v6495
    %6497 = vmatprep.mubr.bf16.mxu0 %v4836
    %6498 = vmatmul.mubr.bf16.gmra.mrb[0].mxu0 %v4835
    %v6499 = vpop.f32.mrb[0].mxu0
    %v6500 = vadd.f32 %v5128, %v6499
    %v6501 = vpop.f32.mrb[0].mxu0
    %v6502 = vadd.f32 %v5132, %v6501
    %v6503 = vpop.f32.mrb[0].mxu0
    %v6504 = vadd.f32 %v5128, %v6503
    %v6505 = vpop.f32.mrb[0].mxu0
    %v6506 = vadd.f32 %v5132, %v6505
    %6507 = vmatprep.mubr.bf16.mxu0 %v4844
    %6508 = vmatmul.mubr.bf16.gmra.mrb[0].mxu0 %v4843
    %v6509 = vpop.f32.mrb[0].mxu0
    %v6510 = vadd.f32 %v5128, %v6509
    %v6511 = vpop.f32.mrb[0].mxu0
    %v6512 = vadd.f32 %v5132, %v6511
    %v6513 = vpop.f32.mrb[0].mxu0
    %v6514 = vadd.f32 %v5128, %v6513
    %v6515 = vpop.f32.mrb[0].mxu0
    %v6516 = vadd.f32 %v5132, %v6515
    %6517 = vmatprep.mubr.bf16.mxu0 %v4852
    %6518 = vmatmul.mubr.bf16.gmra.mrb[0].mxu0 %v4851
    %v6519 = vpop.f32.mrb[0].mxu0
    %v6520 = vadd.f32 %v5128, %v6519
    %v6521 = vpop.f32.mrb[0].mxu0
    %v6522 = vadd.f32 %v5132, %v6521
    %v6523 = vpop.f32.mrb[0].mxu0
    %v6524 = vadd.f32 %v5128, %v6523
    %v6525 = vpop.f32.mrb[0].mxu0
    %v6526 = vadd.f32 %v5132, %v6525
    %6527 = vmatprep.mubr.bf16.mxu0 %v4860
    %6528 = vmatmul.mubr.bf16.gmra.mrb[0].mxu0 %v4859
    %v6529 = vpop.f32.mrb[0].mxu0
    %v6530 = vadd.f32 %v5128, %v6529
    %v6531 = vpop.f32.mrb[0].mxu0
    %v6532 = vadd.f32 %v5132, %v6531
    %v6533 = vpop.f32.mrb[0].mxu0
    %v6534 = vadd.f32 %v5128, %v6533
    %v6535 = vpop.f32.mrb[0].mxu0
    %v6536 = vadd.f32 %v5132, %v6535
    %6537 = vdwg.mxu0
    %6538 = vmatprep.subr.bf16.mxu0 %v5978
    %6539 = vmatpush1.bf16.msra.mxu0 %v5977
    %6540 = vmatprep.subr.bf16.mxu0 %v5982
    %6541 = vmatpush1.bf16.msra.mxu0 %v5981
    %6542 = vmatprep.subr.bf16.mxu0 %v5986
    %6543 = vmatpush1.bf16.msra.mxu0 %v5985
    %6544 = vmatprep.subr.bf16.mxu0 %v5990
    %6545 = vmatpush1.bf16.msra.mxu0 %v5989
    %6546 = vmatprep.subr.bf16.mxu0 %v5994
    %6547 = vmatpush1.bf16.msra.mxu0 %v5993
    %6548 = vmatprep.subr.bf16.mxu0 %v5998
    %6549 = vmatpush1.bf16.msra.mxu0 %v5997
    %6550 = vmatprep.subr.bf16.mxu0 %v6002
    %6551 = vmatpush1.bf16.msra.mxu0 %v6001
    %6552 = vmatprep.subr.bf16.mxu0 %v6006
    %6553 = vmatpush1.bf16.msra.mxu0 %v6005
    %6554 = vmatprep.subr.bf16.mxu0 %v6010
    %6555 = vmatpush1.bf16.msra.mxu0 %v6009
    %6556 = vmatprep.subr.bf16.mxu0 %v6014
    %6557 = vmatpush1.bf16.msra.mxu0 %v6013
    %6558 = vmatprep.subr.bf16.mxu0 %v6018
    %6559 = vmatpush1.bf16.msra.mxu0 %v6017
    %6560 = vmatprep.subr.bf16.mxu0 %v6022
    %6561 = vmatpush1.bf16.msra.mxu0 %v6021
    %6562 = vmatprep.subr.bf16.mxu0 %v6026
    %6563 = vmatpush1.bf16.msra.mxu0 %v6025
    %6564 = vmatprep.subr.bf16.mxu0 %v6030
    %6565 = vmatpush1.bf16.msra.mxu0 %v6029
    %6566 = vmatprep.subr.bf16.mxu0 %v6034
    %6567 = vmatpush1.bf16.msra.mxu0 %v6033
    %6568 = vmatprep.subr.bf16.mxu0 %v6038
    %6569 = vmatpush1.bf16.msra.mxu0 %v6037
    %6570 = vmatprep.mubr.bf16.mxu0 %v4806
    %6571 = vmatmul.mubr.bf16.gmra.mrb[0].mxu0 %v4805
    %v6572 = vpop.f32.mrb[0].mxu0
    %v6573 = vadd.f32 %v6460, %v6572
    %v6574 = vpop.f32.mrb[0].mxu0
    %v6575 = vadd.f32 %v6462, %v6574
    %v6576 = vpop.f32.mrb[0].mxu0
    %v6577 = vadd.f32 %v6464, %v6576
    %v6578 = vpop.f32.mrb[0].mxu0
    %v6579 = vadd.f32 %v6466, %v6578
    %6580 = vmatprep.mubr.bf16.mxu0 %v4814
    %6581 = vmatmul.mubr.bf16.gmra.mrb[0].mxu0 %v4813
    %v6582 = vpop.f32.mrb[0].mxu0
    %v6583 = vadd.f32 %v6470, %v6582
    %v6584 = vpop.f32.mrb[0].mxu0
    %v6585 = vadd.f32 %v6472, %v6584
    %v6586 = vpop.f32.mrb[0].mxu0
    %v6587 = vadd.f32 %v6474, %v6586
    %v6588 = vpop.f32.mrb[0].mxu0
    %v6589 = vadd.f32 %v6476, %v6588
    %6590 = vmatprep.mubr.bf16.mxu0 %v4822
    %6591 = vmatmul.mubr.bf16.gmra.mrb[0].mxu0 %v4821
    %v6592 = vpop.f32.mrb[0].mxu0
    %v6593 = vadd.f32 %v6480, %v6592
    %v6594 = vpop.f32.mrb[0].mxu0
    %v6595 = vadd.f32 %v6482, %v6594
    %v6596 = vpop.f32.mrb[0].mxu0
    %v6597 = vadd.f32 %v6484, %v6596
    %v6598 = vpop.f32.mrb[0].mxu0
    %v6599 = vadd.f32 %v6486, %v6598
    %6600 = vmatprep.mubr.bf16.mxu0 %v4830
    %6601 = vmatmul.mubr.bf16.gmra.mrb[0].mxu0 %v4829
    %v6602 = vpop.f32.mrb[0].mxu0
    %v6603 = vadd.f32 %v6490, %v6602
    %v6604 = vpop.f32.mrb[0].mxu0
    %v6605 = vadd.f32 %v6492, %v6604
    %v6606 = vpop.f32.mrb[0].mxu0
    %v6607 = vadd.f32 %v6494, %v6606
    %v6608 = vpop.f32.mrb[0].mxu0
    %v6609 = vadd.f32 %v6496, %v6608
    %6610 = vmatprep.mubr.bf16.mxu0 %v4838
    %6611 = vmatmul.mubr.bf16.gmra.mrb[0].mxu0 %v4837
    %v6612 = vpop.f32.mrb[0].mxu0
    %v6613 = vadd.f32 %v6500, %v6612
    %v6614 = vpop.f32.mrb[0].mxu0
    %v6615 = vadd.f32 %v6502, %v6614
    %v6616 = vpop.f32.mrb[0].mxu0
    %v6617 = vadd.f32 %v6504, %v6616
    %v6618 = vpop.f32.mrb[0].mxu0
    %v6619 = vadd.f32 %v6506, %v6618
    %6620 = vmatprep.mubr.bf16.mxu0 %v4846
    %6621 = vmatmul.mubr.bf16.gmra.mrb[0].mxu0 %v4845
    %v6622 = vpop.f32.mrb[0].mxu0
    %v6623 = vadd.f32 %v6510, %v6622
    %v6624 = vpop.f32.mrb[0].mxu0
    %v6625 = vadd.f32 %v6512, %v6624
    %v6626 = vpop.f32.mrb[0].mxu0
    %v6627 = vadd.f32 %v6514, %v6626
    %v6628 = vpop.f32.mrb[0].mxu0
    %v6629 = vadd.f32 %v6516, %v6628
    %6630 = vmatprep.mubr.bf16.mxu0 %v4854
    %6631 = vmatmul.mubr.bf16.gmra.mrb[0].mxu0 %v4853
    %v6632 = vpop.f32.mrb[0].mxu0
    %v6633 = vadd.f32 %v6520, %v6632
    %v6634 = vpop.f32.mrb[0].mxu0
    %v6635 = vadd.f32 %v6522, %v6634
    %v6636 = vpop.f32.mrb[0].mxu0
    %v6637 = vadd.f32 %v6524, %v6636
    %v6638 = vpop.f32.mrb[0].mxu0
    %v6639 = vadd.f32 %v6526, %v6638
    %6640 = vmatprep.mubr.bf16.mxu0 %v4862
    %6641 = vmatmul.mubr.bf16.gmra.mrb[0].mxu0 %v4861
    %v6642 = vpop.f32.mrb[0].mxu0
    %v6643 = vadd.f32 %v6530, %v6642
    %v6644 = vpop.f32.mrb[0].mxu0
    %v6645 = vadd.f32 %v6532, %v6644
    %v6646 = vpop.f32.mrb[0].mxu0
    %v6647 = vadd.f32 %v6534, %v6646
    %v6648 = vpop.f32.mrb[0].mxu0
    %v6649 = vadd.f32 %v6536, %v6648
    %6650 = vdwg.mxu0
    %6651 = vmatprep.subr.bf16.mxu0 %v6042
    %6652 = vmatpush1.bf16.msra.mxu0 %v6041
    %6653 = vmatprep.subr.bf16.mxu0 %v6046
    %6654 = vmatpush1.bf16.msra.mxu0 %v6045
    %6655 = vmatprep.subr.bf16.mxu0 %v6050
    %6656 = vmatpush1.bf16.msra.mxu0 %v6049
    %6657 = vmatprep.subr.bf16.mxu0 %v6054
    %6658 = vmatpush1.bf16.msra.mxu0 %v6053
    %6659 = vmatprep.subr.bf16.mxu0 %v6058
    %6660 = vmatpush1.bf16.msra.mxu0 %v6057
    %6661 = vmatprep.subr.bf16.mxu0 %v6062
    %6662 = vmatpush1.bf16.msra.mxu0 %v6061
    %6663 = vmatprep.subr.bf16.mxu0 %v6066
    %6664 = vmatpush1.bf16.msra.mxu0 %v6065
    %6665 = vmatprep.subr.bf16.mxu0 %v6070
    %6666 = vmatpush1.bf16.msra.mxu0 %v6069
    %6667 = vmatprep.subr.bf16.mxu0 %v6074
    %6668 = vmatpush1.bf16.msra.mxu0 %v6073
    %6669 = vmatprep.subr.bf16.mxu0 %v6078
    %6670 = vmatpush1.bf16.msra.mxu0 %v6077
    %6671 = vmatprep.subr.bf16.mxu0 %v6082
    %6672 = vmatpush1.bf16.msra.mxu0 %v6081
    %6673 = vmatprep.subr.bf16.mxu0 %v6086
    %6674 = vmatpush1.bf16.msra.mxu0 %v6085
    %6675 = vmatprep.subr.bf16.mxu0 %v6090
    %6676 = vmatpush1.bf16.msra.mxu0 %v6089
    %6677 = vmatprep.subr.bf16.mxu0 %v6094
    %6678 = vmatpush1.bf16.msra.mxu0 %v6093
    %6679 = vmatprep.subr.bf16.mxu0 %v6098
    %6680 = vmatpush1.bf16.msra.mxu0 %v6097
    %6681 = vmatprep.subr.bf16.mxu0 %v6102
    %6682 = vmatpush1.bf16.msra.mxu0 %v6101
    %6683 = vmatprep.mubr.bf16.mxu0 %v4808
    %6684 = vmatmul.mubr.bf16.gmra.mrb[0].mxu0 %v4807
    %v6685 = vpop.f32.mrb[0].mxu0
    %v6686 = vadd.f32 %v6573, %v6685
    %v6687 = vpop.f32.mrb[0].mxu0
    %v6688 = vadd.f32 %v6575, %v6687
    %v6689 = vpop.f32.mrb[0].mxu0
    %v6690 = vadd.f32 %v6577, %v6689
    %v6691 = vpop.f32.mrb[0].mxu0
    %v6692 = vadd.f32 %v6579, %v6691
    %6693 = vmatprep.mubr.bf16.mxu0 %v4816
    %6694 = vmatmul.mubr.bf16.gmra.mrb[0].mxu0 %v4815
    %v6695 = vpop.f32.mrb[0].mxu0
    %v6696 = vadd.f32 %v6583, %v6695
    %v6697 = vpop.f32.mrb[0].mxu0
    %v6698 = vadd.f32 %v6585, %v6697
    %v6699 = vpop.f32.mrb[0].mxu0
    %v6700 = vadd.f32 %v6587, %v6699
    %v6701 = vpop.f32.mrb[0].mxu0
    %v6702 = vadd.f32 %v6589, %v6701
    %6703 = vmatprep.mubr.bf16.mxu0 %v4824
    %6704 = vmatmul.mubr.bf16.gmra.mrb[0].mxu0 %v4823
    %v6705 = vpop.f32.mrb[0].mxu0
    %v6706 = vadd.f32 %v6593, %v6705
    %v6707 = vpop.f32.mrb[0].mxu0
    %v6708 = vadd.f32 %v6595, %v6707
    %v6709 = vpop.f32.mrb[0].mxu0
    %v6710 = vadd.f32 %v6597, %v6709
    %v6711 = vpop.f32.mrb[0].mxu0
    %v6712 = vadd.f32 %v6599, %v6711
    %6713 = vmatprep.mubr.bf16.mxu0 %v4832
    %6714 = vmatmul.mubr.bf16.gmra.mrb[0].mxu0 %v4831
    %v6715 = vpop.f32.mrb[0].mxu0
    %v6716 = vadd.f32 %v6603, %v6715
    %v6717 = vpop.f32.mrb[0].mxu0
    %v6718 = vadd.f32 %v6605, %v6717
    %v6719 = vpop.f32.mrb[0].mxu0
    %v6720 = vadd.f32 %v6607, %v6719
    %v6721 = vpop.f32.mrb[0].mxu0
    %v6722 = vadd.f32 %v6609, %v6721
    %6723 = vmatprep.mubr.bf16.mxu0 %v4840
    %6724 = vmatmul.mubr.bf16.gmra.mrb[0].mxu0 %v4839
    %v6725 = vpop.f32.mrb[0].mxu0
    %v6726 = vadd.f32 %v6613, %v6725
    %v6727 = vpop.f32.mrb[0].mxu0
    %v6728 = vadd.f32 %v6615, %v6727
    %v6729 = vpop.f32.mrb[0].mxu0
    %v6730 = vadd.f32 %v6617, %v6729
    %v6731 = vpop.f32.mrb[0].mxu0
    %v6732 = vadd.f32 %v6619, %v6731
    %6733 = vmatprep.mubr.bf16.mxu0 %v4848
    %6734 = vmatmul.mubr.bf16.gmra.mrb[0].mxu0 %v4847
    %v6735 = vpop.f32.mrb[0].mxu0
    %v6736 = vadd.f32 %v6623, %v6735
    %v6737 = vpop.f32.mrb[0].mxu0
    %v6738 = vadd.f32 %v6625, %v6737
    %v6739 = vpop.f32.mrb[0].mxu0
    %v6740 = vadd.f32 %v6627, %v6739
    %v6741 = vpop.f32.mrb[0].mxu0
    %v6742 = vadd.f32 %v6629, %v6741
    %6743 = vmatprep.mubr.bf16.mxu0 %v4856
    %6744 = vmatmul.mubr.bf16.gmra.mrb[0].mxu0 %v4855
    %v6745 = vpop.f32.mrb[0].mxu0
    %v6746 = vadd.f32 %v6633, %v6745
    %v6747 = vpop.f32.mrb[0].mxu0
    %v6748 = vadd.f32 %v6635, %v6747
    %v6749 = vpop.f32.mrb[0].mxu0
    %v6750 = vadd.f32 %v6637, %v6749
    %v6751 = vpop.f32.mrb[0].mxu0
    %v6752 = vadd.f32 %v6639, %v6751
    %6753 = vmatprep.mubr.bf16.mxu0 %v4864
    %6754 = vmatmul.mubr.bf16.gmra.mrb[0].mxu0 %v4863
    %v6755 = vpop.f32.mrb[0].mxu0
    %v6756 = vadd.f32 %v6643, %v6755
    %v6757 = vpop.f32.mrb[0].mxu0
    %v6758 = vadd.f32 %v6645, %v6757
    %v6759 = vpop.f32.mrb[0].mxu0
    %v6760 = vadd.f32 %v6647, %v6759
    %v6761 = vpop.f32.mrb[0].mxu0
    %v6762 = vadd.f32 %v6649, %v6761
    %6763 = vdwg.mxu0
    %6764 = vmatprep.subr.bf16.mxu0 %v6106
    %6765 = vmatpush1.bf16.msra.mxu0 %v6105
    %6766 = vmatprep.subr.bf16.mxu0 %v6110
    %6767 = vmatpush1.bf16.msra.mxu0 %v6109
    %6768 = vmatprep.subr.bf16.mxu0 %v6114
    %6769 = vmatpush1.bf16.msra.mxu0 %v6113
    %6770 = vmatprep.subr.bf16.mxu0 %v6118
    %6771 = vmatpush1.bf16.msra.mxu0 %v6117
    %6772 = vmatprep.subr.bf16.mxu0 %v6122
    %6773 = vmatpush1.bf16.msra.mxu0 %v6121
    %6774 = vmatprep.subr.bf16.mxu0 %v6126
    %6775 = vmatpush1.bf16.msra.mxu0 %v6125
    %6776 = vmatprep.subr.bf16.mxu0 %v6130
    %6777 = vmatpush1.bf16.msra.mxu0 %v6129
    %6778 = vmatprep.subr.bf16.mxu0 %v6134
    %6779 = vmatpush1.bf16.msra.mxu0 %v6133
    %6780 = vmatprep.subr.bf16.mxu0 %v6138
    %6781 = vmatpush1.bf16.msra.mxu0 %v6137
    %6782 = vmatprep.subr.bf16.mxu0 %v6142
    %6783 = vmatpush1.bf16.msra.mxu0 %v6141
    %6784 = vmatprep.subr.bf16.mxu0 %v6146
    %6785 = vmatpush1.bf16.msra.mxu0 %v6145
    %6786 = vmatprep.subr.bf16.mxu0 %v6150
    %6787 = vmatpush1.bf16.msra.mxu0 %v6149
    %6788 = vmatprep.subr.bf16.mxu0 %v6154
    %6789 = vmatpush1.bf16.msra.mxu0 %v6153
    %6790 = vmatprep.subr.bf16.mxu0 %v6158
    %6791 = vmatpush1.bf16.msra.mxu0 %v6157
    %6792 = vmatprep.subr.bf16.mxu0 %v6162
    %6793 = vmatpush1.bf16.msra.mxu0 %v6161
    %6794 = vmatprep.subr.bf16.mxu0 %v6166
    %6795 = vmatpush1.bf16.msra.mxu0 %v6165
    %6796 = vmatprep.mubr.bf16.mxu0 %v4810
    %6797 = vmatmul.mubr.bf16.gmra.mrb[0].mxu0 %v4809
    %v6798 = vpop.f32.mrb[0].mxu0
    %v6799 = vadd.f32 %v6686, %v6798
    %v6800 = vpop.f32.mrb[0].mxu0
    %v6801 = vadd.f32 %v6688, %v6800
    %v6802 = vpop.f32.mrb[0].mxu0
    %v6803 = vadd.f32 %v6690, %v6802
    %v6804 = vpop.f32.mrb[0].mxu0
    %v6805 = vadd.f32 %v6692, %v6804
    %6806 = vmatprep.mubr.bf16.mxu0 %v4818
    %6807 = vmatmul.mubr.bf16.gmra.mrb[0].mxu0 %v4817
    %v6808 = vpop.f32.mrb[0].mxu0
    %v6809 = vadd.f32 %v6696, %v6808
    %v6810 = vpop.f32.mrb[0].mxu0
    %v6811 = vadd.f32 %v6698, %v6810
    %v6812 = vpop.f32.mrb[0].mxu0
    %v6813 = vadd.f32 %v6700, %v6812
    %v6814 = vpop.f32.mrb[0].mxu0
    %v6815 = vadd.f32 %v6702, %v6814
    %6816 = vmatprep.mubr.bf16.mxu0 %v4826
    %6817 = vmatmul.mubr.bf16.gmra.mrb[0].mxu0 %v4825
    %v6818 = vpop.f32.mrb[0].mxu0
    %v6819 = vadd.f32 %v6706, %v6818
    %v6820 = vpop.f32.mrb[0].mxu0
    %v6821 = vadd.f32 %v6708, %v6820
    %v6822 = vpop.f32.mrb[0].mxu0
    %v6823 = vadd.f32 %v6710, %v6822
    %v6824 = vpop.f32.mrb[0].mxu0
    %v6825 = vadd.f32 %v6712, %v6824
    %6826 = vmatprep.mubr.bf16.mxu0 %v4834
    %6827 = vmatmul.mubr.bf16.gmra.mrb[0].mxu0 %v4833
    %v6828 = vpop.f32.mrb[0].mxu0
    %v6829 = vadd.f32 %v6716, %v6828
    %v6830 = vpop.f32.mrb[0].mxu0
    %v6831 = vadd.f32 %v6718, %v6830
    %v6832 = vpop.f32.mrb[0].mxu0
    %v6833 = vadd.f32 %v6720, %v6832
    %v6834 = vpop.f32.mrb[0].mxu0
    %v6835 = vadd.f32 %v6722, %v6834
    %6836 = vmatprep.mubr.bf16.mxu0 %v4842
    %6837 = vmatmul.mubr.bf16.gmra.mrb[0].mxu0 %v4841
    %v6838 = vpop.f32.mrb[0].mxu0
    %v6839 = vadd.f32 %v6726, %v6838
    %v6840 = vpop.f32.mrb[0].mxu0
    %v6841 = vadd.f32 %v6728, %v6840
    %v6842 = vpop.f32.mrb[0].mxu0
    %v6843 = vadd.f32 %v6730, %v6842
    %v6844 = vpop.f32.mrb[0].mxu0
    %v6845 = vadd.f32 %v6732, %v6844
    %6846 = vmatprep.mubr.bf16.mxu0 %v4850
    %6847 = vmatmul.mubr.bf16.gmra.mrb[0].mxu0 %v4849
    %v6848 = vpop.f32.mrb[0].mxu0
    %v6849 = vadd.f32 %v6736, %v6848
    %v6850 = vpop.f32.mrb[0].mxu0
    %v6851 = vadd.f32 %v6738, %v6850
    %v6852 = vpop.f32.mrb[0].mxu0
    %v6853 = vadd.f32 %v6740, %v6852
    %v6854 = vpop.f32.mrb[0].mxu0
    %v6855 = vadd.f32 %v6742, %v6854
    %6856 = vmatprep.mubr.bf16.mxu0 %v4858
    %6857 = vmatmul.mubr.bf16.gmra.mrb[0].mxu0 %v4857
    %v6858 = vpop.f32.mrb[0].mxu0
    %v6859 = vadd.f32 %v6746, %v6858
    %v6860 = vpop.f32.mrb[0].mxu0
    %v6861 = vadd.f32 %v6748, %v6860
    %v6862 = vpop.f32.mrb[0].mxu0
    %v6863 = vadd.f32 %v6750, %v6862
    %v6864 = vpop.f32.mrb[0].mxu0
    %v6865 = vadd.f32 %v6752, %v6864
    %6866 = vmatprep.mubr.bf16.mxu0 %v4866
    %6867 = vmatmul.mubr.bf16.gmra.mrb[0].mxu0 %v4865
    %v6868 = vpop.f32.mrb[0].mxu0
    %v6869 = vadd.f32 %v6756, %v6868
    %v6870 = vpop.f32.mrb[0].mxu0
    %v6871 = vadd.f32 %v6758, %v6870
    %v6872 = vpop.f32.mrb[0].mxu0
    %v6873 = vadd.f32 %v6760, %v6872
    %v6874 = vpop.f32.mrb[0].mxu0
    %v6875 = vadd.f32 %v6762, %v6874
    %6876 = vdwg.mxu0
    %6877 = vmatprep.subr.bf16.mxu0 %v5916
    %6878 = vmatpush1.bf16.msra.mxu0 %v5915
    %6879 = vmatprep.subr.bf16.mxu0 %v5920
    %6880 = vmatpush1.bf16.msra.mxu0 %v5919
    %6881 = vmatprep.subr.bf16.mxu0 %v5924
    %6882 = vmatpush1.bf16.msra.mxu0 %v5923
    %6883 = vmatprep.subr.bf16.mxu0 %v5928
    %6884 = vmatpush1.bf16.msra.mxu0 %v5927
    %6885 = vmatprep.subr.bf16.mxu0 %v5932
    %6886 = vmatpush1.bf16.msra.mxu0 %v5931
    %6887 = vmatprep.subr.bf16.mxu0 %v5936
    %6888 = vmatpush1.bf16.msra.mxu0 %v5935
    %6889 = vmatprep.subr.bf16.mxu0 %v5940
    %6890 = vmatpush1.bf16.msra.mxu0 %v5939
    %6891 = vmatprep.subr.bf16.mxu0 %v5944
    %6892 = vmatpush1.bf16.msra.mxu0 %v5943
    %6893 = vmatprep.subr.bf16.mxu0 %v5948
    %6894 = vmatpush1.bf16.msra.mxu0 %v5947
    %6895 = vmatprep.subr.bf16.mxu0 %v5952
    %6896 = vmatpush1.bf16.msra.mxu0 %v5951
    %6897 = vmatprep.subr.bf16.mxu0 %v5956
    %6898 = vmatpush1.bf16.msra.mxu0 %v5955
    %6899 = vmatprep.subr.bf16.mxu0 %v5960
    %6900 = vmatpush1.bf16.msra.mxu0 %v5959
    %6901 = vmatprep.subr.bf16.mxu0 %v5964
    %6902 = vmatpush1.bf16.msra.mxu0 %v5963
    %6903 = vmatprep.subr.bf16.mxu0 %v5968
    %6904 = vmatpush1.bf16.msra.mxu0 %v5967
    %6905 = vmatprep.subr.bf16.mxu0 %v5972
    %6906 = vmatpush1.bf16.msra.mxu0 %v5971
    %6907 = vmatprep.subr.bf16.mxu0 %v5976
    %6908 = vmatpush1.bf16.msra.mxu0 %v5975
    %6909 = vmatprep.mubr.bf16.mxu0 %v4804
    %6910 = vmatmul.mubr.bf16.gmra.mrb[0].mxu0 %v4803
    %v6911 = vpop.f32.mrb[0].mxu0
    %v6912 = vadd.f32 %v5136, %v6911
    %v6913 = vpop.f32.mrb[0].mxu0
    %v6914 = vadd.f32 %v5140, %v6913
    %v6915 = vpop.f32.mrb[0].mxu0
    %v6916 = vadd.f32 %v5136, %v6915
    %v6917 = vpop.f32.mrb[0].mxu0
    %v6918 = vadd.f32 %v5140, %v6917
    %6919 = vmatprep.mubr.bf16.mxu0 %v4812
    %6920 = vmatmul.mubr.bf16.gmra.mrb[0].mxu0 %v4811
    %v6921 = vpop.f32.mrb[0].mxu0
    %v6922 = vadd.f32 %v5136, %v6921
    %v6923 = vpop.f32.mrb[0].mxu0
    %v6924 = vadd.f32 %v5140, %v6923
    %v6925 = vpop.f32.mrb[0].mxu0
    %v6926 = vadd.f32 %v5136, %v6925
    %v6927 = vpop.f32.mrb[0].mxu0
    %v6928 = vadd.f32 %v5140, %v6927
    %6929 = vmatprep.mubr.bf16.mxu0 %v4820
    %6930 = vmatmul.mubr.bf16.gmra.mrb[0].mxu0 %v4819
    %v6931 = vpop.f32.mrb[0].mxu0
    %v6932 = vadd.f32 %v5136, %v6931
    %v6933 = vpop.f32.mrb[0].mxu0
    %v6934 = vadd.f32 %v5140, %v6933
    %v6935 = vpop.f32.mrb[0].mxu0
    %v6936 = vadd.f32 %v5136, %v6935
    %v6937 = vpop.f32.mrb[0].mxu0
    %v6938 = vadd.f32 %v5140, %v6937
    %6939 = vmatprep.mubr.bf16.mxu0 %v4828
    %6940 = vmatmul.mubr.bf16.gmra.mrb[0].mxu0 %v4827
    %v6941 = vpop.f32.mrb[0].mxu0
    %v6942 = vadd.f32 %v5136, %v6941
    %v6943 = vpop.f32.mrb[0].mxu0
    %v6944 = vadd.f32 %v5140, %v6943
    %v6945 = vpop.f32.mrb[0].mxu0
    %v6946 = vadd.f32 %v5136, %v6945
    %v6947 = vpop.f32.mrb[0].mxu0
    %v6948 = vadd.f32 %v5140, %v6947
    %6949 = vmatprep.mubr.bf16.mxu0 %v4836
    %6950 = vmatmul.mubr.bf16.gmra.mrb[0].mxu0 %v4835
    %v6951 = vpop.f32.mrb[0].mxu0
    %v6952 = vadd.f32 %v5136, %v6951
    %v6953 = vpop.f32.mrb[0].mxu0
    %v6954 = vadd.f32 %v5140, %v6953
    %v6955 = vpop.f32.mrb[0].mxu0
    %v6956 = vadd.f32 %v5136, %v6955
    %v6957 = vpop.f32.mrb[0].mxu0
    %v6958 = vadd.f32 %v5140, %v6957
    %6959 = vmatprep.mubr.bf16.mxu0 %v4844
    %6960 = vmatmul.mubr.bf16.gmra.mrb[0].mxu0 %v4843
    %v6961 = vpop.f32.mrb[0].mxu0
    %v6962 = vadd.f32 %v5136, %v6961
    %v6963 = vpop.f32.mrb[0].mxu0
    %v6964 = vadd.f32 %v5140, %v6963
    %v6965 = vpop.f32.mrb[0].mxu0
    %v6966 = vadd.f32 %v5136, %v6965
    %v6967 = vpop.f32.mrb[0].mxu0
    %v6968 = vadd.f32 %v5140, %v6967
    %6969 = vmatprep.mubr.bf16.mxu0 %v4852
    %6970 = vmatmul.mubr.bf16.gmra.mrb[0].mxu0 %v4851
    %v6971 = vpop.f32.mrb[0].mxu0
    %v6972 = vadd.f32 %v5136, %v6971
    %v6973 = vpop.f32.mrb[0].mxu0
    %v6974 = vadd.f32 %v5140, %v6973
    %v6975 = vpop.f32.mrb[0].mxu0
    %v6976 = vadd.f32 %v5136, %v6975
    %v6977 = vpop.f32.mrb[0].mxu0
    %v6978 = vadd.f32 %v5140, %v6977
    %6979 = vmatprep.mubr.bf16.mxu0 %v4860
    %6980 = vmatmul.mubr.bf16.gmra.mrb[0].mxu0 %v4859
    %v6981 = vpop.f32.mrb[0].mxu0
    %v6982 = vadd.f32 %v5136, %v6981
    %v6983 = vpop.f32.mrb[0].mxu0
    %v6984 = vadd.f32 %v5140, %v6983
    %v6985 = vpop.f32.mrb[0].mxu0
    %v6986 = vadd.f32 %v5136, %v6985
    %v6987 = vpop.f32.mrb[0].mxu0
    %v6988 = vadd.f32 %v5140, %v6987
    %6989 = vdwg.mxu0
    %6990 = vmatprep.subr.bf16.mxu0 %v5980
    %6991 = vmatpush1.bf16.msra.mxu0 %v5979
    %6992 = vmatprep.subr.bf16.mxu0 %v5984
    %6993 = vmatpush1.bf16.msra.mxu0 %v5983
    %6994 = vmatprep.subr.bf16.mxu0 %v5988
    %6995 = vmatpush1.bf16.msra.mxu0 %v5987
    %6996 = vmatprep.subr.bf16.mxu0 %v5992
    %6997 = vmatpush1.bf16.msra.mxu0 %v5991
    %6998 = vmatprep.subr.bf16.mxu0 %v5996
    %6999 = vmatpush1.bf16.msra.mxu0 %v5995
    %7000 = vmatprep.subr.bf16.mxu0 %v6000
    %7001 = vmatpush1.bf16.msra.mxu0 %v5999
    %7002 = vmatprep.subr.bf16.mxu0 %v6004
    %7003 = vmatpush1.bf16.msra.mxu0 %v6003
    %7004 = vmatprep.subr.bf16.mxu0 %v6008
    %7005 = vmatpush1.bf16.msra.mxu0 %v6007
    %7006 = vmatprep.subr.bf16.mxu0 %v6012
    %7007 = vmatpush1.bf16.msra.mxu0 %v6011
    %7008 = vmatprep.subr.bf16.mxu0 %v6016
    %7009 = vmatpush1.bf16.msra.mxu0 %v6015
    %7010 = vmatprep.subr.bf16.mxu0 %v6020
    %7011 = vmatpush1.bf16.msra.mxu0 %v6019
    %7012 = vmatprep.subr.bf16.mxu0 %v6024
    %7013 = vmatpush1.bf16.msra.mxu0 %v6023
    %7014 = vmatprep.subr.bf16.mxu0 %v6028
    %7015 = vmatpush1.bf16.msra.mxu0 %v6027
    %7016 = vmatprep.subr.bf16.mxu0 %v6032
    %7017 = vmatpush1.bf16.msra.mxu0 %v6031
    %7018 = vmatprep.subr.bf16.mxu0 %v6036
    %7019 = vmatpush1.bf16.msra.mxu0 %v6035
    %7020 = vmatprep.subr.bf16.mxu0 %v6040
    %7021 = vmatpush1.bf16.msra.mxu0 %v6039
    %7022 = vmatprep.mubr.bf16.mxu0 %v4806
    %7023 = vmatmul.mubr.bf16.gmra.mrb[0].mxu0 %v4805
    %v7024 = vpop.f32.mrb[0].mxu0
    %v7025 = vadd.f32 %v6912, %v7024
    %v7026 = vpop.f32.mrb[0].mxu0
    %v7027 = vadd.f32 %v6914, %v7026
    %v7028 = vpop.f32.mrb[0].mxu0
    %v7029 = vadd.f32 %v6916, %v7028
    %v7030 = vpop.f32.mrb[0].mxu0
    %v7031 = vadd.f32 %v6918, %v7030
    %7032 = vmatprep.mubr.bf16.mxu0 %v4814
    %7033 = vmatmul.mubr.bf16.gmra.mrb[0].mxu0 %v4813
    %v7034 = vpop.f32.mrb[0].mxu0
    %v7035 = vadd.f32 %v6922, %v7034
    %v7036 = vpop.f32.mrb[0].mxu0
    %v7037 = vadd.f32 %v6924, %v7036
    %v7038 = vpop.f32.mrb[0].mxu0
    %v7039 = vadd.f32 %v6926, %v7038
    %v7040 = vpop.f32.mrb[0].mxu0
    %v7041 = vadd.f32 %v6928, %v7040
    %7042 = vmatprep.mubr.bf16.mxu0 %v4822
    %7043 = vmatmul.mubr.bf16.gmra.mrb[0].mxu0 %v4821
    %v7044 = vpop.f32.mrb[0].mxu0
    %v7045 = vadd.f32 %v6932, %v7044
    %v7046 = vpop.f32.mrb[0].mxu0
    %v7047 = vadd.f32 %v6934, %v7046
    %v7048 = vpop.f32.mrb[0].mxu0
    %v7049 = vadd.f32 %v6936, %v7048
    %v7050 = vpop.f32.mrb[0].mxu0
    %v7051 = vadd.f32 %v6938, %v7050
    %7052 = vmatprep.mubr.bf16.mxu0 %v4830
    %7053 = vmatmul.mubr.bf16.gmra.mrb[0].mxu0 %v4829
    %v7054 = vpop.f32.mrb[0].mxu0
    %v7055 = vadd.f32 %v6942, %v7054
    %v7056 = vpop.f32.mrb[0].mxu0
    %v7057 = vadd.f32 %v6944, %v7056
    %v7058 = vpop.f32.mrb[0].mxu0
    %v7059 = vadd.f32 %v6946, %v7058
    %v7060 = vpop.f32.mrb[0].mxu0
    %v7061 = vadd.f32 %v6948, %v7060
    %7062 = vmatprep.mubr.bf16.mxu0 %v4838
    %7063 = vmatmul.mubr.bf16.gmra.mrb[0].mxu0 %v4837
    %v7064 = vpop.f32.mrb[0].mxu0
    %v7065 = vadd.f32 %v6952, %v7064
    %v7066 = vpop.f32.mrb[0].mxu0
    %v7067 = vadd.f32 %v6954, %v7066
    %v7068 = vpop.f32.mrb[0].mxu0
    %v7069 = vadd.f32 %v6956, %v7068
    %v7070 = vpop.f32.mrb[0].mxu0
    %v7071 = vadd.f32 %v6958, %v7070
    %7072 = vmatprep.mubr.bf16.mxu0 %v4846
    %7073 = vmatmul.mubr.bf16.gmra.mrb[0].mxu0 %v4845
    %v7074 = vpop.f32.mrb[0].mxu0
    %v7075 = vadd.f32 %v6962, %v7074
    %v7076 = vpop.f32.mrb[0].mxu0
    %v7077 = vadd.f32 %v6964, %v7076
    %v7078 = vpop.f32.mrb[0].mxu0
    %v7079 = vadd.f32 %v6966, %v7078
    %v7080 = vpop.f32.mrb[0].mxu0
    %v7081 = vadd.f32 %v6968, %v7080
    %7082 = vmatprep.mubr.bf16.mxu0 %v4854
    %7083 = vmatmul.mubr.bf16.gmra.mrb[0].mxu0 %v4853
    %v7084 = vpop.f32.mrb[0].mxu0
    %v7085 = vadd.f32 %v6972, %v7084
    %v7086 = vpop.f32.mrb[0].mxu0
    %v7087 = vadd.f32 %v6974, %v7086
    %v7088 = vpop.f32.mrb[0].mxu0
    %v7089 = vadd.f32 %v6976, %v7088
    %v7090 = vpop.f32.mrb[0].mxu0
    %v7091 = vadd.f32 %v6978, %v7090
    %7092 = vmatprep.mubr.bf16.mxu0 %v4862
    %7093 = vmatmul.mubr.bf16.gmra.mrb[0].mxu0 %v4861
    %v7094 = vpop.f32.mrb[0].mxu0
    %v7095 = vadd.f32 %v6982, %v7094
    %v7096 = vpop.f32.mrb[0].mxu0
    %v7097 = vadd.f32 %v6984, %v7096
    %v7098 = vpop.f32.mrb[0].mxu0
    %v7099 = vadd.f32 %v6986, %v7098
    %v7100 = vpop.f32.mrb[0].mxu0
    %v7101 = vadd.f32 %v6988, %v7100
    %7102 = vdwg.mxu0
    %7103 = vmatprep.subr.bf16.mxu0 %v6044
    %7104 = vmatpush1.bf16.msra.mxu0 %v6043
    %7105 = vmatprep.subr.bf16.mxu0 %v6048
    %7106 = vmatpush1.bf16.msra.mxu0 %v6047
    %7107 = vmatprep.subr.bf16.mxu0 %v6052
    %7108 = vmatpush1.bf16.msra.mxu0 %v6051
    %7109 = vmatprep.subr.bf16.mxu0 %v6056
    %7110 = vmatpush1.bf16.msra.mxu0 %v6055
    %7111 = vmatprep.subr.bf16.mxu0 %v6060
    %7112 = vmatpush1.bf16.msra.mxu0 %v6059
    %7113 = vmatprep.subr.bf16.mxu0 %v6064
    %7114 = vmatpush1.bf16.msra.mxu0 %v6063
    %7115 = vmatprep.subr.bf16.mxu0 %v6068
    %7116 = vmatpush1.bf16.msra.mxu0 %v6067
    %7117 = vmatprep.subr.bf16.mxu0 %v6072
    %7118 = vmatpush1.bf16.msra.mxu0 %v6071
    %7119 = vmatprep.subr.bf16.mxu0 %v6076
    %7120 = vmatpush1.bf16.msra.mxu0 %v6075
    %7121 = vmatprep.subr.bf16.mxu0 %v6080
    %7122 = vmatpush1.bf16.msra.mxu0 %v6079
    %7123 = vmatprep.subr.bf16.mxu0 %v6084
    %7124 = vmatpush1.bf16.msra.mxu0 %v6083
    %7125 = vmatprep.subr.bf16.mxu0 %v6088
    %7126 = vmatpush1.bf16.msra.mxu0 %v6087
    %7127 = vmatprep.subr.bf16.mxu0 %v6092
    %7128 = vmatpush1.bf16.msra.mxu0 %v6091
    %7129 = vmatprep.subr.bf16.mxu0 %v6096
    %7130 = vmatpush1.bf16.msra.mxu0 %v6095
    %7131 = vmatprep.subr.bf16.mxu0 %v6100
    %7132 = vmatpush1.bf16.msra.mxu0 %v6099
    %7133 = vmatprep.subr.bf16.mxu0 %v6104
    %7134 = vmatpush1.bf16.msra.mxu0 %v6103
    %7135 = vmatprep.mubr.bf16.mxu0 %v4808
    %7136 = vmatmul.mubr.bf16.gmra.mrb[0].mxu0 %v4807
    %v7137 = vpop.f32.mrb[0].mxu0
    %v7138 = vadd.f32 %v7025, %v7137
    %v7139 = vpop.f32.mrb[0].mxu0
    %v7140 = vadd.f32 %v7027, %v7139
    %v7141 = vpop.f32.mrb[0].mxu0
    %v7142 = vadd.f32 %v7029, %v7141
    %v7143 = vpop.f32.mrb[0].mxu0
    %v7144 = vadd.f32 %v7031, %v7143
    %7145 = vmatprep.mubr.bf16.mxu0 %v4816
    %7146 = vmatmul.mubr.bf16.gmra.mrb[0].mxu0 %v4815
    %v7147 = vpop.f32.mrb[0].mxu0
    %v7148 = vadd.f32 %v7035, %v7147
    %v7149 = vpop.f32.mrb[0].mxu0
    %v7150 = vadd.f32 %v7037, %v7149
    %v7151 = vpop.f32.mrb[0].mxu0
    %v7152 = vadd.f32 %v7039, %v7151
    %v7153 = vpop.f32.mrb[0].mxu0
    %v7154 = vadd.f32 %v7041, %v7153
    %7155 = vmatprep.mubr.bf16.mxu0 %v4824
    %7156 = vmatmul.mubr.bf16.gmra.mrb[0].mxu0 %v4823
    %v7157 = vpop.f32.mrb[0].mxu0
    %v7158 = vadd.f32 %v7045, %v7157
    %v7159 = vpop.f32.mrb[0].mxu0
    %v7160 = vadd.f32 %v7047, %v7159
    %v7161 = vpop.f32.mrb[0].mxu0
    %v7162 = vadd.f32 %v7049, %v7161
    %v7163 = vpop.f32.mrb[0].mxu0
    %v7164 = vadd.f32 %v7051, %v7163
    %7165 = vmatprep.mubr.bf16.mxu0 %v4832
    %7166 = vmatmul.mubr.bf16.gmra.mrb[0].mxu0 %v4831
    %v7167 = vpop.f32.mrb[0].mxu0
    %v7168 = vadd.f32 %v7055, %v7167
    %v7169 = vpop.f32.mrb[0].mxu0
    %v7170 = vadd.f32 %v7057, %v7169
    %v7171 = vpop.f32.mrb[0].mxu0
    %v7172 = vadd.f32 %v7059, %v7171
    %v7173 = vpop.f32.mrb[0].mxu0
    %v7174 = vadd.f32 %v7061, %v7173
    %7175 = vmatprep.mubr.bf16.mxu0 %v4840
    %7176 = vmatmul.mubr.bf16.gmra.mrb[0].mxu0 %v4839
    %v7177 = vpop.f32.mrb[0].mxu0
    %v7178 = vadd.f32 %v7065, %v7177
    %v7179 = vpop.f32.mrb[0].mxu0
    %v7180 = vadd.f32 %v7067, %v7179
    %v7181 = vpop.f32.mrb[0].mxu0
    %v7182 = vadd.f32 %v7069, %v7181
    %v7183 = vpop.f32.mrb[0].mxu0
    %v7184 = vadd.f32 %v7071, %v7183
    %7185 = vmatprep.mubr.bf16.mxu0 %v4848
    %7186 = vmatmul.mubr.bf16.gmra.mrb[0].mxu0 %v4847
    %v7187 = vpop.f32.mrb[0].mxu0
    %v7188 = vadd.f32 %v7075, %v7187
    %v7189 = vpop.f32.mrb[0].mxu0
    %v7190 = vadd.f32 %v7077, %v7189
    %v7191 = vpop.f32.mrb[0].mxu0
    %v7192 = vadd.f32 %v7079, %v7191
    %v7193 = vpop.f32.mrb[0].mxu0
    %v7194 = vadd.f32 %v7081, %v7193
    %7195 = vmatprep.mubr.bf16.mxu0 %v4856
    %7196 = vmatmul.mubr.bf16.gmra.mrb[0].mxu0 %v4855
    %v7197 = vpop.f32.mrb[0].mxu0
    %v7198 = vadd.f32 %v7085, %v7197
    %v7199 = vpop.f32.mrb[0].mxu0
    %v7200 = vadd.f32 %v7087, %v7199
    %v7201 = vpop.f32.mrb[0].mxu0
    %v7202 = vadd.f32 %v7089, %v7201
    %v7203 = vpop.f32.mrb[0].mxu0
    %v7204 = vadd.f32 %v7091, %v7203
    %7205 = vmatprep.mubr.bf16.mxu0 %v4864
    %7206 = vmatmul.mubr.bf16.gmra.mrb[0].mxu0 %v4863
    %v7207 = vpop.f32.mrb[0].mxu0
    %v7208 = vadd.f32 %v7095, %v7207
    %v7209 = vpop.f32.mrb[0].mxu0
    %v7210 = vadd.f32 %v7097, %v7209
    %v7211 = vpop.f32.mrb[0].mxu0
    %v7212 = vadd.f32 %v7099, %v7211
    %v7213 = vpop.f32.mrb[0].mxu0
    %v7214 = vadd.f32 %v7101, %v7213
    %7215 = vdwg.mxu0
    %7216 = vmatprep.subr.bf16.mxu0 %v6108
    %7217 = vmatpush1.bf16.msra.mxu0 %v6107
    %7218 = vmatprep.subr.bf16.mxu0 %v6112
    %7219 = vmatpush1.bf16.msra.mxu0 %v6111
    %7220 = vmatprep.subr.bf16.mxu0 %v6116
    %7221 = vmatpush1.bf16.msra.mxu0 %v6115
    %7222 = vmatprep.subr.bf16.mxu0 %v6120
    %7223 = vmatpush1.bf16.msra.mxu0 %v6119
    %7224 = vmatprep.subr.bf16.mxu0 %v6124
    %7225 = vmatpush1.bf16.msra.mxu0 %v6123
    %7226 = vmatprep.subr.bf16.mxu0 %v6128
    %7227 = vmatpush1.bf16.msra.mxu0 %v6127
    %7228 = vmatprep.subr.bf16.mxu0 %v6132
    %7229 = vmatpush1.bf16.msra.mxu0 %v6131
    %7230 = vmatprep.subr.bf16.mxu0 %v6136
    %7231 = vmatpush1.bf16.msra.mxu0 %v6135
    %7232 = vmatprep.subr.bf16.mxu0 %v6140
    %7233 = vmatpush1.bf16.msra.mxu0 %v6139
    %7234 = vmatprep.subr.bf16.mxu0 %v6144
    %7235 = vmatpush1.bf16.msra.mxu0 %v6143
    %7236 = vmatprep.subr.bf16.mxu0 %v6148
    %7237 = vmatpush1.bf16.msra.mxu0 %v6147
    %7238 = vmatprep.subr.bf16.mxu0 %v6152
    %7239 = vmatpush1.bf16.msra.mxu0 %v6151
    %7240 = vmatprep.subr.bf16.mxu0 %v6156
    %7241 = vmatpush1.bf16.msra.mxu0 %v6155
    %7242 = vmatprep.subr.bf16.mxu0 %v6160
    %7243 = vmatpush1.bf16.msra.mxu0 %v6159
    %7244 = vmatprep.subr.bf16.mxu0 %v6164
    %7245 = vmatpush1.bf16.msra.mxu0 %v6163
    %7246 = vmatprep.subr.bf16.mxu0 %v6168
    %7247 = vmatpush1.bf16.msra.mxu0 %v6167
    %7248 = vmatprep.mubr.bf16.mxu0 %v4810
    %7249 = vmatmul.mubr.bf16.gmra.mrb[0].mxu0 %v4809
    %v7250 = vpop.f32.mrb[0].mxu0
    %v7251 = vadd.f32 %v7138, %v7250
    %v7252 = vpop.f32.mrb[0].mxu0
    %v7253 = vadd.f32 %v7140, %v7252
    %v7254 = vpop.f32.mrb[0].mxu0
    %v7255 = vadd.f32 %v7142, %v7254
    %v7256 = vpop.f32.mrb[0].mxu0
    %v7257 = vadd.f32 %v7144, %v7256
    %7258 = vmatprep.mubr.bf16.mxu0 %v4818
    %7259 = vmatmul.mubr.bf16.gmra.mrb[0].mxu0 %v4817
    %v7260 = vpop.f32.mrb[0].mxu0
    %v7261 = vadd.f32 %v7148, %v7260
    %v7262 = vpop.f32.mrb[0].mxu0
    %v7263 = vadd.f32 %v7150, %v7262
    %v7264 = vpop.f32.mrb[0].mxu0
    %v7265 = vadd.f32 %v7152, %v7264
    %v7266 = vpop.f32.mrb[0].mxu0
    %v7267 = vadd.f32 %v7154, %v7266
    %7268 = vmatprep.mubr.bf16.mxu0 %v4826
    %7269 = vmatmul.mubr.bf16.gmra.mrb[0].mxu0 %v4825
    %v7270 = vpop.f32.mrb[0].mxu0
    %v7271 = vadd.f32 %v7158, %v7270
    %v7272 = vpop.f32.mrb[0].mxu0
    %v7273 = vadd.f32 %v7160, %v7272
    %v7274 = vpop.f32.mrb[0].mxu0
    %v7275 = vadd.f32 %v7162, %v7274
    %v7276 = vpop.f32.mrb[0].mxu0
    %v7277 = vadd.f32 %v7164, %v7276
    %7278 = vmatprep.mubr.bf16.mxu0 %v4834
    %7279 = vmatmul.mubr.bf16.gmra.mrb[0].mxu0 %v4833
    %v7280 = vpop.f32.mrb[0].mxu0
    %v7281 = vadd.f32 %v7168, %v7280
    %v7282 = vpop.f32.mrb[0].mxu0
    %v7283 = vadd.f32 %v7170, %v7282
    %v7284 = vpop.f32.mrb[0].mxu0
    %v7285 = vadd.f32 %v7172, %v7284
    %v7286 = vpop.f32.mrb[0].mxu0
    %v7287 = vadd.f32 %v7174, %v7286
    %7288 = vmatprep.mubr.bf16.mxu0 %v4842
    %7289 = vmatmul.mubr.bf16.gmra.mrb[0].mxu0 %v4841
    %v7290 = vpop.f32.mrb[0].mxu0
    %v7291 = vadd.f32 %v7178, %v7290
    %v7292 = vpop.f32.mrb[0].mxu0
    %v7293 = vadd.f32 %v7180, %v7292
    %v7294 = vpop.f32.mrb[0].mxu0
    %v7295 = vadd.f32 %v7182, %v7294
    %v7296 = vpop.f32.mrb[0].mxu0
    %v7297 = vadd.f32 %v7184, %v7296
    %7298 = vmatprep.mubr.bf16.mxu0 %v4850
    %7299 = vmatmul.mubr.bf16.gmra.mrb[0].mxu0 %v4849
    %v7300 = vpop.f32.mrb[0].mxu0
    %v7301 = vadd.f32 %v7188, %v7300
    %v7302 = vpop.f32.mrb[0].mxu0
    %v7303 = vadd.f32 %v7190, %v7302
    %v7304 = vpop.f32.mrb[0].mxu0
    %v7305 = vadd.f32 %v7192, %v7304
    %v7306 = vpop.f32.mrb[0].mxu0
    %v7307 = vadd.f32 %v7194, %v7306
    %7308 = vmatprep.mubr.bf16.mxu0 %v4858
    %7309 = vmatmul.mubr.bf16.gmra.mrb[0].mxu0 %v4857
    %v7310 = vpop.f32.mrb[0].mxu0
    %v7311 = vadd.f32 %v7198, %v7310
    %v7312 = vpop.f32.mrb[0].mxu0
    %v7313 = vadd.f32 %v7200, %v7312
    %v7314 = vpop.f32.mrb[0].mxu0
    %v7315 = vadd.f32 %v7202, %v7314
    %v7316 = vpop.f32.mrb[0].mxu0
    %v7317 = vadd.f32 %v7204, %v7316
    %7318 = vmatprep.mubr.bf16.mxu0 %v4866
    %7319 = vmatmul.mubr.bf16.gmra.mrb[0].mxu0 %v4865
    %v7320 = vpop.f32.mrb[0].mxu0
    %v7321 = vadd.f32 %v7208, %v7320
    %v7322 = vpop.f32.mrb[0].mxu0
    %v7323 = vadd.f32 %v7210, %v7322
    %v7324 = vpop.f32.mrb[0].mxu0
    %v7325 = vadd.f32 %v7212, %v7324
    %v7326 = vpop.f32.mrb[0].mxu0
    %v7327 = vadd.f32 %v7214, %v7326
    %7328 = vdwg.mxu0
    %v7329 = vmax.f32 %v6799, 0.0
    %v7330 = vmax.f32 %v6801, 0.0
    %v7331 = vmax.f32 %v7251, 0.0
    %v7332 = vmax.f32 %v7253, 0.0
    %v7333 = vmax.f32 %v6803, 0.0
    %v7334 = vmax.f32 %v6805, 0.0
    %v7335 = vmax.f32 %v7255, 0.0
    %v7336 = vmax.f32 %v7257, 0.0
    %v7337 = vmax.f32 %v6809, 0.0
    %v7338 = vmax.f32 %v6811, 0.0
    %v7339 = vmax.f32 %v7261, 0.0
    %v7340 = vmax.f32 %v7263, 0.0
    %v7341 = vmax.f32 %v6813, 0.0
    %v7342 = vmax.f32 %v6815, 0.0
    %v7343 = vmax.f32 %v7265, 0.0
    %v7344 = vmax.f32 %v7267, 0.0
    %v7345 = vmax.f32 %v6819, 0.0
    %v7346 = vmax.f32 %v6821, 0.0
    %v7347 = vmax.f32 %v7271, 0.0
    %v7348 = vmax.f32 %v7273, 0.0
    %v7349 = vmax.f32 %v6823, 0.0
    %v7350 = vmax.f32 %v6825, 0.0
    %v7351 = vmax.f32 %v7275, 0.0
    %v7352 = vmax.f32 %v7277, 0.0
    %v7353 = vmax.f32 %v6829, 0.0
    %v7354 = vmax.f32 %v6831, 0.0
    %v7355 = vmax.f32 %v7281, 0.0
    %v7356 = vmax.f32 %v7283, 0.0
    %v7357 = vmax.f32 %v6833, 0.0
    %v7358 = vmax.f32 %v6835, 0.0
    %v7359 = vmax.f32 %v7285, 0.0
    %v7360 = vmax.f32 %v7287, 0.0
    %v7361 = vmax.f32 %v6839, 0.0
    %v7362 = vmax.f32 %v6841, 0.0
    %v7363 = vmax.f32 %v7291, 0.0
    %v7364 = vmax.f32 %v7293, 0.0
    %v7365 = vmax.f32 %v6843, 0.0
    %v7366 = vmax.f32 %v6845, 0.0
    %v7367 = vmax.f32 %v7295, 0.0
    %v7368 = vmax.f32 %v7297, 0.0
    %v7369 = vmax.f32 %v6849, 0.0
    %v7370 = vmax.f32 %v6851, 0.0
    %v7371 = vmax.f32 %v7301, 0.0
    %v7372 = vmax.f32 %v7303, 0.0
    %v7373 = vmax.f32 %v6853, 0.0
    %v7374 = vmax.f32 %v6855, 0.0
    %v7375 = vmax.f32 %v7305, 0.0
    %v7376 = vmax.f32 %v7307, 0.0
    %v7377 = vmax.f32 %v6859, 0.0
    %v7378 = vmax.f32 %v6861, 0.0
    %v7379 = vmax.f32 %v7311, 0.0
    %v7380 = vmax.f32 %v7313, 0.0
    %v7381 = vmax.f32 %v6863, 0.0
    %v7382 = vmax.f32 %v6865, 0.0
    %v7383 = vmax.f32 %v7315, 0.0
    %v7384 = vmax.f32 %v7317, 0.0
    %v7385 = vmax.f32 %v6869, 0.0
    %v7386 = vmax.f32 %v6871, 0.0
    %v7387 = vmax.f32 %v7321, 0.0
    %v7388 = vmax.f32 %v7323, 0.0
    %v7389 = vmax.f32 %v6873, 0.0
    %v7390 = vmax.f32 %v6875, 0.0
    %v7391 = vmax.f32 %v7325, 0.0
    %v7392 = vmax.f32 %v7327, 0.0
    %v7393 = vpack.c.bf16 %v7333, %v7329
    %v7394 = vpack.c.bf16 %v7334, %v7330
    %v7395 = vpack.c.bf16 %v7335, %v7331
    %v7396 = vpack.c.bf16 %v7336, %v7332
    %v7397 = vpack.c.bf16 %v7341, %v7337
    %v7398 = vpack.c.bf16 %v7342, %v7338
    %v7399 = vpack.c.bf16 %v7343, %v7339
    %v7400 = vpack.c.bf16 %v7344, %v7340
    %v7401 = vpack.c.bf16 %v7349, %v7345
    %v7402 = vpack.c.bf16 %v7350, %v7346
    %v7403 = vpack.c.bf16 %v7351, %v7347
    %v7404 = vpack.c.bf16 %v7352, %v7348
    %v7405 = vpack.c.bf16 %v7357, %v7353
    %v7406 = vpack.c.bf16 %v7358, %v7354
    %v7407 = vpack.c.bf16 %v7359, %v7355
    %v7408 = vpack.c.bf16 %v7360, %v7356
    %v7409 = vpack.c.bf16 %v7365, %v7361
    %v7410 = vpack.c.bf16 %v7366, %v7362
    %v7411 = vpack.c.bf16 %v7367, %v7363
    %v7412 = vpack.c.bf16 %v7368, %v7364
    %v7413 = vpack.c.bf16 %v7373, %v7369
    %v7414 = vpack.c.bf16 %v7374, %v7370
    %v7415 = vpack.c.bf16 %v7375, %v7371
    %v7416 = vpack.c.bf16 %v7376, %v7372
    %v7417 = vpack.c.bf16 %v7381, %v7377
    %v7418 = vpack.c.bf16 %v7382, %v7378
    %v7419 = vpack.c.bf16 %v7383, %v7379
    %v7420 = vpack.c.bf16 %v7384, %v7380
    %v7421 = vpack.c.bf16 %v7389, %v7385
    %v7422 = vpack.c.bf16 %v7390, %v7386
    %v7423 = vpack.c.bf16 %v7391, %v7387
    %v7424 = vpack.c.bf16 %v7392, %v7388
    %v7425 = vld [vmem:[#allocation10] sm:$0xf]
    %v7426 = vld [vmem:[#allocation10 + $0x4] sm:$0xf]
    %v7427 = vld [vmem:[#allocation10 + $0x8] sm:$0xf]
    %v7428 = vld [vmem:[#allocation10 + $0xc] sm:$0xf]
    %v7429 = vld [vmem:[#allocation10 + $0x10] sm:$0xf]
    %v7430 = vld [vmem:[#allocation10 + $0x14] sm:$0xf]
    %v7431 = vld [vmem:[#allocation10 + $0x18] sm:$0xf]
    %v7432 = vld [vmem:[#allocation10 + $0x1c] sm:$0xf]
    %v7433 = vld [vmem:[#allocation10 + $0x20] sm:$0xf]
    %v7434 = vld [vmem:[#allocation10 + $0x24] sm:$0xf]
    %v7435 = vld [vmem:[#allocation10 + $0x28] sm:$0xf]
    %v7436 = vld [vmem:[#allocation10 + $0x2c] sm:$0xf]
    %v7437 = vld [vmem:[#allocation10 + $0x30] sm:$0xf]
    %v7438 = vld [vmem:[#allocation10 + $0x34] sm:$0xf]
    %v7439 = vld [vmem:[#allocation10 + $0x38] sm:$0xf]
    %v7440 = vld [vmem:[#allocation10 + $0x3c] sm:$0xf]
    %v7441 = vld [vmem:[#allocation10 + $0x40] sm:$0xf]
    %v7442 = vld [vmem:[#allocation10 + $0x44] sm:$0xf]
    %v7443 = vld [vmem:[#allocation10 + $0x48] sm:$0xf]
    %v7444 = vld [vmem:[#allocation10 + $0x4c] sm:$0xf]
    %v7445 = vld [vmem:[#allocation10 + $0x50] sm:$0xf]
    %v7446 = vld [vmem:[#allocation10 + $0x54] sm:$0xf]
    %v7447 = vld [vmem:[#allocation10 + $0x58] sm:$0xf]
    %v7448 = vld [vmem:[#allocation10 + $0x5c] sm:$0xf]
    %v7449 = vld [vmem:[#allocation10 + $0x60] sm:$0xf]
    %v7450 = vld [vmem:[#allocation10 + $0x64] sm:$0xf]
    %v7451 = vld [vmem:[#allocation10 + $0x68] sm:$0xf]
    %v7452 = vld [vmem:[#allocation10 + $0x6c] sm:$0xf]
    %v7453 = vld [vmem:[#allocation10 + $0x70] sm:$0xf]
    %v7454 = vld [vmem:[#allocation10 + $0x74] sm:$0xf]
    %v7455 = vld [vmem:[#allocation10 + $0x78] sm:$0xf]
    %v7456 = vld [vmem:[#allocation10 + $0x7c] sm:$0xf]
    %v7457 = vld [vmem:[#allocation10 + $0x80] sm:$0xf]
    %v7458 = vld [vmem:[#allocation10 + $0x84] sm:$0xf]
    %v7459 = vld [vmem:[#allocation10 + $0x88] sm:$0xf]
    %v7460 = vld [vmem:[#allocation10 + $0x8c] sm:$0xf]
    %v7461 = vld [vmem:[#allocation10 + $0x90] sm:$0xf]
    %v7462 = vld [vmem:[#allocation10 + $0x94] sm:$0xf]
    %v7463 = vld [vmem:[#allocation10 + $0x98] sm:$0xf]
    %v7464 = vld [vmem:[#allocation10 + $0x9c] sm:$0xf]
    %v7465 = vld [vmem:[#allocation10 + $0xa0] sm:$0xf]
    %v7466 = vld [vmem:[#allocation10 + $0xa4] sm:$0xf]
    %v7467 = vld [vmem:[#allocation10 + $0xa8] sm:$0xf]
    %v7468 = vld [vmem:[#allocation10 + $0xac] sm:$0xf]
    %v7469 = vld [vmem:[#allocation10 + $0xb0] sm:$0xf]
    %v7470 = vld [vmem:[#allocation10 + $0xb4] sm:$0xf]
    %v7471 = vld [vmem:[#allocation10 + $0xb8] sm:$0xf]
    %v7472 = vld [vmem:[#allocation10 + $0xbc] sm:$0xf]
    %v7473 = vld [vmem:[#allocation10 + $0xc0] sm:$0xf]
    %v7474 = vld [vmem:[#allocation10 + $0xc4] sm:$0xf]
    %v7475 = vld [vmem:[#allocation10 + $0xc8] sm:$0xf]
    %v7476 = vld [vmem:[#allocation10 + $0xcc] sm:$0xf]
    %v7477 = vld [vmem:[#allocation10 + $0xd0] sm:$0xf]
    %v7478 = vld [vmem:[#allocation10 + $0xd4] sm:$0xf]
    %v7479 = vld [vmem:[#allocation10 + $0xd8] sm:$0xf]
    %v7480 = vld [vmem:[#allocation10 + $0xdc] sm:$0xf]
    %v7481 = vld [vmem:[#allocation10 + $0xe0] sm:$0xf]
    %v7482 = vld [vmem:[#allocation10 + $0xe4] sm:$0xf]
    %v7483 = vld [vmem:[#allocation10 + $0xe8] sm:$0xf]
    %v7484 = vld [vmem:[#allocation10 + $0xec] sm:$0xf]
    %v7485 = vld [vmem:[#allocation10 + $0xf0] sm:$0xf]
    %v7486 = vld [vmem:[#allocation10 + $0xf4] sm:$0xf]
    %v7487 = vld [vmem:[#allocation10 + $0xf8] sm:$0xf]
    %v7488 = vld [vmem:[#allocation10 + $0xfc] sm:$0xf]
    %v7489 = vld [vmem:[#allocation11] sm:$0x1]
    %v7491 = vlaneseq
    %v7492 = vshrl.u32 %v7491, 7
    %v7493 = vsub.s32 0, %v7492
    %v7494 = vrot.slane %v7489, %v7493
    %v7560 = vunpack.c.l.b16 %v7425
    %v7561 = vunpack.c.l.b16 %v7426
    %v7562 = vunpack.c.l.b16 %v7427
    %v7563 = vunpack.c.l.b16 %v7428
    %v7564 = vunpack.c.l.b16 %v7429
    %v7565 = vunpack.c.l.b16 %v7430
    %v7566 = vunpack.c.l.b16 %v7431
    %v7567 = vunpack.c.l.b16 %v7432
    %v7568 = vunpack.c.l.b16 %v7433
    %v7569 = vunpack.c.l.b16 %v7434
    %v7570 = vunpack.c.l.b16 %v7435
    %v7571 = vunpack.c.l.b16 %v7436
    %v7572 = vunpack.c.l.b16 %v7437
    %v7573 = vunpack.c.l.b16 %v7438
    %v7574 = vunpack.c.l.b16 %v7439
    %v7575 = vunpack.c.l.b16 %v7440
    %v7576 = vunpack.c.l.b16 %v7441
    %v7577 = vunpack.c.l.b16 %v7442
    %v7578 = vunpack.c.l.b16 %v7443
    %v7579 = vunpack.c.l.b16 %v7444
    %v7580 = vunpack.c.l.b16 %v7445
    %v7581 = vunpack.c.l.b16 %v7446
    %v7582 = vunpack.c.l.b16 %v7447
    %v7583 = vunpack.c.l.b16 %v7448
    %v7584 = vunpack.c.l.b16 %v7449
    %v7585 = vunpack.c.l.b16 %v7450
    %v7586 = vunpack.c.l.b16 %v7451
    %v7587 = vunpack.c.l.b16 %v7452
    %v7588 = vunpack.c.l.b16 %v7453
    %v7589 = vunpack.c.l.b16 %v7454
    %v7590 = vunpack.c.l.b16 %v7455
    %v7591 = vunpack.c.l.b16 %v7456
    %v7592 = vunpack.c.l.b16 %v7457
    %v7593 = vunpack.c.l.b16 %v7458
    %v7594 = vunpack.c.l.b16 %v7459
    %v7595 = vunpack.c.l.b16 %v7460
    %v7596 = vunpack.c.l.b16 %v7461
    %v7597 = vunpack.c.l.b16 %v7462
    %v7598 = vunpack.c.l.b16 %v7463
    %v7599 = vunpack.c.l.b16 %v7464
    %v7600 = vunpack.c.l.b16 %v7465
    %v7601 = vunpack.c.l.b16 %v7466
    %v7602 = vunpack.c.l.b16 %v7467
    %v7603 = vunpack.c.l.b16 %v7468
    %v7604 = vunpack.c.l.b16 %v7469
    %v7605 = vunpack.c.l.b16 %v7470
    %v7606 = vunpack.c.l.b16 %v7471
    %v7607 = vunpack.c.l.b16 %v7472
    %v7608 = vunpack.c.l.b16 %v7473
    %v7609 = vunpack.c.l.b16 %v7474
    %v7610 = vunpack.c.l.b16 %v7475
    %v7611 = vunpack.c.l.b16 %v7476
    %v7612 = vunpack.c.l.b16 %v7477
    %v7613 = vunpack.c.l.b16 %v7478
    %v7614 = vunpack.c.l.b16 %v7479
    %v7615 = vunpack.c.l.b16 %v7480
    %v7616 = vunpack.c.l.b16 %v7481
    %v7617 = vunpack.c.l.b16 %v7482
    %v7618 = vunpack.c.l.b16 %v7483
    %v7619 = vunpack.c.l.b16 %v7484
    %v7620 = vunpack.c.l.b16 %v7485
    %v7621 = vunpack.c.l.b16 %v7486
    %v7622 = vunpack.c.l.b16 %v7487
    %v7623 = vunpack.c.l.b16 %v7488
    %v7624 = vpack.c.b16 %v7561, %v7560
    %v7625 = vpack.c.b16 %v7563, %v7562
    %v7626 = vpack.c.b16 %v7565, %v7564
    %v7627 = vpack.c.b16 %v7567, %v7566
    %v7628 = vpack.c.b16 %v7569, %v7568
    %v7629 = vpack.c.b16 %v7571, %v7570
    %v7630 = vpack.c.b16 %v7573, %v7572
    %v7631 = vpack.c.b16 %v7575, %v7574
    %v7632 = vpack.c.b16 %v7577, %v7576
    %v7633 = vpack.c.b16 %v7579, %v7578
    %v7634 = vpack.c.b16 %v7581, %v7580
    %v7635 = vpack.c.b16 %v7583, %v7582
    %v7636 = vpack.c.b16 %v7585, %v7584
    %v7637 = vpack.c.b16 %v7587, %v7586
    %v7638 = vpack.c.b16 %v7589, %v7588
    %v7639 = vpack.c.b16 %v7591, %v7590
    %v7640 = vpack.c.b16 %v7593, %v7592
    %v7641 = vpack.c.b16 %v7595, %v7594
    %v7642 = vpack.c.b16 %v7597, %v7596
    %v7643 = vpack.c.b16 %v7599, %v7598
    %v7644 = vpack.c.b16 %v7601, %v7600
    %v7645 = vpack.c.b16 %v7603, %v7602
    %v7646 = vpack.c.b16 %v7605, %v7604
    %v7647 = vpack.c.b16 %v7607, %v7606
    %v7648 = vpack.c.b16 %v7609, %v7608
    %v7649 = vpack.c.b16 %v7611, %v7610
    %v7650 = vpack.c.b16 %v7613, %v7612
    %v7651 = vpack.c.b16 %v7615, %v7614
    %v7652 = vpack.c.b16 %v7617, %v7616
    %v7653 = vpack.c.b16 %v7619, %v7618
    %v7654 = vpack.c.b16 %v7621, %v7620
    %v7655 = vpack.c.b16 %v7623, %v7622
    %7688 = vmatprep.subr.bf16.mxu0 0
    %7689 = vmatpush1.bf16.msra.mxu0 %v7624
    %7690 = vmatprep.subr.bf16.mxu0 0
    %7691 = vmatpush1.bf16.msra.mxu0 %v7625
    %7692 = vmatprep.subr.bf16.mxu0 0
    %7693 = vmatpush1.bf16.msra.mxu0 %v7626
    %7694 = vmatprep.subr.bf16.mxu0 0
    %7695 = vmatpush1.bf16.msra.mxu0 %v7627
    %7696 = vmatprep.subr.bf16.mxu0 0
    %7697 = vmatpush1.bf16.msra.mxu0 %v7628
    %7698 = vmatprep.subr.bf16.mxu0 0
    %7699 = vmatpush1.bf16.msra.mxu0 %v7629
    %7700 = vmatprep.subr.bf16.mxu0 0
    %7701 = vmatpush1.bf16.msra.mxu0 %v7630
    %7702 = vmatprep.subr.bf16.mxu0 0
    %7703 = vmatpush1.bf16.msra.mxu0 %v7631
    %7704 = vmatprep.subr.bf16.mxu0 0
    %7705 = vmatpush1.bf16.msra.mxu0 %v7632
    %7706 = vmatprep.subr.bf16.mxu0 0
    %7707 = vmatpush1.bf16.msra.mxu0 %v7633
    %7708 = vmatprep.subr.bf16.mxu0 0
    %7709 = vmatpush1.bf16.msra.mxu0 %v7634
    %7710 = vmatprep.subr.bf16.mxu0 0
    %7711 = vmatpush1.bf16.msra.mxu0 %v7635
    %7712 = vmatprep.subr.bf16.mxu0 0
    %7713 = vmatpush1.bf16.msra.mxu0 %v7636
    %7714 = vmatprep.subr.bf16.mxu0 0
    %7715 = vmatpush1.bf16.msra.mxu0 %v7637
    %7716 = vmatprep.subr.bf16.mxu0 0
    %7717 = vmatpush1.bf16.msra.mxu0 %v7638
    %7718 = vmatprep.subr.bf16.mxu0 0
    %7719 = vmatpush1.bf16.msra.mxu0 %v7639
    %7720 = vmatprep.mubr.bf16.mxu0 %v7394
    %7721 = vmatmul.mubr.bf16.gmra.mrb[0].mxu0 %v7393
    %v7722 = vpop.f32.mrb[0].mxu0
    %v7723 = vadd.f32 %v7494, %v7722
    %v7724 = vpop.f32.mrb[0].mxu0
    %v7725 = vpop.f32.mrb[0].mxu0
    %v7726 = vadd.f32 %v7494, %v7725
    %v7727 = vpop.f32.mrb[0].mxu0
    %7728 = vmatprep.mubr.bf16.mxu0 %v7398
    %7729 = vmatmul.mubr.bf16.gmra.mrb[0].mxu0 %v7397
    %v7730 = vpop.f32.mrb[0].mxu0
    %v7731 = vadd.f32 %v7494, %v7730
    %v7732 = vpop.f32.mrb[0].mxu0
    %v7733 = vpop.f32.mrb[0].mxu0
    %v7734 = vadd.f32 %v7494, %v7733
    %v7735 = vpop.f32.mrb[0].mxu0
    %7736 = vmatprep.mubr.bf16.mxu0 %v7402
    %7737 = vmatmul.mubr.bf16.gmra.mrb[0].mxu0 %v7401
    %v7738 = vpop.f32.mrb[0].mxu0
    %v7739 = vadd.f32 %v7494, %v7738
    %v7740 = vpop.f32.mrb[0].mxu0
    %v7741 = vpop.f32.mrb[0].mxu0
    %v7742 = vadd.f32 %v7494, %v7741
    %v7743 = vpop.f32.mrb[0].mxu0
    %7744 = vmatprep.mubr.bf16.mxu0 %v7406
    %7745 = vmatmul.mubr.bf16.gmra.mrb[0].mxu0 %v7405
    %v7746 = vpop.f32.mrb[0].mxu0
    %v7747 = vadd.f32 %v7494, %v7746
    %v7748 = vpop.f32.mrb[0].mxu0
    %v7749 = vpop.f32.mrb[0].mxu0
    %v7750 = vadd.f32 %v7494, %v7749
    %v7751 = vpop.f32.mrb[0].mxu0
    %7752 = vmatprep.mubr.bf16.mxu0 %v7410
    %7753 = vmatmul.mubr.bf16.gmra.mrb[0].mxu0 %v7409
    %v7754 = vpop.f32.mrb[0].mxu0
    %v7755 = vadd.f32 %v7494, %v7754
    %v7756 = vpop.f32.mrb[0].mxu0
    %v7757 = vpop.f32.mrb[0].mxu0
    %v7758 = vadd.f32 %v7494, %v7757
    %v7759 = vpop.f32.mrb[0].mxu0
    %7760 = vmatprep.mubr.bf16.mxu0 %v7414
    %7761 = vmatmul.mubr.bf16.gmra.mrb[0].mxu0 %v7413
    %v7762 = vpop.f32.mrb[0].mxu0
    %v7763 = vadd.f32 %v7494, %v7762
    %v7764 = vpop.f32.mrb[0].mxu0
    %v7765 = vpop.f32.mrb[0].mxu0
    %v7766 = vadd.f32 %v7494, %v7765
    %v7767 = vpop.f32.mrb[0].mxu0
    %7768 = vmatprep.mubr.bf16.mxu0 %v7418
    %7769 = vmatmul.mubr.bf16.gmra.mrb[0].mxu0 %v7417
    %v7770 = vpop.f32.mrb[0].mxu0
    %v7771 = vadd.f32 %v7494, %v7770
    %v7772 = vpop.f32.mrb[0].mxu0
    %v7773 = vpop.f32.mrb[0].mxu0
    %v7774 = vadd.f32 %v7494, %v7773
    %v7775 = vpop.f32.mrb[0].mxu0
    %7776 = vmatprep.mubr.bf16.mxu0 %v7422
    %7777 = vmatmul.mubr.bf16.gmra.mrb[0].mxu0 %v7421
    %v7778 = vpop.f32.mrb[0].mxu0
    %v7779 = vadd.f32 %v7494, %v7778
    %v7780 = vpop.f32.mrb[0].mxu0
    %v7781 = vpop.f32.mrb[0].mxu0
    %v7782 = vadd.f32 %v7494, %v7781
    %v7783 = vpop.f32.mrb[0].mxu0
    %7784 = vdwg.mxu0
    %7785 = vmatprep.subr.bf16.mxu0 0
    %7786 = vmatpush1.bf16.msra.mxu0 %v7640
    %7787 = vmatprep.subr.bf16.mxu0 0
    %7788 = vmatpush1.bf16.msra.mxu0 %v7641
    %7789 = vmatprep.subr.bf16.mxu0 0
    %7790 = vmatpush1.bf16.msra.mxu0 %v7642
    %7791 = vmatprep.subr.bf16.mxu0 0
    %7792 = vmatpush1.bf16.msra.mxu0 %v7643
    %7793 = vmatprep.subr.bf16.mxu0 0
    %7794 = vmatpush1.bf16.msra.mxu0 %v7644
    %7795 = vmatprep.subr.bf16.mxu0 0
    %7796 = vmatpush1.bf16.msra.mxu0 %v7645
    %7797 = vmatprep.subr.bf16.mxu0 0
    %7798 = vmatpush1.bf16.msra.mxu0 %v7646
    %7799 = vmatprep.subr.bf16.mxu0 0
    %7800 = vmatpush1.bf16.msra.mxu0 %v7647
    %7801 = vmatprep.subr.bf16.mxu0 0
    %7802 = vmatpush1.bf16.msra.mxu0 %v7648
    %7803 = vmatprep.subr.bf16.mxu0 0
    %7804 = vmatpush1.bf16.msra.mxu0 %v7649
    %7805 = vmatprep.subr.bf16.mxu0 0
    %7806 = vmatpush1.bf16.msra.mxu0 %v7650
    %7807 = vmatprep.subr.bf16.mxu0 0
    %7808 = vmatpush1.bf16.msra.mxu0 %v7651
    %7809 = vmatprep.subr.bf16.mxu0 0
    %7810 = vmatpush1.bf16.msra.mxu0 %v7652
    %7811 = vmatprep.subr.bf16.mxu0 0
    %7812 = vmatpush1.bf16.msra.mxu0 %v7653
    %7813 = vmatprep.subr.bf16.mxu0 0
    %7814 = vmatpush1.bf16.msra.mxu0 %v7654
    %7815 = vmatprep.subr.bf16.mxu0 0
    %7816 = vmatpush1.bf16.msra.mxu0 %v7655
    %7817 = vmatprep.mubr.bf16.mxu0 %v7396
    %7818 = vmatmul.mubr.bf16.gmra.mrb[0].mxu0 %v7395
    %v7819 = vpop.f32.mrb[0].mxu0
    %v7820 = vadd.f32 %v7723, %v7819
    %v7821 = vpop.f32.mrb[0].mxu0
    %v7822 = vpop.f32.mrb[0].mxu0
    %v7823 = vadd.f32 %v7726, %v7822
    %v7824 = vpop.f32.mrb[0].mxu0
    %7825 = vmatprep.mubr.bf16.mxu0 %v7400
    %7826 = vmatmul.mubr.bf16.gmra.mrb[0].mxu0 %v7399
    %v7827 = vpop.f32.mrb[0].mxu0
    %v7828 = vadd.f32 %v7731, %v7827
    %v7829 = vpop.f32.mrb[0].mxu0
    %v7830 = vpop.f32.mrb[0].mxu0
    %v7831 = vadd.f32 %v7734, %v7830
    %v7832 = vpop.f32.mrb[0].mxu0
    %7833 = vmatprep.mubr.bf16.mxu0 %v7404
    %7834 = vmatmul.mubr.bf16.gmra.mrb[0].mxu0 %v7403
    %v7835 = vpop.f32.mrb[0].mxu0
    %v7836 = vadd.f32 %v7739, %v7835
    %v7837 = vpop.f32.mrb[0].mxu0
    %v7838 = vpop.f32.mrb[0].mxu0
    %v7839 = vadd.f32 %v7742, %v7838
    %v7840 = vpop.f32.mrb[0].mxu0
    %7841 = vmatprep.mubr.bf16.mxu0 %v7408
    %7842 = vmatmul.mubr.bf16.gmra.mrb[0].mxu0 %v7407
    %v7843 = vpop.f32.mrb[0].mxu0
    %v7844 = vadd.f32 %v7747, %v7843
    %v7845 = vpop.f32.mrb[0].mxu0
    %v7846 = vpop.f32.mrb[0].mxu0
    %v7847 = vadd.f32 %v7750, %v7846
    %v7848 = vpop.f32.mrb[0].mxu0
    %7849 = vmatprep.mubr.bf16.mxu0 %v7412
    %7850 = vmatmul.mubr.bf16.gmra.mrb[0].mxu0 %v7411
    %v7851 = vpop.f32.mrb[0].mxu0
    %v7852 = vadd.f32 %v7755, %v7851
    %v7853 = vpop.f32.mrb[0].mxu0
    %v7854 = vpop.f32.mrb[0].mxu0
    %v7855 = vadd.f32 %v7758, %v7854
    %v7856 = vpop.f32.mrb[0].mxu0
    %7857 = vmatprep.mubr.bf16.mxu0 %v7416
    %7858 = vmatmul.mubr.bf16.gmra.mrb[0].mxu0 %v7415
    %v7859 = vpop.f32.mrb[0].mxu0
    %v7860 = vadd.f32 %v7763, %v7859
    %v7861 = vpop.f32.mrb[0].mxu0
    %v7862 = vpop.f32.mrb[0].mxu0
    %v7863 = vadd.f32 %v7766, %v7862
    %v7864 = vpop.f32.mrb[0].mxu0
    %7865 = vmatprep.mubr.bf16.mxu0 %v7420
    %7866 = vmatmul.mubr.bf16.gmra.mrb[0].mxu0 %v7419
    %v7867 = vpop.f32.mrb[0].mxu0
    %v7868 = vadd.f32 %v7771, %v7867
    %v7869 = vpop.f32.mrb[0].mxu0
    %v7870 = vpop.f32.mrb[0].mxu0
    %v7871 = vadd.f32 %v7774, %v7870
    %v7872 = vpop.f32.mrb[0].mxu0
    %7873 = vmatprep.mubr.bf16.mxu0 %v7424
    %7874 = vmatmul.mubr.bf16.gmra.mrb[0].mxu0 %v7423
    %v7875 = vpop.f32.mrb[0].mxu0
    %v7876 = vadd.f32 %v7779, %v7875
    %v7877 = vpop.f32.mrb[0].mxu0
    %v7878 = vpop.f32.mrb[0].mxu0
    %v7879 = vadd.f32 %v7782, %v7878
    %v7880 = vpop.f32.mrb[0].mxu0
    %7881 = vdwg.mxu0
    %7882 = vst [vmem:[#allocation13] sm:$0xff] %v7820
    %7883 = vst [vmem:[#allocation13 + $0x8] sm:$0xff] %v7823
    %7884 = vst [vmem:[#allocation13 + $0x10] sm:$0xff] %v7828
    %7885 = vst [vmem:[#allocation13 + $0x18] sm:$0xff] %v7831
    %7886 = vst [vmem:[#allocation13 + $0x20] sm:$0xff] %v7836
    %7887 = vst [vmem:[#allocation13 + $0x28] sm:$0xff] %v7839
    %7888 = vst [vmem:[#allocation13 + $0x30] sm:$0xff] %v7844
    %7889 = vst [vmem:[#allocation13 + $0x38] sm:$0xff] %v7847
    %7890 = vst [vmem:[#allocation13 + $0x40] sm:$0xff] %v7852
    %7891 = vst [vmem:[#allocation13 + $0x48] sm:$0xff] %v7855
    %7892 = vst [vmem:[#allocation13 + $0x50] sm:$0xff] %v7860
    %7893 = vst [vmem:[#allocation13 + $0x58] sm:$0xff] %v7863
    %7894 = vst [vmem:[#allocation13 + $0x60] sm:$0xff] %v7868
    %7895 = vst [vmem:[#allocation13 + $0x68] sm:$0xff] %v7871
    %7896 = vst [vmem:[#allocation13 + $0x70] sm:$0xff] %v7876
    %7897 = vst [vmem:[#allocation13 + $0x78] sm:$0xff] %v7879
    // Predicated region
    $region54: #{tpu_custom_call.1} parent=1 // pred_check
      _
    $region55: #{tpu_custom_call.1} parent=1 // pred_check_branch
      %7899 = sbr.rel (0) target = $region57
    $region56: #{tpu_custom_call.1} parent=1 // pred_region
      %s7901 = ssub.s32 2048, 2048
      %7902 = vsyncadd [#allocation4], %s7901
      %s7903 = sshll.u32 [#allocation13], 4
      %s7904 = int_to_ptr.vmem [resolvable:$true] %s7903
      %7909 = dma.vmem_to_hbm [thread:$0]  %s7904, 2048, %s7, [#allocation4], 128, 128, 8
    $region57: #{tpu_custom_call.1} parent=1 // pred_fallthru
      _
    // Predicated region
    $region58: #{tpu_custom_call.1} parent=1 // pred_check
      _
    $region59: #{tpu_custom_call.1} parent=1 // pred_check_branch
      %7911 = sbr.rel (0) target = $region61
    $region60: #{tpu_custom_call.1} parent=1 // pred_region
      %7912 = dma.done [#allocation4], 2048
    $region61: #{tpu_custom_call.1} parent=1 // pred_fallthru
      _
    %7913 = vsyncpa [#allocation3], 1
    %7914 = vsyncpa [#allocation6], 1
    %7915 = vsyncpa [#allocation9], 1
    %7916 = vsyncpa [#allocation12], 1
    %7917 = vsyncpa [#allocation4], 1

</llo_original>
